<compile_context>
chip_gen: v7x
topology: tpu7x:2x2x1
jax: 0.10.0
libtpu: 0.0.40
codegen_flags: <defaults>
</compile_context>

<pallas_src>
import jax
import jax.numpy as jnp
from jax.experimental import pallas as pl
from jax.experimental.pallas import tpu as pltpu


def _resblock_kernel(x_ref, w1_ref, b1_ref, w2_ref, b2_ref, out_ref, ybuf):
    _, H, W, C = out_ref.shape
    HW = H * W

    # conv1 (+ folded BN1) as 9 shifted matmuls, f32 accumulation, then ReLU.
    acc = jnp.zeros((HW, C), jnp.float32)
    for k in range(9):
        dy, dx = k // 3, k % 3
        patch = x_ref[0, dy:dy + H, dx:dx + W, :].reshape(HW, C)
        acc = acc + jnp.dot(patch, w1_ref[k], preferred_element_type=jnp.float32)
    y1 = jnp.maximum(acc + b1_ref[...], 0.0)

    # Stage the ReLU output into a spatially zero-padded VMEM scratch for conv2.
    ybuf[...] = jnp.zeros_like(ybuf)
    ybuf[1:1 + H, 1:1 + W, :] = y1.reshape(H, W, C).astype(ybuf.dtype)

    # conv2 (+ folded BN2) + residual add.
    acc2 = jnp.zeros((HW, C), jnp.float32)
    for k in range(9):
        dy, dx = k // 3, k % 3
        patch = ybuf[dy:dy + H, dx:dx + W, :].reshape(HW, C)
        acc2 = acc2 + jnp.dot(patch, w2_ref[k], preferred_element_type=jnp.float32)
    res = x_ref[0, 1:1 + H, 1:1 + W, :].reshape(HW, C).astype(jnp.float32)
    out = acc2 + b2_ref[...] + res
    out_ref[...] = out.reshape(1, H, W, C).astype(out_ref.dtype)


def _round_up(n, m):
    return (n + m - 1) // m * m


def _fold_bn(conv_w, conv_b, gamma, beta, mean, var, eps):
    """Fold eval-mode BatchNorm into conv weight (OIHW) and bias."""
    inv = gamma / jnp.sqrt(var + eps)                    # (C,)
    w = conv_w * inv[:, None, None, None]                # scale per output channel
    b = (conv_b - mean) * inv + beta
    return w, b


def _pack_weight(w, c, cp):
    """(O, I, 3, 3) -> (9, I_p, O_p) so the kernel computes patch @ W[k]."""
    w = jnp.transpose(w, (2, 3, 1, 0)).reshape(9, c, c)  # (ky*3+kx, I, O)
    return jnp.pad(w, ((0, 0), (0, cp - c), (0, cp - c)))


def residual_block_forward(x, params):
    """x: (N, C, H, W) float32, PyTorch-convention params. Returns (N, C, H, W)."""
    N, C, H, W = x.shape
    Cp = _round_up(C, 128)
    eps = params["eps"]

    w1, b1 = _fold_bn(params["conv1_w"], params["conv1_b"], params["bn1_gamma"],
                      params["bn1_beta"], params["bn1_mean"], params["bn1_var"], eps)
    w2, b2 = _fold_bn(params["conv2_w"], params["conv2_b"], params["bn2_gamma"],
                      params["bn2_beta"], params["bn2_mean"], params["bn2_var"], eps)

    w1k = _pack_weight(w1, C, Cp)
    w2k = _pack_weight(w2, C, Cp)
    b1k = jnp.pad(b1, (0, Cp - C)).reshape(1, Cp)
    b2k = jnp.pad(b2, (0, Cp - C)).reshape(1, Cp)

    # NCHW -> NHWC, channel pad to lane-dense Cp, spatial halo pad of 1 (all wrapper glue).
    x_nhwc = jnp.transpose(x, (0, 2, 3, 1))
    x_pad = jnp.pad(x_nhwc, ((0, 0), (1, 1), (1, 1), (0, Cp - C)))

    flops = 2 * 2 * N * H * W * 9 * Cp * Cp
    bytes_accessed = 4 * (x_pad.size + w1k.size + w2k.size + b1k.size + b2k.size
                          + N * H * W * Cp)

    out = pl.pallas_call(
        _resblock_kernel,
        out_shape=jax.ShapeDtypeStruct((N, H, W, Cp), x.dtype),
        grid=(N,),
        in_specs=[
            pl.BlockSpec((1, H + 2, W + 2, Cp), lambda n: (n, 0, 0, 0)),
            pl.BlockSpec((9, Cp, Cp), lambda n: (0, 0, 0)),   # weights stay resident
            pl.BlockSpec((1, Cp), lambda n: (0, 0)),
            pl.BlockSpec((9, Cp, Cp), lambda n: (0, 0, 0)),
            pl.BlockSpec((1, Cp), lambda n: (0, 0)),
        ],
        out_specs=pl.BlockSpec((1, H, W, Cp), lambda n: (n, 0, 0, 0)),
        scratch_shapes=[pltpu.VMEM((H + 2, W + 2, Cp), jnp.float32)],
        compiler_params=pltpu.CompilerParams(
            dimension_semantics=("parallel",)),
        cost_estimate=pl.CostEstimate(flops=flops, transcendentals=0,
                                      bytes_accessed=bytes_accessed),
    )(x_pad, w1k, b1k, w2k, b2k)

    # Drop channel padding and return to NCHW.
    return jnp.transpose(out[..., :C], (0, 3, 1, 2))


def init_params(key, channels):
    ks = jax.random.split(key, 12)
    s = 0.1
    return {
        "conv1_w": s * jax.random.normal(ks[0], (channels, channels, 3, 3), jnp.float32),
        "conv1_b": s * jax.random.normal(ks[1], (channels,), jnp.float32),
        "bn1_gamma": 1.0 + s * jax.random.normal(ks[2], (channels,), jnp.float32),
        "bn1_beta": s * jax.random.normal(ks[3], (channels,), jnp.float32),
        "bn1_mean": s * jax.random.normal(ks[4], (channels,), jnp.float32),
        "bn1_var": jnp.abs(1.0 + s * jax.random.normal(ks[5], (channels,), jnp.float32)),
        "conv2_w": s * jax.random.normal(ks[6], (channels, channels, 3, 3), jnp.float32),
        "conv2_b": s * jax.random.normal(ks[7], (channels,), jnp.float32),
        "bn2_gamma": 1.0 + s * jax.random.normal(ks[8], (channels,), jnp.float32),
        "bn2_beta": s * jax.random.normal(ks[9], (channels,), jnp.float32),
        "bn2_mean": s * jax.random.normal(ks[10], (channels,), jnp.float32),
        "bn2_var": jnp.abs(1.0 + s * jax.random.normal(ks[11], (channels,), jnp.float32)),
        "eps": 1e-5,
    }


def reference_forward(x, p):
    def conv3x3(h, w, b):
        y = jax.lax.conv_general_dilated(
            h, w, window_strides=(1, 1), padding=((1, 1), (1, 1)),
            dimension_numbers=("NCHW", "OIHW", "NCHW"),
            precision=jax.lax.Precision.HIGHEST)
        return y + b[None, :, None, None]

    def bn(h, g, bt, m, v, eps):
        inv = g / jnp.sqrt(v + eps)
        return (h - m[None, :, None, None]) * inv[None, :, None, None] + bt[None, :, None, None]

    h = conv3x3(x, p["conv1_w"], p["conv1_b"])
    h = bn(h, p["bn1_gamma"], p["bn1_beta"], p["bn1_mean"], p["bn1_var"], p["eps"])
    h = jnp.maximum(h, 0.0)
    h = conv3x3(h, p["conv2_w"], p["conv2_b"])
    h = bn(h, p["bn2_gamma"], p["bn2_beta"], p["bn2_mean"], p["bn2_var"], p["eps"])
    return x + h


if __name__ == "__main__":
    key = jax.random.PRNGKey(0)
    k_x, k_p = jax.random.split(key)

    N, C, H, W = 2, 4, 16, 16
    x = jax.random.normal(k_x, (N, C, H, W), jnp.float32)
    params = init_params(k_p, C)

    out = residual_block_forward(x, params)
    out = jax.block_until_ready(out)

    ref = reference_forward(x, params)
    assert out.shape == (N, C, H, W)
    err = jnp.max(jnp.abs(out - ref))
    assert jnp.allclose(out, ref, atol=1e-3, rtol=1e-3), f"mismatch vs reference, max abs err={err}"

    print("KERNEL_OK")
</pallas_src>

<mosaic_0001>
module attributes {stable_mosaic.version = 11 : i64} {
  func.func @_resblock_kernel(%arg0: i32, %arg1: memref<1x18x18x128xf32, #tpu.memory_space<vmem>>, %arg2: memref<9x128x128xf32, #tpu.memory_space<vmem>>, %arg3: memref<1x128xf32, #tpu.memory_space<vmem>>, %arg4: memref<9x128x128xf32, #tpu.memory_space<vmem>>, %arg5: memref<1x128xf32, #tpu.memory_space<vmem>>, %arg6: memref<1x16x16x128xf32, #tpu.memory_space<vmem>>, %arg7: memref<18x18x128xf32, #tpu.memory_space<vmem>>) attributes {dimension_semantics = [#tpu.dimension_semantics<parallel>], iteration_bounds = array<i64: 2>, scalar_prefetch = 0 : i64, scratch_operands = 1 : i64, tpu.core_type = #tpu.core_type<tc>, window_params = [{transform_indices = @transform_0, window_bounds = array<i64: 1, 18, 18, 128>}, {pipeline_mode = #tpu.pipeline_mode<synchronous>, transform_indices = @transform_1, window_bounds = array<i64: 9, 128, 128>}, {pipeline_mode = #tpu.pipeline_mode<synchronous>, transform_indices = @transform_2, window_bounds = array<i64: 1, 128>}, {pipeline_mode = #tpu.pipeline_mode<synchronous>, transform_indices = @transform_3, window_bounds = array<i64: 9, 128, 128>}, {pipeline_mode = #tpu.pipeline_mode<synchronous>, transform_indices = @transform_4, window_bounds = array<i64: 1, 128>}, {transform_indices = @transform_5, window_bounds = array<i64: 1, 16, 16, 128>}]} {
    %cst = arith.constant 0.000000e+00 : f32
    %0 = vector.broadcast %cst : f32 to vector<256x128xf32>
    %c0 = arith.constant 0 : index
    %c0_0 = arith.constant 0 : index
    %c0_1 = arith.constant 0 : index
    %c0_2 = arith.constant 0 : index
    %1 = vector.load %arg1[%c0, %c0_0, %c0_1, %c0_2] : memref<1x18x18x128xf32, #tpu.memory_space<vmem>>, vector<1x16x16x128xf32>
    %2 = vector.shape_cast %1 : vector<1x16x16x128xf32> to vector<16x16x128xf32>
    %3 = vector.shape_cast %2 : vector<16x16x128xf32> to vector<256x128xf32>
    %c0_3 = arith.constant 0 : index
    %c0_4 = arith.constant 0 : index
    %c0_5 = arith.constant 0 : index
    %4 = vector.load %arg2[%c0_3, %c0_4, %c0_5] : memref<9x128x128xf32, #tpu.memory_space<vmem>>, vector<1x128x128xf32>
    %5 = vector.shape_cast %4 : vector<1x128x128xf32> to vector<128x128xf32>
    %cst_6 = arith.constant dense<0.000000e+00> : vector<256x128xf32>
    %6 = tpu.matmul %3, %5, %cst_6 {dimension_numbers = #tpu.dot_dimension_numbers<[1], [0], [0], [1], [0, 0, 1, 1], [], []>} : vector<256x128xf32>, vector<128x128xf32>, vector<256x128xf32> -> vector<256x128xf32>
    %7 = arith.addf %0, %6 : vector<256x128xf32>
    %c0_7 = arith.constant 0 : index
    %c0_8 = arith.constant 0 : index
    %c1 = arith.constant 1 : index
    %c0_9 = arith.constant 0 : index
    %8 = vector.load %arg1[%c0_7, %c0_8, %c1, %c0_9] : memref<1x18x18x128xf32, #tpu.memory_space<vmem>>, vector<1x16x16x128xf32>
    %9 = vector.shape_cast %8 : vector<1x16x16x128xf32> to vector<16x16x128xf32>
    %10 = vector.shape_cast %9 : vector<16x16x128xf32> to vector<256x128xf32>
    %c1_10 = arith.constant 1 : index
    %c0_11 = arith.constant 0 : index
    %c0_12 = arith.constant 0 : index
    %11 = vector.load %arg2[%c1_10, %c0_11, %c0_12] : memref<9x128x128xf32, #tpu.memory_space<vmem>>, vector<1x128x128xf32>
    %12 = vector.shape_cast %11 : vector<1x128x128xf32> to vector<128x128xf32>
    %cst_13 = arith.constant dense<0.000000e+00> : vector<256x128xf32>
    %13 = tpu.matmul %10, %12, %cst_13 {dimension_numbers = #tpu.dot_dimension_numbers<[1], [0], [0], [1], [0, 0, 1, 1], [], []>} : vector<256x128xf32>, vector<128x128xf32>, vector<256x128xf32> -> vector<256x128xf32>
    %14 = arith.addf %7, %13 : vector<256x128xf32>
    %c0_14 = arith.constant 0 : index
    %c0_15 = arith.constant 0 : index
    %c2 = arith.constant 2 : index
    %c0_16 = arith.constant 0 : index
    %15 = vector.load %arg1[%c0_14, %c0_15, %c2, %c0_16] : memref<1x18x18x128xf32, #tpu.memory_space<vmem>>, vector<1x16x16x128xf32>
    %16 = vector.shape_cast %15 : vector<1x16x16x128xf32> to vector<16x16x128xf32>
    %17 = vector.shape_cast %16 : vector<16x16x128xf32> to vector<256x128xf32>
    %c2_17 = arith.constant 2 : index
    %c0_18 = arith.constant 0 : index
    %c0_19 = arith.constant 0 : index
    %18 = vector.load %arg2[%c2_17, %c0_18, %c0_19] : memref<9x128x128xf32, #tpu.memory_space<vmem>>, vector<1x128x128xf32>
    %19 = vector.shape_cast %18 : vector<1x128x128xf32> to vector<128x128xf32>
    %cst_20 = arith.constant dense<0.000000e+00> : vector<256x128xf32>
    %20 = tpu.matmul %17, %19, %cst_20 {dimension_numbers = #tpu.dot_dimension_numbers<[1], [0], [0], [1], [0, 0, 1, 1], [], []>} : vector<256x128xf32>, vector<128x128xf32>, vector<256x128xf32> -> vector<256x128xf32>
    %21 = arith.addf %14, %20 : vector<256x128xf32>
    %c0_21 = arith.constant 0 : index
    %c1_22 = arith.constant 1 : index
    %c0_23 = arith.constant 0 : index
    %c0_24 = arith.constant 0 : index
    %22 = vector.load %arg1[%c0_21, %c1_22, %c0_23, %c0_24] : memref<1x18x18x128xf32, #tpu.memory_space<vmem>>, vector<1x16x16x128xf32>
    %23 = vector.shape_cast %22 : vector<1x16x16x128xf32> to vector<16x16x128xf32>
    %24 = vector.shape_cast %23 : vector<16x16x128xf32> to vector<256x128xf32>
    %c3 = arith.constant 3 : index
    %c0_25 = arith.constant 0 : index
    %c0_26 = arith.constant 0 : index
    %25 = vector.load %arg2[%c3, %c0_25, %c0_26] : memref<9x128x128xf32, #tpu.memory_space<vmem>>, vector<1x128x128xf32>
    %26 = vector.shape_cast %25 : vector<1x128x128xf32> to vector<128x128xf32>
    %cst_27 = arith.constant dense<0.000000e+00> : vector<256x128xf32>
    %27 = tpu.matmul %24, %26, %cst_27 {dimension_numbers = #tpu.dot_dimension_numbers<[1], [0], [0], [1], [0, 0, 1, 1], [], []>} : vector<256x128xf32>, vector<128x128xf32>, vector<256x128xf32> -> vector<256x128xf32>
    %28 = arith.addf %21, %27 : vector<256x128xf32>
    %c0_28 = arith.constant 0 : index
    %c1_29 = arith.constant 1 : index
    %c1_30 = arith.constant 1 : index
    %c0_31 = arith.constant 0 : index
    %29 = vector.load %arg1[%c0_28, %c1_29, %c1_30, %c0_31] : memref<1x18x18x128xf32, #tpu.memory_space<vmem>>, vector<1x16x16x128xf32>
    %30 = vector.shape_cast %29 : vector<1x16x16x128xf32> to vector<16x16x128xf32>
    %31 = vector.shape_cast %30 : vector<16x16x128xf32> to vector<256x128xf32>
    %c4 = arith.constant 4 : index
    %c0_32 = arith.constant 0 : index
    %c0_33 = arith.constant 0 : index
    %32 = vector.load %arg2[%c4, %c0_32, %c0_33] : memref<9x128x128xf32, #tpu.memory_space<vmem>>, vector<1x128x128xf32>
    %33 = vector.shape_cast %32 : vector<1x128x128xf32> to vector<128x128xf32>
    %cst_34 = arith.constant dense<0.000000e+00> : vector<256x128xf32>
    %34 = tpu.matmul %31, %33, %cst_34 {dimension_numbers = #tpu.dot_dimension_numbers<[1], [0], [0], [1], [0, 0, 1, 1], [], []>} : vector<256x128xf32>, vector<128x128xf32>, vector<256x128xf32> -> vector<256x128xf32>
    %35 = arith.addf %28, %34 : vector<256x128xf32>
    %c0_35 = arith.constant 0 : index
    %c1_36 = arith.constant 1 : index
    %c2_37 = arith.constant 2 : index
    %c0_38 = arith.constant 0 : index
    %36 = vector.load %arg1[%c0_35, %c1_36, %c2_37, %c0_38] : memref<1x18x18x128xf32, #tpu.memory_space<vmem>>, vector<1x16x16x128xf32>
    %37 = vector.shape_cast %36 : vector<1x16x16x128xf32> to vector<16x16x128xf32>
    %38 = vector.shape_cast %37 : vector<16x16x128xf32> to vector<256x128xf32>
    %c5 = arith.constant 5 : index
    %c0_39 = arith.constant 0 : index
    %c0_40 = arith.constant 0 : index
    %39 = vector.load %arg2[%c5, %c0_39, %c0_40] : memref<9x128x128xf32, #tpu.memory_space<vmem>>, vector<1x128x128xf32>
    %40 = vector.shape_cast %39 : vector<1x128x128xf32> to vector<128x128xf32>
    %cst_41 = arith.constant dense<0.000000e+00> : vector<256x128xf32>
    %41 = tpu.matmul %38, %40, %cst_41 {dimension_numbers = #tpu.dot_dimension_numbers<[1], [0], [0], [1], [0, 0, 1, 1], [], []>} : vector<256x128xf32>, vector<128x128xf32>, vector<256x128xf32> -> vector<256x128xf32>
    %42 = arith.addf %35, %41 : vector<256x128xf32>
    %c0_42 = arith.constant 0 : index
    %c2_43 = arith.constant 2 : index
    %c0_44 = arith.constant 0 : index
    %c0_45 = arith.constant 0 : index
    %43 = vector.load %arg1[%c0_42, %c2_43, %c0_44, %c0_45] : memref<1x18x18x128xf32, #tpu.memory_space<vmem>>, vector<1x16x16x128xf32>
    %44 = vector.shape_cast %43 : vector<1x16x16x128xf32> to vector<16x16x128xf32>
    %45 = vector.shape_cast %44 : vector<16x16x128xf32> to vector<256x128xf32>
    %c6 = arith.constant 6 : index
    %c0_46 = arith.constant 0 : index
    %c0_47 = arith.constant 0 : index
    %46 = vector.load %arg2[%c6, %c0_46, %c0_47] : memref<9x128x128xf32, #tpu.memory_space<vmem>>, vector<1x128x128xf32>
    %47 = vector.shape_cast %46 : vector<1x128x128xf32> to vector<128x128xf32>
    %cst_48 = arith.constant dense<0.000000e+00> : vector<256x128xf32>
    %48 = tpu.matmul %45, %47, %cst_48 {dimension_numbers = #tpu.dot_dimension_numbers<[1], [0], [0], [1], [0, 0, 1, 1], [], []>} : vector<256x128xf32>, vector<128x128xf32>, vector<256x128xf32> -> vector<256x128xf32>
    %49 = arith.addf %42, %48 : vector<256x128xf32>
    %c0_49 = arith.constant 0 : index
    %c2_50 = arith.constant 2 : index
    %c1_51 = arith.constant 1 : index
    %c0_52 = arith.constant 0 : index
    %50 = vector.load %arg1[%c0_49, %c2_50, %c1_51, %c0_52] : memref<1x18x18x128xf32, #tpu.memory_space<vmem>>, vector<1x16x16x128xf32>
    %51 = vector.shape_cast %50 : vector<1x16x16x128xf32> to vector<16x16x128xf32>
    %52 = vector.shape_cast %51 : vector<16x16x128xf32> to vector<256x128xf32>
    %c7 = arith.constant 7 : index
    %c0_53 = arith.constant 0 : index
    %c0_54 = arith.constant 0 : index
    %53 = vector.load %arg2[%c7, %c0_53, %c0_54] : memref<9x128x128xf32, #tpu.memory_space<vmem>>, vector<1x128x128xf32>
    %54 = vector.shape_cast %53 : vector<1x128x128xf32> to vector<128x128xf32>
    %cst_55 = arith.constant dense<0.000000e+00> : vector<256x128xf32>
    %55 = tpu.matmul %52, %54, %cst_55 {dimension_numbers = #tpu.dot_dimension_numbers<[1], [0], [0], [1], [0, 0, 1, 1], [], []>} : vector<256x128xf32>, vector<128x128xf32>, vector<256x128xf32> -> vector<256x128xf32>
    %56 = arith.addf %49, %55 : vector<256x128xf32>
    %c0_56 = arith.constant 0 : index
    %c2_57 = arith.constant 2 : index
    %c2_58 = arith.constant 2 : index
    %c0_59 = arith.constant 0 : index
    %57 = vector.load %arg1[%c0_56, %c2_57, %c2_58, %c0_59] : memref<1x18x18x128xf32, #tpu.memory_space<vmem>>, vector<1x16x16x128xf32>
    %58 = vector.shape_cast %57 : vector<1x16x16x128xf32> to vector<16x16x128xf32>
    %59 = vector.shape_cast %58 : vector<16x16x128xf32> to vector<256x128xf32>
    %c8 = arith.constant 8 : index
    %c0_60 = arith.constant 0 : index
    %c0_61 = arith.constant 0 : index
    %60 = vector.load %arg2[%c8, %c0_60, %c0_61] : memref<9x128x128xf32, #tpu.memory_space<vmem>>, vector<1x128x128xf32>
    %61 = vector.shape_cast %60 : vector<1x128x128xf32> to vector<128x128xf32>
    %cst_62 = arith.constant dense<0.000000e+00> : vector<256x128xf32>
    %62 = tpu.matmul %59, %61, %cst_62 {dimension_numbers = #tpu.dot_dimension_numbers<[1], [0], [0], [1], [0, 0, 1, 1], [], []>} : vector<256x128xf32>, vector<128x128xf32>, vector<256x128xf32> -> vector<256x128xf32>
    %63 = arith.addf %56, %62 : vector<256x128xf32>
    %c0_63 = arith.constant 0 : index
    %c0_64 = arith.constant 0 : index
    %64 = vector.load %arg3[%c0_63, %c0_64] : memref<1x128xf32, #tpu.memory_space<vmem>>, vector<1x128xf32>
    %65 = vector.broadcast %64 : vector<1x128xf32> to vector<256x128xf32>
    %66 = arith.addf %63, %65 : vector<256x128xf32>
    %cst_65 = arith.constant 0.000000e+00 : f32
    %67 = vector.broadcast %cst_65 : f32 to vector<256x128xf32>
    %68 = arith.maximumf %66, %67 : vector<256x128xf32>
    %cst_66 = arith.constant 0.000000e+00 : f32
    %69 = vector.broadcast %cst_66 : f32 to vector<18x18x128xf32>
    %c0_67 = arith.constant 0 : index
    %c0_68 = arith.constant 0 : index
    %c0_69 = arith.constant 0 : index
    %70 = vector.load %arg7[%c0_67, %c0_68, %c0_69] : memref<18x18x128xf32, #tpu.memory_space<vmem>>, vector<18x18x128xf32>
    tpu.vector_store %arg7[%c0_67, %c0_68, %c0_69], %69 {strides = array<i32>} : memref<18x18x128xf32, #tpu.memory_space<vmem>>, vector<18x18x128xf32>,
    %71 = vector.shape_cast %68 : vector<256x128xf32> to vector<16x16x128xf32>
    %c1_70 = arith.constant 1 : index
    %c1_71 = arith.constant 1 : index
    %c0_72 = arith.constant 0 : index
    %72 = vector.load %arg7[%c1_70, %c1_71, %c0_72] : memref<18x18x128xf32, #tpu.memory_space<vmem>>, vector<16x16x128xf32>
    tpu.vector_store %arg7[%c1_70, %c1_71, %c0_72], %71 {strides = array<i32>} : memref<18x18x128xf32, #tpu.memory_space<vmem>>, vector<16x16x128xf32>,
    %cst_73 = arith.constant 0.000000e+00 : f32
    %73 = vector.broadcast %cst_73 : f32 to vector<256x128xf32>
    %c0_74 = arith.constant 0 : index
    %c0_75 = arith.constant 0 : index
    %c0_76 = arith.constant 0 : index
    %74 = vector.load %arg7[%c0_74, %c0_75, %c0_76] : memref<18x18x128xf32, #tpu.memory_space<vmem>>, vector<16x16x128xf32>
    %75 = vector.shape_cast %74 : vector<16x16x128xf32> to vector<256x128xf32>
    %c0_77 = arith.constant 0 : index
    %c0_78 = arith.constant 0 : index
    %c0_79 = arith.constant 0 : index
    %76 = vector.load %arg4[%c0_77, %c0_78, %c0_79] : memref<9x128x128xf32, #tpu.memory_space<vmem>>, vector<1x128x128xf32>
    %77 = vector.shape_cast %76 : vector<1x128x128xf32> to vector<128x128xf32>
    %cst_80 = arith.constant dense<0.000000e+00> : vector<256x128xf32>
    %78 = tpu.matmul %75, %77, %cst_80 {dimension_numbers = #tpu.dot_dimension_numbers<[1], [0], [0], [1], [0, 0, 1, 1], [], []>} : vector<256x128xf32>, vector<128x128xf32>, vector<256x128xf32> -> vector<256x128xf32>
    %79 = arith.addf %73, %78 : vector<256x128xf32>
    %c0_81 = arith.constant 0 : index
    %c1_82 = arith.constant 1 : index
    %c0_83 = arith.constant 0 : index
    %80 = vector.load %arg7[%c0_81, %c1_82, %c0_83] : memref<18x18x128xf32, #tpu.memory_space<vmem>>, vector<16x16x128xf32>
    %81 = vector.shape_cast %80 : vector<16x16x128xf32> to vector<256x128xf32>
    %c1_84 = arith.constant 1 : index
    %c0_85 = arith.constant 0 : index
    %c0_86 = arith.constant 0 : index
    %82 = vector.load %arg4[%c1_84, %c0_85, %c0_86] : memref<9x128x128xf32, #tpu.memory_space<vmem>>, vector<1x128x128xf32>
    %83 = vector.shape_cast %82 : vector<1x128x128xf32> to vector<128x128xf32>
    %cst_87 = arith.constant dense<0.000000e+00> : vector<256x128xf32>
    %84 = tpu.matmul %81, %83, %cst_87 {dimension_numbers = #tpu.dot_dimension_numbers<[1], [0], [0], [1], [0, 0, 1, 1], [], []>} : vector<256x128xf32>, vector<128x128xf32>, vector<256x128xf32> -> vector<256x128xf32>
    %85 = arith.addf %79, %84 : vector<256x128xf32>
    %c0_88 = arith.constant 0 : index
    %c2_89 = arith.constant 2 : index
    %c0_90 = arith.constant 0 : index
    %86 = vector.load %arg7[%c0_88, %c2_89, %c0_90] : memref<18x18x128xf32, #tpu.memory_space<vmem>>, vector<16x16x128xf32>
    %87 = vector.shape_cast %86 : vector<16x16x128xf32> to vector<256x128xf32>
    %c2_91 = arith.constant 2 : index
    %c0_92 = arith.constant 0 : index
    %c0_93 = arith.constant 0 : index
    %88 = vector.load %arg4[%c2_91, %c0_92, %c0_93] : memref<9x128x128xf32, #tpu.memory_space<vmem>>, vector<1x128x128xf32>
    %89 = vector.shape_cast %88 : vector<1x128x128xf32> to vector<128x128xf32>
    %cst_94 = arith.constant dense<0.000000e+00> : vector<256x128xf32>
    %90 = tpu.matmul %87, %89, %cst_94 {dimension_numbers = #tpu.dot_dimension_numbers<[1], [0], [0], [1], [0, 0, 1, 1], [], []>} : vector<256x128xf32>, vector<128x128xf32>, vector<256x128xf32> -> vector<256x128xf32>
    %91 = arith.addf %85, %90 : vector<256x128xf32>
    %c1_95 = arith.constant 1 : index
    %c0_96 = arith.constant 0 : index
    %c0_97 = arith.constant 0 : index
    %92 = vector.load %arg7[%c1_95, %c0_96, %c0_97] : memref<18x18x128xf32, #tpu.memory_space<vmem>>, vector<16x16x128xf32>
    %93 = vector.shape_cast %92 : vector<16x16x128xf32> to vector<256x128xf32>
    %c3_98 = arith.constant 3 : index
    %c0_99 = arith.constant 0 : index
    %c0_100 = arith.constant 0 : index
    %94 = vector.load %arg4[%c3_98, %c0_99, %c0_100] : memref<9x128x128xf32, #tpu.memory_space<vmem>>, vector<1x128x128xf32>
    %95 = vector.shape_cast %94 : vector<1x128x128xf32> to vector<128x128xf32>
    %cst_101 = arith.constant dense<0.000000e+00> : vector<256x128xf32>
    %96 = tpu.matmul %93, %95, %cst_101 {dimension_numbers = #tpu.dot_dimension_numbers<[1], [0], [0], [1], [0, 0, 1, 1], [], []>} : vector<256x128xf32>, vector<128x128xf32>, vector<256x128xf32> -> vector<256x128xf32>
    %97 = arith.addf %91, %96 : vector<256x128xf32>
    %c1_102 = arith.constant 1 : index
    %c1_103 = arith.constant 1 : index
    %c0_104 = arith.constant 0 : index
    %98 = vector.load %arg7[%c1_102, %c1_103, %c0_104] : memref<18x18x128xf32, #tpu.memory_space<vmem>>, vector<16x16x128xf32>
    %99 = vector.shape_cast %98 : vector<16x16x128xf32> to vector<256x128xf32>
    %c4_105 = arith.constant 4 : index
    %c0_106 = arith.constant 0 : index
    %c0_107 = arith.constant 0 : index
    %100 = vector.load %arg4[%c4_105, %c0_106, %c0_107] : memref<9x128x128xf32, #tpu.memory_space<vmem>>, vector<1x128x128xf32>
    %101 = vector.shape_cast %100 : vector<1x128x128xf32> to vector<128x128xf32>
    %cst_108 = arith.constant dense<0.000000e+00> : vector<256x128xf32>
    %102 = tpu.matmul %99, %101, %cst_108 {dimension_numbers = #tpu.dot_dimension_numbers<[1], [0], [0], [1], [0, 0, 1, 1], [], []>} : vector<256x128xf32>, vector<128x128xf32>, vector<256x128xf32> -> vector<256x128xf32>
    %103 = arith.addf %97, %102 : vector<256x128xf32>
    %c1_109 = arith.constant 1 : index
    %c2_110 = arith.constant 2 : index
    %c0_111 = arith.constant 0 : index
    %104 = vector.load %arg7[%c1_109, %c2_110, %c0_111] : memref<18x18x128xf32, #tpu.memory_space<vmem>>, vector<16x16x128xf32>
    %105 = vector.shape_cast %104 : vector<16x16x128xf32> to vector<256x128xf32>
    %c5_112 = arith.constant 5 : index
    %c0_113 = arith.constant 0 : index
    %c0_114 = arith.constant 0 : index
    %106 = vector.load %arg4[%c5_112, %c0_113, %c0_114] : memref<9x128x128xf32, #tpu.memory_space<vmem>>, vector<1x128x128xf32>
    %107 = vector.shape_cast %106 : vector<1x128x128xf32> to vector<128x128xf32>
    %cst_115 = arith.constant dense<0.000000e+00> : vector<256x128xf32>
    %108 = tpu.matmul %105, %107, %cst_115 {dimension_numbers = #tpu.dot_dimension_numbers<[1], [0], [0], [1], [0, 0, 1, 1], [], []>} : vector<256x128xf32>, vector<128x128xf32>, vector<256x128xf32> -> vector<256x128xf32>
    %109 = arith.addf %103, %108 : vector<256x128xf32>
    %c2_116 = arith.constant 2 : index
    %c0_117 = arith.constant 0 : index
    %c0_118 = arith.constant 0 : index
    %110 = vector.load %arg7[%c2_116, %c0_117, %c0_118] : memref<18x18x128xf32, #tpu.memory_space<vmem>>, vector<16x16x128xf32>
    %111 = vector.shape_cast %110 : vector<16x16x128xf32> to vector<256x128xf32>
    %c6_119 = arith.constant 6 : index
    %c0_120 = arith.constant 0 : index
    %c0_121 = arith.constant 0 : index
    %112 = vector.load %arg4[%c6_119, %c0_120, %c0_121] : memref<9x128x128xf32, #tpu.memory_space<vmem>>, vector<1x128x128xf32>
    %113 = vector.shape_cast %112 : vector<1x128x128xf32> to vector<128x128xf32>
    %cst_122 = arith.constant dense<0.000000e+00> : vector<256x128xf32>
    %114 = tpu.matmul %111, %113, %cst_122 {dimension_numbers = #tpu.dot_dimension_numbers<[1], [0], [0], [1], [0, 0, 1, 1], [], []>} : vector<256x128xf32>, vector<128x128xf32>, vector<256x128xf32> -> vector<256x128xf32>
    %115 = arith.addf %109, %114 : vector<256x128xf32>
    %c2_123 = arith.constant 2 : index
    %c1_124 = arith.constant 1 : index
    %c0_125 = arith.constant 0 : index
    %116 = vector.load %arg7[%c2_123, %c1_124, %c0_125] : memref<18x18x128xf32, #tpu.memory_space<vmem>>, vector<16x16x128xf32>
    %117 = vector.shape_cast %116 : vector<16x16x128xf32> to vector<256x128xf32>
    %c7_126 = arith.constant 7 : index
    %c0_127 = arith.constant 0 : index
    %c0_128 = arith.constant 0 : index
    %118 = vector.load %arg4[%c7_126, %c0_127, %c0_128] : memref<9x128x128xf32, #tpu.memory_space<vmem>>, vector<1x128x128xf32>
    %119 = vector.shape_cast %118 : vector<1x128x128xf32> to vector<128x128xf32>
    %cst_129 = arith.constant dense<0.000000e+00> : vector<256x128xf32>
    %120 = tpu.matmul %117, %119, %cst_129 {dimension_numbers = #tpu.dot_dimension_numbers<[1], [0], [0], [1], [0, 0, 1, 1], [], []>} : vector<256x128xf32>, vector<128x128xf32>, vector<256x128xf32> -> vector<256x128xf32>
    %121 = arith.addf %115, %120 : vector<256x128xf32>
    %c2_130 = arith.constant 2 : index
    %c2_131 = arith.constant 2 : index
    %c0_132 = arith.constant 0 : index
    %122 = vector.load %arg7[%c2_130, %c2_131, %c0_132] : memref<18x18x128xf32, #tpu.memory_space<vmem>>, vector<16x16x128xf32>
    %123 = vector.shape_cast %122 : vector<16x16x128xf32> to vector<256x128xf32>
    %c8_133 = arith.constant 8 : index
    %c0_134 = arith.constant 0 : index
    %c0_135 = arith.constant 0 : index
    %124 = vector.load %arg4[%c8_133, %c0_134, %c0_135] : memref<9x128x128xf32, #tpu.memory_space<vmem>>, vector<1x128x128xf32>
    %125 = vector.shape_cast %124 : vector<1x128x128xf32> to vector<128x128xf32>
    %cst_136 = arith.constant dense<0.000000e+00> : vector<256x128xf32>
    %126 = tpu.matmul %123, %125, %cst_136 {dimension_numbers = #tpu.dot_dimension_numbers<[1], [0], [0], [1], [0, 0, 1, 1], [], []>} : vector<256x128xf32>, vector<128x128xf32>, vector<256x128xf32> -> vector<256x128xf32>
    %127 = arith.addf %121, %126 : vector<256x128xf32>
    %c0_137 = arith.constant 0 : index
    %c1_138 = arith.constant 1 : index
    %c1_139 = arith.constant 1 : index
    %c0_140 = arith.constant 0 : index
    %128 = vector.load %arg1[%c0_137, %c1_138, %c1_139, %c0_140] : memref<1x18x18x128xf32, #tpu.memory_space<vmem>>, vector<1x16x16x128xf32>
    %129 = vector.shape_cast %128 : vector<1x16x16x128xf32> to vector<16x16x128xf32>
    %130 = vector.shape_cast %129 : vector<16x16x128xf32> to vector<256x128xf32>
    %c0_141 = arith.constant 0 : index
    %c0_142 = arith.constant 0 : index
    %131 = vector.load %arg5[%c0_141, %c0_142] : memref<1x128xf32, #tpu.memory_space<vmem>>, vector<1x128xf32>
    %132 = vector.broadcast %131 : vector<1x128xf32> to vector<256x128xf32>
    %133 = arith.addf %127, %132 : vector<256x128xf32>
    %134 = arith.addf %133, %130 : vector<256x128xf32>
    %135 = vector.shape_cast %134 : vector<256x128xf32> to vector<1x16x16x128xf32>
    %c0_143 = arith.constant 0 : index
    %c0_144 = arith.constant 0 : index
    %c0_145 = arith.constant 0 : index
    %c0_146 = arith.constant 0 : index
    %136 = vector.load %arg6[%c0_143, %c0_144, %c0_145, %c0_146] : memref<1x16x16x128xf32, #tpu.memory_space<vmem>>, vector<1x16x16x128xf32>
    tpu.vector_store %arg6[%c0_143, %c0_144, %c0_145, %c0_146], %135 {strides = array<i32>} : memref<1x16x16x128xf32, #tpu.memory_space<vmem>>, vector<1x16x16x128xf32>,
    return
  }
  func.func @transform_0(%arg0: i32) -> (i32, i32, i32, i32) {
    %c0_i32 = arith.constant 0 : i32
    %c0_i32_0 = arith.constant 0 : i32
    %c0_i32_1 = arith.constant 0 : i32
    %c0_i32_2 = arith.constant 0 : i32
    return %arg0, %c0_i32, %c0_i32_0, %c0_i32_1 : i32, i32, i32, i32
  }
  func.func @transform_1(%arg0: i32) -> (i32, i32, i32) {
    %c0_i32 = arith.constant 0 : i32
    %c0_i32_0 = arith.constant 0 : i32
    %c0_i32_1 = arith.constant 0 : i32
    %c0_i32_2 = arith.constant 0 : i32
    return %c0_i32, %c0_i32_0, %c0_i32_1 : i32, i32, i32
  }
  func.func @transform_2(%arg0: i32) -> (i32, i32) {
    %c0_i32 = arith.constant 0 : i32
    %c0_i32_0 = arith.constant 0 : i32
    %c0_i32_1 = arith.constant 0 : i32
    return %c0_i32, %c0_i32_0 : i32, i32
  }
  func.func @transform_3(%arg0: i32) -> (i32, i32, i32) {
    %c0_i32 = arith.constant 0 : i32
    %c0_i32_0 = arith.constant 0 : i32
    %c0_i32_1 = arith.constant 0 : i32
    %c0_i32_2 = arith.constant 0 : i32
    return %c0_i32, %c0_i32_0, %c0_i32_1 : i32, i32, i32
  }
  func.func @transform_4(%arg0: i32) -> (i32, i32) {
    %c0_i32 = arith.constant 0 : i32
    %c0_i32_0 = arith.constant 0 : i32
    %c0_i32_1 = arith.constant 0 : i32
    return %c0_i32, %c0_i32_0 : i32, i32
  }
  func.func @transform_5(%arg0: i32) -> (i32, i32, i32, i32) {
    %c0_i32 = arith.constant 0 : i32
    %c0_i32_0 = arith.constant 0 : i32
    %c0_i32_1 = arith.constant 0 : i32
    %c0_i32_2 = arith.constant 0 : i32
    return %arg0, %c0_i32, %c0_i32_0, %c0_i32_1 : i32, i32, i32, i32
  }
}

</mosaic_0001>

<llo_original>
// kernel: tpu_custom_call.1
$region0: #{tpu_custom_call.1}
  #allocation0 [shape = 'u32[]', space=smem, size = 0x4, offset = 0x4, fixed_abs, tag = 'smem constant byte address 0x4 - core index']
  #allocation1 [shape = 'u32[144,128]{1,0:T(1,128)}', space=vmem, size = 0x12000, scoped, tag = 'internal scratch']
  #allocation2 [shape = 'f32[18,18,128]{2,1,0:T(8,128)}', space=vmem, size = 0x36000, scoped, tag = 'scratch operand']
  %s0 = inlined_call_operand.vmem [shape: f32[2,18,18,128], index: 0, kind: input, shape index: {}]
  %s1 = inlined_call_operand.vmem [shape: f32[9,128,128], index: 1, kind: input, shape index: {}]
  %s2 = inlined_call_operand.vmem [shape: f32[1,128], index: 2, kind: input, shape index: {}]
  %s3 = inlined_call_operand.hbm [shape: f32[9,128,128], index: 3, kind: input, shape index: {}]
  %s4 = inlined_call_operand.vmem [shape: f32[1,128], index: 4, kind: input, shape index: {}]
  %s5 = inlined_call_operand.hbm [shape: f32[2,16,16,128], index: 5, kind: output, shape index: {}]
  %s6 = sld [smem:[#allocation0]]
  $region57: #{tpu_custom_call.1} parent=0
    _
  %s8 = ssub.s32 1, %s6
  %s9 = scalar_select 0, %s8, %s6
  $region1: #{tpu_custom_call.1} parent=0
    #allocation3 [shape = 'u8[589824]{0}', space=vmem, size = 0x90000, scoped, tag = 'input window, operand 3, single buffered']
    #allocation4 [shape = 's32[2]{0}', space=sflag, size = 0x8, scoped, tag = 'scoped memory for tpu_custom_call.1']
    #allocation5 [shape = 's32[2]{0}', space=sflag, size = 0x8, scoped, tag = 'scoped memory for tpu_custom_call.1']
    #allocation6 [shape = 'u8[262144]{0}', space=vmem, size = 0x40000, scoped, tag = 'output window, operand 0']
    %10 = vsyncpa [#allocation4], 0
    %11 = vsyncpa [#allocation5], 0
    %s12 = scalar_lea.sflag [#allocation5], 1
    %13 = vsyncpa %s12, 0
    loop: start=0, step=1, limit=4
    $region2: #{tpu_custom_call.1} parent=1 // loop_pre_header
      _
    $region3: #{tpu_custom_call.1} parent=1 // loop_header
      %s15 = sphi 0, %s19
      %p16 = scmp.ge.s32.totalorder %s15, 4
      %s25 = sphi 0, %s27
      %s28 = sphi 0, %s25
      %s29 = sphi 0, %s28
      %s45 = sphi 0, %s29
      %s49 = sphi 0, %s49
      %s51 = sphi 0, %s49
      %s52 = sphi 0, %s51
      %s66 = sphi 0, %s52
      %s70 = sphi 0, %s70
      %s72 = sphi 0, %s70
      %s73 = sphi 0, %s72
      %s87 = sphi 0, %s73
      %s91 = sphi 0, %s91
      %s93 = sphi 0, %s91
      %s94 = sphi 0, %s93
      %s108 = sphi 0, %s94
      %s112 = sphi 0, %s112
      %s114 = sphi 0, %s112
      %s115 = sphi 0, %s114
      %s129 = sphi 0, %s115
      %s135 = sphi 0, %s137
      %s138 = sphi 0, %s135
      %s139 = sphi 0, %s138
      %s155 = sphi 0, %s139
    $region4: #{tpu_custom_call.1} parent=1 // loop_header_branch
      %18 = sbr.rel (%p16) target = $region8
    $region5: #{tpu_custom_call.1} parent=1 // loop_body
      %s20 = ssub.s32 %s15, 1
      %s21 = ssub.s32 %s15, 2
      %s22 = sadd.s32 %s15, 1
      %s23 = ssub.s32 %s15, %s22
      %p24 = scmp.eq.s32.totalorder %s23, 0
      %s26 = sadd.s32 %s25, 1
      %s27 = scalar_select %p24, %s25, %s26
      %p30 = pneg %p24
      %p31 = scmp.eq.s32.totalorder %s15, 1
      %p32 = por %p30, %p31
      %p33 = scmp.ne.s32.totalorder %s25, %s28
      %p34 = scmp.eq.s32.totalorder %s15, 0
      %p35 = por %p33, %p34
      %p36 = scmp.ne.s32.totalorder %s25, %s28
      %p37 = scmp.eq.s32.totalorder %s20, 1
      %p38 = por %p36, %p37
      %p39 = scmp.ne.s32.totalorder %s28, %s29
      %p40 = scmp.eq.s32.totalorder %s20, 0
      %p41 = por %p39, %p40
      %p42 = scmp.ne.s32.totalorder %s28, %s29
      %p43 = scmp.eq.s32.totalorder %s21, 1
      %p44 = por %p42, %p43
      %p46 = scmp.ne.s32.totalorder %s29, %s45
      %p47 = scmp.eq.s32.totalorder %s21, 0
      %p48 = por %p46, %p47
      %s50 = sadd.s32 %s49, 1
      %p53 = scmp.eq.s32.totalorder %s15, 1
      %p54 = scmp.ne.s32.totalorder %s49, %s51
      %p55 = scmp.eq.s32.totalorder %s15, 0
      %p56 = por %p54, %p55
      %p57 = scmp.ne.s32.totalorder %s49, %s51
      %p58 = scmp.eq.s32.totalorder %s20, 1
      %p59 = por %p57, %p58
      %p60 = scmp.ne.s32.totalorder %s51, %s52
      %p61 = scmp.eq.s32.totalorder %s20, 0
      %p62 = por %p60, %p61
      %p63 = scmp.ne.s32.totalorder %s51, %s52
      %p64 = scmp.eq.s32.totalorder %s21, 1
      %p65 = por %p63, %p64
      %p67 = scmp.ne.s32.totalorder %s52, %s66
      %p68 = scmp.eq.s32.totalorder %s21, 0
      %p69 = por %p67, %p68
      %s71 = sadd.s32 %s70, 1
      %p74 = scmp.eq.s32.totalorder %s15, 1
      %p75 = scmp.ne.s32.totalorder %s70, %s72
      %p76 = scmp.eq.s32.totalorder %s15, 0
      %p77 = por %p75, %p76
      %p78 = scmp.ne.s32.totalorder %s70, %s72
      %p79 = scmp.eq.s32.totalorder %s20, 1
      %p80 = por %p78, %p79
      %p81 = scmp.ne.s32.totalorder %s72, %s73
      %p82 = scmp.eq.s32.totalorder %s20, 0
      %p83 = por %p81, %p82
      %p84 = scmp.ne.s32.totalorder %s72, %s73
      %p85 = scmp.eq.s32.totalorder %s21, 1
      %p86 = por %p84, %p85
      %p88 = scmp.ne.s32.totalorder %s73, %s87
      %p89 = scmp.eq.s32.totalorder %s21, 0
      %p90 = por %p88, %p89
      %s92 = sadd.s32 %s91, 1
      %p95 = scmp.eq.s32.totalorder %s15, 1
      %p96 = scmp.ne.s32.totalorder %s91, %s93
      %p97 = scmp.eq.s32.totalorder %s15, 0
      %p98 = por %p96, %p97
      %p99 = scmp.ne.s32.totalorder %s91, %s93
      %p100 = scmp.eq.s32.totalorder %s20, 1
      %p101 = por %p99, %p100
      %p102 = scmp.ne.s32.totalorder %s93, %s94
      %p103 = scmp.eq.s32.totalorder %s20, 0
      %p104 = por %p102, %p103
      %p105 = scmp.ne.s32.totalorder %s93, %s94
      %p106 = scmp.eq.s32.totalorder %s21, 1
      %p107 = por %p105, %p106
      %p109 = scmp.ne.s32.totalorder %s94, %s108
      %p110 = scmp.eq.s32.totalorder %s21, 0
      %p111 = por %p109, %p110
      %s113 = sadd.s32 %s112, 1
      %p116 = scmp.eq.s32.totalorder %s15, 1
      %p117 = scmp.ne.s32.totalorder %s112, %s114
      %p118 = scmp.eq.s32.totalorder %s15, 0
      %p119 = por %p117, %p118
      %p120 = scmp.ne.s32.totalorder %s112, %s114
      %p121 = scmp.eq.s32.totalorder %s20, 1
      %p122 = por %p120, %p121
      %p123 = scmp.ne.s32.totalorder %s114, %s115
      %p124 = scmp.eq.s32.totalorder %s20, 0
      %p125 = por %p123, %p124
      %p126 = scmp.ne.s32.totalorder %s114, %s115
      %p127 = scmp.eq.s32.totalorder %s21, 1
      %p128 = por %p126, %p127
      %p130 = scmp.ne.s32.totalorder %s115, %s129
      %p131 = scmp.eq.s32.totalorder %s21, 0
      %p132 = por %p130, %p131
      %s133 = ssub.s32 %s15, %s22
      %p134 = scmp.eq.s32.totalorder %s133, 0
      %s136 = sadd.s32 %s135, 1
      %s137 = scalar_select %p134, %s135, %s136
      %p140 = pneg %p134
      %p141 = scmp.eq.s32.totalorder %s15, 1
      %p142 = por %p140, %p141
      %p143 = scmp.ne.s32.totalorder %s135, %s138
      %p144 = scmp.eq.s32.totalorder %s15, 0
      %p145 = por %p143, %p144
      %p146 = scmp.ne.s32.totalorder %s135, %s138
      %p147 = scmp.eq.s32.totalorder %s20, 1
      %p148 = por %p146, %p147
      %p149 = scmp.ne.s32.totalorder %s138, %s139
      %p150 = scmp.eq.s32.totalorder %s20, 0
      %p151 = por %p149, %p150
      %p152 = scmp.ne.s32.totalorder %s138, %s139
      %p153 = scmp.eq.s32.totalorder %s21, 1
      %p154 = por %p152, %p153
      %p156 = scmp.ne.s32.totalorder %s139, %s155
      %p157 = scmp.eq.s32.totalorder %s21, 0
      %p158 = por %p156, %p157
      %p159 = scmp.le.s32.totalorder 1, %s15
      %p160 = scmp.lt.s32.totalorder %s15, 3
      %p161 = pnand %p159, %p160
      %p162 = pneg %p161
      // Predicated region
      $region9: #{tpu_custom_call.1} parent=5 // pred_check
        _
      $region10: #{tpu_custom_call.1} parent=5 // pred_check_branch
        %164 = sbr.rel (%p161) target = $region12
      $region11: #{tpu_custom_call.1} parent=5 // pred_region
        %s165 = ssub.s32 %s15, 1
        // Predicated region
        $region13: #{tpu_custom_call.1} parent=11 // pred_check
          %p166 = pneg %p62
        $region14: #{tpu_custom_call.1} parent=11 // pred_check_branch
          %168 = sbr.rel (%p166) target = $region16
        $region15: #{tpu_custom_call.1} parent=11 // pred_region
          _
        $region16: #{tpu_custom_call.1} parent=11 // pred_fallthru
          _
        // Predicated region
        $region17: #{tpu_custom_call.1} parent=11 // pred_check
          %p169 = pneg %p83
        $region18: #{tpu_custom_call.1} parent=11 // pred_check_branch
          %171 = sbr.rel (%p169) target = $region20
        $region19: #{tpu_custom_call.1} parent=11 // pred_region
          _
        $region20: #{tpu_custom_call.1} parent=11 // pred_fallthru
          _
        // Predicated region
        $region21: #{tpu_custom_call.1} parent=11 // pred_check
          %p172 = pneg %p104
        $region22: #{tpu_custom_call.1} parent=11 // pred_check_branch
          %174 = sbr.rel (%p172) target = $region24
        $region23: #{tpu_custom_call.1} parent=11 // pred_region
          %s176 = ssub.s32 18432, 18432
          %177 = vsyncadd [#allocation4], %s176
          %s178 = sshll.u32 [#allocation3], 4
          %s179 = int_to_ptr.vmem [resolvable:$true] %s178
          %184 = dma.hbm_to_vmem [thread:$0]  %s3, 18432, %s179, [#allocation4], 128, 128, 8
        $region24: #{tpu_custom_call.1} parent=11 // pred_fallthru
          _
        // Predicated region
        $region25: #{tpu_custom_call.1} parent=11 // pred_check
          %p185 = pneg %p125
        $region26: #{tpu_custom_call.1} parent=11 // pred_check_branch
          %187 = sbr.rel (%p185) target = $region28
        $region27: #{tpu_custom_call.1} parent=11 // pred_region
          _
        $region28: #{tpu_custom_call.1} parent=11 // pred_fallthru
          _
      $region12: #{tpu_custom_call.1} parent=5 // pred_fallthru
        _
      %p188 = scmp.lt.s32.totalorder %s15, 2
      // Predicated region
      $region29: #{tpu_custom_call.1} parent=5 // pred_check
        %p189 = pneg %p188
      $region30: #{tpu_custom_call.1} parent=5 // pred_check_branch
        %191 = sbr.rel (%p189) target = $region32
      $region31: #{tpu_custom_call.1} parent=5 // pred_region
        // Predicated region
        $region33: #{tpu_custom_call.1} parent=31 // pred_check
          %p192 = pneg %p35
        $region34: #{tpu_custom_call.1} parent=31 // pred_check_branch
          %194 = sbr.rel (%p192) target = $region36
        $region35: #{tpu_custom_call.1} parent=31 // pred_region
          %p195 = scmp.lt.s32.totalorder %s15, 1
          %s196 = scalar_select %p195, %s15, 1
          %s197 = smul.addr %s196, 54
          %s198 = smul.addr %s197, 8
          %s199 = scalar_lea.vmem %s0, %s198
        $region36: #{tpu_custom_call.1} parent=31 // pred_fallthru
          _
      $region32: #{tpu_custom_call.1} parent=5 // pred_fallthru
        _
      %p200 = scmp.le.s32.totalorder 1, %s15
      %p201 = scmp.lt.s32.totalorder %s15, 3
      %p202 = pnand %p200, %p201
      %p203 = pneg %p202
      // Predicated region
      $region37: #{tpu_custom_call.1} parent=5 // pred_check
        _
      $region38: #{tpu_custom_call.1} parent=5 // pred_check_branch
        %205 = sbr.rel (%p202) target = $region40
      $region39: #{tpu_custom_call.1} parent=5 // pred_region
        %s206 = ssub.s32 %s15, 1
        // Predicated region
        $region41: #{tpu_custom_call.1} parent=39 // pred_check
          %p207 = pneg %p104
        $region42: #{tpu_custom_call.1} parent=39 // pred_check_branch
          %209 = sbr.rel (%p207) target = $region44
        $region43: #{tpu_custom_call.1} parent=39 // pred_region
          %210 = dma.done [#allocation4], 18432
        $region44: #{tpu_custom_call.1} parent=39 // pred_fallthru
          _
        %p211 = scmp.lt.s32.totalorder %s20, 1
        %s212 = scalar_select %p211, %s20, 1
        %s213 = smul.addr %s212, 54
        %s214 = smul.addr %s213, 8
        %s215 = scalar_lea.vmem %s0, %s214
        %p216 = pneg %p41
        %p217 = pneg %p38
        %p218 = pneg %p62
        %p219 = pneg %p59
        %p220 = pneg %p83
        %p221 = pneg %p80
        %p222 = pneg %p104
        %p223 = pneg %p101
        %p224 = pneg %p125
        %p225 = pneg %p122
        %p226 = pneg %p151
        %p227 = pneg %p148
        %s228 = sand.u32 %s138, 1
        %s229 = scalar_lea.sflag [#allocation5], %s228
        %s230 = sand.u32 %s138, 1
        %s231 = smul.addr %s230, 256
        %s232 = scalar_lea.vmem [#allocation6], %s231
        %p233 = scmp.lt.s32.totalorder %s20, 1
        %s234 = scalar_select %p233, %s20, 1
        %s235 = smul.addr %s234, 54
        %s236 = smul.addr %s235, 8
        %s237 = scalar_lea.vmem %s0, %s236
        %v238 = vld [vmem:[%s237] sm:$0xff]
        %v239 = vld [vmem:[%s237 + $0x8] sm:$0xff]
        %v240 = vld [vmem:[%s237 + $0x18] sm:$0xff]
        %v241 = vld [vmem:[%s237 + $0x20] sm:$0xff]
        %v242 = vld [vmem:[%s237 + $0x30] sm:$0xff]
        %v243 = vld [vmem:[%s237 + $0x38] sm:$0xff]
        %v244 = vld [vmem:[%s237 + $0x48] sm:$0xff]
        %v245 = vld [vmem:[%s237 + $0x50] sm:$0xff]
        %v246 = vld [vmem:[%s237 + $0x60] sm:$0xff]
        %v247 = vld [vmem:[%s237 + $0x68] sm:$0xff]
        %v248 = vld [vmem:[%s237 + $0x78] sm:$0xff]
        %v249 = vld [vmem:[%s237 + $0x80] sm:$0xff]
        %v250 = vld [vmem:[%s237 + $0x90] sm:$0xff]
        %v251 = vld [vmem:[%s237 + $0x98] sm:$0xff]
        %v252 = vld [vmem:[%s237 + $0xa8] sm:$0xff]
        %v253 = vld [vmem:[%s237 + $0xb0] sm:$0xff]
        %v254 = vld [vmem:[%s237 + $0xc0] sm:$0xff]
        %v255 = vld [vmem:[%s237 + $0xc8] sm:$0xff]
        %v256 = vld [vmem:[%s237 + $0xd8] sm:$0xff]
        %v257 = vld [vmem:[%s237 + $0xe0] sm:$0xff]
        %v258 = vld [vmem:[%s237 + $0xf0] sm:$0xff]
        %v259 = vld [vmem:[%s237 + $0xf8] sm:$0xff]
        %v260 = vld [vmem:[%s237 + $0x108] sm:$0xff]
        %v261 = vld [vmem:[%s237 + $0x110] sm:$0xff]
        %v262 = vld [vmem:[%s237 + $0x120] sm:$0xff]
        %v263 = vld [vmem:[%s237 + $0x128] sm:$0xff]
        %v264 = vld [vmem:[%s237 + $0x138] sm:$0xff]
        %v265 = vld [vmem:[%s237 + $0x140] sm:$0xff]
        %v266 = vld [vmem:[%s237 + $0x150] sm:$0xff]
        %v267 = vld [vmem:[%s237 + $0x158] sm:$0xff]
        %v268 = vld [vmem:[%s237 + $0x168] sm:$0xff]
        %v269 = vld [vmem:[%s237 + $0x170] sm:$0xff]
        %v270 = vld [vmem:[%s1] sm:$0xff]
        %v271 = vld [vmem:[%s1 + $0x8] sm:$0xff]
        %v272 = vld [vmem:[%s1 + $0x10] sm:$0xff]
        %v273 = vld [vmem:[%s1 + $0x18] sm:$0xff]
        %v274 = vld [vmem:[%s1 + $0x20] sm:$0xff]
        %v275 = vld [vmem:[%s1 + $0x28] sm:$0xff]
        %v276 = vld [vmem:[%s1 + $0x30] sm:$0xff]
        %v277 = vld [vmem:[%s1 + $0x38] sm:$0xff]
        %v278 = vld [vmem:[%s1 + $0x40] sm:$0xff]
        %v279 = vld [vmem:[%s1 + $0x48] sm:$0xff]
        %v280 = vld [vmem:[%s1 + $0x50] sm:$0xff]
        %v281 = vld [vmem:[%s1 + $0x58] sm:$0xff]
        %v282 = vld [vmem:[%s1 + $0x60] sm:$0xff]
        %v283 = vld [vmem:[%s1 + $0x68] sm:$0xff]
        %v284 = vld [vmem:[%s1 + $0x70] sm:$0xff]
        %v285 = vld [vmem:[%s1 + $0x78] sm:$0xff]
        %v286 = vld [vmem:[%s237 + $0x1] sm:$0xff]
        %v287 = vld [vmem:[%s237 + $0x9] sm:$0xff]
        %v288 = vld [vmem:[%s237 + $0x19] sm:$0xff]
        %v289 = vld [vmem:[%s237 + $0x21] sm:$0xff]
        %v290 = vld [vmem:[%s237 + $0x31] sm:$0xff]
        %v291 = vld [vmem:[%s237 + $0x39] sm:$0xff]
        %v292 = vld [vmem:[%s237 + $0x49] sm:$0xff]
        %v293 = vld [vmem:[%s237 + $0x51] sm:$0xff]
        %v294 = vld [vmem:[%s237 + $0x61] sm:$0xff]
        %v295 = vld [vmem:[%s237 + $0x69] sm:$0xff]
        %v296 = vld [vmem:[%s237 + $0x79] sm:$0xff]
        %v297 = vld [vmem:[%s237 + $0x81] sm:$0xff]
        %v298 = vld [vmem:[%s237 + $0x91] sm:$0xff]
        %v299 = vld [vmem:[%s237 + $0x99] sm:$0xff]
        %v300 = vld [vmem:[%s237 + $0xa9] sm:$0xff]
        %v301 = vld [vmem:[%s237 + $0xb1] sm:$0xff]
        %v302 = vld [vmem:[%s237 + $0xc1] sm:$0xff]
        %v303 = vld [vmem:[%s237 + $0xc9] sm:$0xff]
        %v304 = vld [vmem:[%s237 + $0xd9] sm:$0xff]
        %v305 = vld [vmem:[%s237 + $0xe1] sm:$0xff]
        %v306 = vld [vmem:[%s237 + $0xf1] sm:$0xff]
        %v307 = vld [vmem:[%s237 + $0xf9] sm:$0xff]
        %v308 = vld [vmem:[%s237 + $0x109] sm:$0xff]
        %v309 = vld [vmem:[%s237 + $0x111] sm:$0xff]
        %v310 = vld [vmem:[%s237 + $0x121] sm:$0xff]
        %v311 = vld [vmem:[%s237 + $0x129] sm:$0xff]
        %v312 = vld [vmem:[%s237 + $0x139] sm:$0xff]
        %v313 = vld [vmem:[%s237 + $0x141] sm:$0xff]
        %v314 = vld [vmem:[%s237 + $0x151] sm:$0xff]
        %v315 = vld [vmem:[%s237 + $0x159] sm:$0xff]
        %v316 = vld [vmem:[%s237 + $0x169] sm:$0xff]
        %v317 = vld [vmem:[%s237 + $0x171] sm:$0xff]
        %s318 = scalar_lea.vmem %s1, 128
        %v319 = vld [vmem:[%s318] sm:$0xff]
        %v320 = vld [vmem:[%s318 + $0x8] sm:$0xff]
        %v321 = vld [vmem:[%s318 + $0x10] sm:$0xff]
        %v322 = vld [vmem:[%s318 + $0x18] sm:$0xff]
        %v323 = vld [vmem:[%s318 + $0x20] sm:$0xff]
        %v324 = vld [vmem:[%s318 + $0x28] sm:$0xff]
        %v325 = vld [vmem:[%s318 + $0x30] sm:$0xff]
        %v326 = vld [vmem:[%s318 + $0x38] sm:$0xff]
        %v327 = vld [vmem:[%s318 + $0x40] sm:$0xff]
        %v328 = vld [vmem:[%s318 + $0x48] sm:$0xff]
        %v329 = vld [vmem:[%s318 + $0x50] sm:$0xff]
        %v330 = vld [vmem:[%s318 + $0x58] sm:$0xff]
        %v331 = vld [vmem:[%s318 + $0x60] sm:$0xff]
        %v332 = vld [vmem:[%s318 + $0x68] sm:$0xff]
        %v333 = vld [vmem:[%s318 + $0x70] sm:$0xff]
        %v334 = vld [vmem:[%s318 + $0x78] sm:$0xff]
        %335 = vmatprep.subr.mxu0 0.0
        %336 = vmatpush1.msra.mxu0 %v319
        %337 = vmatprep.subr.mxu0 0.0
        %338 = vmatpush1.msra.mxu0 %v320
        %339 = vmatprep.subr.mxu0 0.0
        %340 = vmatpush1.msra.mxu0 %v321
        %341 = vmatprep.subr.mxu0 0.0
        %342 = vmatpush1.msra.mxu0 %v322
        %343 = vmatprep.subr.mxu0 0.0
        %344 = vmatpush1.msra.mxu0 %v323
        %345 = vmatprep.subr.mxu0 0.0
        %346 = vmatpush1.msra.mxu0 %v324
        %347 = vmatprep.subr.mxu0 0.0
        %348 = vmatpush1.msra.mxu0 %v325
        %349 = vmatprep.subr.mxu0 0.0
        %350 = vmatpush1.msra.mxu0 %v326
        %351 = vmatprep.subr.mxu0 0.0
        %352 = vmatpush1.msra.mxu0 %v327
        %353 = vmatprep.subr.mxu0 0.0
        %354 = vmatpush1.msra.mxu0 %v328
        %355 = vmatprep.subr.mxu0 0.0
        %356 = vmatpush1.msra.mxu0 %v329
        %357 = vmatprep.subr.mxu0 0.0
        %358 = vmatpush1.msra.mxu0 %v330
        %359 = vmatprep.subr.mxu0 0.0
        %360 = vmatpush1.msra.mxu0 %v331
        %361 = vmatprep.subr.mxu0 0.0
        %362 = vmatpush1.msra.mxu0 %v332
        %363 = vmatprep.subr.mxu0 0.0
        %364 = vmatpush1.msra.mxu0 %v333
        %365 = vmatprep.subr.mxu0 0.0
        %366 = vmatpush1.msra.mxu0 %v334
        %367 = vmatprep.subr.mxu0 0.0
        %368 = vmatpush1.msra.mxu0 0.0
        %369 = vmatprep.subr.mxu0 0.0
        %370 = vmatpush1.msra.mxu0 0.0
        %371 = vmatprep.subr.mxu0 0.0
        %372 = vmatpush1.msra.mxu0 0.0
        %373 = vmatprep.subr.mxu0 0.0
        %374 = vmatpush1.msra.mxu0 0.0
        %375 = vmatprep.subr.mxu0 0.0
        %376 = vmatpush1.msra.mxu0 0.0
        %377 = vmatprep.subr.mxu0 0.0
        %378 = vmatpush1.msra.mxu0 0.0
        %379 = vmatprep.subr.mxu0 0.0
        %380 = vmatpush1.msra.mxu0 0.0
        %381 = vmatprep.subr.mxu0 0.0
        %382 = vmatpush1.msra.mxu0 0.0
        %383 = vmatprep.subr.mxu0 0.0
        %384 = vmatpush1.msra.mxu0 0.0
        %385 = vmatprep.subr.mxu0 0.0
        %386 = vmatpush1.msra.mxu0 0.0
        %387 = vmatprep.subr.mxu0 0.0
        %388 = vmatpush1.msra.mxu0 0.0
        %389 = vmatprep.subr.mxu0 0.0
        %390 = vmatpush1.msra.mxu0 0.0
        %391 = vmatprep.subr.mxu0 0.0
        %392 = vmatpush1.msra.mxu0 0.0
        %393 = vmatprep.subr.mxu0 0.0
        %394 = vmatpush1.msra.mxu0 0.0
        %395 = vmatprep.subr.mxu0 0.0
        %396 = vmatpush1.msra.mxu0 0.0
        %397 = vmatprep.subr.mxu0 0.0
        %398 = vmatpush1.msra.mxu0 0.0
        %399 = vmatprep.mubr.f32.mxu0 0.0
        %400 = vmatmul.mubr.f32.gmra.mrb[0].mxu0 %v286
        %v401 = vpop.f32.mrb[0].mxu0
        %v402 = vadd.f32 0.0, %v401
        %v403 = vpop.f32.mrb[0].mxu0
        %404 = vmatprep.mubr.f32.mxu0 0.0
        %405 = vmatmul.mubr.f32.gmra.mrb[0].mxu0 %v287
        %v406 = vpop.f32.mrb[0].mxu0
        %v407 = vadd.f32 0.0, %v406
        %v408 = vpop.f32.mrb[0].mxu0
        %409 = vmatprep.mubr.f32.mxu0 0.0
        %410 = vmatmul.mubr.f32.gmra.mrb[0].mxu0 %v288
        %v411 = vpop.f32.mrb[0].mxu0
        %v412 = vadd.f32 0.0, %v411
        %v413 = vpop.f32.mrb[0].mxu0
        %414 = vmatprep.mubr.f32.mxu0 0.0
        %415 = vmatmul.mubr.f32.gmra.mrb[0].mxu0 %v289
        %v416 = vpop.f32.mrb[0].mxu0
        %v417 = vadd.f32 0.0, %v416
        %v418 = vpop.f32.mrb[0].mxu0
        %419 = vmatprep.mubr.f32.mxu0 0.0
        %420 = vmatmul.mubr.f32.gmra.mrb[0].mxu0 %v290
        %v421 = vpop.f32.mrb[0].mxu0
        %v422 = vadd.f32 0.0, %v421
        %v423 = vpop.f32.mrb[0].mxu0
        %424 = vmatprep.mubr.f32.mxu0 0.0
        %425 = vmatmul.mubr.f32.gmra.mrb[0].mxu0 %v291
        %v426 = vpop.f32.mrb[0].mxu0
        %v427 = vadd.f32 0.0, %v426
        %v428 = vpop.f32.mrb[0].mxu0
        %429 = vmatprep.mubr.f32.mxu0 0.0
        %430 = vmatmul.mubr.f32.gmra.mrb[0].mxu0 %v292
        %v431 = vpop.f32.mrb[0].mxu0
        %v432 = vadd.f32 0.0, %v431
        %v433 = vpop.f32.mrb[0].mxu0
        %434 = vmatprep.mubr.f32.mxu0 0.0
        %435 = vmatmul.mubr.f32.gmra.mrb[0].mxu0 %v293
        %v436 = vpop.f32.mrb[0].mxu0
        %v437 = vadd.f32 0.0, %v436
        %v438 = vpop.f32.mrb[0].mxu0
        %439 = vmatprep.mubr.f32.mxu0 0.0
        %440 = vmatmul.mubr.f32.gmra.mrb[0].mxu0 %v294
        %v441 = vpop.f32.mrb[0].mxu0
        %v442 = vadd.f32 0.0, %v441
        %v443 = vpop.f32.mrb[0].mxu0
        %444 = vmatprep.mubr.f32.mxu0 0.0
        %445 = vmatmul.mubr.f32.gmra.mrb[0].mxu0 %v295
        %v446 = vpop.f32.mrb[0].mxu0
        %v447 = vadd.f32 0.0, %v446
        %v448 = vpop.f32.mrb[0].mxu0
        %449 = vmatprep.mubr.f32.mxu0 0.0
        %450 = vmatmul.mubr.f32.gmra.mrb[0].mxu0 %v296
        %v451 = vpop.f32.mrb[0].mxu0
        %v452 = vadd.f32 0.0, %v451
        %v453 = vpop.f32.mrb[0].mxu0
        %454 = vmatprep.mubr.f32.mxu0 0.0
        %455 = vmatmul.mubr.f32.gmra.mrb[0].mxu0 %v297
        %v456 = vpop.f32.mrb[0].mxu0
        %v457 = vadd.f32 0.0, %v456
        %v458 = vpop.f32.mrb[0].mxu0
        %459 = vmatprep.mubr.f32.mxu0 0.0
        %460 = vmatmul.mubr.f32.gmra.mrb[0].mxu0 %v298
        %v461 = vpop.f32.mrb[0].mxu0
        %v462 = vadd.f32 0.0, %v461
        %v463 = vpop.f32.mrb[0].mxu0
        %464 = vmatprep.mubr.f32.mxu0 0.0
        %465 = vmatmul.mubr.f32.gmra.mrb[0].mxu0 %v299
        %v466 = vpop.f32.mrb[0].mxu0
        %v467 = vadd.f32 0.0, %v466
        %v468 = vpop.f32.mrb[0].mxu0
        %469 = vmatprep.mubr.f32.mxu0 0.0
        %470 = vmatmul.mubr.f32.gmra.mrb[0].mxu0 %v300
        %v471 = vpop.f32.mrb[0].mxu0
        %v472 = vadd.f32 0.0, %v471
        %v473 = vpop.f32.mrb[0].mxu0
        %474 = vmatprep.mubr.f32.mxu0 0.0
        %475 = vmatmul.mubr.f32.gmra.mrb[0].mxu0 %v301
        %v476 = vpop.f32.mrb[0].mxu0
        %v477 = vadd.f32 0.0, %v476
        %v478 = vpop.f32.mrb[0].mxu0
        %479 = vmatprep.mubr.f32.mxu0 0.0
        %480 = vmatmul.mubr.f32.gmra.mrb[0].mxu0 %v302
        %v481 = vpop.f32.mrb[0].mxu0
        %v482 = vadd.f32 0.0, %v481
        %v483 = vpop.f32.mrb[0].mxu0
        %484 = vmatprep.mubr.f32.mxu0 0.0
        %485 = vmatmul.mubr.f32.gmra.mrb[0].mxu0 %v303
        %v486 = vpop.f32.mrb[0].mxu0
        %v487 = vadd.f32 0.0, %v486
        %v488 = vpop.f32.mrb[0].mxu0
        %489 = vmatprep.mubr.f32.mxu0 0.0
        %490 = vmatmul.mubr.f32.gmra.mrb[0].mxu0 %v304
        %v491 = vpop.f32.mrb[0].mxu0
        %v492 = vadd.f32 0.0, %v491
        %v493 = vpop.f32.mrb[0].mxu0
        %494 = vmatprep.mubr.f32.mxu0 0.0
        %495 = vmatmul.mubr.f32.gmra.mrb[0].mxu0 %v305
        %v496 = vpop.f32.mrb[0].mxu0
        %v497 = vadd.f32 0.0, %v496
        %v498 = vpop.f32.mrb[0].mxu0
        %499 = vmatprep.mubr.f32.mxu0 0.0
        %500 = vmatmul.mubr.f32.gmra.mrb[0].mxu0 %v306
        %v501 = vpop.f32.mrb[0].mxu0
        %v502 = vadd.f32 0.0, %v501
        %v503 = vpop.f32.mrb[0].mxu0
        %504 = vmatprep.mubr.f32.mxu0 0.0
        %505 = vmatmul.mubr.f32.gmra.mrb[0].mxu0 %v307
        %v506 = vpop.f32.mrb[0].mxu0
        %v507 = vadd.f32 0.0, %v506
        %v508 = vpop.f32.mrb[0].mxu0
        %509 = vmatprep.mubr.f32.mxu0 0.0
        %510 = vmatmul.mubr.f32.gmra.mrb[0].mxu0 %v308
        %v511 = vpop.f32.mrb[0].mxu0
        %v512 = vadd.f32 0.0, %v511
        %v513 = vpop.f32.mrb[0].mxu0
        %514 = vmatprep.mubr.f32.mxu0 0.0
        %515 = vmatmul.mubr.f32.gmra.mrb[0].mxu0 %v309
        %v516 = vpop.f32.mrb[0].mxu0
        %v517 = vadd.f32 0.0, %v516
        %v518 = vpop.f32.mrb[0].mxu0
        %519 = vmatprep.mubr.f32.mxu0 0.0
        %520 = vmatmul.mubr.f32.gmra.mrb[0].mxu0 %v310
        %v521 = vpop.f32.mrb[0].mxu0
        %v522 = vadd.f32 0.0, %v521
        %v523 = vpop.f32.mrb[0].mxu0
        %524 = vmatprep.mubr.f32.mxu0 0.0
        %525 = vmatmul.mubr.f32.gmra.mrb[0].mxu0 %v311
        %v526 = vpop.f32.mrb[0].mxu0
        %v527 = vadd.f32 0.0, %v526
        %v528 = vpop.f32.mrb[0].mxu0
        %529 = vmatprep.mubr.f32.mxu0 0.0
        %530 = vmatmul.mubr.f32.gmra.mrb[0].mxu0 %v312
        %v531 = vpop.f32.mrb[0].mxu0
        %v532 = vadd.f32 0.0, %v531
        %v533 = vpop.f32.mrb[0].mxu0
        %534 = vmatprep.mubr.f32.mxu0 0.0
        %535 = vmatmul.mubr.f32.gmra.mrb[0].mxu0 %v313
        %v536 = vpop.f32.mrb[0].mxu0
        %v537 = vadd.f32 0.0, %v536
        %v538 = vpop.f32.mrb[0].mxu0
        %539 = vmatprep.mubr.f32.mxu0 0.0
        %540 = vmatmul.mubr.f32.gmra.mrb[0].mxu0 %v314
        %v541 = vpop.f32.mrb[0].mxu0
        %v542 = vadd.f32 0.0, %v541
        %v543 = vpop.f32.mrb[0].mxu0
        %544 = vmatprep.mubr.f32.mxu0 0.0
        %545 = vmatmul.mubr.f32.gmra.mrb[0].mxu0 %v315
        %v546 = vpop.f32.mrb[0].mxu0
        %v547 = vadd.f32 0.0, %v546
        %v548 = vpop.f32.mrb[0].mxu0
        %549 = vmatprep.mubr.f32.mxu0 0.0
        %550 = vmatmul.mubr.f32.gmra.mrb[0].mxu0 %v316
        %v551 = vpop.f32.mrb[0].mxu0
        %v552 = vadd.f32 0.0, %v551
        %v553 = vpop.f32.mrb[0].mxu0
        %554 = vmatprep.mubr.f32.mxu0 0.0
        %555 = vmatmul.mubr.f32.gmra.mrb[0].mxu0 %v317
        %v556 = vpop.f32.mrb[0].mxu0
        %v557 = vadd.f32 0.0, %v556
        %v558 = vpop.f32.mrb[0].mxu0
        %559 = vdwg.mxu0
        %560 = vmatprep.subr.mxu0 0.0
        %561 = vmatpush1.msra.mxu0 %v270
        %562 = vmatprep.subr.mxu0 0.0
        %563 = vmatpush1.msra.mxu0 %v271
        %564 = vmatprep.subr.mxu0 0.0
        %565 = vmatpush1.msra.mxu0 %v272
        %566 = vmatprep.subr.mxu0 0.0
        %567 = vmatpush1.msra.mxu0 %v273
        %568 = vmatprep.subr.mxu0 0.0
        %569 = vmatpush1.msra.mxu0 %v274
        %570 = vmatprep.subr.mxu0 0.0
        %571 = vmatpush1.msra.mxu0 %v275
        %572 = vmatprep.subr.mxu0 0.0
        %573 = vmatpush1.msra.mxu0 %v276
        %574 = vmatprep.subr.mxu0 0.0
        %575 = vmatpush1.msra.mxu0 %v277
        %576 = vmatprep.subr.mxu0 0.0
        %577 = vmatpush1.msra.mxu0 %v278
        %578 = vmatprep.subr.mxu0 0.0
        %579 = vmatpush1.msra.mxu0 %v279
        %580 = vmatprep.subr.mxu0 0.0
        %581 = vmatpush1.msra.mxu0 %v280
        %582 = vmatprep.subr.mxu0 0.0
        %583 = vmatpush1.msra.mxu0 %v281
        %584 = vmatprep.subr.mxu0 0.0
        %585 = vmatpush1.msra.mxu0 %v282
        %586 = vmatprep.subr.mxu0 0.0
        %587 = vmatpush1.msra.mxu0 %v283
        %588 = vmatprep.subr.mxu0 0.0
        %589 = vmatpush1.msra.mxu0 %v284
        %590 = vmatprep.subr.mxu0 0.0
        %591 = vmatpush1.msra.mxu0 %v285
        %592 = vmatprep.subr.mxu0 0.0
        %593 = vmatpush1.msra.mxu0 0.0
        %594 = vmatprep.subr.mxu0 0.0
        %595 = vmatpush1.msra.mxu0 0.0
        %596 = vmatprep.subr.mxu0 0.0
        %597 = vmatpush1.msra.mxu0 0.0
        %598 = vmatprep.subr.mxu0 0.0
        %599 = vmatpush1.msra.mxu0 0.0
        %600 = vmatprep.subr.mxu0 0.0
        %601 = vmatpush1.msra.mxu0 0.0
        %602 = vmatprep.subr.mxu0 0.0
        %603 = vmatpush1.msra.mxu0 0.0
        %604 = vmatprep.subr.mxu0 0.0
        %605 = vmatpush1.msra.mxu0 0.0
        %606 = vmatprep.subr.mxu0 0.0
        %607 = vmatpush1.msra.mxu0 0.0
        %608 = vmatprep.subr.mxu0 0.0
        %609 = vmatpush1.msra.mxu0 0.0
        %610 = vmatprep.subr.mxu0 0.0
        %611 = vmatpush1.msra.mxu0 0.0
        %612 = vmatprep.subr.mxu0 0.0
        %613 = vmatpush1.msra.mxu0 0.0
        %614 = vmatprep.subr.mxu0 0.0
        %615 = vmatpush1.msra.mxu0 0.0
        %616 = vmatprep.subr.mxu0 0.0
        %617 = vmatpush1.msra.mxu0 0.0
        %618 = vmatprep.subr.mxu0 0.0
        %619 = vmatpush1.msra.mxu0 0.0
        %620 = vmatprep.subr.mxu0 0.0
        %621 = vmatpush1.msra.mxu0 0.0
        %622 = vmatprep.subr.mxu0 0.0
        %623 = vmatpush1.msra.mxu0 0.0
        %624 = vmatprep.mubr.f32.mxu0 0.0
        %625 = vmatmul.mubr.f32.gmra.mrb[0].mxu0 %v238
        %v626 = vpop.f32.mrb[0].mxu0
        %v627 = vadd.f32 %v402, %v626
        %v628 = vpop.f32.mrb[0].mxu0
        %629 = vmatprep.mubr.f32.mxu0 0.0
        %630 = vmatmul.mubr.f32.gmra.mrb[0].mxu0 %v239
        %v631 = vpop.f32.mrb[0].mxu0
        %v632 = vadd.f32 %v407, %v631
        %v633 = vpop.f32.mrb[0].mxu0
        %634 = vmatprep.mubr.f32.mxu0 0.0
        %635 = vmatmul.mubr.f32.gmra.mrb[0].mxu0 %v240
        %v636 = vpop.f32.mrb[0].mxu0
        %v637 = vadd.f32 %v412, %v636
        %v638 = vpop.f32.mrb[0].mxu0
        %639 = vmatprep.mubr.f32.mxu0 0.0
        %640 = vmatmul.mubr.f32.gmra.mrb[0].mxu0 %v241
        %v641 = vpop.f32.mrb[0].mxu0
        %v642 = vadd.f32 %v417, %v641
        %v643 = vpop.f32.mrb[0].mxu0
        %644 = vmatprep.mubr.f32.mxu0 0.0
        %645 = vmatmul.mubr.f32.gmra.mrb[0].mxu0 %v242
        %v646 = vpop.f32.mrb[0].mxu0
        %v647 = vadd.f32 %v422, %v646
        %v648 = vpop.f32.mrb[0].mxu0
        %649 = vmatprep.mubr.f32.mxu0 0.0
        %650 = vmatmul.mubr.f32.gmra.mrb[0].mxu0 %v243
        %v651 = vpop.f32.mrb[0].mxu0
        %v652 = vadd.f32 %v427, %v651
        %v653 = vpop.f32.mrb[0].mxu0
        %654 = vmatprep.mubr.f32.mxu0 0.0
        %655 = vmatmul.mubr.f32.gmra.mrb[0].mxu0 %v244
        %v656 = vpop.f32.mrb[0].mxu0
        %v657 = vadd.f32 %v432, %v656
        %v658 = vpop.f32.mrb[0].mxu0
        %659 = vmatprep.mubr.f32.mxu0 0.0
        %660 = vmatmul.mubr.f32.gmra.mrb[0].mxu0 %v245
        %v661 = vpop.f32.mrb[0].mxu0
        %v662 = vadd.f32 %v437, %v661
        %v663 = vpop.f32.mrb[0].mxu0
        %664 = vmatprep.mubr.f32.mxu0 0.0
        %665 = vmatmul.mubr.f32.gmra.mrb[0].mxu0 %v246
        %v666 = vpop.f32.mrb[0].mxu0
        %v667 = vadd.f32 %v442, %v666
        %v668 = vpop.f32.mrb[0].mxu0
        %669 = vmatprep.mubr.f32.mxu0 0.0
        %670 = vmatmul.mubr.f32.gmra.mrb[0].mxu0 %v247
        %v671 = vpop.f32.mrb[0].mxu0
        %v672 = vadd.f32 %v447, %v671
        %v673 = vpop.f32.mrb[0].mxu0
        %674 = vmatprep.mubr.f32.mxu0 0.0
        %675 = vmatmul.mubr.f32.gmra.mrb[0].mxu0 %v248
        %v676 = vpop.f32.mrb[0].mxu0
        %v677 = vadd.f32 %v452, %v676
        %v678 = vpop.f32.mrb[0].mxu0
        %679 = vmatprep.mubr.f32.mxu0 0.0
        %680 = vmatmul.mubr.f32.gmra.mrb[0].mxu0 %v249
        %v681 = vpop.f32.mrb[0].mxu0
        %v682 = vadd.f32 %v457, %v681
        %v683 = vpop.f32.mrb[0].mxu0
        %684 = vmatprep.mubr.f32.mxu0 0.0
        %685 = vmatmul.mubr.f32.gmra.mrb[0].mxu0 %v250
        %v686 = vpop.f32.mrb[0].mxu0
        %v687 = vadd.f32 %v462, %v686
        %v688 = vpop.f32.mrb[0].mxu0
        %689 = vmatprep.mubr.f32.mxu0 0.0
        %690 = vmatmul.mubr.f32.gmra.mrb[0].mxu0 %v251
        %v691 = vpop.f32.mrb[0].mxu0
        %v692 = vadd.f32 %v467, %v691
        %v693 = vpop.f32.mrb[0].mxu0
        %694 = vmatprep.mubr.f32.mxu0 0.0
        %695 = vmatmul.mubr.f32.gmra.mrb[0].mxu0 %v252
        %v696 = vpop.f32.mrb[0].mxu0
        %v697 = vadd.f32 %v472, %v696
        %v698 = vpop.f32.mrb[0].mxu0
        %699 = vmatprep.mubr.f32.mxu0 0.0
        %700 = vmatmul.mubr.f32.gmra.mrb[0].mxu0 %v253
        %v701 = vpop.f32.mrb[0].mxu0
        %v702 = vadd.f32 %v477, %v701
        %v703 = vpop.f32.mrb[0].mxu0
        %704 = vmatprep.mubr.f32.mxu0 0.0
        %705 = vmatmul.mubr.f32.gmra.mrb[0].mxu0 %v254
        %v706 = vpop.f32.mrb[0].mxu0
        %v707 = vadd.f32 %v482, %v706
        %v708 = vpop.f32.mrb[0].mxu0
        %709 = vmatprep.mubr.f32.mxu0 0.0
        %710 = vmatmul.mubr.f32.gmra.mrb[0].mxu0 %v255
        %v711 = vpop.f32.mrb[0].mxu0
        %v712 = vadd.f32 %v487, %v711
        %v713 = vpop.f32.mrb[0].mxu0
        %714 = vmatprep.mubr.f32.mxu0 0.0
        %715 = vmatmul.mubr.f32.gmra.mrb[0].mxu0 %v256
        %v716 = vpop.f32.mrb[0].mxu0
        %v717 = vadd.f32 %v492, %v716
        %v718 = vpop.f32.mrb[0].mxu0
        %719 = vmatprep.mubr.f32.mxu0 0.0
        %720 = vmatmul.mubr.f32.gmra.mrb[0].mxu0 %v257
        %v721 = vpop.f32.mrb[0].mxu0
        %v722 = vadd.f32 %v497, %v721
        %v723 = vpop.f32.mrb[0].mxu0
        %724 = vmatprep.mubr.f32.mxu0 0.0
        %725 = vmatmul.mubr.f32.gmra.mrb[0].mxu0 %v258
        %v726 = vpop.f32.mrb[0].mxu0
        %v727 = vadd.f32 %v502, %v726
        %v728 = vpop.f32.mrb[0].mxu0
        %729 = vmatprep.mubr.f32.mxu0 0.0
        %730 = vmatmul.mubr.f32.gmra.mrb[0].mxu0 %v259
        %v731 = vpop.f32.mrb[0].mxu0
        %v732 = vadd.f32 %v507, %v731
        %v733 = vpop.f32.mrb[0].mxu0
        %734 = vmatprep.mubr.f32.mxu0 0.0
        %735 = vmatmul.mubr.f32.gmra.mrb[0].mxu0 %v260
        %v736 = vpop.f32.mrb[0].mxu0
        %v737 = vadd.f32 %v512, %v736
        %v738 = vpop.f32.mrb[0].mxu0
        %739 = vmatprep.mubr.f32.mxu0 0.0
        %740 = vmatmul.mubr.f32.gmra.mrb[0].mxu0 %v261
        %v741 = vpop.f32.mrb[0].mxu0
        %v742 = vadd.f32 %v517, %v741
        %v743 = vpop.f32.mrb[0].mxu0
        %744 = vmatprep.mubr.f32.mxu0 0.0
        %745 = vmatmul.mubr.f32.gmra.mrb[0].mxu0 %v262
        %v746 = vpop.f32.mrb[0].mxu0
        %v747 = vadd.f32 %v522, %v746
        %v748 = vpop.f32.mrb[0].mxu0
        %749 = vmatprep.mubr.f32.mxu0 0.0
        %750 = vmatmul.mubr.f32.gmra.mrb[0].mxu0 %v263
        %v751 = vpop.f32.mrb[0].mxu0
        %v752 = vadd.f32 %v527, %v751
        %v753 = vpop.f32.mrb[0].mxu0
        %754 = vmatprep.mubr.f32.mxu0 0.0
        %755 = vmatmul.mubr.f32.gmra.mrb[0].mxu0 %v264
        %v756 = vpop.f32.mrb[0].mxu0
        %v757 = vadd.f32 %v532, %v756
        %v758 = vpop.f32.mrb[0].mxu0
        %759 = vmatprep.mubr.f32.mxu0 0.0
        %760 = vmatmul.mubr.f32.gmra.mrb[0].mxu0 %v265
        %v761 = vpop.f32.mrb[0].mxu0
        %v762 = vadd.f32 %v537, %v761
        %v763 = vpop.f32.mrb[0].mxu0
        %764 = vmatprep.mubr.f32.mxu0 0.0
        %765 = vmatmul.mubr.f32.gmra.mrb[0].mxu0 %v266
        %v766 = vpop.f32.mrb[0].mxu0
        %v767 = vadd.f32 %v542, %v766
        %v768 = vpop.f32.mrb[0].mxu0
        %769 = vmatprep.mubr.f32.mxu0 0.0
        %770 = vmatmul.mubr.f32.gmra.mrb[0].mxu0 %v267
        %v771 = vpop.f32.mrb[0].mxu0
        %v772 = vadd.f32 %v547, %v771
        %v773 = vpop.f32.mrb[0].mxu0
        %774 = vmatprep.mubr.f32.mxu0 0.0
        %775 = vmatmul.mubr.f32.gmra.mrb[0].mxu0 %v268
        %v776 = vpop.f32.mrb[0].mxu0
        %v777 = vadd.f32 %v552, %v776
        %v778 = vpop.f32.mrb[0].mxu0
        %779 = vmatprep.mubr.f32.mxu0 0.0
        %780 = vmatmul.mubr.f32.gmra.mrb[0].mxu0 %v269
        %v781 = vpop.f32.mrb[0].mxu0
        %v782 = vadd.f32 %v557, %v781
        %v783 = vpop.f32.mrb[0].mxu0
        %784 = vdwg.mxu0
        %v785 = vld [vmem:[%s237 + $0x2] sm:$0xff]
        %v786 = vld [vmem:[%s237 + $0xa] sm:$0xff]
        %v787 = vld [vmem:[%s237 + $0x1a] sm:$0xff]
        %v788 = vld [vmem:[%s237 + $0x22] sm:$0xff]
        %v789 = vld [vmem:[%s237 + $0x32] sm:$0xff]
        %v790 = vld [vmem:[%s237 + $0x3a] sm:$0xff]
        %v791 = vld [vmem:[%s237 + $0x4a] sm:$0xff]
        %v792 = vld [vmem:[%s237 + $0x52] sm:$0xff]
        %v793 = vld [vmem:[%s237 + $0x62] sm:$0xff]
        %v794 = vld [vmem:[%s237 + $0x6a] sm:$0xff]
        %v795 = vld [vmem:[%s237 + $0x7a] sm:$0xff]
        %v796 = vld [vmem:[%s237 + $0x82] sm:$0xff]
        %v797 = vld [vmem:[%s237 + $0x92] sm:$0xff]
        %v798 = vld [vmem:[%s237 + $0x9a] sm:$0xff]
        %v799 = vld [vmem:[%s237 + $0xaa] sm:$0xff]
        %v800 = vld [vmem:[%s237 + $0xb2] sm:$0xff]
        %v801 = vld [vmem:[%s237 + $0xc2] sm:$0xff]
        %v802 = vld [vmem:[%s237 + $0xca] sm:$0xff]
        %v803 = vld [vmem:[%s237 + $0xda] sm:$0xff]
        %v804 = vld [vmem:[%s237 + $0xe2] sm:$0xff]
        %v805 = vld [vmem:[%s237 + $0xf2] sm:$0xff]
        %v806 = vld [vmem:[%s237 + $0xfa] sm:$0xff]
        %v807 = vld [vmem:[%s237 + $0x10a] sm:$0xff]
        %v808 = vld [vmem:[%s237 + $0x112] sm:$0xff]
        %v809 = vld [vmem:[%s237 + $0x122] sm:$0xff]
        %v810 = vld [vmem:[%s237 + $0x12a] sm:$0xff]
        %v811 = vld [vmem:[%s237 + $0x13a] sm:$0xff]
        %v812 = vld [vmem:[%s237 + $0x142] sm:$0xff]
        %v813 = vld [vmem:[%s237 + $0x152] sm:$0xff]
        %v814 = vld [vmem:[%s237 + $0x15a] sm:$0xff]
        %v815 = vld [vmem:[%s237 + $0x16a] sm:$0xff]
        %v816 = vld [vmem:[%s237 + $0x172] sm:$0xff]
        %s817 = scalar_lea.vmem %s1, 256
        %v818 = vld [vmem:[%s817] sm:$0xff]
        %v819 = vld [vmem:[%s817 + $0x8] sm:$0xff]
        %v820 = vld [vmem:[%s817 + $0x10] sm:$0xff]
        %v821 = vld [vmem:[%s817 + $0x18] sm:$0xff]
        %v822 = vld [vmem:[%s817 + $0x20] sm:$0xff]
        %v823 = vld [vmem:[%s817 + $0x28] sm:$0xff]
        %v824 = vld [vmem:[%s817 + $0x30] sm:$0xff]
        %v825 = vld [vmem:[%s817 + $0x38] sm:$0xff]
        %v826 = vld [vmem:[%s817 + $0x40] sm:$0xff]
        %v827 = vld [vmem:[%s817 + $0x48] sm:$0xff]
        %v828 = vld [vmem:[%s817 + $0x50] sm:$0xff]
        %v829 = vld [vmem:[%s817 + $0x58] sm:$0xff]
        %v830 = vld [vmem:[%s817 + $0x60] sm:$0xff]
        %v831 = vld [vmem:[%s817 + $0x68] sm:$0xff]
        %v832 = vld [vmem:[%s817 + $0x70] sm:$0xff]
        %v833 = vld [vmem:[%s817 + $0x78] sm:$0xff]
        %834 = vmatprep.subr.mxu0 0.0
        %835 = vmatpush1.msra.mxu0 %v818
        %836 = vmatprep.subr.mxu0 0.0
        %837 = vmatpush1.msra.mxu0 %v819
        %838 = vmatprep.subr.mxu0 0.0
        %839 = vmatpush1.msra.mxu0 %v820
        %840 = vmatprep.subr.mxu0 0.0
        %841 = vmatpush1.msra.mxu0 %v821
        %842 = vmatprep.subr.mxu0 0.0
        %843 = vmatpush1.msra.mxu0 %v822
        %844 = vmatprep.subr.mxu0 0.0
        %845 = vmatpush1.msra.mxu0 %v823
        %846 = vmatprep.subr.mxu0 0.0
        %847 = vmatpush1.msra.mxu0 %v824
        %848 = vmatprep.subr.mxu0 0.0
        %849 = vmatpush1.msra.mxu0 %v825
        %850 = vmatprep.subr.mxu0 0.0
        %851 = vmatpush1.msra.mxu0 %v826
        %852 = vmatprep.subr.mxu0 0.0
        %853 = vmatpush1.msra.mxu0 %v827
        %854 = vmatprep.subr.mxu0 0.0
        %855 = vmatpush1.msra.mxu0 %v828
        %856 = vmatprep.subr.mxu0 0.0
        %857 = vmatpush1.msra.mxu0 %v829
        %858 = vmatprep.subr.mxu0 0.0
        %859 = vmatpush1.msra.mxu0 %v830
        %860 = vmatprep.subr.mxu0 0.0
        %861 = vmatpush1.msra.mxu0 %v831
        %862 = vmatprep.subr.mxu0 0.0
        %863 = vmatpush1.msra.mxu0 %v832
        %864 = vmatprep.subr.mxu0 0.0
        %865 = vmatpush1.msra.mxu0 %v833
        %866 = vmatprep.subr.mxu0 0.0
        %867 = vmatpush1.msra.mxu0 0.0
        %868 = vmatprep.subr.mxu0 0.0
        %869 = vmatpush1.msra.mxu0 0.0
        %870 = vmatprep.subr.mxu0 0.0
        %871 = vmatpush1.msra.mxu0 0.0
        %872 = vmatprep.subr.mxu0 0.0
        %873 = vmatpush1.msra.mxu0 0.0
        %874 = vmatprep.subr.mxu0 0.0
        %875 = vmatpush1.msra.mxu0 0.0
        %876 = vmatprep.subr.mxu0 0.0
        %877 = vmatpush1.msra.mxu0 0.0
        %878 = vmatprep.subr.mxu0 0.0
        %879 = vmatpush1.msra.mxu0 0.0
        %880 = vmatprep.subr.mxu0 0.0
        %881 = vmatpush1.msra.mxu0 0.0
        %882 = vmatprep.subr.mxu0 0.0
        %883 = vmatpush1.msra.mxu0 0.0
        %884 = vmatprep.subr.mxu0 0.0
        %885 = vmatpush1.msra.mxu0 0.0
        %886 = vmatprep.subr.mxu0 0.0
        %887 = vmatpush1.msra.mxu0 0.0
        %888 = vmatprep.subr.mxu0 0.0
        %889 = vmatpush1.msra.mxu0 0.0
        %890 = vmatprep.subr.mxu0 0.0
        %891 = vmatpush1.msra.mxu0 0.0
        %892 = vmatprep.subr.mxu0 0.0
        %893 = vmatpush1.msra.mxu0 0.0
        %894 = vmatprep.subr.mxu0 0.0
        %895 = vmatpush1.msra.mxu0 0.0
        %896 = vmatprep.subr.mxu0 0.0
        %897 = vmatpush1.msra.mxu0 0.0
        %898 = vmatprep.mubr.f32.mxu0 0.0
        %899 = vmatmul.mubr.f32.gmra.mrb[0].mxu0 %v785
        %v900 = vpop.f32.mrb[0].mxu0
        %v901 = vadd.f32 0.0, %v900
        %v902 = vpop.f32.mrb[0].mxu0
        %903 = vmatprep.mubr.f32.mxu0 0.0
        %904 = vmatmul.mubr.f32.gmra.mrb[0].mxu0 %v786
        %v905 = vpop.f32.mrb[0].mxu0
        %v906 = vadd.f32 0.0, %v905
        %v907 = vpop.f32.mrb[0].mxu0
        %908 = vmatprep.mubr.f32.mxu0 0.0
        %909 = vmatmul.mubr.f32.gmra.mrb[0].mxu0 %v787
        %v910 = vpop.f32.mrb[0].mxu0
        %v911 = vadd.f32 0.0, %v910
        %v912 = vpop.f32.mrb[0].mxu0
        %913 = vmatprep.mubr.f32.mxu0 0.0
        %914 = vmatmul.mubr.f32.gmra.mrb[0].mxu0 %v788
        %v915 = vpop.f32.mrb[0].mxu0
        %v916 = vadd.f32 0.0, %v915
        %v917 = vpop.f32.mrb[0].mxu0
        %918 = vmatprep.mubr.f32.mxu0 0.0
        %919 = vmatmul.mubr.f32.gmra.mrb[0].mxu0 %v789
        %v920 = vpop.f32.mrb[0].mxu0
        %v921 = vadd.f32 0.0, %v920
        %v922 = vpop.f32.mrb[0].mxu0
        %923 = vmatprep.mubr.f32.mxu0 0.0
        %924 = vmatmul.mubr.f32.gmra.mrb[0].mxu0 %v790
        %v925 = vpop.f32.mrb[0].mxu0
        %v926 = vadd.f32 0.0, %v925
        %v927 = vpop.f32.mrb[0].mxu0
        %928 = vmatprep.mubr.f32.mxu0 0.0
        %929 = vmatmul.mubr.f32.gmra.mrb[0].mxu0 %v791
        %v930 = vpop.f32.mrb[0].mxu0
        %v931 = vadd.f32 0.0, %v930
        %v932 = vpop.f32.mrb[0].mxu0
        %933 = vmatprep.mubr.f32.mxu0 0.0
        %934 = vmatmul.mubr.f32.gmra.mrb[0].mxu0 %v792
        %v935 = vpop.f32.mrb[0].mxu0
        %v936 = vadd.f32 0.0, %v935
        %v937 = vpop.f32.mrb[0].mxu0
        %938 = vmatprep.mubr.f32.mxu0 0.0
        %939 = vmatmul.mubr.f32.gmra.mrb[0].mxu0 %v793
        %v940 = vpop.f32.mrb[0].mxu0
        %v941 = vadd.f32 0.0, %v940
        %v942 = vpop.f32.mrb[0].mxu0
        %943 = vmatprep.mubr.f32.mxu0 0.0
        %944 = vmatmul.mubr.f32.gmra.mrb[0].mxu0 %v794
        %v945 = vpop.f32.mrb[0].mxu0
        %v946 = vadd.f32 0.0, %v945
        %v947 = vpop.f32.mrb[0].mxu0
        %948 = vmatprep.mubr.f32.mxu0 0.0
        %949 = vmatmul.mubr.f32.gmra.mrb[0].mxu0 %v795
        %v950 = vpop.f32.mrb[0].mxu0
        %v951 = vadd.f32 0.0, %v950
        %v952 = vpop.f32.mrb[0].mxu0
        %953 = vmatprep.mubr.f32.mxu0 0.0
        %954 = vmatmul.mubr.f32.gmra.mrb[0].mxu0 %v796
        %v955 = vpop.f32.mrb[0].mxu0
        %v956 = vadd.f32 0.0, %v955
        %v957 = vpop.f32.mrb[0].mxu0
        %958 = vmatprep.mubr.f32.mxu0 0.0
        %959 = vmatmul.mubr.f32.gmra.mrb[0].mxu0 %v797
        %v960 = vpop.f32.mrb[0].mxu0
        %v961 = vadd.f32 0.0, %v960
        %v962 = vpop.f32.mrb[0].mxu0
        %963 = vmatprep.mubr.f32.mxu0 0.0
        %964 = vmatmul.mubr.f32.gmra.mrb[0].mxu0 %v798
        %v965 = vpop.f32.mrb[0].mxu0
        %v966 = vadd.f32 0.0, %v965
        %v967 = vpop.f32.mrb[0].mxu0
        %968 = vmatprep.mubr.f32.mxu0 0.0
        %969 = vmatmul.mubr.f32.gmra.mrb[0].mxu0 %v799
        %v970 = vpop.f32.mrb[0].mxu0
        %v971 = vadd.f32 0.0, %v970
        %v972 = vpop.f32.mrb[0].mxu0
        %973 = vmatprep.mubr.f32.mxu0 0.0
        %974 = vmatmul.mubr.f32.gmra.mrb[0].mxu0 %v800
        %v975 = vpop.f32.mrb[0].mxu0
        %v976 = vadd.f32 0.0, %v975
        %v977 = vpop.f32.mrb[0].mxu0
        %978 = vmatprep.mubr.f32.mxu0 0.0
        %979 = vmatmul.mubr.f32.gmra.mrb[0].mxu0 %v801
        %v980 = vpop.f32.mrb[0].mxu0
        %v981 = vadd.f32 0.0, %v980
        %v982 = vpop.f32.mrb[0].mxu0
        %983 = vmatprep.mubr.f32.mxu0 0.0
        %984 = vmatmul.mubr.f32.gmra.mrb[0].mxu0 %v802
        %v985 = vpop.f32.mrb[0].mxu0
        %v986 = vadd.f32 0.0, %v985
        %v987 = vpop.f32.mrb[0].mxu0
        %988 = vmatprep.mubr.f32.mxu0 0.0
        %989 = vmatmul.mubr.f32.gmra.mrb[0].mxu0 %v803
        %v990 = vpop.f32.mrb[0].mxu0
        %v991 = vadd.f32 0.0, %v990
        %v992 = vpop.f32.mrb[0].mxu0
        %993 = vmatprep.mubr.f32.mxu0 0.0
        %994 = vmatmul.mubr.f32.gmra.mrb[0].mxu0 %v804
        %v995 = vpop.f32.mrb[0].mxu0
        %v996 = vadd.f32 0.0, %v995
        %v997 = vpop.f32.mrb[0].mxu0
        %998 = vmatprep.mubr.f32.mxu0 0.0
        %999 = vmatmul.mubr.f32.gmra.mrb[0].mxu0 %v805
        %v1000 = vpop.f32.mrb[0].mxu0
        %v1001 = vadd.f32 0.0, %v1000
        %v1002 = vpop.f32.mrb[0].mxu0
        %1003 = vmatprep.mubr.f32.mxu0 0.0
        %1004 = vmatmul.mubr.f32.gmra.mrb[0].mxu0 %v806
        %v1005 = vpop.f32.mrb[0].mxu0
        %v1006 = vadd.f32 0.0, %v1005
        %v1007 = vpop.f32.mrb[0].mxu0
        %1008 = vmatprep.mubr.f32.mxu0 0.0
        %1009 = vmatmul.mubr.f32.gmra.mrb[0].mxu0 %v807
        %v1010 = vpop.f32.mrb[0].mxu0
        %v1011 = vadd.f32 0.0, %v1010
        %v1012 = vpop.f32.mrb[0].mxu0
        %1013 = vmatprep.mubr.f32.mxu0 0.0
        %1014 = vmatmul.mubr.f32.gmra.mrb[0].mxu0 %v808
        %v1015 = vpop.f32.mrb[0].mxu0
        %v1016 = vadd.f32 0.0, %v1015
        %v1017 = vpop.f32.mrb[0].mxu0
        %1018 = vmatprep.mubr.f32.mxu0 0.0
        %1019 = vmatmul.mubr.f32.gmra.mrb[0].mxu0 %v809
        %v1020 = vpop.f32.mrb[0].mxu0
        %v1021 = vadd.f32 0.0, %v1020
        %v1022 = vpop.f32.mrb[0].mxu0
        %1023 = vmatprep.mubr.f32.mxu0 0.0
        %1024 = vmatmul.mubr.f32.gmra.mrb[0].mxu0 %v810
        %v1025 = vpop.f32.mrb[0].mxu0
        %v1026 = vadd.f32 0.0, %v1025
        %v1027 = vpop.f32.mrb[0].mxu0
        %1028 = vmatprep.mubr.f32.mxu0 0.0
        %1029 = vmatmul.mubr.f32.gmra.mrb[0].mxu0 %v811
        %v1030 = vpop.f32.mrb[0].mxu0
        %v1031 = vadd.f32 0.0, %v1030
        %v1032 = vpop.f32.mrb[0].mxu0
        %1033 = vmatprep.mubr.f32.mxu0 0.0
        %1034 = vmatmul.mubr.f32.gmra.mrb[0].mxu0 %v812
        %v1035 = vpop.f32.mrb[0].mxu0
        %v1036 = vadd.f32 0.0, %v1035
        %v1037 = vpop.f32.mrb[0].mxu0
        %1038 = vmatprep.mubr.f32.mxu0 0.0
        %1039 = vmatmul.mubr.f32.gmra.mrb[0].mxu0 %v813
        %v1040 = vpop.f32.mrb[0].mxu0
        %v1041 = vadd.f32 0.0, %v1040
        %v1042 = vpop.f32.mrb[0].mxu0
        %1043 = vmatprep.mubr.f32.mxu0 0.0
        %1044 = vmatmul.mubr.f32.gmra.mrb[0].mxu0 %v814
        %v1045 = vpop.f32.mrb[0].mxu0
        %v1046 = vadd.f32 0.0, %v1045
        %v1047 = vpop.f32.mrb[0].mxu0
        %1048 = vmatprep.mubr.f32.mxu0 0.0
        %1049 = vmatmul.mubr.f32.gmra.mrb[0].mxu0 %v815
        %v1050 = vpop.f32.mrb[0].mxu0
        %v1051 = vadd.f32 0.0, %v1050
        %v1052 = vpop.f32.mrb[0].mxu0
        %1053 = vmatprep.mubr.f32.mxu0 0.0
        %1054 = vmatmul.mubr.f32.gmra.mrb[0].mxu0 %v816
        %v1055 = vpop.f32.mrb[0].mxu0
        %v1056 = vadd.f32 0.0, %v1055
        %v1057 = vpop.f32.mrb[0].mxu0
        %1058 = vdwg.mxu0
        %v1059 = vadd.f32 %v627, %v901
        %v1060 = vadd.f32 %v632, %v906
        %v1061 = vadd.f32 %v637, %v911
        %v1062 = vadd.f32 %v642, %v916
        %v1063 = vadd.f32 %v647, %v921
        %v1064 = vadd.f32 %v652, %v926
        %v1065 = vadd.f32 %v657, %v931
        %v1066 = vadd.f32 %v662, %v936
        %v1067 = vadd.f32 %v667, %v941
        %v1068 = vadd.f32 %v672, %v946
        %v1069 = vadd.f32 %v677, %v951
        %v1070 = vadd.f32 %v682, %v956
        %v1071 = vadd.f32 %v687, %v961
        %v1072 = vadd.f32 %v692, %v966
        %v1073 = vadd.f32 %v697, %v971
        %v1074 = vadd.f32 %v702, %v976
        %v1075 = vadd.f32 %v707, %v981
        %v1076 = vadd.f32 %v712, %v986
        %v1077 = vadd.f32 %v717, %v991
        %v1078 = vadd.f32 %v722, %v996
        %v1079 = vadd.f32 %v727, %v1001
        %v1080 = vadd.f32 %v732, %v1006
        %v1081 = vadd.f32 %v737, %v1011
        %v1082 = vadd.f32 %v742, %v1016
        %v1083 = vadd.f32 %v747, %v1021
        %v1084 = vadd.f32 %v752, %v1026
        %v1085 = vadd.f32 %v757, %v1031
        %v1086 = vadd.f32 %v762, %v1036
        %v1087 = vadd.f32 %v767, %v1041
        %v1088 = vadd.f32 %v772, %v1046
        %v1089 = vadd.f32 %v777, %v1051
        %v1090 = vadd.f32 %v782, %v1056
        %s1091 = scalar_lea.vmem %s237, 24
        %v1092 = vld [vmem:[%s1091] sm:$0xff]
        %v1093 = vld [vmem:[%s1091 + $0x8] sm:$0xff]
        %v1094 = vld [vmem:[%s1091 + $0x18] sm:$0xff]
        %v1095 = vld [vmem:[%s1091 + $0x20] sm:$0xff]
        %v1096 = vld [vmem:[%s1091 + $0x30] sm:$0xff]
        %v1097 = vld [vmem:[%s1091 + $0x38] sm:$0xff]
        %v1098 = vld [vmem:[%s1091 + $0x48] sm:$0xff]
        %v1099 = vld [vmem:[%s1091 + $0x50] sm:$0xff]
        %v1100 = vld [vmem:[%s1091 + $0x60] sm:$0xff]
        %v1101 = vld [vmem:[%s1091 + $0x68] sm:$0xff]
        %v1102 = vld [vmem:[%s1091 + $0x78] sm:$0xff]
        %v1103 = vld [vmem:[%s1091 + $0x80] sm:$0xff]
        %v1104 = vld [vmem:[%s1091 + $0x90] sm:$0xff]
        %v1105 = vld [vmem:[%s1091 + $0x98] sm:$0xff]
        %v1106 = vld [vmem:[%s1091 + $0xa8] sm:$0xff]
        %v1107 = vld [vmem:[%s1091 + $0xb0] sm:$0xff]
        %v1108 = vld [vmem:[%s1091 + $0xc0] sm:$0xff]
        %v1109 = vld [vmem:[%s1091 + $0xc8] sm:$0xff]
        %v1110 = vld [vmem:[%s1091 + $0xd8] sm:$0xff]
        %v1111 = vld [vmem:[%s1091 + $0xe0] sm:$0xff]
        %v1112 = vld [vmem:[%s1091 + $0xf0] sm:$0xff]
        %v1113 = vld [vmem:[%s1091 + $0xf8] sm:$0xff]
        %v1114 = vld [vmem:[%s1091 + $0x108] sm:$0xff]
        %v1115 = vld [vmem:[%s1091 + $0x110] sm:$0xff]
        %v1116 = vld [vmem:[%s1091 + $0x120] sm:$0xff]
        %v1117 = vld [vmem:[%s1091 + $0x128] sm:$0xff]
        %v1118 = vld [vmem:[%s1091 + $0x138] sm:$0xff]
        %v1119 = vld [vmem:[%s1091 + $0x140] sm:$0xff]
        %v1120 = vld [vmem:[%s1091 + $0x150] sm:$0xff]
        %v1121 = vld [vmem:[%s1091 + $0x158] sm:$0xff]
        %v1122 = vld [vmem:[%s1091 + $0x168] sm:$0xff]
        %v1123 = vld [vmem:[%s1091 + $0x170] sm:$0xff]
        %s1124 = scalar_lea.vmem %s1, 384
        %v1125 = vld [vmem:[%s1124] sm:$0xff]
        %v1126 = vld [vmem:[%s1124 + $0x8] sm:$0xff]
        %v1127 = vld [vmem:[%s1124 + $0x10] sm:$0xff]
        %v1128 = vld [vmem:[%s1124 + $0x18] sm:$0xff]
        %v1129 = vld [vmem:[%s1124 + $0x20] sm:$0xff]
        %v1130 = vld [vmem:[%s1124 + $0x28] sm:$0xff]
        %v1131 = vld [vmem:[%s1124 + $0x30] sm:$0xff]
        %v1132 = vld [vmem:[%s1124 + $0x38] sm:$0xff]
        %v1133 = vld [vmem:[%s1124 + $0x40] sm:$0xff]
        %v1134 = vld [vmem:[%s1124 + $0x48] sm:$0xff]
        %v1135 = vld [vmem:[%s1124 + $0x50] sm:$0xff]
        %v1136 = vld [vmem:[%s1124 + $0x58] sm:$0xff]
        %v1137 = vld [vmem:[%s1124 + $0x60] sm:$0xff]
        %v1138 = vld [vmem:[%s1124 + $0x68] sm:$0xff]
        %v1139 = vld [vmem:[%s1124 + $0x70] sm:$0xff]
        %v1140 = vld [vmem:[%s1124 + $0x78] sm:$0xff]
        %1141 = vmatprep.subr.mxu0 0.0
        %1142 = vmatpush1.msra.mxu0 %v1125
        %1143 = vmatprep.subr.mxu0 0.0
        %1144 = vmatpush1.msra.mxu0 %v1126
        %1145 = vmatprep.subr.mxu0 0.0
        %1146 = vmatpush1.msra.mxu0 %v1127
        %1147 = vmatprep.subr.mxu0 0.0
        %1148 = vmatpush1.msra.mxu0 %v1128
        %1149 = vmatprep.subr.mxu0 0.0
        %1150 = vmatpush1.msra.mxu0 %v1129
        %1151 = vmatprep.subr.mxu0 0.0
        %1152 = vmatpush1.msra.mxu0 %v1130
        %1153 = vmatprep.subr.mxu0 0.0
        %1154 = vmatpush1.msra.mxu0 %v1131
        %1155 = vmatprep.subr.mxu0 0.0
        %1156 = vmatpush1.msra.mxu0 %v1132
        %1157 = vmatprep.subr.mxu0 0.0
        %1158 = vmatpush1.msra.mxu0 %v1133
        %1159 = vmatprep.subr.mxu0 0.0
        %1160 = vmatpush1.msra.mxu0 %v1134
        %1161 = vmatprep.subr.mxu0 0.0
        %1162 = vmatpush1.msra.mxu0 %v1135
        %1163 = vmatprep.subr.mxu0 0.0
        %1164 = vmatpush1.msra.mxu0 %v1136
        %1165 = vmatprep.subr.mxu0 0.0
        %1166 = vmatpush1.msra.mxu0 %v1137
        %1167 = vmatprep.subr.mxu0 0.0
        %1168 = vmatpush1.msra.mxu0 %v1138
        %1169 = vmatprep.subr.mxu0 0.0
        %1170 = vmatpush1.msra.mxu0 %v1139
        %1171 = vmatprep.subr.mxu0 0.0
        %1172 = vmatpush1.msra.mxu0 %v1140
        %1173 = vmatprep.subr.mxu0 0.0
        %1174 = vmatpush1.msra.mxu0 0.0
        %1175 = vmatprep.subr.mxu0 0.0
        %1176 = vmatpush1.msra.mxu0 0.0
        %1177 = vmatprep.subr.mxu0 0.0
        %1178 = vmatpush1.msra.mxu0 0.0
        %1179 = vmatprep.subr.mxu0 0.0
        %1180 = vmatpush1.msra.mxu0 0.0
        %1181 = vmatprep.subr.mxu0 0.0
        %1182 = vmatpush1.msra.mxu0 0.0
        %1183 = vmatprep.subr.mxu0 0.0
        %1184 = vmatpush1.msra.mxu0 0.0
        %1185 = vmatprep.subr.mxu0 0.0
        %1186 = vmatpush1.msra.mxu0 0.0
        %1187 = vmatprep.subr.mxu0 0.0
        %1188 = vmatpush1.msra.mxu0 0.0
        %1189 = vmatprep.subr.mxu0 0.0
        %1190 = vmatpush1.msra.mxu0 0.0
        %1191 = vmatprep.subr.mxu0 0.0
        %1192 = vmatpush1.msra.mxu0 0.0
        %1193 = vmatprep.subr.mxu0 0.0
        %1194 = vmatpush1.msra.mxu0 0.0
        %1195 = vmatprep.subr.mxu0 0.0
        %1196 = vmatpush1.msra.mxu0 0.0
        %1197 = vmatprep.subr.mxu0 0.0
        %1198 = vmatpush1.msra.mxu0 0.0
        %1199 = vmatprep.subr.mxu0 0.0
        %1200 = vmatpush1.msra.mxu0 0.0
        %1201 = vmatprep.subr.mxu0 0.0
        %1202 = vmatpush1.msra.mxu0 0.0
        %1203 = vmatprep.subr.mxu0 0.0
        %1204 = vmatpush1.msra.mxu0 0.0
        %1205 = vmatprep.mubr.f32.mxu0 0.0
        %1206 = vmatmul.mubr.f32.gmra.mrb[0].mxu0 %v1092
        %v1207 = vpop.f32.mrb[0].mxu0
        %v1208 = vadd.f32 0.0, %v1207
        %v1209 = vpop.f32.mrb[0].mxu0
        %1210 = vmatprep.mubr.f32.mxu0 0.0
        %1211 = vmatmul.mubr.f32.gmra.mrb[0].mxu0 %v1093
        %v1212 = vpop.f32.mrb[0].mxu0
        %v1213 = vadd.f32 0.0, %v1212
        %v1214 = vpop.f32.mrb[0].mxu0
        %1215 = vmatprep.mubr.f32.mxu0 0.0
        %1216 = vmatmul.mubr.f32.gmra.mrb[0].mxu0 %v1094
        %v1217 = vpop.f32.mrb[0].mxu0
        %v1218 = vadd.f32 0.0, %v1217
        %v1219 = vpop.f32.mrb[0].mxu0
        %1220 = vmatprep.mubr.f32.mxu0 0.0
        %1221 = vmatmul.mubr.f32.gmra.mrb[0].mxu0 %v1095
        %v1222 = vpop.f32.mrb[0].mxu0
        %v1223 = vadd.f32 0.0, %v1222
        %v1224 = vpop.f32.mrb[0].mxu0
        %1225 = vmatprep.mubr.f32.mxu0 0.0
        %1226 = vmatmul.mubr.f32.gmra.mrb[0].mxu0 %v1096
        %v1227 = vpop.f32.mrb[0].mxu0
        %v1228 = vadd.f32 0.0, %v1227
        %v1229 = vpop.f32.mrb[0].mxu0
        %1230 = vmatprep.mubr.f32.mxu0 0.0
        %1231 = vmatmul.mubr.f32.gmra.mrb[0].mxu0 %v1097
        %v1232 = vpop.f32.mrb[0].mxu0
        %v1233 = vadd.f32 0.0, %v1232
        %v1234 = vpop.f32.mrb[0].mxu0
        %1235 = vmatprep.mubr.f32.mxu0 0.0
        %1236 = vmatmul.mubr.f32.gmra.mrb[0].mxu0 %v1098
        %v1237 = vpop.f32.mrb[0].mxu0
        %v1238 = vadd.f32 0.0, %v1237
        %v1239 = vpop.f32.mrb[0].mxu0
        %1240 = vmatprep.mubr.f32.mxu0 0.0
        %1241 = vmatmul.mubr.f32.gmra.mrb[0].mxu0 %v1099
        %v1242 = vpop.f32.mrb[0].mxu0
        %v1243 = vadd.f32 0.0, %v1242
        %v1244 = vpop.f32.mrb[0].mxu0
        %1245 = vmatprep.mubr.f32.mxu0 0.0
        %1246 = vmatmul.mubr.f32.gmra.mrb[0].mxu0 %v1100
        %v1247 = vpop.f32.mrb[0].mxu0
        %v1248 = vadd.f32 0.0, %v1247
        %v1249 = vpop.f32.mrb[0].mxu0
        %1250 = vmatprep.mubr.f32.mxu0 0.0
        %1251 = vmatmul.mubr.f32.gmra.mrb[0].mxu0 %v1101
        %v1252 = vpop.f32.mrb[0].mxu0
        %v1253 = vadd.f32 0.0, %v1252
        %v1254 = vpop.f32.mrb[0].mxu0
        %1255 = vmatprep.mubr.f32.mxu0 0.0
        %1256 = vmatmul.mubr.f32.gmra.mrb[0].mxu0 %v1102
        %v1257 = vpop.f32.mrb[0].mxu0
        %v1258 = vadd.f32 0.0, %v1257
        %v1259 = vpop.f32.mrb[0].mxu0
        %1260 = vmatprep.mubr.f32.mxu0 0.0
        %1261 = vmatmul.mubr.f32.gmra.mrb[0].mxu0 %v1103
        %v1262 = vpop.f32.mrb[0].mxu0
        %v1263 = vadd.f32 0.0, %v1262
        %v1264 = vpop.f32.mrb[0].mxu0
        %1265 = vmatprep.mubr.f32.mxu0 0.0
        %1266 = vmatmul.mubr.f32.gmra.mrb[0].mxu0 %v1104
        %v1267 = vpop.f32.mrb[0].mxu0
        %v1268 = vadd.f32 0.0, %v1267
        %v1269 = vpop.f32.mrb[0].mxu0
        %1270 = vmatprep.mubr.f32.mxu0 0.0
        %1271 = vmatmul.mubr.f32.gmra.mrb[0].mxu0 %v1105
        %v1272 = vpop.f32.mrb[0].mxu0
        %v1273 = vadd.f32 0.0, %v1272
        %v1274 = vpop.f32.mrb[0].mxu0
        %1275 = vmatprep.mubr.f32.mxu0 0.0
        %1276 = vmatmul.mubr.f32.gmra.mrb[0].mxu0 %v1106
        %v1277 = vpop.f32.mrb[0].mxu0
        %v1278 = vadd.f32 0.0, %v1277
        %v1279 = vpop.f32.mrb[0].mxu0
        %1280 = vmatprep.mubr.f32.mxu0 0.0
        %1281 = vmatmul.mubr.f32.gmra.mrb[0].mxu0 %v1107
        %v1282 = vpop.f32.mrb[0].mxu0
        %v1283 = vadd.f32 0.0, %v1282
        %v1284 = vpop.f32.mrb[0].mxu0
        %1285 = vmatprep.mubr.f32.mxu0 0.0
        %1286 = vmatmul.mubr.f32.gmra.mrb[0].mxu0 %v1108
        %v1287 = vpop.f32.mrb[0].mxu0
        %v1288 = vadd.f32 0.0, %v1287
        %v1289 = vpop.f32.mrb[0].mxu0
        %1290 = vmatprep.mubr.f32.mxu0 0.0
        %1291 = vmatmul.mubr.f32.gmra.mrb[0].mxu0 %v1109
        %v1292 = vpop.f32.mrb[0].mxu0
        %v1293 = vadd.f32 0.0, %v1292
        %v1294 = vpop.f32.mrb[0].mxu0
        %1295 = vmatprep.mubr.f32.mxu0 0.0
        %1296 = vmatmul.mubr.f32.gmra.mrb[0].mxu0 %v1110
        %v1297 = vpop.f32.mrb[0].mxu0
        %v1298 = vadd.f32 0.0, %v1297
        %v1299 = vpop.f32.mrb[0].mxu0
        %1300 = vmatprep.mubr.f32.mxu0 0.0
        %1301 = vmatmul.mubr.f32.gmra.mrb[0].mxu0 %v1111
        %v1302 = vpop.f32.mrb[0].mxu0
        %v1303 = vadd.f32 0.0, %v1302
        %v1304 = vpop.f32.mrb[0].mxu0
        %1305 = vmatprep.mubr.f32.mxu0 0.0
        %1306 = vmatmul.mubr.f32.gmra.mrb[0].mxu0 %v1112
        %v1307 = vpop.f32.mrb[0].mxu0
        %v1308 = vadd.f32 0.0, %v1307
        %v1309 = vpop.f32.mrb[0].mxu0
        %1310 = vmatprep.mubr.f32.mxu0 0.0
        %1311 = vmatmul.mubr.f32.gmra.mrb[0].mxu0 %v1113
        %v1312 = vpop.f32.mrb[0].mxu0
        %v1313 = vadd.f32 0.0, %v1312
        %v1314 = vpop.f32.mrb[0].mxu0
        %1315 = vmatprep.mubr.f32.mxu0 0.0
        %1316 = vmatmul.mubr.f32.gmra.mrb[0].mxu0 %v1114
        %v1317 = vpop.f32.mrb[0].mxu0
        %v1318 = vadd.f32 0.0, %v1317
        %v1319 = vpop.f32.mrb[0].mxu0
        %1320 = vmatprep.mubr.f32.mxu0 0.0
        %1321 = vmatmul.mubr.f32.gmra.mrb[0].mxu0 %v1115
        %v1322 = vpop.f32.mrb[0].mxu0
        %v1323 = vadd.f32 0.0, %v1322
        %v1324 = vpop.f32.mrb[0].mxu0
        %1325 = vmatprep.mubr.f32.mxu0 0.0
        %1326 = vmatmul.mubr.f32.gmra.mrb[0].mxu0 %v1116
        %v1327 = vpop.f32.mrb[0].mxu0
        %v1328 = vadd.f32 0.0, %v1327
        %v1329 = vpop.f32.mrb[0].mxu0
        %1330 = vmatprep.mubr.f32.mxu0 0.0
        %1331 = vmatmul.mubr.f32.gmra.mrb[0].mxu0 %v1117
        %v1332 = vpop.f32.mrb[0].mxu0
        %v1333 = vadd.f32 0.0, %v1332
        %v1334 = vpop.f32.mrb[0].mxu0
        %1335 = vmatprep.mubr.f32.mxu0 0.0
        %1336 = vmatmul.mubr.f32.gmra.mrb[0].mxu0 %v1118
        %v1337 = vpop.f32.mrb[0].mxu0
        %v1338 = vadd.f32 0.0, %v1337
        %v1339 = vpop.f32.mrb[0].mxu0
        %1340 = vmatprep.mubr.f32.mxu0 0.0
        %1341 = vmatmul.mubr.f32.gmra.mrb[0].mxu0 %v1119
        %v1342 = vpop.f32.mrb[0].mxu0
        %v1343 = vadd.f32 0.0, %v1342
        %v1344 = vpop.f32.mrb[0].mxu0
        %1345 = vmatprep.mubr.f32.mxu0 0.0
        %1346 = vmatmul.mubr.f32.gmra.mrb[0].mxu0 %v1120
        %v1347 = vpop.f32.mrb[0].mxu0
        %v1348 = vadd.f32 0.0, %v1347
        %v1349 = vpop.f32.mrb[0].mxu0
        %1350 = vmatprep.mubr.f32.mxu0 0.0
        %1351 = vmatmul.mubr.f32.gmra.mrb[0].mxu0 %v1121
        %v1352 = vpop.f32.mrb[0].mxu0
        %v1353 = vadd.f32 0.0, %v1352
        %v1354 = vpop.f32.mrb[0].mxu0
        %1355 = vmatprep.mubr.f32.mxu0 0.0
        %1356 = vmatmul.mubr.f32.gmra.mrb[0].mxu0 %v1122
        %v1357 = vpop.f32.mrb[0].mxu0
        %v1358 = vadd.f32 0.0, %v1357
        %v1359 = vpop.f32.mrb[0].mxu0
        %1360 = vmatprep.mubr.f32.mxu0 0.0
        %1361 = vmatmul.mubr.f32.gmra.mrb[0].mxu0 %v1123
        %v1362 = vpop.f32.mrb[0].mxu0
        %v1363 = vadd.f32 0.0, %v1362
        %v1364 = vpop.f32.mrb[0].mxu0
        %1365 = vdwg.mxu0
        %v1366 = vadd.f32 %v1059, %v1208
        %v1367 = vadd.f32 %v1060, %v1213
        %v1368 = vadd.f32 %v1061, %v1218
        %v1369 = vadd.f32 %v1062, %v1223
        %v1370 = vadd.f32 %v1063, %v1228
        %v1371 = vadd.f32 %v1064, %v1233
        %v1372 = vadd.f32 %v1065, %v1238
        %v1373 = vadd.f32 %v1066, %v1243
        %v1374 = vadd.f32 %v1067, %v1248
        %v1375 = vadd.f32 %v1068, %v1253
        %v1376 = vadd.f32 %v1069, %v1258
        %v1377 = vadd.f32 %v1070, %v1263
        %v1378 = vadd.f32 %v1071, %v1268
        %v1379 = vadd.f32 %v1072, %v1273
        %v1380 = vadd.f32 %v1073, %v1278
        %v1381 = vadd.f32 %v1074, %v1283
        %v1382 = vadd.f32 %v1075, %v1288
        %v1383 = vadd.f32 %v1076, %v1293
        %v1384 = vadd.f32 %v1077, %v1298
        %v1385 = vadd.f32 %v1078, %v1303
        %v1386 = vadd.f32 %v1079, %v1308
        %v1387 = vadd.f32 %v1080, %v1313
        %v1388 = vadd.f32 %v1081, %v1318
        %v1389 = vadd.f32 %v1082, %v1323
        %v1390 = vadd.f32 %v1083, %v1328
        %v1391 = vadd.f32 %v1084, %v1333
        %v1392 = vadd.f32 %v1085, %v1338
        %v1393 = vadd.f32 %v1086, %v1343
        %v1394 = vadd.f32 %v1087, %v1348
        %v1395 = vadd.f32 %v1088, %v1353
        %v1396 = vadd.f32 %v1089, %v1358
        %v1397 = vadd.f32 %v1090, %v1363
        %v1398 = vld [vmem:[%s1091 + $0x1] sm:$0xff]
        %v1399 = vld [vmem:[%s1091 + $0x9] sm:$0xff]
        %v1400 = vld [vmem:[%s1091 + $0x19] sm:$0xff]
        %v1401 = vld [vmem:[%s1091 + $0x21] sm:$0xff]
        %v1402 = vld [vmem:[%s1091 + $0x31] sm:$0xff]
        %v1403 = vld [vmem:[%s1091 + $0x39] sm:$0xff]
        %v1404 = vld [vmem:[%s1091 + $0x49] sm:$0xff]
        %v1405 = vld [vmem:[%s1091 + $0x51] sm:$0xff]
        %v1406 = vld [vmem:[%s1091 + $0x61] sm:$0xff]
        %v1407 = vld [vmem:[%s1091 + $0x69] sm:$0xff]
        %v1408 = vld [vmem:[%s1091 + $0x79] sm:$0xff]
        %v1409 = vld [vmem:[%s1091 + $0x81] sm:$0xff]
        %v1410 = vld [vmem:[%s1091 + $0x91] sm:$0xff]
        %v1411 = vld [vmem:[%s1091 + $0x99] sm:$0xff]
        %v1412 = vld [vmem:[%s1091 + $0xa9] sm:$0xff]
        %v1413 = vld [vmem:[%s1091 + $0xb1] sm:$0xff]
        %v1414 = vld [vmem:[%s1091 + $0xc1] sm:$0xff]
        %v1415 = vld [vmem:[%s1091 + $0xc9] sm:$0xff]
        %v1416 = vld [vmem:[%s1091 + $0xd9] sm:$0xff]
        %v1417 = vld [vmem:[%s1091 + $0xe1] sm:$0xff]
        %v1418 = vld [vmem:[%s1091 + $0xf1] sm:$0xff]
        %v1419 = vld [vmem:[%s1091 + $0xf9] sm:$0xff]
        %v1420 = vld [vmem:[%s1091 + $0x109] sm:$0xff]
        %v1421 = vld [vmem:[%s1091 + $0x111] sm:$0xff]
        %v1422 = vld [vmem:[%s1091 + $0x121] sm:$0xff]
        %v1423 = vld [vmem:[%s1091 + $0x129] sm:$0xff]
        %v1424 = vld [vmem:[%s1091 + $0x139] sm:$0xff]
        %v1425 = vld [vmem:[%s1091 + $0x141] sm:$0xff]
        %v1426 = vld [vmem:[%s1091 + $0x151] sm:$0xff]
        %v1427 = vld [vmem:[%s1091 + $0x159] sm:$0xff]
        %v1428 = vld [vmem:[%s1091 + $0x169] sm:$0xff]
        %v1429 = vld [vmem:[%s1091 + $0x171] sm:$0xff]
        %s1430 = scalar_lea.vmem %s1, 512
        %v1431 = vld [vmem:[%s1430] sm:$0xff]
        %v1432 = vld [vmem:[%s1430 + $0x8] sm:$0xff]
        %v1433 = vld [vmem:[%s1430 + $0x10] sm:$0xff]
        %v1434 = vld [vmem:[%s1430 + $0x18] sm:$0xff]
        %v1435 = vld [vmem:[%s1430 + $0x20] sm:$0xff]
        %v1436 = vld [vmem:[%s1430 + $0x28] sm:$0xff]
        %v1437 = vld [vmem:[%s1430 + $0x30] sm:$0xff]
        %v1438 = vld [vmem:[%s1430 + $0x38] sm:$0xff]
        %v1439 = vld [vmem:[%s1430 + $0x40] sm:$0xff]
        %v1440 = vld [vmem:[%s1430 + $0x48] sm:$0xff]
        %v1441 = vld [vmem:[%s1430 + $0x50] sm:$0xff]
        %v1442 = vld [vmem:[%s1430 + $0x58] sm:$0xff]
        %v1443 = vld [vmem:[%s1430 + $0x60] sm:$0xff]
        %v1444 = vld [vmem:[%s1430 + $0x68] sm:$0xff]
        %v1445 = vld [vmem:[%s1430 + $0x70] sm:$0xff]
        %v1446 = vld [vmem:[%s1430 + $0x78] sm:$0xff]
        %1447 = vmatprep.subr.mxu0 0.0
        %1448 = vmatpush1.msra.mxu0 %v1431
        %1449 = vmatprep.subr.mxu0 0.0
        %1450 = vmatpush1.msra.mxu0 %v1432
        %1451 = vmatprep.subr.mxu0 0.0
        %1452 = vmatpush1.msra.mxu0 %v1433
        %1453 = vmatprep.subr.mxu0 0.0
        %1454 = vmatpush1.msra.mxu0 %v1434
        %1455 = vmatprep.subr.mxu0 0.0
        %1456 = vmatpush1.msra.mxu0 %v1435
        %1457 = vmatprep.subr.mxu0 0.0
        %1458 = vmatpush1.msra.mxu0 %v1436
        %1459 = vmatprep.subr.mxu0 0.0
        %1460 = vmatpush1.msra.mxu0 %v1437
        %1461 = vmatprep.subr.mxu0 0.0
        %1462 = vmatpush1.msra.mxu0 %v1438
        %1463 = vmatprep.subr.mxu0 0.0
        %1464 = vmatpush1.msra.mxu0 %v1439
        %1465 = vmatprep.subr.mxu0 0.0
        %1466 = vmatpush1.msra.mxu0 %v1440
        %1467 = vmatprep.subr.mxu0 0.0
        %1468 = vmatpush1.msra.mxu0 %v1441
        %1469 = vmatprep.subr.mxu0 0.0
        %1470 = vmatpush1.msra.mxu0 %v1442
        %1471 = vmatprep.subr.mxu0 0.0
        %1472 = vmatpush1.msra.mxu0 %v1443
        %1473 = vmatprep.subr.mxu0 0.0
        %1474 = vmatpush1.msra.mxu0 %v1444
        %1475 = vmatprep.subr.mxu0 0.0
        %1476 = vmatpush1.msra.mxu0 %v1445
        %1477 = vmatprep.subr.mxu0 0.0
        %1478 = vmatpush1.msra.mxu0 %v1446
        %1479 = vmatprep.subr.mxu0 0.0
        %1480 = vmatpush1.msra.mxu0 0.0
        %1481 = vmatprep.subr.mxu0 0.0
        %1482 = vmatpush1.msra.mxu0 0.0
        %1483 = vmatprep.subr.mxu0 0.0
        %1484 = vmatpush1.msra.mxu0 0.0
        %1485 = vmatprep.subr.mxu0 0.0
        %1486 = vmatpush1.msra.mxu0 0.0
        %1487 = vmatprep.subr.mxu0 0.0
        %1488 = vmatpush1.msra.mxu0 0.0
        %1489 = vmatprep.subr.mxu0 0.0
        %1490 = vmatpush1.msra.mxu0 0.0
        %1491 = vmatprep.subr.mxu0 0.0
        %1492 = vmatpush1.msra.mxu0 0.0
        %1493 = vmatprep.subr.mxu0 0.0
        %1494 = vmatpush1.msra.mxu0 0.0
        %1495 = vmatprep.subr.mxu0 0.0
        %1496 = vmatpush1.msra.mxu0 0.0
        %1497 = vmatprep.subr.mxu0 0.0
        %1498 = vmatpush1.msra.mxu0 0.0
        %1499 = vmatprep.subr.mxu0 0.0
        %1500 = vmatpush1.msra.mxu0 0.0
        %1501 = vmatprep.subr.mxu0 0.0
        %1502 = vmatpush1.msra.mxu0 0.0
        %1503 = vmatprep.subr.mxu0 0.0
        %1504 = vmatpush1.msra.mxu0 0.0
        %1505 = vmatprep.subr.mxu0 0.0
        %1506 = vmatpush1.msra.mxu0 0.0
        %1507 = vmatprep.subr.mxu0 0.0
        %1508 = vmatpush1.msra.mxu0 0.0
        %1509 = vmatprep.subr.mxu0 0.0
        %1510 = vmatpush1.msra.mxu0 0.0
        %1511 = vmatprep.mubr.f32.mxu0 0.0
        %1512 = vmatmul.mubr.f32.gmra.mrb[0].mxu0 %v1398
        %v1513 = vpop.f32.mrb[0].mxu0
        %v1514 = vadd.f32 0.0, %v1513
        %v1515 = vpop.f32.mrb[0].mxu0
        %1516 = vmatprep.mubr.f32.mxu0 0.0
        %1517 = vmatmul.mubr.f32.gmra.mrb[0].mxu0 %v1399
        %v1518 = vpop.f32.mrb[0].mxu0
        %v1519 = vadd.f32 0.0, %v1518
        %v1520 = vpop.f32.mrb[0].mxu0
        %1521 = vmatprep.mubr.f32.mxu0 0.0
        %1522 = vmatmul.mubr.f32.gmra.mrb[0].mxu0 %v1400
        %v1523 = vpop.f32.mrb[0].mxu0
        %v1524 = vadd.f32 0.0, %v1523
        %v1525 = vpop.f32.mrb[0].mxu0
        %1526 = vmatprep.mubr.f32.mxu0 0.0
        %1527 = vmatmul.mubr.f32.gmra.mrb[0].mxu0 %v1401
        %v1528 = vpop.f32.mrb[0].mxu0
        %v1529 = vadd.f32 0.0, %v1528
        %v1530 = vpop.f32.mrb[0].mxu0
        %1531 = vmatprep.mubr.f32.mxu0 0.0
        %1532 = vmatmul.mubr.f32.gmra.mrb[0].mxu0 %v1402
        %v1533 = vpop.f32.mrb[0].mxu0
        %v1534 = vadd.f32 0.0, %v1533
        %v1535 = vpop.f32.mrb[0].mxu0
        %1536 = vmatprep.mubr.f32.mxu0 0.0
        %1537 = vmatmul.mubr.f32.gmra.mrb[0].mxu0 %v1403
        %v1538 = vpop.f32.mrb[0].mxu0
        %v1539 = vadd.f32 0.0, %v1538
        %v1540 = vpop.f32.mrb[0].mxu0
        %1541 = vmatprep.mubr.f32.mxu0 0.0
        %1542 = vmatmul.mubr.f32.gmra.mrb[0].mxu0 %v1404
        %v1543 = vpop.f32.mrb[0].mxu0
        %v1544 = vadd.f32 0.0, %v1543
        %v1545 = vpop.f32.mrb[0].mxu0
        %1546 = vmatprep.mubr.f32.mxu0 0.0
        %1547 = vmatmul.mubr.f32.gmra.mrb[0].mxu0 %v1405
        %v1548 = vpop.f32.mrb[0].mxu0
        %v1549 = vadd.f32 0.0, %v1548
        %v1550 = vpop.f32.mrb[0].mxu0
        %1551 = vmatprep.mubr.f32.mxu0 0.0
        %1552 = vmatmul.mubr.f32.gmra.mrb[0].mxu0 %v1406
        %v1553 = vpop.f32.mrb[0].mxu0
        %v1554 = vadd.f32 0.0, %v1553
        %v1555 = vpop.f32.mrb[0].mxu0
        %1556 = vmatprep.mubr.f32.mxu0 0.0
        %1557 = vmatmul.mubr.f32.gmra.mrb[0].mxu0 %v1407
        %v1558 = vpop.f32.mrb[0].mxu0
        %v1559 = vadd.f32 0.0, %v1558
        %v1560 = vpop.f32.mrb[0].mxu0
        %1561 = vmatprep.mubr.f32.mxu0 0.0
        %1562 = vmatmul.mubr.f32.gmra.mrb[0].mxu0 %v1408
        %v1563 = vpop.f32.mrb[0].mxu0
        %v1564 = vadd.f32 0.0, %v1563
        %v1565 = vpop.f32.mrb[0].mxu0
        %1566 = vmatprep.mubr.f32.mxu0 0.0
        %1567 = vmatmul.mubr.f32.gmra.mrb[0].mxu0 %v1409
        %v1568 = vpop.f32.mrb[0].mxu0
        %v1569 = vadd.f32 0.0, %v1568
        %v1570 = vpop.f32.mrb[0].mxu0
        %1571 = vmatprep.mubr.f32.mxu0 0.0
        %1572 = vmatmul.mubr.f32.gmra.mrb[0].mxu0 %v1410
        %v1573 = vpop.f32.mrb[0].mxu0
        %v1574 = vadd.f32 0.0, %v1573
        %v1575 = vpop.f32.mrb[0].mxu0
        %1576 = vmatprep.mubr.f32.mxu0 0.0
        %1577 = vmatmul.mubr.f32.gmra.mrb[0].mxu0 %v1411
        %v1578 = vpop.f32.mrb[0].mxu0
        %v1579 = vadd.f32 0.0, %v1578
        %v1580 = vpop.f32.mrb[0].mxu0
        %1581 = vmatprep.mubr.f32.mxu0 0.0
        %1582 = vmatmul.mubr.f32.gmra.mrb[0].mxu0 %v1412
        %v1583 = vpop.f32.mrb[0].mxu0
        %v1584 = vadd.f32 0.0, %v1583
        %v1585 = vpop.f32.mrb[0].mxu0
        %1586 = vmatprep.mubr.f32.mxu0 0.0
        %1587 = vmatmul.mubr.f32.gmra.mrb[0].mxu0 %v1413
        %v1588 = vpop.f32.mrb[0].mxu0
        %v1589 = vadd.f32 0.0, %v1588
        %v1590 = vpop.f32.mrb[0].mxu0
        %1591 = vmatprep.mubr.f32.mxu0 0.0
        %1592 = vmatmul.mubr.f32.gmra.mrb[0].mxu0 %v1414
        %v1593 = vpop.f32.mrb[0].mxu0
        %v1594 = vadd.f32 0.0, %v1593
        %v1595 = vpop.f32.mrb[0].mxu0
        %1596 = vmatprep.mubr.f32.mxu0 0.0
        %1597 = vmatmul.mubr.f32.gmra.mrb[0].mxu0 %v1415
        %v1598 = vpop.f32.mrb[0].mxu0
        %v1599 = vadd.f32 0.0, %v1598
        %v1600 = vpop.f32.mrb[0].mxu0
        %1601 = vmatprep.mubr.f32.mxu0 0.0
        %1602 = vmatmul.mubr.f32.gmra.mrb[0].mxu0 %v1416
        %v1603 = vpop.f32.mrb[0].mxu0
        %v1604 = vadd.f32 0.0, %v1603
        %v1605 = vpop.f32.mrb[0].mxu0
        %1606 = vmatprep.mubr.f32.mxu0 0.0
        %1607 = vmatmul.mubr.f32.gmra.mrb[0].mxu0 %v1417
        %v1608 = vpop.f32.mrb[0].mxu0
        %v1609 = vadd.f32 0.0, %v1608
        %v1610 = vpop.f32.mrb[0].mxu0
        %1611 = vmatprep.mubr.f32.mxu0 0.0
        %1612 = vmatmul.mubr.f32.gmra.mrb[0].mxu0 %v1418
        %v1613 = vpop.f32.mrb[0].mxu0
        %v1614 = vadd.f32 0.0, %v1613
        %v1615 = vpop.f32.mrb[0].mxu0
        %1616 = vmatprep.mubr.f32.mxu0 0.0
        %1617 = vmatmul.mubr.f32.gmra.mrb[0].mxu0 %v1419
        %v1618 = vpop.f32.mrb[0].mxu0
        %v1619 = vadd.f32 0.0, %v1618
        %v1620 = vpop.f32.mrb[0].mxu0
        %1621 = vmatprep.mubr.f32.mxu0 0.0
        %1622 = vmatmul.mubr.f32.gmra.mrb[0].mxu0 %v1420
        %v1623 = vpop.f32.mrb[0].mxu0
        %v1624 = vadd.f32 0.0, %v1623
        %v1625 = vpop.f32.mrb[0].mxu0
        %1626 = vmatprep.mubr.f32.mxu0 0.0
        %1627 = vmatmul.mubr.f32.gmra.mrb[0].mxu0 %v1421
        %v1628 = vpop.f32.mrb[0].mxu0
        %v1629 = vadd.f32 0.0, %v1628
        %v1630 = vpop.f32.mrb[0].mxu0
        %1631 = vmatprep.mubr.f32.mxu0 0.0
        %1632 = vmatmul.mubr.f32.gmra.mrb[0].mxu0 %v1422
        %v1633 = vpop.f32.mrb[0].mxu0
        %v1634 = vadd.f32 0.0, %v1633
        %v1635 = vpop.f32.mrb[0].mxu0
        %1636 = vmatprep.mubr.f32.mxu0 0.0
        %1637 = vmatmul.mubr.f32.gmra.mrb[0].mxu0 %v1423
        %v1638 = vpop.f32.mrb[0].mxu0
        %v1639 = vadd.f32 0.0, %v1638
        %v1640 = vpop.f32.mrb[0].mxu0
        %1641 = vmatprep.mubr.f32.mxu0 0.0
        %1642 = vmatmul.mubr.f32.gmra.mrb[0].mxu0 %v1424
        %v1643 = vpop.f32.mrb[0].mxu0
        %v1644 = vadd.f32 0.0, %v1643
        %v1645 = vpop.f32.mrb[0].mxu0
        %1646 = vmatprep.mubr.f32.mxu0 0.0
        %1647 = vmatmul.mubr.f32.gmra.mrb[0].mxu0 %v1425
        %v1648 = vpop.f32.mrb[0].mxu0
        %v1649 = vadd.f32 0.0, %v1648
        %v1650 = vpop.f32.mrb[0].mxu0
        %1651 = vmatprep.mubr.f32.mxu0 0.0
        %1652 = vmatmul.mubr.f32.gmra.mrb[0].mxu0 %v1426
        %v1653 = vpop.f32.mrb[0].mxu0
        %v1654 = vadd.f32 0.0, %v1653
        %v1655 = vpop.f32.mrb[0].mxu0
        %1656 = vmatprep.mubr.f32.mxu0 0.0
        %1657 = vmatmul.mubr.f32.gmra.mrb[0].mxu0 %v1427
        %v1658 = vpop.f32.mrb[0].mxu0
        %v1659 = vadd.f32 0.0, %v1658
        %v1660 = vpop.f32.mrb[0].mxu0
        %1661 = vmatprep.mubr.f32.mxu0 0.0
        %1662 = vmatmul.mubr.f32.gmra.mrb[0].mxu0 %v1428
        %v1663 = vpop.f32.mrb[0].mxu0
        %v1664 = vadd.f32 0.0, %v1663
        %v1665 = vpop.f32.mrb[0].mxu0
        %1666 = vmatprep.mubr.f32.mxu0 0.0
        %1667 = vmatmul.mubr.f32.gmra.mrb[0].mxu0 %v1429
        %v1668 = vpop.f32.mrb[0].mxu0
        %v1669 = vadd.f32 0.0, %v1668
        %v1670 = vpop.f32.mrb[0].mxu0
        %1671 = vdwg.mxu0
        %v1672 = vadd.f32 %v1366, %v1514
        %v1673 = vadd.f32 %v1367, %v1519
        %v1674 = vadd.f32 %v1368, %v1524
        %v1675 = vadd.f32 %v1369, %v1529
        %v1676 = vadd.f32 %v1370, %v1534
        %v1677 = vadd.f32 %v1371, %v1539
        %v1678 = vadd.f32 %v1372, %v1544
        %v1679 = vadd.f32 %v1373, %v1549
        %v1680 = vadd.f32 %v1374, %v1554
        %v1681 = vadd.f32 %v1375, %v1559
        %v1682 = vadd.f32 %v1376, %v1564
        %v1683 = vadd.f32 %v1377, %v1569
        %v1684 = vadd.f32 %v1378, %v1574
        %v1685 = vadd.f32 %v1379, %v1579
        %v1686 = vadd.f32 %v1380, %v1584
        %v1687 = vadd.f32 %v1381, %v1589
        %v1688 = vadd.f32 %v1382, %v1594
        %v1689 = vadd.f32 %v1383, %v1599
        %v1690 = vadd.f32 %v1384, %v1604
        %v1691 = vadd.f32 %v1385, %v1609
        %v1692 = vadd.f32 %v1386, %v1614
        %v1693 = vadd.f32 %v1387, %v1619
        %v1694 = vadd.f32 %v1388, %v1624
        %v1695 = vadd.f32 %v1389, %v1629
        %v1696 = vadd.f32 %v1390, %v1634
        %v1697 = vadd.f32 %v1391, %v1639
        %v1698 = vadd.f32 %v1392, %v1644
        %v1699 = vadd.f32 %v1393, %v1649
        %v1700 = vadd.f32 %v1394, %v1654
        %v1701 = vadd.f32 %v1395, %v1659
        %v1702 = vadd.f32 %v1396, %v1664
        %v1703 = vadd.f32 %v1397, %v1669
        %v1704 = vld [vmem:[%s1091 + $0x2] sm:$0xff]
        %v1705 = vld [vmem:[%s1091 + $0xa] sm:$0xff]
        %v1706 = vld [vmem:[%s1091 + $0x1a] sm:$0xff]
        %v1707 = vld [vmem:[%s1091 + $0x22] sm:$0xff]
        %v1708 = vld [vmem:[%s1091 + $0x32] sm:$0xff]
        %v1709 = vld [vmem:[%s1091 + $0x3a] sm:$0xff]
        %v1710 = vld [vmem:[%s1091 + $0x4a] sm:$0xff]
        %v1711 = vld [vmem:[%s1091 + $0x52] sm:$0xff]
        %v1712 = vld [vmem:[%s1091 + $0x62] sm:$0xff]
        %v1713 = vld [vmem:[%s1091 + $0x6a] sm:$0xff]
        %v1714 = vld [vmem:[%s1091 + $0x7a] sm:$0xff]
        %v1715 = vld [vmem:[%s1091 + $0x82] sm:$0xff]
        %v1716 = vld [vmem:[%s1091 + $0x92] sm:$0xff]
        %v1717 = vld [vmem:[%s1091 + $0x9a] sm:$0xff]
        %v1718 = vld [vmem:[%s1091 + $0xaa] sm:$0xff]
        %v1719 = vld [vmem:[%s1091 + $0xb2] sm:$0xff]
        %v1720 = vld [vmem:[%s1091 + $0xc2] sm:$0xff]
        %v1721 = vld [vmem:[%s1091 + $0xca] sm:$0xff]
        %v1722 = vld [vmem:[%s1091 + $0xda] sm:$0xff]
        %v1723 = vld [vmem:[%s1091 + $0xe2] sm:$0xff]
        %v1724 = vld [vmem:[%s1091 + $0xf2] sm:$0xff]
        %v1725 = vld [vmem:[%s1091 + $0xfa] sm:$0xff]
        %v1726 = vld [vmem:[%s1091 + $0x10a] sm:$0xff]
        %v1727 = vld [vmem:[%s1091 + $0x112] sm:$0xff]
        %v1728 = vld [vmem:[%s1091 + $0x122] sm:$0xff]
        %v1729 = vld [vmem:[%s1091 + $0x12a] sm:$0xff]
        %v1730 = vld [vmem:[%s1091 + $0x13a] sm:$0xff]
        %v1731 = vld [vmem:[%s1091 + $0x142] sm:$0xff]
        %v1732 = vld [vmem:[%s1091 + $0x152] sm:$0xff]
        %v1733 = vld [vmem:[%s1091 + $0x15a] sm:$0xff]
        %v1734 = vld [vmem:[%s1091 + $0x16a] sm:$0xff]
        %v1735 = vld [vmem:[%s1091 + $0x172] sm:$0xff]
        %s1736 = scalar_lea.vmem %s1, 640
        %v1737 = vld [vmem:[%s1736] sm:$0xff]
        %v1738 = vld [vmem:[%s1736 + $0x8] sm:$0xff]
        %v1739 = vld [vmem:[%s1736 + $0x10] sm:$0xff]
        %v1740 = vld [vmem:[%s1736 + $0x18] sm:$0xff]
        %v1741 = vld [vmem:[%s1736 + $0x20] sm:$0xff]
        %v1742 = vld [vmem:[%s1736 + $0x28] sm:$0xff]
        %v1743 = vld [vmem:[%s1736 + $0x30] sm:$0xff]
        %v1744 = vld [vmem:[%s1736 + $0x38] sm:$0xff]
        %v1745 = vld [vmem:[%s1736 + $0x40] sm:$0xff]
        %v1746 = vld [vmem:[%s1736 + $0x48] sm:$0xff]
        %v1747 = vld [vmem:[%s1736 + $0x50] sm:$0xff]
        %v1748 = vld [vmem:[%s1736 + $0x58] sm:$0xff]
        %v1749 = vld [vmem:[%s1736 + $0x60] sm:$0xff]
        %v1750 = vld [vmem:[%s1736 + $0x68] sm:$0xff]
        %v1751 = vld [vmem:[%s1736 + $0x70] sm:$0xff]
        %v1752 = vld [vmem:[%s1736 + $0x78] sm:$0xff]
        %1753 = vmatprep.subr.mxu0 0.0
        %1754 = vmatpush1.msra.mxu0 %v1737
        %1755 = vmatprep.subr.mxu0 0.0
        %1756 = vmatpush1.msra.mxu0 %v1738
        %1757 = vmatprep.subr.mxu0 0.0
        %1758 = vmatpush1.msra.mxu0 %v1739
        %1759 = vmatprep.subr.mxu0 0.0
        %1760 = vmatpush1.msra.mxu0 %v1740
        %1761 = vmatprep.subr.mxu0 0.0
        %1762 = vmatpush1.msra.mxu0 %v1741
        %1763 = vmatprep.subr.mxu0 0.0
        %1764 = vmatpush1.msra.mxu0 %v1742
        %1765 = vmatprep.subr.mxu0 0.0
        %1766 = vmatpush1.msra.mxu0 %v1743
        %1767 = vmatprep.subr.mxu0 0.0
        %1768 = vmatpush1.msra.mxu0 %v1744
        %1769 = vmatprep.subr.mxu0 0.0
        %1770 = vmatpush1.msra.mxu0 %v1745
        %1771 = vmatprep.subr.mxu0 0.0
        %1772 = vmatpush1.msra.mxu0 %v1746
        %1773 = vmatprep.subr.mxu0 0.0
        %1774 = vmatpush1.msra.mxu0 %v1747
        %1775 = vmatprep.subr.mxu0 0.0
        %1776 = vmatpush1.msra.mxu0 %v1748
        %1777 = vmatprep.subr.mxu0 0.0
        %1778 = vmatpush1.msra.mxu0 %v1749
        %1779 = vmatprep.subr.mxu0 0.0
        %1780 = vmatpush1.msra.mxu0 %v1750
        %1781 = vmatprep.subr.mxu0 0.0
        %1782 = vmatpush1.msra.mxu0 %v1751
        %1783 = vmatprep.subr.mxu0 0.0
        %1784 = vmatpush1.msra.mxu0 %v1752
        %1785 = vmatprep.subr.mxu0 0.0
        %1786 = vmatpush1.msra.mxu0 0.0
        %1787 = vmatprep.subr.mxu0 0.0
        %1788 = vmatpush1.msra.mxu0 0.0
        %1789 = vmatprep.subr.mxu0 0.0
        %1790 = vmatpush1.msra.mxu0 0.0
        %1791 = vmatprep.subr.mxu0 0.0
        %1792 = vmatpush1.msra.mxu0 0.0
        %1793 = vmatprep.subr.mxu0 0.0
        %1794 = vmatpush1.msra.mxu0 0.0
        %1795 = vmatprep.subr.mxu0 0.0
        %1796 = vmatpush1.msra.mxu0 0.0
        %1797 = vmatprep.subr.mxu0 0.0
        %1798 = vmatpush1.msra.mxu0 0.0
        %1799 = vmatprep.subr.mxu0 0.0
        %1800 = vmatpush1.msra.mxu0 0.0
        %1801 = vmatprep.subr.mxu0 0.0
        %1802 = vmatpush1.msra.mxu0 0.0
        %1803 = vmatprep.subr.mxu0 0.0
        %1804 = vmatpush1.msra.mxu0 0.0
        %1805 = vmatprep.subr.mxu0 0.0
        %1806 = vmatpush1.msra.mxu0 0.0
        %1807 = vmatprep.subr.mxu0 0.0
        %1808 = vmatpush1.msra.mxu0 0.0
        %1809 = vmatprep.subr.mxu0 0.0
        %1810 = vmatpush1.msra.mxu0 0.0
        %1811 = vmatprep.subr.mxu0 0.0
        %1812 = vmatpush1.msra.mxu0 0.0
        %1813 = vmatprep.subr.mxu0 0.0
        %1814 = vmatpush1.msra.mxu0 0.0
        %1815 = vmatprep.subr.mxu0 0.0
        %1816 = vmatpush1.msra.mxu0 0.0
        %1817 = vmatprep.mubr.f32.mxu0 0.0
        %1818 = vmatmul.mubr.f32.gmra.mrb[0].mxu0 %v1704
        %v1819 = vpop.f32.mrb[0].mxu0
        %v1820 = vadd.f32 0.0, %v1819
        %v1821 = vpop.f32.mrb[0].mxu0
        %1822 = vmatprep.mubr.f32.mxu0 0.0
        %1823 = vmatmul.mubr.f32.gmra.mrb[0].mxu0 %v1705
        %v1824 = vpop.f32.mrb[0].mxu0
        %v1825 = vadd.f32 0.0, %v1824
        %v1826 = vpop.f32.mrb[0].mxu0
        %1827 = vmatprep.mubr.f32.mxu0 0.0
        %1828 = vmatmul.mubr.f32.gmra.mrb[0].mxu0 %v1706
        %v1829 = vpop.f32.mrb[0].mxu0
        %v1830 = vadd.f32 0.0, %v1829
        %v1831 = vpop.f32.mrb[0].mxu0
        %1832 = vmatprep.mubr.f32.mxu0 0.0
        %1833 = vmatmul.mubr.f32.gmra.mrb[0].mxu0 %v1707
        %v1834 = vpop.f32.mrb[0].mxu0
        %v1835 = vadd.f32 0.0, %v1834
        %v1836 = vpop.f32.mrb[0].mxu0
        %1837 = vmatprep.mubr.f32.mxu0 0.0
        %1838 = vmatmul.mubr.f32.gmra.mrb[0].mxu0 %v1708
        %v1839 = vpop.f32.mrb[0].mxu0
        %v1840 = vadd.f32 0.0, %v1839
        %v1841 = vpop.f32.mrb[0].mxu0
        %1842 = vmatprep.mubr.f32.mxu0 0.0
        %1843 = vmatmul.mubr.f32.gmra.mrb[0].mxu0 %v1709
        %v1844 = vpop.f32.mrb[0].mxu0
        %v1845 = vadd.f32 0.0, %v1844
        %v1846 = vpop.f32.mrb[0].mxu0
        %1847 = vmatprep.mubr.f32.mxu0 0.0
        %1848 = vmatmul.mubr.f32.gmra.mrb[0].mxu0 %v1710
        %v1849 = vpop.f32.mrb[0].mxu0
        %v1850 = vadd.f32 0.0, %v1849
        %v1851 = vpop.f32.mrb[0].mxu0
        %1852 = vmatprep.mubr.f32.mxu0 0.0
        %1853 = vmatmul.mubr.f32.gmra.mrb[0].mxu0 %v1711
        %v1854 = vpop.f32.mrb[0].mxu0
        %v1855 = vadd.f32 0.0, %v1854
        %v1856 = vpop.f32.mrb[0].mxu0
        %1857 = vmatprep.mubr.f32.mxu0 0.0
        %1858 = vmatmul.mubr.f32.gmra.mrb[0].mxu0 %v1712
        %v1859 = vpop.f32.mrb[0].mxu0
        %v1860 = vadd.f32 0.0, %v1859
        %v1861 = vpop.f32.mrb[0].mxu0
        %1862 = vmatprep.mubr.f32.mxu0 0.0
        %1863 = vmatmul.mubr.f32.gmra.mrb[0].mxu0 %v1713
        %v1864 = vpop.f32.mrb[0].mxu0
        %v1865 = vadd.f32 0.0, %v1864
        %v1866 = vpop.f32.mrb[0].mxu0
        %1867 = vmatprep.mubr.f32.mxu0 0.0
        %1868 = vmatmul.mubr.f32.gmra.mrb[0].mxu0 %v1714
        %v1869 = vpop.f32.mrb[0].mxu0
        %v1870 = vadd.f32 0.0, %v1869
        %v1871 = vpop.f32.mrb[0].mxu0
        %1872 = vmatprep.mubr.f32.mxu0 0.0
        %1873 = vmatmul.mubr.f32.gmra.mrb[0].mxu0 %v1715
        %v1874 = vpop.f32.mrb[0].mxu0
        %v1875 = vadd.f32 0.0, %v1874
        %v1876 = vpop.f32.mrb[0].mxu0
        %1877 = vmatprep.mubr.f32.mxu0 0.0
        %1878 = vmatmul.mubr.f32.gmra.mrb[0].mxu0 %v1716
        %v1879 = vpop.f32.mrb[0].mxu0
        %v1880 = vadd.f32 0.0, %v1879
        %v1881 = vpop.f32.mrb[0].mxu0
        %1882 = vmatprep.mubr.f32.mxu0 0.0
        %1883 = vmatmul.mubr.f32.gmra.mrb[0].mxu0 %v1717
        %v1884 = vpop.f32.mrb[0].mxu0
        %v1885 = vadd.f32 0.0, %v1884
        %v1886 = vpop.f32.mrb[0].mxu0
        %1887 = vmatprep.mubr.f32.mxu0 0.0
        %1888 = vmatmul.mubr.f32.gmra.mrb[0].mxu0 %v1718
        %v1889 = vpop.f32.mrb[0].mxu0
        %v1890 = vadd.f32 0.0, %v1889
        %v1891 = vpop.f32.mrb[0].mxu0
        %1892 = vmatprep.mubr.f32.mxu0 0.0
        %1893 = vmatmul.mubr.f32.gmra.mrb[0].mxu0 %v1719
        %v1894 = vpop.f32.mrb[0].mxu0
        %v1895 = vadd.f32 0.0, %v1894
        %v1896 = vpop.f32.mrb[0].mxu0
        %1897 = vmatprep.mubr.f32.mxu0 0.0
        %1898 = vmatmul.mubr.f32.gmra.mrb[0].mxu0 %v1720
        %v1899 = vpop.f32.mrb[0].mxu0
        %v1900 = vadd.f32 0.0, %v1899
        %v1901 = vpop.f32.mrb[0].mxu0
        %1902 = vmatprep.mubr.f32.mxu0 0.0
        %1903 = vmatmul.mubr.f32.gmra.mrb[0].mxu0 %v1721
        %v1904 = vpop.f32.mrb[0].mxu0
        %v1905 = vadd.f32 0.0, %v1904
        %v1906 = vpop.f32.mrb[0].mxu0
        %1907 = vmatprep.mubr.f32.mxu0 0.0
        %1908 = vmatmul.mubr.f32.gmra.mrb[0].mxu0 %v1722
        %v1909 = vpop.f32.mrb[0].mxu0
        %v1910 = vadd.f32 0.0, %v1909
        %v1911 = vpop.f32.mrb[0].mxu0
        %1912 = vmatprep.mubr.f32.mxu0 0.0
        %1913 = vmatmul.mubr.f32.gmra.mrb[0].mxu0 %v1723
        %v1914 = vpop.f32.mrb[0].mxu0
        %v1915 = vadd.f32 0.0, %v1914
        %v1916 = vpop.f32.mrb[0].mxu0
        %1917 = vmatprep.mubr.f32.mxu0 0.0
        %1918 = vmatmul.mubr.f32.gmra.mrb[0].mxu0 %v1724
        %v1919 = vpop.f32.mrb[0].mxu0
        %v1920 = vadd.f32 0.0, %v1919
        %v1921 = vpop.f32.mrb[0].mxu0
        %1922 = vmatprep.mubr.f32.mxu0 0.0
        %1923 = vmatmul.mubr.f32.gmra.mrb[0].mxu0 %v1725
        %v1924 = vpop.f32.mrb[0].mxu0
        %v1925 = vadd.f32 0.0, %v1924
        %v1926 = vpop.f32.mrb[0].mxu0
        %1927 = vmatprep.mubr.f32.mxu0 0.0
        %1928 = vmatmul.mubr.f32.gmra.mrb[0].mxu0 %v1726
        %v1929 = vpop.f32.mrb[0].mxu0
        %v1930 = vadd.f32 0.0, %v1929
        %v1931 = vpop.f32.mrb[0].mxu0
        %1932 = vmatprep.mubr.f32.mxu0 0.0
        %1933 = vmatmul.mubr.f32.gmra.mrb[0].mxu0 %v1727
        %v1934 = vpop.f32.mrb[0].mxu0
        %v1935 = vadd.f32 0.0, %v1934
        %v1936 = vpop.f32.mrb[0].mxu0
        %1937 = vmatprep.mubr.f32.mxu0 0.0
        %1938 = vmatmul.mubr.f32.gmra.mrb[0].mxu0 %v1728
        %v1939 = vpop.f32.mrb[0].mxu0
        %v1940 = vadd.f32 0.0, %v1939
        %v1941 = vpop.f32.mrb[0].mxu0
        %1942 = vmatprep.mubr.f32.mxu0 0.0
        %1943 = vmatmul.mubr.f32.gmra.mrb[0].mxu0 %v1729
        %v1944 = vpop.f32.mrb[0].mxu0
        %v1945 = vadd.f32 0.0, %v1944
        %v1946 = vpop.f32.mrb[0].mxu0
        %1947 = vmatprep.mubr.f32.mxu0 0.0
        %1948 = vmatmul.mubr.f32.gmra.mrb[0].mxu0 %v1730
        %v1949 = vpop.f32.mrb[0].mxu0
        %v1950 = vadd.f32 0.0, %v1949
        %v1951 = vpop.f32.mrb[0].mxu0
        %1952 = vmatprep.mubr.f32.mxu0 0.0
        %1953 = vmatmul.mubr.f32.gmra.mrb[0].mxu0 %v1731
        %v1954 = vpop.f32.mrb[0].mxu0
        %v1955 = vadd.f32 0.0, %v1954
        %v1956 = vpop.f32.mrb[0].mxu0
        %1957 = vmatprep.mubr.f32.mxu0 0.0
        %1958 = vmatmul.mubr.f32.gmra.mrb[0].mxu0 %v1732
        %v1959 = vpop.f32.mrb[0].mxu0
        %v1960 = vadd.f32 0.0, %v1959
        %v1961 = vpop.f32.mrb[0].mxu0
        %1962 = vmatprep.mubr.f32.mxu0 0.0
        %1963 = vmatmul.mubr.f32.gmra.mrb[0].mxu0 %v1733
        %v1964 = vpop.f32.mrb[0].mxu0
        %v1965 = vadd.f32 0.0, %v1964
        %v1966 = vpop.f32.mrb[0].mxu0
        %1967 = vmatprep.mubr.f32.mxu0 0.0
        %1968 = vmatmul.mubr.f32.gmra.mrb[0].mxu0 %v1734
        %v1969 = vpop.f32.mrb[0].mxu0
        %v1970 = vadd.f32 0.0, %v1969
        %v1971 = vpop.f32.mrb[0].mxu0
        %1972 = vmatprep.mubr.f32.mxu0 0.0
        %1973 = vmatmul.mubr.f32.gmra.mrb[0].mxu0 %v1735
        %v1974 = vpop.f32.mrb[0].mxu0
        %v1975 = vadd.f32 0.0, %v1974
        %v1976 = vpop.f32.mrb[0].mxu0
        %1977 = vdwg.mxu0
        %v1978 = vadd.f32 %v1672, %v1820
        %v1979 = vadd.f32 %v1673, %v1825
        %v1980 = vadd.f32 %v1674, %v1830
        %v1981 = vadd.f32 %v1675, %v1835
        %v1982 = vadd.f32 %v1676, %v1840
        %v1983 = vadd.f32 %v1677, %v1845
        %v1984 = vadd.f32 %v1678, %v1850
        %v1985 = vadd.f32 %v1679, %v1855
        %v1986 = vadd.f32 %v1680, %v1860
        %v1987 = vadd.f32 %v1681, %v1865
        %v1988 = vadd.f32 %v1682, %v1870
        %v1989 = vadd.f32 %v1683, %v1875
        %v1990 = vadd.f32 %v1684, %v1880
        %v1991 = vadd.f32 %v1685, %v1885
        %v1992 = vadd.f32 %v1686, %v1890
        %v1993 = vadd.f32 %v1687, %v1895
        %v1994 = vadd.f32 %v1688, %v1900
        %v1995 = vadd.f32 %v1689, %v1905
        %v1996 = vadd.f32 %v1690, %v1910
        %v1997 = vadd.f32 %v1691, %v1915
        %v1998 = vadd.f32 %v1692, %v1920
        %v1999 = vadd.f32 %v1693, %v1925
        %v2000 = vadd.f32 %v1694, %v1930
        %v2001 = vadd.f32 %v1695, %v1935
        %v2002 = vadd.f32 %v1696, %v1940
        %v2003 = vadd.f32 %v1697, %v1945
        %v2004 = vadd.f32 %v1698, %v1950
        %v2005 = vadd.f32 %v1699, %v1955
        %v2006 = vadd.f32 %v1700, %v1960
        %v2007 = vadd.f32 %v1701, %v1965
        %v2008 = vadd.f32 %v1702, %v1970
        %v2009 = vadd.f32 %v1703, %v1975
        %s2010 = scalar_lea.vmem %s237, 48
        %v2011 = vld [vmem:[%s2010] sm:$0xff]
        %v2012 = vld [vmem:[%s2010 + $0x8] sm:$0xff]
        %v2013 = vld [vmem:[%s2010 + $0x18] sm:$0xff]
        %v2014 = vld [vmem:[%s2010 + $0x20] sm:$0xff]
        %v2015 = vld [vmem:[%s2010 + $0x30] sm:$0xff]
        %v2016 = vld [vmem:[%s2010 + $0x38] sm:$0xff]
        %v2017 = vld [vmem:[%s2010 + $0x48] sm:$0xff]
        %v2018 = vld [vmem:[%s2010 + $0x50] sm:$0xff]
        %v2019 = vld [vmem:[%s2010 + $0x60] sm:$0xff]
        %v2020 = vld [vmem:[%s2010 + $0x68] sm:$0xff]
        %v2021 = vld [vmem:[%s2010 + $0x78] sm:$0xff]
        %v2022 = vld [vmem:[%s2010 + $0x80] sm:$0xff]
        %v2023 = vld [vmem:[%s2010 + $0x90] sm:$0xff]
        %v2024 = vld [vmem:[%s2010 + $0x98] sm:$0xff]
        %v2025 = vld [vmem:[%s2010 + $0xa8] sm:$0xff]
        %v2026 = vld [vmem:[%s2010 + $0xb0] sm:$0xff]
        %v2027 = vld [vmem:[%s2010 + $0xc0] sm:$0xff]
        %v2028 = vld [vmem:[%s2010 + $0xc8] sm:$0xff]
        %v2029 = vld [vmem:[%s2010 + $0xd8] sm:$0xff]
        %v2030 = vld [vmem:[%s2010 + $0xe0] sm:$0xff]
        %v2031 = vld [vmem:[%s2010 + $0xf0] sm:$0xff]
        %v2032 = vld [vmem:[%s2010 + $0xf8] sm:$0xff]
        %v2033 = vld [vmem:[%s2010 + $0x108] sm:$0xff]
        %v2034 = vld [vmem:[%s2010 + $0x110] sm:$0xff]
        %v2035 = vld [vmem:[%s2010 + $0x120] sm:$0xff]
        %v2036 = vld [vmem:[%s2010 + $0x128] sm:$0xff]
        %v2037 = vld [vmem:[%s2010 + $0x138] sm:$0xff]
        %v2038 = vld [vmem:[%s2010 + $0x140] sm:$0xff]
        %v2039 = vld [vmem:[%s2010 + $0x150] sm:$0xff]
        %v2040 = vld [vmem:[%s2010 + $0x158] sm:$0xff]
        %v2041 = vld [vmem:[%s2010 + $0x168] sm:$0xff]
        %v2042 = vld [vmem:[%s2010 + $0x170] sm:$0xff]
        %s2043 = scalar_lea.vmem %s1, 768
        %v2044 = vld [vmem:[%s2043] sm:$0xff]
        %v2045 = vld [vmem:[%s2043 + $0x8] sm:$0xff]
        %v2046 = vld [vmem:[%s2043 + $0x10] sm:$0xff]
        %v2047 = vld [vmem:[%s2043 + $0x18] sm:$0xff]
        %v2048 = vld [vmem:[%s2043 + $0x20] sm:$0xff]
        %v2049 = vld [vmem:[%s2043 + $0x28] sm:$0xff]
        %v2050 = vld [vmem:[%s2043 + $0x30] sm:$0xff]
        %v2051 = vld [vmem:[%s2043 + $0x38] sm:$0xff]
        %v2052 = vld [vmem:[%s2043 + $0x40] sm:$0xff]
        %v2053 = vld [vmem:[%s2043 + $0x48] sm:$0xff]
        %v2054 = vld [vmem:[%s2043 + $0x50] sm:$0xff]
        %v2055 = vld [vmem:[%s2043 + $0x58] sm:$0xff]
        %v2056 = vld [vmem:[%s2043 + $0x60] sm:$0xff]
        %v2057 = vld [vmem:[%s2043 + $0x68] sm:$0xff]
        %v2058 = vld [vmem:[%s2043 + $0x70] sm:$0xff]
        %v2059 = vld [vmem:[%s2043 + $0x78] sm:$0xff]
        %2060 = vmatprep.subr.mxu0 0.0
        %2061 = vmatpush1.msra.mxu0 %v2044
        %2062 = vmatprep.subr.mxu0 0.0
        %2063 = vmatpush1.msra.mxu0 %v2045
        %2064 = vmatprep.subr.mxu0 0.0
        %2065 = vmatpush1.msra.mxu0 %v2046
        %2066 = vmatprep.subr.mxu0 0.0
        %2067 = vmatpush1.msra.mxu0 %v2047
        %2068 = vmatprep.subr.mxu0 0.0
        %2069 = vmatpush1.msra.mxu0 %v2048
        %2070 = vmatprep.subr.mxu0 0.0
        %2071 = vmatpush1.msra.mxu0 %v2049
        %2072 = vmatprep.subr.mxu0 0.0
        %2073 = vmatpush1.msra.mxu0 %v2050
        %2074 = vmatprep.subr.mxu0 0.0
        %2075 = vmatpush1.msra.mxu0 %v2051
        %2076 = vmatprep.subr.mxu0 0.0
        %2077 = vmatpush1.msra.mxu0 %v2052
        %2078 = vmatprep.subr.mxu0 0.0
        %2079 = vmatpush1.msra.mxu0 %v2053
        %2080 = vmatprep.subr.mxu0 0.0
        %2081 = vmatpush1.msra.mxu0 %v2054
        %2082 = vmatprep.subr.mxu0 0.0
        %2083 = vmatpush1.msra.mxu0 %v2055
        %2084 = vmatprep.subr.mxu0 0.0
        %2085 = vmatpush1.msra.mxu0 %v2056
        %2086 = vmatprep.subr.mxu0 0.0
        %2087 = vmatpush1.msra.mxu0 %v2057
        %2088 = vmatprep.subr.mxu0 0.0
        %2089 = vmatpush1.msra.mxu0 %v2058
        %2090 = vmatprep.subr.mxu0 0.0
        %2091 = vmatpush1.msra.mxu0 %v2059
        %2092 = vmatprep.subr.mxu0 0.0
        %2093 = vmatpush1.msra.mxu0 0.0
        %2094 = vmatprep.subr.mxu0 0.0
        %2095 = vmatpush1.msra.mxu0 0.0
        %2096 = vmatprep.subr.mxu0 0.0
        %2097 = vmatpush1.msra.mxu0 0.0
        %2098 = vmatprep.subr.mxu0 0.0
        %2099 = vmatpush1.msra.mxu0 0.0
        %2100 = vmatprep.subr.mxu0 0.0
        %2101 = vmatpush1.msra.mxu0 0.0
        %2102 = vmatprep.subr.mxu0 0.0
        %2103 = vmatpush1.msra.mxu0 0.0
        %2104 = vmatprep.subr.mxu0 0.0
        %2105 = vmatpush1.msra.mxu0 0.0
        %2106 = vmatprep.subr.mxu0 0.0
        %2107 = vmatpush1.msra.mxu0 0.0
        %2108 = vmatprep.subr.mxu0 0.0
        %2109 = vmatpush1.msra.mxu0 0.0
        %2110 = vmatprep.subr.mxu0 0.0
        %2111 = vmatpush1.msra.mxu0 0.0
        %2112 = vmatprep.subr.mxu0 0.0
        %2113 = vmatpush1.msra.mxu0 0.0
        %2114 = vmatprep.subr.mxu0 0.0
        %2115 = vmatpush1.msra.mxu0 0.0
        %2116 = vmatprep.subr.mxu0 0.0
        %2117 = vmatpush1.msra.mxu0 0.0
        %2118 = vmatprep.subr.mxu0 0.0
        %2119 = vmatpush1.msra.mxu0 0.0
        %2120 = vmatprep.subr.mxu0 0.0
        %2121 = vmatpush1.msra.mxu0 0.0
        %2122 = vmatprep.subr.mxu0 0.0
        %2123 = vmatpush1.msra.mxu0 0.0
        %2124 = vmatprep.mubr.f32.mxu0 0.0
        %2125 = vmatmul.mubr.f32.gmra.mrb[0].mxu0 %v2011
        %v2126 = vpop.f32.mrb[0].mxu0
        %v2127 = vadd.f32 0.0, %v2126
        %v2128 = vpop.f32.mrb[0].mxu0
        %2129 = vmatprep.mubr.f32.mxu0 0.0
        %2130 = vmatmul.mubr.f32.gmra.mrb[0].mxu0 %v2012
        %v2131 = vpop.f32.mrb[0].mxu0
        %v2132 = vadd.f32 0.0, %v2131
        %v2133 = vpop.f32.mrb[0].mxu0
        %2134 = vmatprep.mubr.f32.mxu0 0.0
        %2135 = vmatmul.mubr.f32.gmra.mrb[0].mxu0 %v2013
        %v2136 = vpop.f32.mrb[0].mxu0
        %v2137 = vadd.f32 0.0, %v2136
        %v2138 = vpop.f32.mrb[0].mxu0
        %2139 = vmatprep.mubr.f32.mxu0 0.0
        %2140 = vmatmul.mubr.f32.gmra.mrb[0].mxu0 %v2014
        %v2141 = vpop.f32.mrb[0].mxu0
        %v2142 = vadd.f32 0.0, %v2141
        %v2143 = vpop.f32.mrb[0].mxu0
        %2144 = vmatprep.mubr.f32.mxu0 0.0
        %2145 = vmatmul.mubr.f32.gmra.mrb[0].mxu0 %v2015
        %v2146 = vpop.f32.mrb[0].mxu0
        %v2147 = vadd.f32 0.0, %v2146
        %v2148 = vpop.f32.mrb[0].mxu0
        %2149 = vmatprep.mubr.f32.mxu0 0.0
        %2150 = vmatmul.mubr.f32.gmra.mrb[0].mxu0 %v2016
        %v2151 = vpop.f32.mrb[0].mxu0
        %v2152 = vadd.f32 0.0, %v2151
        %v2153 = vpop.f32.mrb[0].mxu0
        %2154 = vmatprep.mubr.f32.mxu0 0.0
        %2155 = vmatmul.mubr.f32.gmra.mrb[0].mxu0 %v2017
        %v2156 = vpop.f32.mrb[0].mxu0
        %v2157 = vadd.f32 0.0, %v2156
        %v2158 = vpop.f32.mrb[0].mxu0
        %2159 = vmatprep.mubr.f32.mxu0 0.0
        %2160 = vmatmul.mubr.f32.gmra.mrb[0].mxu0 %v2018
        %v2161 = vpop.f32.mrb[0].mxu0
        %v2162 = vadd.f32 0.0, %v2161
        %v2163 = vpop.f32.mrb[0].mxu0
        %2164 = vmatprep.mubr.f32.mxu0 0.0
        %2165 = vmatmul.mubr.f32.gmra.mrb[0].mxu0 %v2019
        %v2166 = vpop.f32.mrb[0].mxu0
        %v2167 = vadd.f32 0.0, %v2166
        %v2168 = vpop.f32.mrb[0].mxu0
        %2169 = vmatprep.mubr.f32.mxu0 0.0
        %2170 = vmatmul.mubr.f32.gmra.mrb[0].mxu0 %v2020
        %v2171 = vpop.f32.mrb[0].mxu0
        %v2172 = vadd.f32 0.0, %v2171
        %v2173 = vpop.f32.mrb[0].mxu0
        %2174 = vmatprep.mubr.f32.mxu0 0.0
        %2175 = vmatmul.mubr.f32.gmra.mrb[0].mxu0 %v2021
        %v2176 = vpop.f32.mrb[0].mxu0
        %v2177 = vadd.f32 0.0, %v2176
        %v2178 = vpop.f32.mrb[0].mxu0
        %2179 = vmatprep.mubr.f32.mxu0 0.0
        %2180 = vmatmul.mubr.f32.gmra.mrb[0].mxu0 %v2022
        %v2181 = vpop.f32.mrb[0].mxu0
        %v2182 = vadd.f32 0.0, %v2181
        %v2183 = vpop.f32.mrb[0].mxu0
        %2184 = vmatprep.mubr.f32.mxu0 0.0
        %2185 = vmatmul.mubr.f32.gmra.mrb[0].mxu0 %v2023
        %v2186 = vpop.f32.mrb[0].mxu0
        %v2187 = vadd.f32 0.0, %v2186
        %v2188 = vpop.f32.mrb[0].mxu0
        %2189 = vmatprep.mubr.f32.mxu0 0.0
        %2190 = vmatmul.mubr.f32.gmra.mrb[0].mxu0 %v2024
        %v2191 = vpop.f32.mrb[0].mxu0
        %v2192 = vadd.f32 0.0, %v2191
        %v2193 = vpop.f32.mrb[0].mxu0
        %2194 = vmatprep.mubr.f32.mxu0 0.0
        %2195 = vmatmul.mubr.f32.gmra.mrb[0].mxu0 %v2025
        %v2196 = vpop.f32.mrb[0].mxu0
        %v2197 = vadd.f32 0.0, %v2196
        %v2198 = vpop.f32.mrb[0].mxu0
        %2199 = vmatprep.mubr.f32.mxu0 0.0
        %2200 = vmatmul.mubr.f32.gmra.mrb[0].mxu0 %v2026
        %v2201 = vpop.f32.mrb[0].mxu0
        %v2202 = vadd.f32 0.0, %v2201
        %v2203 = vpop.f32.mrb[0].mxu0
        %2204 = vmatprep.mubr.f32.mxu0 0.0
        %2205 = vmatmul.mubr.f32.gmra.mrb[0].mxu0 %v2027
        %v2206 = vpop.f32.mrb[0].mxu0
        %v2207 = vadd.f32 0.0, %v2206
        %v2208 = vpop.f32.mrb[0].mxu0
        %2209 = vmatprep.mubr.f32.mxu0 0.0
        %2210 = vmatmul.mubr.f32.gmra.mrb[0].mxu0 %v2028
        %v2211 = vpop.f32.mrb[0].mxu0
        %v2212 = vadd.f32 0.0, %v2211
        %v2213 = vpop.f32.mrb[0].mxu0
        %2214 = vmatprep.mubr.f32.mxu0 0.0
        %2215 = vmatmul.mubr.f32.gmra.mrb[0].mxu0 %v2029
        %v2216 = vpop.f32.mrb[0].mxu0
        %v2217 = vadd.f32 0.0, %v2216
        %v2218 = vpop.f32.mrb[0].mxu0
        %2219 = vmatprep.mubr.f32.mxu0 0.0
        %2220 = vmatmul.mubr.f32.gmra.mrb[0].mxu0 %v2030
        %v2221 = vpop.f32.mrb[0].mxu0
        %v2222 = vadd.f32 0.0, %v2221
        %v2223 = vpop.f32.mrb[0].mxu0
        %2224 = vmatprep.mubr.f32.mxu0 0.0
        %2225 = vmatmul.mubr.f32.gmra.mrb[0].mxu0 %v2031
        %v2226 = vpop.f32.mrb[0].mxu0
        %v2227 = vadd.f32 0.0, %v2226
        %v2228 = vpop.f32.mrb[0].mxu0
        %2229 = vmatprep.mubr.f32.mxu0 0.0
        %2230 = vmatmul.mubr.f32.gmra.mrb[0].mxu0 %v2032
        %v2231 = vpop.f32.mrb[0].mxu0
        %v2232 = vadd.f32 0.0, %v2231
        %v2233 = vpop.f32.mrb[0].mxu0
        %2234 = vmatprep.mubr.f32.mxu0 0.0
        %2235 = vmatmul.mubr.f32.gmra.mrb[0].mxu0 %v2033
        %v2236 = vpop.f32.mrb[0].mxu0
        %v2237 = vadd.f32 0.0, %v2236
        %v2238 = vpop.f32.mrb[0].mxu0
        %2239 = vmatprep.mubr.f32.mxu0 0.0
        %2240 = vmatmul.mubr.f32.gmra.mrb[0].mxu0 %v2034
        %v2241 = vpop.f32.mrb[0].mxu0
        %v2242 = vadd.f32 0.0, %v2241
        %v2243 = vpop.f32.mrb[0].mxu0
        %2244 = vmatprep.mubr.f32.mxu0 0.0
        %2245 = vmatmul.mubr.f32.gmra.mrb[0].mxu0 %v2035
        %v2246 = vpop.f32.mrb[0].mxu0
        %v2247 = vadd.f32 0.0, %v2246
        %v2248 = vpop.f32.mrb[0].mxu0
        %2249 = vmatprep.mubr.f32.mxu0 0.0
        %2250 = vmatmul.mubr.f32.gmra.mrb[0].mxu0 %v2036
        %v2251 = vpop.f32.mrb[0].mxu0
        %v2252 = vadd.f32 0.0, %v2251
        %v2253 = vpop.f32.mrb[0].mxu0
        %2254 = vmatprep.mubr.f32.mxu0 0.0
        %2255 = vmatmul.mubr.f32.gmra.mrb[0].mxu0 %v2037
        %v2256 = vpop.f32.mrb[0].mxu0
        %v2257 = vadd.f32 0.0, %v2256
        %v2258 = vpop.f32.mrb[0].mxu0
        %2259 = vmatprep.mubr.f32.mxu0 0.0
        %2260 = vmatmul.mubr.f32.gmra.mrb[0].mxu0 %v2038
        %v2261 = vpop.f32.mrb[0].mxu0
        %v2262 = vadd.f32 0.0, %v2261
        %v2263 = vpop.f32.mrb[0].mxu0
        %2264 = vmatprep.mubr.f32.mxu0 0.0
        %2265 = vmatmul.mubr.f32.gmra.mrb[0].mxu0 %v2039
        %v2266 = vpop.f32.mrb[0].mxu0
        %v2267 = vadd.f32 0.0, %v2266
        %v2268 = vpop.f32.mrb[0].mxu0
        %2269 = vmatprep.mubr.f32.mxu0 0.0
        %2270 = vmatmul.mubr.f32.gmra.mrb[0].mxu0 %v2040
        %v2271 = vpop.f32.mrb[0].mxu0
        %v2272 = vadd.f32 0.0, %v2271
        %v2273 = vpop.f32.mrb[0].mxu0
        %2274 = vmatprep.mubr.f32.mxu0 0.0
        %2275 = vmatmul.mubr.f32.gmra.mrb[0].mxu0 %v2041
        %v2276 = vpop.f32.mrb[0].mxu0
        %v2277 = vadd.f32 0.0, %v2276
        %v2278 = vpop.f32.mrb[0].mxu0
        %2279 = vmatprep.mubr.f32.mxu0 0.0
        %2280 = vmatmul.mubr.f32.gmra.mrb[0].mxu0 %v2042
        %v2281 = vpop.f32.mrb[0].mxu0
        %v2282 = vadd.f32 0.0, %v2281
        %v2283 = vpop.f32.mrb[0].mxu0
        %2284 = vdwg.mxu0
        %v2285 = vadd.f32 %v1978, %v2127
        %v2286 = vadd.f32 %v1979, %v2132
        %v2287 = vadd.f32 %v1980, %v2137
        %v2288 = vadd.f32 %v1981, %v2142
        %v2289 = vadd.f32 %v1982, %v2147
        %v2290 = vadd.f32 %v1983, %v2152
        %v2291 = vadd.f32 %v1984, %v2157
        %v2292 = vadd.f32 %v1985, %v2162
        %v2293 = vadd.f32 %v1986, %v2167
        %v2294 = vadd.f32 %v1987, %v2172
        %v2295 = vadd.f32 %v1988, %v2177
        %v2296 = vadd.f32 %v1989, %v2182
        %v2297 = vadd.f32 %v1990, %v2187
        %v2298 = vadd.f32 %v1991, %v2192
        %v2299 = vadd.f32 %v1992, %v2197
        %v2300 = vadd.f32 %v1993, %v2202
        %v2301 = vadd.f32 %v1994, %v2207
        %v2302 = vadd.f32 %v1995, %v2212
        %v2303 = vadd.f32 %v1996, %v2217
        %v2304 = vadd.f32 %v1997, %v2222
        %v2305 = vadd.f32 %v1998, %v2227
        %v2306 = vadd.f32 %v1999, %v2232
        %v2307 = vadd.f32 %v2000, %v2237
        %v2308 = vadd.f32 %v2001, %v2242
        %v2309 = vadd.f32 %v2002, %v2247
        %v2310 = vadd.f32 %v2003, %v2252
        %v2311 = vadd.f32 %v2004, %v2257
        %v2312 = vadd.f32 %v2005, %v2262
        %v2313 = vadd.f32 %v2006, %v2267
        %v2314 = vadd.f32 %v2007, %v2272
        %v2315 = vadd.f32 %v2008, %v2277
        %v2316 = vadd.f32 %v2009, %v2282
        %v2317 = vld [vmem:[%s2010 + $0x1] sm:$0xff]
        %v2318 = vld [vmem:[%s2010 + $0x9] sm:$0xff]
        %v2319 = vld [vmem:[%s2010 + $0x19] sm:$0xff]
        %v2320 = vld [vmem:[%s2010 + $0x21] sm:$0xff]
        %v2321 = vld [vmem:[%s2010 + $0x31] sm:$0xff]
        %v2322 = vld [vmem:[%s2010 + $0x39] sm:$0xff]
        %v2323 = vld [vmem:[%s2010 + $0x49] sm:$0xff]
        %v2324 = vld [vmem:[%s2010 + $0x51] sm:$0xff]
        %v2325 = vld [vmem:[%s2010 + $0x61] sm:$0xff]
        %v2326 = vld [vmem:[%s2010 + $0x69] sm:$0xff]
        %v2327 = vld [vmem:[%s2010 + $0x79] sm:$0xff]
        %v2328 = vld [vmem:[%s2010 + $0x81] sm:$0xff]
        %v2329 = vld [vmem:[%s2010 + $0x91] sm:$0xff]
        %v2330 = vld [vmem:[%s2010 + $0x99] sm:$0xff]
        %v2331 = vld [vmem:[%s2010 + $0xa9] sm:$0xff]
        %v2332 = vld [vmem:[%s2010 + $0xb1] sm:$0xff]
        %v2333 = vld [vmem:[%s2010 + $0xc1] sm:$0xff]
        %v2334 = vld [vmem:[%s2010 + $0xc9] sm:$0xff]
        %v2335 = vld [vmem:[%s2010 + $0xd9] sm:$0xff]
        %v2336 = vld [vmem:[%s2010 + $0xe1] sm:$0xff]
        %v2337 = vld [vmem:[%s2010 + $0xf1] sm:$0xff]
        %v2338 = vld [vmem:[%s2010 + $0xf9] sm:$0xff]
        %v2339 = vld [vmem:[%s2010 + $0x109] sm:$0xff]
        %v2340 = vld [vmem:[%s2010 + $0x111] sm:$0xff]
        %v2341 = vld [vmem:[%s2010 + $0x121] sm:$0xff]
        %v2342 = vld [vmem:[%s2010 + $0x129] sm:$0xff]
        %v2343 = vld [vmem:[%s2010 + $0x139] sm:$0xff]
        %v2344 = vld [vmem:[%s2010 + $0x141] sm:$0xff]
        %v2345 = vld [vmem:[%s2010 + $0x151] sm:$0xff]
        %v2346 = vld [vmem:[%s2010 + $0x159] sm:$0xff]
        %v2347 = vld [vmem:[%s2010 + $0x169] sm:$0xff]
        %v2348 = vld [vmem:[%s2010 + $0x171] sm:$0xff]
        %s2349 = scalar_lea.vmem %s1, 896
        %v2350 = vld [vmem:[%s2349] sm:$0xff]
        %v2351 = vld [vmem:[%s2349 + $0x8] sm:$0xff]
        %v2352 = vld [vmem:[%s2349 + $0x10] sm:$0xff]
        %v2353 = vld [vmem:[%s2349 + $0x18] sm:$0xff]
        %v2354 = vld [vmem:[%s2349 + $0x20] sm:$0xff]
        %v2355 = vld [vmem:[%s2349 + $0x28] sm:$0xff]
        %v2356 = vld [vmem:[%s2349 + $0x30] sm:$0xff]
        %v2357 = vld [vmem:[%s2349 + $0x38] sm:$0xff]
        %v2358 = vld [vmem:[%s2349 + $0x40] sm:$0xff]
        %v2359 = vld [vmem:[%s2349 + $0x48] sm:$0xff]
        %v2360 = vld [vmem:[%s2349 + $0x50] sm:$0xff]
        %v2361 = vld [vmem:[%s2349 + $0x58] sm:$0xff]
        %v2362 = vld [vmem:[%s2349 + $0x60] sm:$0xff]
        %v2363 = vld [vmem:[%s2349 + $0x68] sm:$0xff]
        %v2364 = vld [vmem:[%s2349 + $0x70] sm:$0xff]
        %v2365 = vld [vmem:[%s2349 + $0x78] sm:$0xff]
        %2366 = vmatprep.subr.mxu0 0.0
        %2367 = vmatpush1.msra.mxu0 %v2350
        %2368 = vmatprep.subr.mxu0 0.0
        %2369 = vmatpush1.msra.mxu0 %v2351
        %2370 = vmatprep.subr.mxu0 0.0
        %2371 = vmatpush1.msra.mxu0 %v2352
        %2372 = vmatprep.subr.mxu0 0.0
        %2373 = vmatpush1.msra.mxu0 %v2353
        %2374 = vmatprep.subr.mxu0 0.0
        %2375 = vmatpush1.msra.mxu0 %v2354
        %2376 = vmatprep.subr.mxu0 0.0
        %2377 = vmatpush1.msra.mxu0 %v2355
        %2378 = vmatprep.subr.mxu0 0.0
        %2379 = vmatpush1.msra.mxu0 %v2356
        %2380 = vmatprep.subr.mxu0 0.0
        %2381 = vmatpush1.msra.mxu0 %v2357
        %2382 = vmatprep.subr.mxu0 0.0
        %2383 = vmatpush1.msra.mxu0 %v2358
        %2384 = vmatprep.subr.mxu0 0.0
        %2385 = vmatpush1.msra.mxu0 %v2359
        %2386 = vmatprep.subr.mxu0 0.0
        %2387 = vmatpush1.msra.mxu0 %v2360
        %2388 = vmatprep.subr.mxu0 0.0
        %2389 = vmatpush1.msra.mxu0 %v2361
        %2390 = vmatprep.subr.mxu0 0.0
        %2391 = vmatpush1.msra.mxu0 %v2362
        %2392 = vmatprep.subr.mxu0 0.0
        %2393 = vmatpush1.msra.mxu0 %v2363
        %2394 = vmatprep.subr.mxu0 0.0
        %2395 = vmatpush1.msra.mxu0 %v2364
        %2396 = vmatprep.subr.mxu0 0.0
        %2397 = vmatpush1.msra.mxu0 %v2365
        %2398 = vmatprep.subr.mxu0 0.0
        %2399 = vmatpush1.msra.mxu0 0.0
        %2400 = vmatprep.subr.mxu0 0.0
        %2401 = vmatpush1.msra.mxu0 0.0
        %2402 = vmatprep.subr.mxu0 0.0
        %2403 = vmatpush1.msra.mxu0 0.0
        %2404 = vmatprep.subr.mxu0 0.0
        %2405 = vmatpush1.msra.mxu0 0.0
        %2406 = vmatprep.subr.mxu0 0.0
        %2407 = vmatpush1.msra.mxu0 0.0
        %2408 = vmatprep.subr.mxu0 0.0
        %2409 = vmatpush1.msra.mxu0 0.0
        %2410 = vmatprep.subr.mxu0 0.0
        %2411 = vmatpush1.msra.mxu0 0.0
        %2412 = vmatprep.subr.mxu0 0.0
        %2413 = vmatpush1.msra.mxu0 0.0
        %2414 = vmatprep.subr.mxu0 0.0
        %2415 = vmatpush1.msra.mxu0 0.0
        %2416 = vmatprep.subr.mxu0 0.0
        %2417 = vmatpush1.msra.mxu0 0.0
        %2418 = vmatprep.subr.mxu0 0.0
        %2419 = vmatpush1.msra.mxu0 0.0
        %2420 = vmatprep.subr.mxu0 0.0
        %2421 = vmatpush1.msra.mxu0 0.0
        %2422 = vmatprep.subr.mxu0 0.0
        %2423 = vmatpush1.msra.mxu0 0.0
        %2424 = vmatprep.subr.mxu0 0.0
        %2425 = vmatpush1.msra.mxu0 0.0
        %2426 = vmatprep.subr.mxu0 0.0
        %2427 = vmatpush1.msra.mxu0 0.0
        %2428 = vmatprep.subr.mxu0 0.0
        %2429 = vmatpush1.msra.mxu0 0.0
        %2430 = vmatprep.mubr.f32.mxu0 0.0
        %2431 = vmatmul.mubr.f32.gmra.mrb[0].mxu0 %v2317
        %v2432 = vpop.f32.mrb[0].mxu0
        %v2433 = vadd.f32 0.0, %v2432
        %v2434 = vpop.f32.mrb[0].mxu0
        %2435 = vmatprep.mubr.f32.mxu0 0.0
        %2436 = vmatmul.mubr.f32.gmra.mrb[0].mxu0 %v2318
        %v2437 = vpop.f32.mrb[0].mxu0
        %v2438 = vadd.f32 0.0, %v2437
        %v2439 = vpop.f32.mrb[0].mxu0
        %2440 = vmatprep.mubr.f32.mxu0 0.0
        %2441 = vmatmul.mubr.f32.gmra.mrb[0].mxu0 %v2319
        %v2442 = vpop.f32.mrb[0].mxu0
        %v2443 = vadd.f32 0.0, %v2442
        %v2444 = vpop.f32.mrb[0].mxu0
        %2445 = vmatprep.mubr.f32.mxu0 0.0
        %2446 = vmatmul.mubr.f32.gmra.mrb[0].mxu0 %v2320
        %v2447 = vpop.f32.mrb[0].mxu0
        %v2448 = vadd.f32 0.0, %v2447
        %v2449 = vpop.f32.mrb[0].mxu0
        %2450 = vmatprep.mubr.f32.mxu0 0.0
        %2451 = vmatmul.mubr.f32.gmra.mrb[0].mxu0 %v2321
        %v2452 = vpop.f32.mrb[0].mxu0
        %v2453 = vadd.f32 0.0, %v2452
        %v2454 = vpop.f32.mrb[0].mxu0
        %2455 = vmatprep.mubr.f32.mxu0 0.0
        %2456 = vmatmul.mubr.f32.gmra.mrb[0].mxu0 %v2322
        %v2457 = vpop.f32.mrb[0].mxu0
        %v2458 = vadd.f32 0.0, %v2457
        %v2459 = vpop.f32.mrb[0].mxu0
        %2460 = vmatprep.mubr.f32.mxu0 0.0
        %2461 = vmatmul.mubr.f32.gmra.mrb[0].mxu0 %v2323
        %v2462 = vpop.f32.mrb[0].mxu0
        %v2463 = vadd.f32 0.0, %v2462
        %v2464 = vpop.f32.mrb[0].mxu0
        %2465 = vmatprep.mubr.f32.mxu0 0.0
        %2466 = vmatmul.mubr.f32.gmra.mrb[0].mxu0 %v2324
        %v2467 = vpop.f32.mrb[0].mxu0
        %v2468 = vadd.f32 0.0, %v2467
        %v2469 = vpop.f32.mrb[0].mxu0
        %2470 = vmatprep.mubr.f32.mxu0 0.0
        %2471 = vmatmul.mubr.f32.gmra.mrb[0].mxu0 %v2325
        %v2472 = vpop.f32.mrb[0].mxu0
        %v2473 = vadd.f32 0.0, %v2472
        %v2474 = vpop.f32.mrb[0].mxu0
        %2475 = vmatprep.mubr.f32.mxu0 0.0
        %2476 = vmatmul.mubr.f32.gmra.mrb[0].mxu0 %v2326
        %v2477 = vpop.f32.mrb[0].mxu0
        %v2478 = vadd.f32 0.0, %v2477
        %v2479 = vpop.f32.mrb[0].mxu0
        %2480 = vmatprep.mubr.f32.mxu0 0.0
        %2481 = vmatmul.mubr.f32.gmra.mrb[0].mxu0 %v2327
        %v2482 = vpop.f32.mrb[0].mxu0
        %v2483 = vadd.f32 0.0, %v2482
        %v2484 = vpop.f32.mrb[0].mxu0
        %2485 = vmatprep.mubr.f32.mxu0 0.0
        %2486 = vmatmul.mubr.f32.gmra.mrb[0].mxu0 %v2328
        %v2487 = vpop.f32.mrb[0].mxu0
        %v2488 = vadd.f32 0.0, %v2487
        %v2489 = vpop.f32.mrb[0].mxu0
        %2490 = vmatprep.mubr.f32.mxu0 0.0
        %2491 = vmatmul.mubr.f32.gmra.mrb[0].mxu0 %v2329
        %v2492 = vpop.f32.mrb[0].mxu0
        %v2493 = vadd.f32 0.0, %v2492
        %v2494 = vpop.f32.mrb[0].mxu0
        %2495 = vmatprep.mubr.f32.mxu0 0.0
        %2496 = vmatmul.mubr.f32.gmra.mrb[0].mxu0 %v2330
        %v2497 = vpop.f32.mrb[0].mxu0
        %v2498 = vadd.f32 0.0, %v2497
        %v2499 = vpop.f32.mrb[0].mxu0
        %2500 = vmatprep.mubr.f32.mxu0 0.0
        %2501 = vmatmul.mubr.f32.gmra.mrb[0].mxu0 %v2331
        %v2502 = vpop.f32.mrb[0].mxu0
        %v2503 = vadd.f32 0.0, %v2502
        %v2504 = vpop.f32.mrb[0].mxu0
        %2505 = vmatprep.mubr.f32.mxu0 0.0
        %2506 = vmatmul.mubr.f32.gmra.mrb[0].mxu0 %v2332
        %v2507 = vpop.f32.mrb[0].mxu0
        %v2508 = vadd.f32 0.0, %v2507
        %v2509 = vpop.f32.mrb[0].mxu0
        %2510 = vmatprep.mubr.f32.mxu0 0.0
        %2511 = vmatmul.mubr.f32.gmra.mrb[0].mxu0 %v2333
        %v2512 = vpop.f32.mrb[0].mxu0
        %v2513 = vadd.f32 0.0, %v2512
        %v2514 = vpop.f32.mrb[0].mxu0
        %2515 = vmatprep.mubr.f32.mxu0 0.0
        %2516 = vmatmul.mubr.f32.gmra.mrb[0].mxu0 %v2334
        %v2517 = vpop.f32.mrb[0].mxu0
        %v2518 = vadd.f32 0.0, %v2517
        %v2519 = vpop.f32.mrb[0].mxu0
        %2520 = vmatprep.mubr.f32.mxu0 0.0
        %2521 = vmatmul.mubr.f32.gmra.mrb[0].mxu0 %v2335
        %v2522 = vpop.f32.mrb[0].mxu0
        %v2523 = vadd.f32 0.0, %v2522
        %v2524 = vpop.f32.mrb[0].mxu0
        %2525 = vmatprep.mubr.f32.mxu0 0.0
        %2526 = vmatmul.mubr.f32.gmra.mrb[0].mxu0 %v2336
        %v2527 = vpop.f32.mrb[0].mxu0
        %v2528 = vadd.f32 0.0, %v2527
        %v2529 = vpop.f32.mrb[0].mxu0
        %2530 = vmatprep.mubr.f32.mxu0 0.0
        %2531 = vmatmul.mubr.f32.gmra.mrb[0].mxu0 %v2337
        %v2532 = vpop.f32.mrb[0].mxu0
        %v2533 = vadd.f32 0.0, %v2532
        %v2534 = vpop.f32.mrb[0].mxu0
        %2535 = vmatprep.mubr.f32.mxu0 0.0
        %2536 = vmatmul.mubr.f32.gmra.mrb[0].mxu0 %v2338
        %v2537 = vpop.f32.mrb[0].mxu0
        %v2538 = vadd.f32 0.0, %v2537
        %v2539 = vpop.f32.mrb[0].mxu0
        %2540 = vmatprep.mubr.f32.mxu0 0.0
        %2541 = vmatmul.mubr.f32.gmra.mrb[0].mxu0 %v2339
        %v2542 = vpop.f32.mrb[0].mxu0
        %v2543 = vadd.f32 0.0, %v2542
        %v2544 = vpop.f32.mrb[0].mxu0
        %2545 = vmatprep.mubr.f32.mxu0 0.0
        %2546 = vmatmul.mubr.f32.gmra.mrb[0].mxu0 %v2340
        %v2547 = vpop.f32.mrb[0].mxu0
        %v2548 = vadd.f32 0.0, %v2547
        %v2549 = vpop.f32.mrb[0].mxu0
        %2550 = vmatprep.mubr.f32.mxu0 0.0
        %2551 = vmatmul.mubr.f32.gmra.mrb[0].mxu0 %v2341
        %v2552 = vpop.f32.mrb[0].mxu0
        %v2553 = vadd.f32 0.0, %v2552
        %v2554 = vpop.f32.mrb[0].mxu0
        %2555 = vmatprep.mubr.f32.mxu0 0.0
        %2556 = vmatmul.mubr.f32.gmra.mrb[0].mxu0 %v2342
        %v2557 = vpop.f32.mrb[0].mxu0
        %v2558 = vadd.f32 0.0, %v2557
        %v2559 = vpop.f32.mrb[0].mxu0
        %2560 = vmatprep.mubr.f32.mxu0 0.0
        %2561 = vmatmul.mubr.f32.gmra.mrb[0].mxu0 %v2343
        %v2562 = vpop.f32.mrb[0].mxu0
        %v2563 = vadd.f32 0.0, %v2562
        %v2564 = vpop.f32.mrb[0].mxu0
        %2565 = vmatprep.mubr.f32.mxu0 0.0
        %2566 = vmatmul.mubr.f32.gmra.mrb[0].mxu0 %v2344
        %v2567 = vpop.f32.mrb[0].mxu0
        %v2568 = vadd.f32 0.0, %v2567
        %v2569 = vpop.f32.mrb[0].mxu0
        %2570 = vmatprep.mubr.f32.mxu0 0.0
        %2571 = vmatmul.mubr.f32.gmra.mrb[0].mxu0 %v2345
        %v2572 = vpop.f32.mrb[0].mxu0
        %v2573 = vadd.f32 0.0, %v2572
        %v2574 = vpop.f32.mrb[0].mxu0
        %2575 = vmatprep.mubr.f32.mxu0 0.0
        %2576 = vmatmul.mubr.f32.gmra.mrb[0].mxu0 %v2346
        %v2577 = vpop.f32.mrb[0].mxu0
        %v2578 = vadd.f32 0.0, %v2577
        %v2579 = vpop.f32.mrb[0].mxu0
        %2580 = vmatprep.mubr.f32.mxu0 0.0
        %2581 = vmatmul.mubr.f32.gmra.mrb[0].mxu0 %v2347
        %v2582 = vpop.f32.mrb[0].mxu0
        %v2583 = vadd.f32 0.0, %v2582
        %v2584 = vpop.f32.mrb[0].mxu0
        %2585 = vmatprep.mubr.f32.mxu0 0.0
        %2586 = vmatmul.mubr.f32.gmra.mrb[0].mxu0 %v2348
        %v2587 = vpop.f32.mrb[0].mxu0
        %v2588 = vadd.f32 0.0, %v2587
        %v2589 = vpop.f32.mrb[0].mxu0
        %2590 = vdwg.mxu0
        %v2591 = vadd.f32 %v2285, %v2433
        %v2592 = vadd.f32 %v2286, %v2438
        %v2593 = vadd.f32 %v2287, %v2443
        %v2594 = vadd.f32 %v2288, %v2448
        %v2595 = vadd.f32 %v2289, %v2453
        %v2596 = vadd.f32 %v2290, %v2458
        %v2597 = vadd.f32 %v2291, %v2463
        %v2598 = vadd.f32 %v2292, %v2468
        %v2599 = vadd.f32 %v2293, %v2473
        %v2600 = vadd.f32 %v2294, %v2478
        %v2601 = vadd.f32 %v2295, %v2483
        %v2602 = vadd.f32 %v2296, %v2488
        %v2603 = vadd.f32 %v2297, %v2493
        %v2604 = vadd.f32 %v2298, %v2498
        %v2605 = vadd.f32 %v2299, %v2503
        %v2606 = vadd.f32 %v2300, %v2508
        %v2607 = vadd.f32 %v2301, %v2513
        %v2608 = vadd.f32 %v2302, %v2518
        %v2609 = vadd.f32 %v2303, %v2523
        %v2610 = vadd.f32 %v2304, %v2528
        %v2611 = vadd.f32 %v2305, %v2533
        %v2612 = vadd.f32 %v2306, %v2538
        %v2613 = vadd.f32 %v2307, %v2543
        %v2614 = vadd.f32 %v2308, %v2548
        %v2615 = vadd.f32 %v2309, %v2553
        %v2616 = vadd.f32 %v2310, %v2558
        %v2617 = vadd.f32 %v2311, %v2563
        %v2618 = vadd.f32 %v2312, %v2568
        %v2619 = vadd.f32 %v2313, %v2573
        %v2620 = vadd.f32 %v2314, %v2578
        %v2621 = vadd.f32 %v2315, %v2583
        %v2622 = vadd.f32 %v2316, %v2588
        %v2623 = vld [vmem:[%s2010 + $0x2] sm:$0xff]
        %v2624 = vld [vmem:[%s2010 + $0xa] sm:$0xff]
        %v2625 = vld [vmem:[%s2010 + $0x1a] sm:$0xff]
        %v2626 = vld [vmem:[%s2010 + $0x22] sm:$0xff]
        %v2627 = vld [vmem:[%s2010 + $0x32] sm:$0xff]
        %v2628 = vld [vmem:[%s2010 + $0x3a] sm:$0xff]
        %v2629 = vld [vmem:[%s2010 + $0x4a] sm:$0xff]
        %v2630 = vld [vmem:[%s2010 + $0x52] sm:$0xff]
        %v2631 = vld [vmem:[%s2010 + $0x62] sm:$0xff]
        %v2632 = vld [vmem:[%s2010 + $0x6a] sm:$0xff]
        %v2633 = vld [vmem:[%s2010 + $0x7a] sm:$0xff]
        %v2634 = vld [vmem:[%s2010 + $0x82] sm:$0xff]
        %v2635 = vld [vmem:[%s2010 + $0x92] sm:$0xff]
        %v2636 = vld [vmem:[%s2010 + $0x9a] sm:$0xff]
        %v2637 = vld [vmem:[%s2010 + $0xaa] sm:$0xff]
        %v2638 = vld [vmem:[%s2010 + $0xb2] sm:$0xff]
        %v2639 = vld [vmem:[%s2010 + $0xc2] sm:$0xff]
        %v2640 = vld [vmem:[%s2010 + $0xca] sm:$0xff]
        %v2641 = vld [vmem:[%s2010 + $0xda] sm:$0xff]
        %v2642 = vld [vmem:[%s2010 + $0xe2] sm:$0xff]
        %v2643 = vld [vmem:[%s2010 + $0xf2] sm:$0xff]
        %v2644 = vld [vmem:[%s2010 + $0xfa] sm:$0xff]
        %v2645 = vld [vmem:[%s2010 + $0x10a] sm:$0xff]
        %v2646 = vld [vmem:[%s2010 + $0x112] sm:$0xff]
        %v2647 = vld [vmem:[%s2010 + $0x122] sm:$0xff]
        %v2648 = vld [vmem:[%s2010 + $0x12a] sm:$0xff]
        %v2649 = vld [vmem:[%s2010 + $0x13a] sm:$0xff]
        %v2650 = vld [vmem:[%s2010 + $0x142] sm:$0xff]
        %v2651 = vld [vmem:[%s2010 + $0x152] sm:$0xff]
        %v2652 = vld [vmem:[%s2010 + $0x15a] sm:$0xff]
        %v2653 = vld [vmem:[%s2010 + $0x16a] sm:$0xff]
        %v2654 = vld [vmem:[%s2010 + $0x172] sm:$0xff]
        %s2655 = scalar_lea.vmem %s1, 1024
        %v2656 = vld [vmem:[%s2655] sm:$0xff]
        %v2657 = vld [vmem:[%s2655 + $0x8] sm:$0xff]
        %v2658 = vld [vmem:[%s2655 + $0x10] sm:$0xff]
        %v2659 = vld [vmem:[%s2655 + $0x18] sm:$0xff]
        %v2660 = vld [vmem:[%s2655 + $0x20] sm:$0xff]
        %v2661 = vld [vmem:[%s2655 + $0x28] sm:$0xff]
        %v2662 = vld [vmem:[%s2655 + $0x30] sm:$0xff]
        %v2663 = vld [vmem:[%s2655 + $0x38] sm:$0xff]
        %v2664 = vld [vmem:[%s2655 + $0x40] sm:$0xff]
        %v2665 = vld [vmem:[%s2655 + $0x48] sm:$0xff]
        %v2666 = vld [vmem:[%s2655 + $0x50] sm:$0xff]
        %v2667 = vld [vmem:[%s2655 + $0x58] sm:$0xff]
        %v2668 = vld [vmem:[%s2655 + $0x60] sm:$0xff]
        %v2669 = vld [vmem:[%s2655 + $0x68] sm:$0xff]
        %v2670 = vld [vmem:[%s2655 + $0x70] sm:$0xff]
        %v2671 = vld [vmem:[%s2655 + $0x78] sm:$0xff]
        %2672 = vmatprep.subr.mxu0 0.0
        %2673 = vmatpush1.msra.mxu0 %v2656
        %2674 = vmatprep.subr.mxu0 0.0
        %2675 = vmatpush1.msra.mxu0 %v2657
        %2676 = vmatprep.subr.mxu0 0.0
        %2677 = vmatpush1.msra.mxu0 %v2658
        %2678 = vmatprep.subr.mxu0 0.0
        %2679 = vmatpush1.msra.mxu0 %v2659
        %2680 = vmatprep.subr.mxu0 0.0
        %2681 = vmatpush1.msra.mxu0 %v2660
        %2682 = vmatprep.subr.mxu0 0.0
        %2683 = vmatpush1.msra.mxu0 %v2661
        %2684 = vmatprep.subr.mxu0 0.0
        %2685 = vmatpush1.msra.mxu0 %v2662
        %2686 = vmatprep.subr.mxu0 0.0
        %2687 = vmatpush1.msra.mxu0 %v2663
        %2688 = vmatprep.subr.mxu0 0.0
        %2689 = vmatpush1.msra.mxu0 %v2664
        %2690 = vmatprep.subr.mxu0 0.0
        %2691 = vmatpush1.msra.mxu0 %v2665
        %2692 = vmatprep.subr.mxu0 0.0
        %2693 = vmatpush1.msra.mxu0 %v2666
        %2694 = vmatprep.subr.mxu0 0.0
        %2695 = vmatpush1.msra.mxu0 %v2667
        %2696 = vmatprep.subr.mxu0 0.0
        %2697 = vmatpush1.msra.mxu0 %v2668
        %2698 = vmatprep.subr.mxu0 0.0
        %2699 = vmatpush1.msra.mxu0 %v2669
        %2700 = vmatprep.subr.mxu0 0.0
        %2701 = vmatpush1.msra.mxu0 %v2670
        %2702 = vmatprep.subr.mxu0 0.0
        %2703 = vmatpush1.msra.mxu0 %v2671
        %2704 = vmatprep.subr.mxu0 0.0
        %2705 = vmatpush1.msra.mxu0 0.0
        %2706 = vmatprep.subr.mxu0 0.0
        %2707 = vmatpush1.msra.mxu0 0.0
        %2708 = vmatprep.subr.mxu0 0.0
        %2709 = vmatpush1.msra.mxu0 0.0
        %2710 = vmatprep.subr.mxu0 0.0
        %2711 = vmatpush1.msra.mxu0 0.0
        %2712 = vmatprep.subr.mxu0 0.0
        %2713 = vmatpush1.msra.mxu0 0.0
        %2714 = vmatprep.subr.mxu0 0.0
        %2715 = vmatpush1.msra.mxu0 0.0
        %2716 = vmatprep.subr.mxu0 0.0
        %2717 = vmatpush1.msra.mxu0 0.0
        %2718 = vmatprep.subr.mxu0 0.0
        %2719 = vmatpush1.msra.mxu0 0.0
        %2720 = vmatprep.subr.mxu0 0.0
        %2721 = vmatpush1.msra.mxu0 0.0
        %2722 = vmatprep.subr.mxu0 0.0
        %2723 = vmatpush1.msra.mxu0 0.0
        %2724 = vmatprep.subr.mxu0 0.0
        %2725 = vmatpush1.msra.mxu0 0.0
        %2726 = vmatprep.subr.mxu0 0.0
        %2727 = vmatpush1.msra.mxu0 0.0
        %2728 = vmatprep.subr.mxu0 0.0
        %2729 = vmatpush1.msra.mxu0 0.0
        %2730 = vmatprep.subr.mxu0 0.0
        %2731 = vmatpush1.msra.mxu0 0.0
        %2732 = vmatprep.subr.mxu0 0.0
        %2733 = vmatpush1.msra.mxu0 0.0
        %2734 = vmatprep.subr.mxu0 0.0
        %2735 = vmatpush1.msra.mxu0 0.0
        %2736 = vmatprep.mubr.f32.mxu0 0.0
        %2737 = vmatmul.mubr.f32.gmra.mrb[0].mxu0 %v2623
        %v2738 = vpop.f32.mrb[0].mxu0
        %v2739 = vadd.f32 0.0, %v2738
        %v2740 = vpop.f32.mrb[0].mxu0
        %2741 = vmatprep.mubr.f32.mxu0 0.0
        %2742 = vmatmul.mubr.f32.gmra.mrb[0].mxu0 %v2624
        %v2743 = vpop.f32.mrb[0].mxu0
        %v2744 = vadd.f32 0.0, %v2743
        %v2745 = vpop.f32.mrb[0].mxu0
        %2746 = vmatprep.mubr.f32.mxu0 0.0
        %2747 = vmatmul.mubr.f32.gmra.mrb[0].mxu0 %v2625
        %v2748 = vpop.f32.mrb[0].mxu0
        %v2749 = vadd.f32 0.0, %v2748
        %v2750 = vpop.f32.mrb[0].mxu0
        %2751 = vmatprep.mubr.f32.mxu0 0.0
        %2752 = vmatmul.mubr.f32.gmra.mrb[0].mxu0 %v2626
        %v2753 = vpop.f32.mrb[0].mxu0
        %v2754 = vadd.f32 0.0, %v2753
        %v2755 = vpop.f32.mrb[0].mxu0
        %2756 = vmatprep.mubr.f32.mxu0 0.0
        %2757 = vmatmul.mubr.f32.gmra.mrb[0].mxu0 %v2627
        %v2758 = vpop.f32.mrb[0].mxu0
        %v2759 = vadd.f32 0.0, %v2758
        %v2760 = vpop.f32.mrb[0].mxu0
        %2761 = vmatprep.mubr.f32.mxu0 0.0
        %2762 = vmatmul.mubr.f32.gmra.mrb[0].mxu0 %v2628
        %v2763 = vpop.f32.mrb[0].mxu0
        %v2764 = vadd.f32 0.0, %v2763
        %v2765 = vpop.f32.mrb[0].mxu0
        %2766 = vmatprep.mubr.f32.mxu0 0.0
        %2767 = vmatmul.mubr.f32.gmra.mrb[0].mxu0 %v2629
        %v2768 = vpop.f32.mrb[0].mxu0
        %v2769 = vadd.f32 0.0, %v2768
        %v2770 = vpop.f32.mrb[0].mxu0
        %2771 = vmatprep.mubr.f32.mxu0 0.0
        %2772 = vmatmul.mubr.f32.gmra.mrb[0].mxu0 %v2630
        %v2773 = vpop.f32.mrb[0].mxu0
        %v2774 = vadd.f32 0.0, %v2773
        %v2775 = vpop.f32.mrb[0].mxu0
        %2776 = vmatprep.mubr.f32.mxu0 0.0
        %2777 = vmatmul.mubr.f32.gmra.mrb[0].mxu0 %v2631
        %v2778 = vpop.f32.mrb[0].mxu0
        %v2779 = vadd.f32 0.0, %v2778
        %v2780 = vpop.f32.mrb[0].mxu0
        %2781 = vmatprep.mubr.f32.mxu0 0.0
        %2782 = vmatmul.mubr.f32.gmra.mrb[0].mxu0 %v2632
        %v2783 = vpop.f32.mrb[0].mxu0
        %v2784 = vadd.f32 0.0, %v2783
        %v2785 = vpop.f32.mrb[0].mxu0
        %2786 = vmatprep.mubr.f32.mxu0 0.0
        %2787 = vmatmul.mubr.f32.gmra.mrb[0].mxu0 %v2633
        %v2788 = vpop.f32.mrb[0].mxu0
        %v2789 = vadd.f32 0.0, %v2788
        %v2790 = vpop.f32.mrb[0].mxu0
        %2791 = vmatprep.mubr.f32.mxu0 0.0
        %2792 = vmatmul.mubr.f32.gmra.mrb[0].mxu0 %v2634
        %v2793 = vpop.f32.mrb[0].mxu0
        %v2794 = vadd.f32 0.0, %v2793
        %v2795 = vpop.f32.mrb[0].mxu0
        %2796 = vmatprep.mubr.f32.mxu0 0.0
        %2797 = vmatmul.mubr.f32.gmra.mrb[0].mxu0 %v2635
        %v2798 = vpop.f32.mrb[0].mxu0
        %v2799 = vadd.f32 0.0, %v2798
        %v2800 = vpop.f32.mrb[0].mxu0
        %2801 = vmatprep.mubr.f32.mxu0 0.0
        %2802 = vmatmul.mubr.f32.gmra.mrb[0].mxu0 %v2636
        %v2803 = vpop.f32.mrb[0].mxu0
        %v2804 = vadd.f32 0.0, %v2803
        %v2805 = vpop.f32.mrb[0].mxu0
        %2806 = vmatprep.mubr.f32.mxu0 0.0
        %2807 = vmatmul.mubr.f32.gmra.mrb[0].mxu0 %v2637
        %v2808 = vpop.f32.mrb[0].mxu0
        %v2809 = vadd.f32 0.0, %v2808
        %v2810 = vpop.f32.mrb[0].mxu0
        %2811 = vmatprep.mubr.f32.mxu0 0.0
        %2812 = vmatmul.mubr.f32.gmra.mrb[0].mxu0 %v2638
        %v2813 = vpop.f32.mrb[0].mxu0
        %v2814 = vadd.f32 0.0, %v2813
        %v2815 = vpop.f32.mrb[0].mxu0
        %2816 = vmatprep.mubr.f32.mxu0 0.0
        %2817 = vmatmul.mubr.f32.gmra.mrb[0].mxu0 %v2639
        %v2818 = vpop.f32.mrb[0].mxu0
        %v2819 = vadd.f32 0.0, %v2818
        %v2820 = vpop.f32.mrb[0].mxu0
        %2821 = vmatprep.mubr.f32.mxu0 0.0
        %2822 = vmatmul.mubr.f32.gmra.mrb[0].mxu0 %v2640
        %v2823 = vpop.f32.mrb[0].mxu0
        %v2824 = vadd.f32 0.0, %v2823
        %v2825 = vpop.f32.mrb[0].mxu0
        %2826 = vmatprep.mubr.f32.mxu0 0.0
        %2827 = vmatmul.mubr.f32.gmra.mrb[0].mxu0 %v2641
        %v2828 = vpop.f32.mrb[0].mxu0
        %v2829 = vadd.f32 0.0, %v2828
        %v2830 = vpop.f32.mrb[0].mxu0
        %2831 = vmatprep.mubr.f32.mxu0 0.0
        %2832 = vmatmul.mubr.f32.gmra.mrb[0].mxu0 %v2642
        %v2833 = vpop.f32.mrb[0].mxu0
        %v2834 = vadd.f32 0.0, %v2833
        %v2835 = vpop.f32.mrb[0].mxu0
        %2836 = vmatprep.mubr.f32.mxu0 0.0
        %2837 = vmatmul.mubr.f32.gmra.mrb[0].mxu0 %v2643
        %v2838 = vpop.f32.mrb[0].mxu0
        %v2839 = vadd.f32 0.0, %v2838
        %v2840 = vpop.f32.mrb[0].mxu0
        %2841 = vmatprep.mubr.f32.mxu0 0.0
        %2842 = vmatmul.mubr.f32.gmra.mrb[0].mxu0 %v2644
        %v2843 = vpop.f32.mrb[0].mxu0
        %v2844 = vadd.f32 0.0, %v2843
        %v2845 = vpop.f32.mrb[0].mxu0
        %2846 = vmatprep.mubr.f32.mxu0 0.0
        %2847 = vmatmul.mubr.f32.gmra.mrb[0].mxu0 %v2645
        %v2848 = vpop.f32.mrb[0].mxu0
        %v2849 = vadd.f32 0.0, %v2848
        %v2850 = vpop.f32.mrb[0].mxu0
        %2851 = vmatprep.mubr.f32.mxu0 0.0
        %2852 = vmatmul.mubr.f32.gmra.mrb[0].mxu0 %v2646
        %v2853 = vpop.f32.mrb[0].mxu0
        %v2854 = vadd.f32 0.0, %v2853
        %v2855 = vpop.f32.mrb[0].mxu0
        %2856 = vmatprep.mubr.f32.mxu0 0.0
        %2857 = vmatmul.mubr.f32.gmra.mrb[0].mxu0 %v2647
        %v2858 = vpop.f32.mrb[0].mxu0
        %v2859 = vadd.f32 0.0, %v2858
        %v2860 = vpop.f32.mrb[0].mxu0
        %2861 = vmatprep.mubr.f32.mxu0 0.0
        %2862 = vmatmul.mubr.f32.gmra.mrb[0].mxu0 %v2648
        %v2863 = vpop.f32.mrb[0].mxu0
        %v2864 = vadd.f32 0.0, %v2863
        %v2865 = vpop.f32.mrb[0].mxu0
        %2866 = vmatprep.mubr.f32.mxu0 0.0
        %2867 = vmatmul.mubr.f32.gmra.mrb[0].mxu0 %v2649
        %v2868 = vpop.f32.mrb[0].mxu0
        %v2869 = vadd.f32 0.0, %v2868
        %v2870 = vpop.f32.mrb[0].mxu0
        %2871 = vmatprep.mubr.f32.mxu0 0.0
        %2872 = vmatmul.mubr.f32.gmra.mrb[0].mxu0 %v2650
        %v2873 = vpop.f32.mrb[0].mxu0
        %v2874 = vadd.f32 0.0, %v2873
        %v2875 = vpop.f32.mrb[0].mxu0
        %2876 = vmatprep.mubr.f32.mxu0 0.0
        %2877 = vmatmul.mubr.f32.gmra.mrb[0].mxu0 %v2651
        %v2878 = vpop.f32.mrb[0].mxu0
        %v2879 = vadd.f32 0.0, %v2878
        %v2880 = vpop.f32.mrb[0].mxu0
        %2881 = vmatprep.mubr.f32.mxu0 0.0
        %2882 = vmatmul.mubr.f32.gmra.mrb[0].mxu0 %v2652
        %v2883 = vpop.f32.mrb[0].mxu0
        %v2884 = vadd.f32 0.0, %v2883
        %v2885 = vpop.f32.mrb[0].mxu0
        %2886 = vmatprep.mubr.f32.mxu0 0.0
        %2887 = vmatmul.mubr.f32.gmra.mrb[0].mxu0 %v2653
        %v2888 = vpop.f32.mrb[0].mxu0
        %v2889 = vadd.f32 0.0, %v2888
        %v2890 = vpop.f32.mrb[0].mxu0
        %2891 = vmatprep.mubr.f32.mxu0 0.0
        %2892 = vmatmul.mubr.f32.gmra.mrb[0].mxu0 %v2654
        %v2893 = vpop.f32.mrb[0].mxu0
        %v2894 = vadd.f32 0.0, %v2893
        %v2895 = vpop.f32.mrb[0].mxu0
        %2896 = vdwg.mxu0
        %v2897 = vadd.f32 %v2591, %v2739
        %v2898 = vadd.f32 %v2592, %v2744
        %v2899 = vadd.f32 %v2593, %v2749
        %v2900 = vadd.f32 %v2594, %v2754
        %v2901 = vadd.f32 %v2595, %v2759
        %v2902 = vadd.f32 %v2596, %v2764
        %v2903 = vadd.f32 %v2597, %v2769
        %v2904 = vadd.f32 %v2598, %v2774
        %v2905 = vadd.f32 %v2599, %v2779
        %v2906 = vadd.f32 %v2600, %v2784
        %v2907 = vadd.f32 %v2601, %v2789
        %v2908 = vadd.f32 %v2602, %v2794
        %v2909 = vadd.f32 %v2603, %v2799
        %v2910 = vadd.f32 %v2604, %v2804
        %v2911 = vadd.f32 %v2605, %v2809
        %v2912 = vadd.f32 %v2606, %v2814
        %v2913 = vadd.f32 %v2607, %v2819
        %v2914 = vadd.f32 %v2608, %v2824
        %v2915 = vadd.f32 %v2609, %v2829
        %v2916 = vadd.f32 %v2610, %v2834
        %v2917 = vadd.f32 %v2611, %v2839
        %v2918 = vadd.f32 %v2612, %v2844
        %v2919 = vadd.f32 %v2613, %v2849
        %v2920 = vadd.f32 %v2614, %v2854
        %v2921 = vadd.f32 %v2615, %v2859
        %v2922 = vadd.f32 %v2616, %v2864
        %v2923 = vadd.f32 %v2617, %v2869
        %v2924 = vadd.f32 %v2618, %v2874
        %v2925 = vadd.f32 %v2619, %v2879
        %v2926 = vadd.f32 %v2620, %v2884
        %v2927 = vadd.f32 %v2621, %v2889
        %v2928 = vadd.f32 %v2622, %v2894
        %v2929 = vld [vmem:[%s2] sm:$0x1]
        %v2931 = vlaneseq
        %v2932 = vshrl.u32 %v2931, 7
        %v2933 = vsub.s32 0, %v2932
        %v2934 = vrot.slane %v2929, %v2933
        %v2936 = vadd.f32 %v2897, %v2934
        %v2937 = vadd.f32 %v2898, %v2934
        %v2938 = vadd.f32 %v2899, %v2934
        %v2939 = vadd.f32 %v2900, %v2934
        %v2940 = vadd.f32 %v2901, %v2934
        %v2941 = vadd.f32 %v2902, %v2934
        %v2942 = vadd.f32 %v2903, %v2934
        %v2943 = vadd.f32 %v2904, %v2934
        %v2944 = vadd.f32 %v2905, %v2934
        %v2945 = vadd.f32 %v2906, %v2934
        %v2946 = vadd.f32 %v2907, %v2934
        %v2947 = vadd.f32 %v2908, %v2934
        %v2948 = vadd.f32 %v2909, %v2934
        %v2949 = vadd.f32 %v2910, %v2934
        %v2950 = vadd.f32 %v2911, %v2934
        %v2951 = vadd.f32 %v2912, %v2934
        %v2952 = vadd.f32 %v2913, %v2934
        %v2953 = vadd.f32 %v2914, %v2934
        %v2954 = vadd.f32 %v2915, %v2934
        %v2955 = vadd.f32 %v2916, %v2934
        %v2956 = vadd.f32 %v2917, %v2934
        %v2957 = vadd.f32 %v2918, %v2934
        %v2958 = vadd.f32 %v2919, %v2934
        %v2959 = vadd.f32 %v2920, %v2934
        %v2960 = vadd.f32 %v2921, %v2934
        %v2961 = vadd.f32 %v2922, %v2934
        %v2962 = vadd.f32 %v2923, %v2934
        %v2963 = vadd.f32 %v2924, %v2934
        %v2964 = vadd.f32 %v2925, %v2934
        %v2965 = vadd.f32 %v2926, %v2934
        %v2966 = vadd.f32 %v2927, %v2934
        %v2967 = vadd.f32 %v2928, %v2934
        %v2968 = vmax.f32 %v2936, 0.0
        %v2969 = vmax.f32 %v2937, 0.0
        %v2970 = vmax.f32 %v2938, 0.0
        %v2971 = vmax.f32 %v2939, 0.0
        %v2972 = vmax.f32 %v2940, 0.0
        %v2973 = vmax.f32 %v2941, 0.0
        %v2974 = vmax.f32 %v2942, 0.0
        %v2975 = vmax.f32 %v2943, 0.0
        %v2976 = vmax.f32 %v2944, 0.0
        %v2977 = vmax.f32 %v2945, 0.0
        %v2978 = vmax.f32 %v2946, 0.0
        %v2979 = vmax.f32 %v2947, 0.0
        %v2980 = vmax.f32 %v2948, 0.0
        %v2981 = vmax.f32 %v2949, 0.0
        %v2982 = vmax.f32 %v2950, 0.0
        %v2983 = vmax.f32 %v2951, 0.0
        %v2984 = vmax.f32 %v2952, 0.0
        %v2985 = vmax.f32 %v2953, 0.0
        %v2986 = vmax.f32 %v2954, 0.0
        %v2987 = vmax.f32 %v2955, 0.0
        %v2988 = vmax.f32 %v2956, 0.0
        %v2989 = vmax.f32 %v2957, 0.0
        %v2990 = vmax.f32 %v2958, 0.0
        %v2991 = vmax.f32 %v2959, 0.0
        %v2992 = vmax.f32 %v2960, 0.0
        %v2993 = vmax.f32 %v2961, 0.0
        %v2994 = vmax.f32 %v2962, 0.0
        %v2995 = vmax.f32 %v2963, 0.0
        %v2996 = vmax.f32 %v2964, 0.0
        %v2997 = vmax.f32 %v2965, 0.0
        %v2998 = vmax.f32 %v2966, 0.0
        %v2999 = vmax.f32 %v2967, 0.0
        %3000 = vst [vmem:[#allocation2] sm:$0xff] 0.0
        %3001 = vst [vmem:[#allocation2 + $0x8] sm:$0xff] 0.0
        %3002 = vst [vmem:[#allocation2 + $0x10] sm:$0x3] 0.0
        %3003 = vst [vmem:[#allocation2 + $0x18] sm:$0xff] 0.0
        %3004 = vst [vmem:[#allocation2 + $0x20] sm:$0xff] 0.0
        %3005 = vst [vmem:[#allocation2 + $0x28] sm:$0x3] 0.0
        %3006 = vst [vmem:[#allocation2 + $0x30] sm:$0xff] 0.0
        %3007 = vst [vmem:[#allocation2 + $0x38] sm:$0xff] 0.0
        %3008 = vst [vmem:[#allocation2 + $0x40] sm:$0x3] 0.0
        %3009 = vst [vmem:[#allocation2 + $0x48] sm:$0xff] 0.0
        %3010 = vst [vmem:[#allocation2 + $0x50] sm:$0xff] 0.0
        %3011 = vst [vmem:[#allocation2 + $0x58] sm:$0x3] 0.0
        %3012 = vst [vmem:[#allocation2 + $0x60] sm:$0xff] 0.0
        %3013 = vst [vmem:[#allocation2 + $0x68] sm:$0xff] 0.0
        %3014 = vst [vmem:[#allocation2 + $0x70] sm:$0x3] 0.0
        %3015 = vst [vmem:[#allocation2 + $0x78] sm:$0xff] 0.0
        %3016 = vst [vmem:[#allocation2 + $0x80] sm:$0xff] 0.0
        %3017 = vst [vmem:[#allocation2 + $0x88] sm:$0x3] 0.0
        %3018 = vst [vmem:[#allocation2 + $0x90] sm:$0xff] 0.0
        %3019 = vst [vmem:[#allocation2 + $0x98] sm:$0xff] 0.0
        %3020 = vst [vmem:[#allocation2 + $0xa0] sm:$0x3] 0.0
        %3021 = vst [vmem:[#allocation2 + $0xa8] sm:$0xff] 0.0
        %3022 = vst [vmem:[#allocation2 + $0xb0] sm:$0xff] 0.0
        %3023 = vst [vmem:[#allocation2 + $0xb8] sm:$0x3] 0.0
        %3024 = vst [vmem:[#allocation2 + $0xc0] sm:$0xff] 0.0
        %3025 = vst [vmem:[#allocation2 + $0xc8] sm:$0xff] 0.0
        %3026 = vst [vmem:[#allocation2 + $0xd0] sm:$0x3] 0.0
        %3027 = vst [vmem:[#allocation2 + $0xd8] sm:$0xff] 0.0
        %3028 = vst [vmem:[#allocation2 + $0xe0] sm:$0xff] 0.0
        %3029 = vst [vmem:[#allocation2 + $0xe8] sm:$0x3] 0.0
        %3030 = vst [vmem:[#allocation2 + $0xf0] sm:$0xff] 0.0
        %3031 = vst [vmem:[#allocation2 + $0xf8] sm:$0xff] 0.0
        %3032 = vst [vmem:[#allocation2 + $0x100] sm:$0x3] 0.0
        %3033 = vst [vmem:[#allocation2 + $0x108] sm:$0xff] 0.0
        %3034 = vst [vmem:[#allocation2 + $0x110] sm:$0xff] 0.0
        %3035 = vst [vmem:[#allocation2 + $0x118] sm:$0x3] 0.0
        %3036 = vst [vmem:[#allocation2 + $0x120] sm:$0xff] 0.0
        %3037 = vst [vmem:[#allocation2 + $0x128] sm:$0xff] 0.0
        %3038 = vst [vmem:[#allocation2 + $0x130] sm:$0x3] 0.0
        %3039 = vst [vmem:[#allocation2 + $0x138] sm:$0xff] 0.0
        %3040 = vst [vmem:[#allocation2 + $0x140] sm:$0xff] 0.0
        %3041 = vst [vmem:[#allocation2 + $0x148] sm:$0x3] 0.0
        %3042 = vst [vmem:[#allocation2 + $0x150] sm:$0xff] 0.0
        %3043 = vst [vmem:[#allocation2 + $0x158] sm:$0xff] 0.0
        %3044 = vst [vmem:[#allocation2 + $0x160] sm:$0x3] 0.0
        %3045 = vst [vmem:[#allocation2 + $0x168] sm:$0xff] 0.0
        %3046 = vst [vmem:[#allocation2 + $0x170] sm:$0xff] 0.0
        %3047 = vst [vmem:[#allocation2 + $0x178] sm:$0x3] 0.0
        %3048 = vst [vmem:[#allocation2 + $0x180] sm:$0xff] 0.0
        %3049 = vst [vmem:[#allocation2 + $0x188] sm:$0xff] 0.0
        %3050 = vst [vmem:[#allocation2 + $0x190] sm:$0x3] 0.0
        %3051 = vst [vmem:[#allocation2 + $0x198] sm:$0xff] 0.0
        %3052 = vst [vmem:[#allocation2 + $0x1a0] sm:$0xff] 0.0
        %3053 = vst [vmem:[#allocation2 + $0x1a8] sm:$0x3] 0.0
        %s3054 = scalar_lea.vmem [#allocation2], 24
        %3055 = vst [vmem:[%s3054 + $0x1] sm:$0xff] %v2968
        %3056 = vst [vmem:[%s3054 + $0x9] sm:$0xff] %v2969
        %3057 = vst [vmem:[%s3054 + $0x19] sm:$0xff] %v2970
        %3058 = vst [vmem:[%s3054 + $0x21] sm:$0xff] %v2971
        %3059 = vst [vmem:[%s3054 + $0x31] sm:$0xff] %v2972
        %3060 = vst [vmem:[%s3054 + $0x39] sm:$0xff] %v2973
        %3061 = vst [vmem:[%s3054 + $0x49] sm:$0xff] %v2974
        %3062 = vst [vmem:[%s3054 + $0x51] sm:$0xff] %v2975
        %3063 = vst [vmem:[%s3054 + $0x61] sm:$0xff] %v2976
        %3064 = vst [vmem:[%s3054 + $0x69] sm:$0xff] %v2977
        %3065 = vst [vmem:[%s3054 + $0x79] sm:$0xff] %v2978
        %3066 = vst [vmem:[%s3054 + $0x81] sm:$0xff] %v2979
        %3067 = vst [vmem:[%s3054 + $0x91] sm:$0xff] %v2980
        %3068 = vst [vmem:[%s3054 + $0x99] sm:$0xff] %v2981
        %3069 = vst [vmem:[%s3054 + $0xa9] sm:$0xff] %v2982
        %3070 = vst [vmem:[%s3054 + $0xb1] sm:$0xff] %v2983
        %3071 = vst [vmem:[%s3054 + $0xc1] sm:$0xff] %v2984
        %3072 = vst [vmem:[%s3054 + $0xc9] sm:$0xff] %v2985
        %3073 = vst [vmem:[%s3054 + $0xd9] sm:$0xff] %v2986
        %3074 = vst [vmem:[%s3054 + $0xe1] sm:$0xff] %v2987
        %3075 = vst [vmem:[%s3054 + $0xf1] sm:$0xff] %v2988
        %3076 = vst [vmem:[%s3054 + $0xf9] sm:$0xff] %v2989
        %3077 = vst [vmem:[%s3054 + $0x109] sm:$0xff] %v2990
        %3078 = vst [vmem:[%s3054 + $0x111] sm:$0xff] %v2991
        %3079 = vst [vmem:[%s3054 + $0x121] sm:$0xff] %v2992
        %3080 = vst [vmem:[%s3054 + $0x129] sm:$0xff] %v2993
        %3081 = vst [vmem:[%s3054 + $0x139] sm:$0xff] %v2994
        %3082 = vst [vmem:[%s3054 + $0x141] sm:$0xff] %v2995
        %3083 = vst [vmem:[%s3054 + $0x151] sm:$0xff] %v2996
        %3084 = vst [vmem:[%s3054 + $0x159] sm:$0xff] %v2997
        %3085 = vst [vmem:[%s3054 + $0x169] sm:$0xff] %v2998
        %3086 = vst [vmem:[%s3054 + $0x171] sm:$0xff] %v2999
        %v3087 = vld [vmem:[#allocation2] sm:$0xff]
        %v3088 = vld [vmem:[#allocation2 + $0x8] sm:$0xff]
        %v3089 = vld [vmem:[#allocation2 + $0x18] sm:$0xff]
        %v3090 = vld [vmem:[#allocation2 + $0x20] sm:$0xff]
        %v3091 = vld [vmem:[#allocation2 + $0x30] sm:$0xff]
        %v3092 = vld [vmem:[#allocation2 + $0x38] sm:$0xff]
        %v3093 = vld [vmem:[#allocation2 + $0x48] sm:$0xff]
        %v3094 = vld [vmem:[#allocation2 + $0x50] sm:$0xff]
        %v3095 = vld [vmem:[#allocation2 + $0x60] sm:$0xff]
        %v3096 = vld [vmem:[#allocation2 + $0x68] sm:$0xff]
        %v3097 = vld [vmem:[#allocation2 + $0x78] sm:$0xff]
        %v3098 = vld [vmem:[#allocation2 + $0x80] sm:$0xff]
        %v3099 = vld [vmem:[#allocation2 + $0x90] sm:$0xff]
        %v3100 = vld [vmem:[#allocation2 + $0x98] sm:$0xff]
        %v3101 = vld [vmem:[#allocation2 + $0xa8] sm:$0xff]
        %v3102 = vld [vmem:[#allocation2 + $0xb0] sm:$0xff]
        %v3103 = vld [vmem:[#allocation2 + $0xc0] sm:$0xff]
        %v3104 = vld [vmem:[#allocation2 + $0xc8] sm:$0xff]
        %v3105 = vld [vmem:[#allocation2 + $0xd8] sm:$0xff]
        %v3106 = vld [vmem:[#allocation2 + $0xe0] sm:$0xff]
        %v3107 = vld [vmem:[#allocation2 + $0xf0] sm:$0xff]
        %v3108 = vld [vmem:[#allocation2 + $0xf8] sm:$0xff]
        %v3109 = vld [vmem:[#allocation2 + $0x108] sm:$0xff]
        %v3110 = vld [vmem:[#allocation2 + $0x110] sm:$0xff]
        %v3111 = vld [vmem:[#allocation2 + $0x120] sm:$0xff]
        %v3112 = vld [vmem:[#allocation2 + $0x128] sm:$0xff]
        %v3113 = vld [vmem:[#allocation2 + $0x138] sm:$0xff]
        %v3114 = vld [vmem:[#allocation2 + $0x140] sm:$0xff]
        %v3115 = vld [vmem:[#allocation2 + $0x150] sm:$0xff]
        %v3116 = vld [vmem:[#allocation2 + $0x158] sm:$0xff]
        %v3117 = vld [vmem:[#allocation2 + $0x168] sm:$0xff]
        %v3118 = vld [vmem:[#allocation2 + $0x170] sm:$0xff]
        %v3119 = vld [vmem:[#allocation3] sm:$0xff]
        %v3120 = vld [vmem:[#allocation3 + $0x8] sm:$0xff]
        %v3121 = vld [vmem:[#allocation3 + $0x10] sm:$0xff]
        %v3122 = vld [vmem:[#allocation3 + $0x18] sm:$0xff]
        %v3123 = vld [vmem:[#allocation3 + $0x20] sm:$0xff]
        %v3124 = vld [vmem:[#allocation3 + $0x28] sm:$0xff]
        %v3125 = vld [vmem:[#allocation3 + $0x30] sm:$0xff]
        %v3126 = vld [vmem:[#allocation3 + $0x38] sm:$0xff]
        %v3127 = vld [vmem:[#allocation3 + $0x40] sm:$0xff]
        %v3128 = vld [vmem:[#allocation3 + $0x48] sm:$0xff]
        %v3129 = vld [vmem:[#allocation3 + $0x50] sm:$0xff]
        %v3130 = vld [vmem:[#allocation3 + $0x58] sm:$0xff]
        %v3131 = vld [vmem:[#allocation3 + $0x60] sm:$0xff]
        %v3132 = vld [vmem:[#allocation3 + $0x68] sm:$0xff]
        %v3133 = vld [vmem:[#allocation3 + $0x70] sm:$0xff]
        %v3134 = vld [vmem:[#allocation3 + $0x78] sm:$0xff]
        %v3135 = vld [vmem:[#allocation2 + $0x1] sm:$0xff]
        %v3136 = vld [vmem:[#allocation2 + $0x9] sm:$0xff]
        %v3137 = vld [vmem:[#allocation2 + $0x19] sm:$0xff]
        %v3138 = vld [vmem:[#allocation2 + $0x21] sm:$0xff]
        %v3139 = vld [vmem:[#allocation2 + $0x31] sm:$0xff]
        %v3140 = vld [vmem:[#allocation2 + $0x39] sm:$0xff]
        %v3141 = vld [vmem:[#allocation2 + $0x49] sm:$0xff]
        %v3142 = vld [vmem:[#allocation2 + $0x51] sm:$0xff]
        %v3143 = vld [vmem:[#allocation2 + $0x61] sm:$0xff]
        %v3144 = vld [vmem:[#allocation2 + $0x69] sm:$0xff]
        %v3145 = vld [vmem:[#allocation2 + $0x79] sm:$0xff]
        %v3146 = vld [vmem:[#allocation2 + $0x81] sm:$0xff]
        %v3147 = vld [vmem:[#allocation2 + $0x91] sm:$0xff]
        %v3148 = vld [vmem:[#allocation2 + $0x99] sm:$0xff]
        %v3149 = vld [vmem:[#allocation2 + $0xa9] sm:$0xff]
        %v3150 = vld [vmem:[#allocation2 + $0xb1] sm:$0xff]
        %v3151 = vld [vmem:[#allocation2 + $0xc1] sm:$0xff]
        %v3152 = vld [vmem:[#allocation2 + $0xc9] sm:$0xff]
        %v3153 = vld [vmem:[#allocation2 + $0xd9] sm:$0xff]
        %v3154 = vld [vmem:[#allocation2 + $0xe1] sm:$0xff]
        %v3155 = vld [vmem:[#allocation2 + $0xf1] sm:$0xff]
        %v3156 = vld [vmem:[#allocation2 + $0xf9] sm:$0xff]
        %v3157 = vld [vmem:[#allocation2 + $0x109] sm:$0xff]
        %v3158 = vld [vmem:[#allocation2 + $0x111] sm:$0xff]
        %v3159 = vld [vmem:[#allocation2 + $0x121] sm:$0xff]
        %v3160 = vld [vmem:[#allocation2 + $0x129] sm:$0xff]
        %v3161 = vld [vmem:[#allocation2 + $0x139] sm:$0xff]
        %v3162 = vld [vmem:[#allocation2 + $0x141] sm:$0xff]
        %v3163 = vld [vmem:[#allocation2 + $0x151] sm:$0xff]
        %v3164 = vld [vmem:[#allocation2 + $0x159] sm:$0xff]
        %v3165 = vld [vmem:[#allocation2 + $0x169] sm:$0xff]
        %v3166 = vld [vmem:[#allocation2 + $0x171] sm:$0xff]
        %s3167 = scalar_lea.vmem [#allocation3], 128
        %v3168 = vld [vmem:[%s3167] sm:$0xff]
        %v3169 = vld [vmem:[%s3167 + $0x8] sm:$0xff]
        %v3170 = vld [vmem:[%s3167 + $0x10] sm:$0xff]
        %v3171 = vld [vmem:[%s3167 + $0x18] sm:$0xff]
        %v3172 = vld [vmem:[%s3167 + $0x20] sm:$0xff]
        %v3173 = vld [vmem:[%s3167 + $0x28] sm:$0xff]
        %v3174 = vld [vmem:[%s3167 + $0x30] sm:$0xff]
        %v3175 = vld [vmem:[%s3167 + $0x38] sm:$0xff]
        %v3176 = vld [vmem:[%s3167 + $0x40] sm:$0xff]
        %v3177 = vld [vmem:[%s3167 + $0x48] sm:$0xff]
        %v3178 = vld [vmem:[%s3167 + $0x50] sm:$0xff]
        %v3179 = vld [vmem:[%s3167 + $0x58] sm:$0xff]
        %v3180 = vld [vmem:[%s3167 + $0x60] sm:$0xff]
        %v3181 = vld [vmem:[%s3167 + $0x68] sm:$0xff]
        %v3182 = vld [vmem:[%s3167 + $0x70] sm:$0xff]
        %v3183 = vld [vmem:[%s3167 + $0x78] sm:$0xff]
        %3184 = vmatprep.subr.mxu0 0.0
        %3185 = vmatpush1.msra.mxu0 %v3168
        %3186 = vmatprep.subr.mxu0 0.0
        %3187 = vmatpush1.msra.mxu0 %v3169
        %3188 = vmatprep.subr.mxu0 0.0
        %3189 = vmatpush1.msra.mxu0 %v3170
        %3190 = vmatprep.subr.mxu0 0.0
        %3191 = vmatpush1.msra.mxu0 %v3171
        %3192 = vmatprep.subr.mxu0 0.0
        %3193 = vmatpush1.msra.mxu0 %v3172
        %3194 = vmatprep.subr.mxu0 0.0
        %3195 = vmatpush1.msra.mxu0 %v3173
        %3196 = vmatprep.subr.mxu0 0.0
        %3197 = vmatpush1.msra.mxu0 %v3174
        %3198 = vmatprep.subr.mxu0 0.0
        %3199 = vmatpush1.msra.mxu0 %v3175
        %3200 = vmatprep.subr.mxu0 0.0
        %3201 = vmatpush1.msra.mxu0 %v3176
        %3202 = vmatprep.subr.mxu0 0.0
        %3203 = vmatpush1.msra.mxu0 %v3177
        %3204 = vmatprep.subr.mxu0 0.0
        %3205 = vmatpush1.msra.mxu0 %v3178
        %3206 = vmatprep.subr.mxu0 0.0
        %3207 = vmatpush1.msra.mxu0 %v3179
        %3208 = vmatprep.subr.mxu0 0.0
        %3209 = vmatpush1.msra.mxu0 %v3180
        %3210 = vmatprep.subr.mxu0 0.0
        %3211 = vmatpush1.msra.mxu0 %v3181
        %3212 = vmatprep.subr.mxu0 0.0
        %3213 = vmatpush1.msra.mxu0 %v3182
        %3214 = vmatprep.subr.mxu0 0.0
        %3215 = vmatpush1.msra.mxu0 %v3183
        %3216 = vmatprep.subr.mxu0 0.0
        %3217 = vmatpush1.msra.mxu0 0.0
        %3218 = vmatprep.subr.mxu0 0.0
        %3219 = vmatpush1.msra.mxu0 0.0
        %3220 = vmatprep.subr.mxu0 0.0
        %3221 = vmatpush1.msra.mxu0 0.0
        %3222 = vmatprep.subr.mxu0 0.0
        %3223 = vmatpush1.msra.mxu0 0.0
        %3224 = vmatprep.subr.mxu0 0.0
        %3225 = vmatpush1.msra.mxu0 0.0
        %3226 = vmatprep.subr.mxu0 0.0
        %3227 = vmatpush1.msra.mxu0 0.0
        %3228 = vmatprep.subr.mxu0 0.0
        %3229 = vmatpush1.msra.mxu0 0.0
        %3230 = vmatprep.subr.mxu0 0.0
        %3231 = vmatpush1.msra.mxu0 0.0
        %3232 = vmatprep.subr.mxu0 0.0
        %3233 = vmatpush1.msra.mxu0 0.0
        %3234 = vmatprep.subr.mxu0 0.0
        %3235 = vmatpush1.msra.mxu0 0.0
        %3236 = vmatprep.subr.mxu0 0.0
        %3237 = vmatpush1.msra.mxu0 0.0
        %3238 = vmatprep.subr.mxu0 0.0
        %3239 = vmatpush1.msra.mxu0 0.0
        %3240 = vmatprep.subr.mxu0 0.0
        %3241 = vmatpush1.msra.mxu0 0.0
        %3242 = vmatprep.subr.mxu0 0.0
        %3243 = vmatpush1.msra.mxu0 0.0
        %3244 = vmatprep.subr.mxu0 0.0
        %3245 = vmatpush1.msra.mxu0 0.0
        %3246 = vmatprep.subr.mxu0 0.0
        %3247 = vmatpush1.msra.mxu0 0.0
        %3248 = vmatprep.mubr.f32.mxu0 0.0
        %3249 = vmatmul.mubr.f32.gmra.mrb[0].mxu0 %v3135
        %v3250 = vpop.f32.mrb[0].mxu0
        %v3251 = vadd.f32 0.0, %v3250
        %v3252 = vpop.f32.mrb[0].mxu0
        %3253 = vmatprep.mubr.f32.mxu0 0.0
        %3254 = vmatmul.mubr.f32.gmra.mrb[0].mxu0 %v3136
        %v3255 = vpop.f32.mrb[0].mxu0
        %v3256 = vadd.f32 0.0, %v3255
        %v3257 = vpop.f32.mrb[0].mxu0
        %3258 = vmatprep.mubr.f32.mxu0 0.0
        %3259 = vmatmul.mubr.f32.gmra.mrb[0].mxu0 %v3137
        %v3260 = vpop.f32.mrb[0].mxu0
        %v3261 = vadd.f32 0.0, %v3260
        %v3262 = vpop.f32.mrb[0].mxu0
        %3263 = vmatprep.mubr.f32.mxu0 0.0
        %3264 = vmatmul.mubr.f32.gmra.mrb[0].mxu0 %v3138
        %v3265 = vpop.f32.mrb[0].mxu0
        %v3266 = vadd.f32 0.0, %v3265
        %v3267 = vpop.f32.mrb[0].mxu0
        %3268 = vmatprep.mubr.f32.mxu0 0.0
        %3269 = vmatmul.mubr.f32.gmra.mrb[0].mxu0 %v3139
        %v3270 = vpop.f32.mrb[0].mxu0
        %v3271 = vadd.f32 0.0, %v3270
        %v3272 = vpop.f32.mrb[0].mxu0
        %3273 = vmatprep.mubr.f32.mxu0 0.0
        %3274 = vmatmul.mubr.f32.gmra.mrb[0].mxu0 %v3140
        %v3275 = vpop.f32.mrb[0].mxu0
        %v3276 = vadd.f32 0.0, %v3275
        %v3277 = vpop.f32.mrb[0].mxu0
        %3278 = vmatprep.mubr.f32.mxu0 0.0
        %3279 = vmatmul.mubr.f32.gmra.mrb[0].mxu0 %v3141
        %v3280 = vpop.f32.mrb[0].mxu0
        %v3281 = vadd.f32 0.0, %v3280
        %v3282 = vpop.f32.mrb[0].mxu0
        %3283 = vmatprep.mubr.f32.mxu0 0.0
        %3284 = vmatmul.mubr.f32.gmra.mrb[0].mxu0 %v3142
        %v3285 = vpop.f32.mrb[0].mxu0
        %v3286 = vadd.f32 0.0, %v3285
        %v3287 = vpop.f32.mrb[0].mxu0
        %3288 = vmatprep.mubr.f32.mxu0 0.0
        %3289 = vmatmul.mubr.f32.gmra.mrb[0].mxu0 %v3143
        %v3290 = vpop.f32.mrb[0].mxu0
        %v3291 = vadd.f32 0.0, %v3290
        %v3292 = vpop.f32.mrb[0].mxu0
        %3293 = vmatprep.mubr.f32.mxu0 0.0
        %3294 = vmatmul.mubr.f32.gmra.mrb[0].mxu0 %v3144
        %v3295 = vpop.f32.mrb[0].mxu0
        %v3296 = vadd.f32 0.0, %v3295
        %v3297 = vpop.f32.mrb[0].mxu0
        %3298 = vmatprep.mubr.f32.mxu0 0.0
        %3299 = vmatmul.mubr.f32.gmra.mrb[0].mxu0 %v3145
        %v3300 = vpop.f32.mrb[0].mxu0
        %v3301 = vadd.f32 0.0, %v3300
        %v3302 = vpop.f32.mrb[0].mxu0
        %3303 = vmatprep.mubr.f32.mxu0 0.0
        %3304 = vmatmul.mubr.f32.gmra.mrb[0].mxu0 %v3146
        %v3305 = vpop.f32.mrb[0].mxu0
        %v3306 = vadd.f32 0.0, %v3305
        %v3307 = vpop.f32.mrb[0].mxu0
        %3308 = vmatprep.mubr.f32.mxu0 0.0
        %3309 = vmatmul.mubr.f32.gmra.mrb[0].mxu0 %v3147
        %v3310 = vpop.f32.mrb[0].mxu0
        %v3311 = vadd.f32 0.0, %v3310
        %v3312 = vpop.f32.mrb[0].mxu0
        %3313 = vmatprep.mubr.f32.mxu0 0.0
        %3314 = vmatmul.mubr.f32.gmra.mrb[0].mxu0 %v3148
        %v3315 = vpop.f32.mrb[0].mxu0
        %v3316 = vadd.f32 0.0, %v3315
        %v3317 = vpop.f32.mrb[0].mxu0
        %3318 = vmatprep.mubr.f32.mxu0 0.0
        %3319 = vmatmul.mubr.f32.gmra.mrb[0].mxu0 %v3149
        %v3320 = vpop.f32.mrb[0].mxu0
        %v3321 = vadd.f32 0.0, %v3320
        %v3322 = vpop.f32.mrb[0].mxu0
        %3323 = vmatprep.mubr.f32.mxu0 0.0
        %3324 = vmatmul.mubr.f32.gmra.mrb[0].mxu0 %v3150
        %v3325 = vpop.f32.mrb[0].mxu0
        %v3326 = vadd.f32 0.0, %v3325
        %v3327 = vpop.f32.mrb[0].mxu0
        %3328 = vmatprep.mubr.f32.mxu0 0.0
        %3329 = vmatmul.mubr.f32.gmra.mrb[0].mxu0 %v3151
        %v3330 = vpop.f32.mrb[0].mxu0
        %v3331 = vadd.f32 0.0, %v3330
        %v3332 = vpop.f32.mrb[0].mxu0
        %3333 = vmatprep.mubr.f32.mxu0 0.0
        %3334 = vmatmul.mubr.f32.gmra.mrb[0].mxu0 %v3152
        %v3335 = vpop.f32.mrb[0].mxu0
        %v3336 = vadd.f32 0.0, %v3335
        %v3337 = vpop.f32.mrb[0].mxu0
        %3338 = vmatprep.mubr.f32.mxu0 0.0
        %3339 = vmatmul.mubr.f32.gmra.mrb[0].mxu0 %v3153
        %v3340 = vpop.f32.mrb[0].mxu0
        %v3341 = vadd.f32 0.0, %v3340
        %v3342 = vpop.f32.mrb[0].mxu0
        %3343 = vmatprep.mubr.f32.mxu0 0.0
        %3344 = vmatmul.mubr.f32.gmra.mrb[0].mxu0 %v3154
        %v3345 = vpop.f32.mrb[0].mxu0
        %v3346 = vadd.f32 0.0, %v3345
        %v3347 = vpop.f32.mrb[0].mxu0
        %3348 = vmatprep.mubr.f32.mxu0 0.0
        %3349 = vmatmul.mubr.f32.gmra.mrb[0].mxu0 %v3155
        %v3350 = vpop.f32.mrb[0].mxu0
        %v3351 = vadd.f32 0.0, %v3350
        %v3352 = vpop.f32.mrb[0].mxu0
        %3353 = vmatprep.mubr.f32.mxu0 0.0
        %3354 = vmatmul.mubr.f32.gmra.mrb[0].mxu0 %v3156
        %v3355 = vpop.f32.mrb[0].mxu0
        %v3356 = vadd.f32 0.0, %v3355
        %v3357 = vpop.f32.mrb[0].mxu0
        %3358 = vmatprep.mubr.f32.mxu0 0.0
        %3359 = vmatmul.mubr.f32.gmra.mrb[0].mxu0 %v3157
        %v3360 = vpop.f32.mrb[0].mxu0
        %v3361 = vadd.f32 0.0, %v3360
        %v3362 = vpop.f32.mrb[0].mxu0
        %3363 = vmatprep.mubr.f32.mxu0 0.0
        %3364 = vmatmul.mubr.f32.gmra.mrb[0].mxu0 %v3158
        %v3365 = vpop.f32.mrb[0].mxu0
        %v3366 = vadd.f32 0.0, %v3365
        %v3367 = vpop.f32.mrb[0].mxu0
        %3368 = vmatprep.mubr.f32.mxu0 0.0
        %3369 = vmatmul.mubr.f32.gmra.mrb[0].mxu0 %v3159
        %v3370 = vpop.f32.mrb[0].mxu0
        %v3371 = vadd.f32 0.0, %v3370
        %v3372 = vpop.f32.mrb[0].mxu0
        %3373 = vmatprep.mubr.f32.mxu0 0.0
        %3374 = vmatmul.mubr.f32.gmra.mrb[0].mxu0 %v3160
        %v3375 = vpop.f32.mrb[0].mxu0
        %v3376 = vadd.f32 0.0, %v3375
        %v3377 = vpop.f32.mrb[0].mxu0
        %3378 = vmatprep.mubr.f32.mxu0 0.0
        %3379 = vmatmul.mubr.f32.gmra.mrb[0].mxu0 %v3161
        %v3380 = vpop.f32.mrb[0].mxu0
        %v3381 = vadd.f32 0.0, %v3380
        %v3382 = vpop.f32.mrb[0].mxu0
        %3383 = vmatprep.mubr.f32.mxu0 0.0
        %3384 = vmatmul.mubr.f32.gmra.mrb[0].mxu0 %v3162
        %v3385 = vpop.f32.mrb[0].mxu0
        %v3386 = vadd.f32 0.0, %v3385
        %v3387 = vpop.f32.mrb[0].mxu0
        %3388 = vmatprep.mubr.f32.mxu0 0.0
        %3389 = vmatmul.mubr.f32.gmra.mrb[0].mxu0 %v3163
        %v3390 = vpop.f32.mrb[0].mxu0
        %v3391 = vadd.f32 0.0, %v3390
        %v3392 = vpop.f32.mrb[0].mxu0
        %3393 = vmatprep.mubr.f32.mxu0 0.0
        %3394 = vmatmul.mubr.f32.gmra.mrb[0].mxu0 %v3164
        %v3395 = vpop.f32.mrb[0].mxu0
        %v3396 = vadd.f32 0.0, %v3395
        %v3397 = vpop.f32.mrb[0].mxu0
        %3398 = vmatprep.mubr.f32.mxu0 0.0
        %3399 = vmatmul.mubr.f32.gmra.mrb[0].mxu0 %v3165
        %v3400 = vpop.f32.mrb[0].mxu0
        %v3401 = vadd.f32 0.0, %v3400
        %v3402 = vpop.f32.mrb[0].mxu0
        %3403 = vmatprep.mubr.f32.mxu0 0.0
        %3404 = vmatmul.mubr.f32.gmra.mrb[0].mxu0 %v3166
        %v3405 = vpop.f32.mrb[0].mxu0
        %v3406 = vadd.f32 0.0, %v3405
        %v3407 = vpop.f32.mrb[0].mxu0
        %3408 = vdwg.mxu0
        %3409 = vmatprep.subr.mxu0 0.0
        %3410 = vmatpush1.msra.mxu0 %v3119
        %3411 = vmatprep.subr.mxu0 0.0
        %3412 = vmatpush1.msra.mxu0 %v3120
        %3413 = vmatprep.subr.mxu0 0.0
        %3414 = vmatpush1.msra.mxu0 %v3121
        %3415 = vmatprep.subr.mxu0 0.0
        %3416 = vmatpush1.msra.mxu0 %v3122
        %3417 = vmatprep.subr.mxu0 0.0
        %3418 = vmatpush1.msra.mxu0 %v3123
        %3419 = vmatprep.subr.mxu0 0.0
        %3420 = vmatpush1.msra.mxu0 %v3124
        %3421 = vmatprep.subr.mxu0 0.0
        %3422 = vmatpush1.msra.mxu0 %v3125
        %3423 = vmatprep.subr.mxu0 0.0
        %3424 = vmatpush1.msra.mxu0 %v3126
        %3425 = vmatprep.subr.mxu0 0.0
        %3426 = vmatpush1.msra.mxu0 %v3127
        %3427 = vmatprep.subr.mxu0 0.0
        %3428 = vmatpush1.msra.mxu0 %v3128
        %3429 = vmatprep.subr.mxu0 0.0
        %3430 = vmatpush1.msra.mxu0 %v3129
        %3431 = vmatprep.subr.mxu0 0.0
        %3432 = vmatpush1.msra.mxu0 %v3130
        %3433 = vmatprep.subr.mxu0 0.0
        %3434 = vmatpush1.msra.mxu0 %v3131
        %3435 = vmatprep.subr.mxu0 0.0
        %3436 = vmatpush1.msra.mxu0 %v3132
        %3437 = vmatprep.subr.mxu0 0.0
        %3438 = vmatpush1.msra.mxu0 %v3133
        %3439 = vmatprep.subr.mxu0 0.0
        %3440 = vmatpush1.msra.mxu0 %v3134
        %3441 = vmatprep.subr.mxu0 0.0
        %3442 = vmatpush1.msra.mxu0 0.0
        %3443 = vmatprep.subr.mxu0 0.0
        %3444 = vmatpush1.msra.mxu0 0.0
        %3445 = vmatprep.subr.mxu0 0.0
        %3446 = vmatpush1.msra.mxu0 0.0
        %3447 = vmatprep.subr.mxu0 0.0
        %3448 = vmatpush1.msra.mxu0 0.0
        %3449 = vmatprep.subr.mxu0 0.0
        %3450 = vmatpush1.msra.mxu0 0.0
        %3451 = vmatprep.subr.mxu0 0.0
        %3452 = vmatpush1.msra.mxu0 0.0
        %3453 = vmatprep.subr.mxu0 0.0
        %3454 = vmatpush1.msra.mxu0 0.0
        %3455 = vmatprep.subr.mxu0 0.0
        %3456 = vmatpush1.msra.mxu0 0.0
        %3457 = vmatprep.subr.mxu0 0.0
        %3458 = vmatpush1.msra.mxu0 0.0
        %3459 = vmatprep.subr.mxu0 0.0
        %3460 = vmatpush1.msra.mxu0 0.0
        %3461 = vmatprep.subr.mxu0 0.0
        %3462 = vmatpush1.msra.mxu0 0.0
        %3463 = vmatprep.subr.mxu0 0.0
        %3464 = vmatpush1.msra.mxu0 0.0
        %3465 = vmatprep.subr.mxu0 0.0
        %3466 = vmatpush1.msra.mxu0 0.0
        %3467 = vmatprep.subr.mxu0 0.0
        %3468 = vmatpush1.msra.mxu0 0.0
        %3469 = vmatprep.subr.mxu0 0.0
        %3470 = vmatpush1.msra.mxu0 0.0
        %3471 = vmatprep.subr.mxu0 0.0
        %3472 = vmatpush1.msra.mxu0 0.0
        %3473 = vmatprep.mubr.f32.mxu0 0.0
        %3474 = vmatmul.mubr.f32.gmra.mrb[0].mxu0 %v3087
        %v3475 = vpop.f32.mrb[0].mxu0
        %v3476 = vadd.f32 %v3251, %v3475
        %v3477 = vpop.f32.mrb[0].mxu0
        %3478 = vmatprep.mubr.f32.mxu0 0.0
        %3479 = vmatmul.mubr.f32.gmra.mrb[0].mxu0 %v3088
        %v3480 = vpop.f32.mrb[0].mxu0
        %v3481 = vadd.f32 %v3256, %v3480
        %v3482 = vpop.f32.mrb[0].mxu0
        %3483 = vmatprep.mubr.f32.mxu0 0.0
        %3484 = vmatmul.mubr.f32.gmra.mrb[0].mxu0 %v3089
        %v3485 = vpop.f32.mrb[0].mxu0
        %v3486 = vadd.f32 %v3261, %v3485
        %v3487 = vpop.f32.mrb[0].mxu0
        %3488 = vmatprep.mubr.f32.mxu0 0.0
        %3489 = vmatmul.mubr.f32.gmra.mrb[0].mxu0 %v3090
        %v3490 = vpop.f32.mrb[0].mxu0
        %v3491 = vadd.f32 %v3266, %v3490
        %v3492 = vpop.f32.mrb[0].mxu0
        %3493 = vmatprep.mubr.f32.mxu0 0.0
        %3494 = vmatmul.mubr.f32.gmra.mrb[0].mxu0 %v3091
        %v3495 = vpop.f32.mrb[0].mxu0
        %v3496 = vadd.f32 %v3271, %v3495
        %v3497 = vpop.f32.mrb[0].mxu0
        %3498 = vmatprep.mubr.f32.mxu0 0.0
        %3499 = vmatmul.mubr.f32.gmra.mrb[0].mxu0 %v3092
        %v3500 = vpop.f32.mrb[0].mxu0
        %v3501 = vadd.f32 %v3276, %v3500
        %v3502 = vpop.f32.mrb[0].mxu0
        %3503 = vmatprep.mubr.f32.mxu0 0.0
        %3504 = vmatmul.mubr.f32.gmra.mrb[0].mxu0 %v3093
        %v3505 = vpop.f32.mrb[0].mxu0
        %v3506 = vadd.f32 %v3281, %v3505
        %v3507 = vpop.f32.mrb[0].mxu0
        %3508 = vmatprep.mubr.f32.mxu0 0.0
        %3509 = vmatmul.mubr.f32.gmra.mrb[0].mxu0 %v3094
        %v3510 = vpop.f32.mrb[0].mxu0
        %v3511 = vadd.f32 %v3286, %v3510
        %v3512 = vpop.f32.mrb[0].mxu0
        %3513 = vmatprep.mubr.f32.mxu0 0.0
        %3514 = vmatmul.mubr.f32.gmra.mrb[0].mxu0 %v3095
        %v3515 = vpop.f32.mrb[0].mxu0
        %v3516 = vadd.f32 %v3291, %v3515
        %v3517 = vpop.f32.mrb[0].mxu0
        %3518 = vmatprep.mubr.f32.mxu0 0.0
        %3519 = vmatmul.mubr.f32.gmra.mrb[0].mxu0 %v3096
        %v3520 = vpop.f32.mrb[0].mxu0
        %v3521 = vadd.f32 %v3296, %v3520
        %v3522 = vpop.f32.mrb[0].mxu0
        %3523 = vmatprep.mubr.f32.mxu0 0.0
        %3524 = vmatmul.mubr.f32.gmra.mrb[0].mxu0 %v3097
        %v3525 = vpop.f32.mrb[0].mxu0
        %v3526 = vadd.f32 %v3301, %v3525
        %v3527 = vpop.f32.mrb[0].mxu0
        %3528 = vmatprep.mubr.f32.mxu0 0.0
        %3529 = vmatmul.mubr.f32.gmra.mrb[0].mxu0 %v3098
        %v3530 = vpop.f32.mrb[0].mxu0
        %v3531 = vadd.f32 %v3306, %v3530
        %v3532 = vpop.f32.mrb[0].mxu0
        %3533 = vmatprep.mubr.f32.mxu0 0.0
        %3534 = vmatmul.mubr.f32.gmra.mrb[0].mxu0 %v3099
        %v3535 = vpop.f32.mrb[0].mxu0
        %v3536 = vadd.f32 %v3311, %v3535
        %v3537 = vpop.f32.mrb[0].mxu0
        %3538 = vmatprep.mubr.f32.mxu0 0.0
        %3539 = vmatmul.mubr.f32.gmra.mrb[0].mxu0 %v3100
        %v3540 = vpop.f32.mrb[0].mxu0
        %v3541 = vadd.f32 %v3316, %v3540
        %v3542 = vpop.f32.mrb[0].mxu0
        %3543 = vmatprep.mubr.f32.mxu0 0.0
        %3544 = vmatmul.mubr.f32.gmra.mrb[0].mxu0 %v3101
        %v3545 = vpop.f32.mrb[0].mxu0
        %v3546 = vadd.f32 %v3321, %v3545
        %v3547 = vpop.f32.mrb[0].mxu0
        %3548 = vmatprep.mubr.f32.mxu0 0.0
        %3549 = vmatmul.mubr.f32.gmra.mrb[0].mxu0 %v3102
        %v3550 = vpop.f32.mrb[0].mxu0
        %v3551 = vadd.f32 %v3326, %v3550
        %v3552 = vpop.f32.mrb[0].mxu0
        %3553 = vmatprep.mubr.f32.mxu0 0.0
        %3554 = vmatmul.mubr.f32.gmra.mrb[0].mxu0 %v3103
        %v3555 = vpop.f32.mrb[0].mxu0
        %v3556 = vadd.f32 %v3331, %v3555
        %v3557 = vpop.f32.mrb[0].mxu0
        %3558 = vmatprep.mubr.f32.mxu0 0.0
        %3559 = vmatmul.mubr.f32.gmra.mrb[0].mxu0 %v3104
        %v3560 = vpop.f32.mrb[0].mxu0
        %v3561 = vadd.f32 %v3336, %v3560
        %v3562 = vpop.f32.mrb[0].mxu0
        %3563 = vmatprep.mubr.f32.mxu0 0.0
        %3564 = vmatmul.mubr.f32.gmra.mrb[0].mxu0 %v3105
        %v3565 = vpop.f32.mrb[0].mxu0
        %v3566 = vadd.f32 %v3341, %v3565
        %v3567 = vpop.f32.mrb[0].mxu0
        %3568 = vmatprep.mubr.f32.mxu0 0.0
        %3569 = vmatmul.mubr.f32.gmra.mrb[0].mxu0 %v3106
        %v3570 = vpop.f32.mrb[0].mxu0
        %v3571 = vadd.f32 %v3346, %v3570
        %v3572 = vpop.f32.mrb[0].mxu0
        %3573 = vmatprep.mubr.f32.mxu0 0.0
        %3574 = vmatmul.mubr.f32.gmra.mrb[0].mxu0 %v3107
        %v3575 = vpop.f32.mrb[0].mxu0
        %v3576 = vadd.f32 %v3351, %v3575
        %v3577 = vpop.f32.mrb[0].mxu0
        %3578 = vmatprep.mubr.f32.mxu0 0.0
        %3579 = vmatmul.mubr.f32.gmra.mrb[0].mxu0 %v3108
        %v3580 = vpop.f32.mrb[0].mxu0
        %v3581 = vadd.f32 %v3356, %v3580
        %v3582 = vpop.f32.mrb[0].mxu0
        %3583 = vmatprep.mubr.f32.mxu0 0.0
        %3584 = vmatmul.mubr.f32.gmra.mrb[0].mxu0 %v3109
        %v3585 = vpop.f32.mrb[0].mxu0
        %v3586 = vadd.f32 %v3361, %v3585
        %v3587 = vpop.f32.mrb[0].mxu0
        %3588 = vmatprep.mubr.f32.mxu0 0.0
        %3589 = vmatmul.mubr.f32.gmra.mrb[0].mxu0 %v3110
        %v3590 = vpop.f32.mrb[0].mxu0
        %v3591 = vadd.f32 %v3366, %v3590
        %v3592 = vpop.f32.mrb[0].mxu0
        %3593 = vmatprep.mubr.f32.mxu0 0.0
        %3594 = vmatmul.mubr.f32.gmra.mrb[0].mxu0 %v3111
        %v3595 = vpop.f32.mrb[0].mxu0
        %v3596 = vadd.f32 %v3371, %v3595
        %v3597 = vpop.f32.mrb[0].mxu0
        %3598 = vmatprep.mubr.f32.mxu0 0.0
        %3599 = vmatmul.mubr.f32.gmra.mrb[0].mxu0 %v3112
        %v3600 = vpop.f32.mrb[0].mxu0
        %v3601 = vadd.f32 %v3376, %v3600
        %v3602 = vpop.f32.mrb[0].mxu0
        %3603 = vmatprep.mubr.f32.mxu0 0.0
        %3604 = vmatmul.mubr.f32.gmra.mrb[0].mxu0 %v3113
        %v3605 = vpop.f32.mrb[0].mxu0
        %v3606 = vadd.f32 %v3381, %v3605
        %v3607 = vpop.f32.mrb[0].mxu0
        %3608 = vmatprep.mubr.f32.mxu0 0.0
        %3609 = vmatmul.mubr.f32.gmra.mrb[0].mxu0 %v3114
        %v3610 = vpop.f32.mrb[0].mxu0
        %v3611 = vadd.f32 %v3386, %v3610
        %v3612 = vpop.f32.mrb[0].mxu0
        %3613 = vmatprep.mubr.f32.mxu0 0.0
        %3614 = vmatmul.mubr.f32.gmra.mrb[0].mxu0 %v3115
        %v3615 = vpop.f32.mrb[0].mxu0
        %v3616 = vadd.f32 %v3391, %v3615
        %v3617 = vpop.f32.mrb[0].mxu0
        %3618 = vmatprep.mubr.f32.mxu0 0.0
        %3619 = vmatmul.mubr.f32.gmra.mrb[0].mxu0 %v3116
        %v3620 = vpop.f32.mrb[0].mxu0
        %v3621 = vadd.f32 %v3396, %v3620
        %v3622 = vpop.f32.mrb[0].mxu0
        %3623 = vmatprep.mubr.f32.mxu0 0.0
        %3624 = vmatmul.mubr.f32.gmra.mrb[0].mxu0 %v3117
        %v3625 = vpop.f32.mrb[0].mxu0
        %v3626 = vadd.f32 %v3401, %v3625
        %v3627 = vpop.f32.mrb[0].mxu0
        %3628 = vmatprep.mubr.f32.mxu0 0.0
        %3629 = vmatmul.mubr.f32.gmra.mrb[0].mxu0 %v3118
        %v3630 = vpop.f32.mrb[0].mxu0
        %v3631 = vadd.f32 %v3406, %v3630
        %v3632 = vpop.f32.mrb[0].mxu0
        %3633 = vdwg.mxu0
        %v3634 = vld [vmem:[#allocation2 + $0x2] sm:$0xff]
        %v3635 = vld [vmem:[#allocation2 + $0xa] sm:$0xff]
        %v3636 = vld [vmem:[#allocation2 + $0x1a] sm:$0xff]
        %v3637 = vld [vmem:[#allocation2 + $0x22] sm:$0xff]
        %v3638 = vld [vmem:[#allocation2 + $0x32] sm:$0xff]
        %v3639 = vld [vmem:[#allocation2 + $0x3a] sm:$0xff]
        %v3640 = vld [vmem:[#allocation2 + $0x4a] sm:$0xff]
        %v3641 = vld [vmem:[#allocation2 + $0x52] sm:$0xff]
        %v3642 = vld [vmem:[#allocation2 + $0x62] sm:$0xff]
        %v3643 = vld [vmem:[#allocation2 + $0x6a] sm:$0xff]
        %v3644 = vld [vmem:[#allocation2 + $0x7a] sm:$0xff]
        %v3645 = vld [vmem:[#allocation2 + $0x82] sm:$0xff]
        %v3646 = vld [vmem:[#allocation2 + $0x92] sm:$0xff]
        %v3647 = vld [vmem:[#allocation2 + $0x9a] sm:$0xff]
        %v3648 = vld [vmem:[#allocation2 + $0xaa] sm:$0xff]
        %v3649 = vld [vmem:[#allocation2 + $0xb2] sm:$0xff]
        %v3650 = vld [vmem:[#allocation2 + $0xc2] sm:$0xff]
        %v3651 = vld [vmem:[#allocation2 + $0xca] sm:$0xff]
        %v3652 = vld [vmem:[#allocation2 + $0xda] sm:$0xff]
        %v3653 = vld [vmem:[#allocation2 + $0xe2] sm:$0xff]
        %v3654 = vld [vmem:[#allocation2 + $0xf2] sm:$0xff]
        %v3655 = vld [vmem:[#allocation2 + $0xfa] sm:$0xff]
        %v3656 = vld [vmem:[#allocation2 + $0x10a] sm:$0xff]
        %v3657 = vld [vmem:[#allocation2 + $0x112] sm:$0xff]
        %v3658 = vld [vmem:[#allocation2 + $0x122] sm:$0xff]
        %v3659 = vld [vmem:[#allocation2 + $0x12a] sm:$0xff]
        %v3660 = vld [vmem:[#allocation2 + $0x13a] sm:$0xff]
        %v3661 = vld [vmem:[#allocation2 + $0x142] sm:$0xff]
        %v3662 = vld [vmem:[#allocation2 + $0x152] sm:$0xff]
        %v3663 = vld [vmem:[#allocation2 + $0x15a] sm:$0xff]
        %v3664 = vld [vmem:[#allocation2 + $0x16a] sm:$0xff]
        %v3665 = vld [vmem:[#allocation2 + $0x172] sm:$0xff]
        %s3666 = scalar_lea.vmem [#allocation3], 256
        %v3667 = vld [vmem:[%s3666] sm:$0xff]
        %v3668 = vld [vmem:[%s3666 + $0x8] sm:$0xff]
        %v3669 = vld [vmem:[%s3666 + $0x10] sm:$0xff]
        %v3670 = vld [vmem:[%s3666 + $0x18] sm:$0xff]
        %v3671 = vld [vmem:[%s3666 + $0x20] sm:$0xff]
        %v3672 = vld [vmem:[%s3666 + $0x28] sm:$0xff]
        %v3673 = vld [vmem:[%s3666 + $0x30] sm:$0xff]
        %v3674 = vld [vmem:[%s3666 + $0x38] sm:$0xff]
        %v3675 = vld [vmem:[%s3666 + $0x40] sm:$0xff]
        %v3676 = vld [vmem:[%s3666 + $0x48] sm:$0xff]
        %v3677 = vld [vmem:[%s3666 + $0x50] sm:$0xff]
        %v3678 = vld [vmem:[%s3666 + $0x58] sm:$0xff]
        %v3679 = vld [vmem:[%s3666 + $0x60] sm:$0xff]
        %v3680 = vld [vmem:[%s3666 + $0x68] sm:$0xff]
        %v3681 = vld [vmem:[%s3666 + $0x70] sm:$0xff]
        %v3682 = vld [vmem:[%s3666 + $0x78] sm:$0xff]
        %3683 = vmatprep.subr.mxu0 0.0
        %3684 = vmatpush1.msra.mxu0 %v3667
        %3685 = vmatprep.subr.mxu0 0.0
        %3686 = vmatpush1.msra.mxu0 %v3668
        %3687 = vmatprep.subr.mxu0 0.0
        %3688 = vmatpush1.msra.mxu0 %v3669
        %3689 = vmatprep.subr.mxu0 0.0
        %3690 = vmatpush1.msra.mxu0 %v3670
        %3691 = vmatprep.subr.mxu0 0.0
        %3692 = vmatpush1.msra.mxu0 %v3671
        %3693 = vmatprep.subr.mxu0 0.0
        %3694 = vmatpush1.msra.mxu0 %v3672
        %3695 = vmatprep.subr.mxu0 0.0
        %3696 = vmatpush1.msra.mxu0 %v3673
        %3697 = vmatprep.subr.mxu0 0.0
        %3698 = vmatpush1.msra.mxu0 %v3674
        %3699 = vmatprep.subr.mxu0 0.0
        %3700 = vmatpush1.msra.mxu0 %v3675
        %3701 = vmatprep.subr.mxu0 0.0
        %3702 = vmatpush1.msra.mxu0 %v3676
        %3703 = vmatprep.subr.mxu0 0.0
        %3704 = vmatpush1.msra.mxu0 %v3677
        %3705 = vmatprep.subr.mxu0 0.0
        %3706 = vmatpush1.msra.mxu0 %v3678
        %3707 = vmatprep.subr.mxu0 0.0
        %3708 = vmatpush1.msra.mxu0 %v3679
        %3709 = vmatprep.subr.mxu0 0.0
        %3710 = vmatpush1.msra.mxu0 %v3680
        %3711 = vmatprep.subr.mxu0 0.0
        %3712 = vmatpush1.msra.mxu0 %v3681
        %3713 = vmatprep.subr.mxu0 0.0
        %3714 = vmatpush1.msra.mxu0 %v3682
        %3715 = vmatprep.subr.mxu0 0.0
        %3716 = vmatpush1.msra.mxu0 0.0
        %3717 = vmatprep.subr.mxu0 0.0
        %3718 = vmatpush1.msra.mxu0 0.0
        %3719 = vmatprep.subr.mxu0 0.0
        %3720 = vmatpush1.msra.mxu0 0.0
        %3721 = vmatprep.subr.mxu0 0.0
        %3722 = vmatpush1.msra.mxu0 0.0
        %3723 = vmatprep.subr.mxu0 0.0
        %3724 = vmatpush1.msra.mxu0 0.0
        %3725 = vmatprep.subr.mxu0 0.0
        %3726 = vmatpush1.msra.mxu0 0.0
        %3727 = vmatprep.subr.mxu0 0.0
        %3728 = vmatpush1.msra.mxu0 0.0
        %3729 = vmatprep.subr.mxu0 0.0
        %3730 = vmatpush1.msra.mxu0 0.0
        %3731 = vmatprep.subr.mxu0 0.0
        %3732 = vmatpush1.msra.mxu0 0.0
        %3733 = vmatprep.subr.mxu0 0.0
        %3734 = vmatpush1.msra.mxu0 0.0
        %3735 = vmatprep.subr.mxu0 0.0
        %3736 = vmatpush1.msra.mxu0 0.0
        %3737 = vmatprep.subr.mxu0 0.0
        %3738 = vmatpush1.msra.mxu0 0.0
        %3739 = vmatprep.subr.mxu0 0.0
        %3740 = vmatpush1.msra.mxu0 0.0
        %3741 = vmatprep.subr.mxu0 0.0
        %3742 = vmatpush1.msra.mxu0 0.0
        %3743 = vmatprep.subr.mxu0 0.0
        %3744 = vmatpush1.msra.mxu0 0.0
        %3745 = vmatprep.subr.mxu0 0.0
        %3746 = vmatpush1.msra.mxu0 0.0
        %3747 = vmatprep.mubr.f32.mxu0 0.0
        %3748 = vmatmul.mubr.f32.gmra.mrb[0].mxu0 %v3634
        %v3749 = vpop.f32.mrb[0].mxu0
        %v3750 = vadd.f32 0.0, %v3749
        %v3751 = vpop.f32.mrb[0].mxu0
        %3752 = vmatprep.mubr.f32.mxu0 0.0
        %3753 = vmatmul.mubr.f32.gmra.mrb[0].mxu0 %v3635
        %v3754 = vpop.f32.mrb[0].mxu0
        %v3755 = vadd.f32 0.0, %v3754
        %v3756 = vpop.f32.mrb[0].mxu0
        %3757 = vmatprep.mubr.f32.mxu0 0.0
        %3758 = vmatmul.mubr.f32.gmra.mrb[0].mxu0 %v3636
        %v3759 = vpop.f32.mrb[0].mxu0
        %v3760 = vadd.f32 0.0, %v3759
        %v3761 = vpop.f32.mrb[0].mxu0
        %3762 = vmatprep.mubr.f32.mxu0 0.0
        %3763 = vmatmul.mubr.f32.gmra.mrb[0].mxu0 %v3637
        %v3764 = vpop.f32.mrb[0].mxu0
        %v3765 = vadd.f32 0.0, %v3764
        %v3766 = vpop.f32.mrb[0].mxu0
        %3767 = vmatprep.mubr.f32.mxu0 0.0
        %3768 = vmatmul.mubr.f32.gmra.mrb[0].mxu0 %v3638
        %v3769 = vpop.f32.mrb[0].mxu0
        %v3770 = vadd.f32 0.0, %v3769
        %v3771 = vpop.f32.mrb[0].mxu0
        %3772 = vmatprep.mubr.f32.mxu0 0.0
        %3773 = vmatmul.mubr.f32.gmra.mrb[0].mxu0 %v3639
        %v3774 = vpop.f32.mrb[0].mxu0
        %v3775 = vadd.f32 0.0, %v3774
        %v3776 = vpop.f32.mrb[0].mxu0
        %3777 = vmatprep.mubr.f32.mxu0 0.0
        %3778 = vmatmul.mubr.f32.gmra.mrb[0].mxu0 %v3640
        %v3779 = vpop.f32.mrb[0].mxu0
        %v3780 = vadd.f32 0.0, %v3779
        %v3781 = vpop.f32.mrb[0].mxu0
        %3782 = vmatprep.mubr.f32.mxu0 0.0
        %3783 = vmatmul.mubr.f32.gmra.mrb[0].mxu0 %v3641
        %v3784 = vpop.f32.mrb[0].mxu0
        %v3785 = vadd.f32 0.0, %v3784
        %v3786 = vpop.f32.mrb[0].mxu0
        %3787 = vmatprep.mubr.f32.mxu0 0.0
        %3788 = vmatmul.mubr.f32.gmra.mrb[0].mxu0 %v3642
        %v3789 = vpop.f32.mrb[0].mxu0
        %v3790 = vadd.f32 0.0, %v3789
        %v3791 = vpop.f32.mrb[0].mxu0
        %3792 = vmatprep.mubr.f32.mxu0 0.0
        %3793 = vmatmul.mubr.f32.gmra.mrb[0].mxu0 %v3643
        %v3794 = vpop.f32.mrb[0].mxu0
        %v3795 = vadd.f32 0.0, %v3794
        %v3796 = vpop.f32.mrb[0].mxu0
        %3797 = vmatprep.mubr.f32.mxu0 0.0
        %3798 = vmatmul.mubr.f32.gmra.mrb[0].mxu0 %v3644
        %v3799 = vpop.f32.mrb[0].mxu0
        %v3800 = vadd.f32 0.0, %v3799
        %v3801 = vpop.f32.mrb[0].mxu0
        %3802 = vmatprep.mubr.f32.mxu0 0.0
        %3803 = vmatmul.mubr.f32.gmra.mrb[0].mxu0 %v3645
        %v3804 = vpop.f32.mrb[0].mxu0
        %v3805 = vadd.f32 0.0, %v3804
        %v3806 = vpop.f32.mrb[0].mxu0
        %3807 = vmatprep.mubr.f32.mxu0 0.0
        %3808 = vmatmul.mubr.f32.gmra.mrb[0].mxu0 %v3646
        %v3809 = vpop.f32.mrb[0].mxu0
        %v3810 = vadd.f32 0.0, %v3809
        %v3811 = vpop.f32.mrb[0].mxu0
        %3812 = vmatprep.mubr.f32.mxu0 0.0
        %3813 = vmatmul.mubr.f32.gmra.mrb[0].mxu0 %v3647
        %v3814 = vpop.f32.mrb[0].mxu0
        %v3815 = vadd.f32 0.0, %v3814
        %v3816 = vpop.f32.mrb[0].mxu0
        %3817 = vmatprep.mubr.f32.mxu0 0.0
        %3818 = vmatmul.mubr.f32.gmra.mrb[0].mxu0 %v3648
        %v3819 = vpop.f32.mrb[0].mxu0
        %v3820 = vadd.f32 0.0, %v3819
        %v3821 = vpop.f32.mrb[0].mxu0
        %3822 = vmatprep.mubr.f32.mxu0 0.0
        %3823 = vmatmul.mubr.f32.gmra.mrb[0].mxu0 %v3649
        %v3824 = vpop.f32.mrb[0].mxu0
        %v3825 = vadd.f32 0.0, %v3824
        %v3826 = vpop.f32.mrb[0].mxu0
        %3827 = vmatprep.mubr.f32.mxu0 0.0
        %3828 = vmatmul.mubr.f32.gmra.mrb[0].mxu0 %v3650
        %v3829 = vpop.f32.mrb[0].mxu0
        %v3830 = vadd.f32 0.0, %v3829
        %v3831 = vpop.f32.mrb[0].mxu0
        %3832 = vmatprep.mubr.f32.mxu0 0.0
        %3833 = vmatmul.mubr.f32.gmra.mrb[0].mxu0 %v3651
        %v3834 = vpop.f32.mrb[0].mxu0
        %v3835 = vadd.f32 0.0, %v3834
        %v3836 = vpop.f32.mrb[0].mxu0
        %3837 = vmatprep.mubr.f32.mxu0 0.0
        %3838 = vmatmul.mubr.f32.gmra.mrb[0].mxu0 %v3652
        %v3839 = vpop.f32.mrb[0].mxu0
        %v3840 = vadd.f32 0.0, %v3839
        %v3841 = vpop.f32.mrb[0].mxu0
        %3842 = vmatprep.mubr.f32.mxu0 0.0
        %3843 = vmatmul.mubr.f32.gmra.mrb[0].mxu0 %v3653
        %v3844 = vpop.f32.mrb[0].mxu0
        %v3845 = vadd.f32 0.0, %v3844
        %v3846 = vpop.f32.mrb[0].mxu0
        %3847 = vmatprep.mubr.f32.mxu0 0.0
        %3848 = vmatmul.mubr.f32.gmra.mrb[0].mxu0 %v3654
        %v3849 = vpop.f32.mrb[0].mxu0
        %v3850 = vadd.f32 0.0, %v3849
        %v3851 = vpop.f32.mrb[0].mxu0
        %3852 = vmatprep.mubr.f32.mxu0 0.0
        %3853 = vmatmul.mubr.f32.gmra.mrb[0].mxu0 %v3655
        %v3854 = vpop.f32.mrb[0].mxu0
        %v3855 = vadd.f32 0.0, %v3854
        %v3856 = vpop.f32.mrb[0].mxu0
        %3857 = vmatprep.mubr.f32.mxu0 0.0
        %3858 = vmatmul.mubr.f32.gmra.mrb[0].mxu0 %v3656
        %v3859 = vpop.f32.mrb[0].mxu0
        %v3860 = vadd.f32 0.0, %v3859
        %v3861 = vpop.f32.mrb[0].mxu0
        %3862 = vmatprep.mubr.f32.mxu0 0.0
        %3863 = vmatmul.mubr.f32.gmra.mrb[0].mxu0 %v3657
        %v3864 = vpop.f32.mrb[0].mxu0
        %v3865 = vadd.f32 0.0, %v3864
        %v3866 = vpop.f32.mrb[0].mxu0
        %3867 = vmatprep.mubr.f32.mxu0 0.0
        %3868 = vmatmul.mubr.f32.gmra.mrb[0].mxu0 %v3658
        %v3869 = vpop.f32.mrb[0].mxu0
        %v3870 = vadd.f32 0.0, %v3869
        %v3871 = vpop.f32.mrb[0].mxu0
        %3872 = vmatprep.mubr.f32.mxu0 0.0
        %3873 = vmatmul.mubr.f32.gmra.mrb[0].mxu0 %v3659
        %v3874 = vpop.f32.mrb[0].mxu0
        %v3875 = vadd.f32 0.0, %v3874
        %v3876 = vpop.f32.mrb[0].mxu0
        %3877 = vmatprep.mubr.f32.mxu0 0.0
        %3878 = vmatmul.mubr.f32.gmra.mrb[0].mxu0 %v3660
        %v3879 = vpop.f32.mrb[0].mxu0
        %v3880 = vadd.f32 0.0, %v3879
        %v3881 = vpop.f32.mrb[0].mxu0
        %3882 = vmatprep.mubr.f32.mxu0 0.0
        %3883 = vmatmul.mubr.f32.gmra.mrb[0].mxu0 %v3661
        %v3884 = vpop.f32.mrb[0].mxu0
        %v3885 = vadd.f32 0.0, %v3884
        %v3886 = vpop.f32.mrb[0].mxu0
        %3887 = vmatprep.mubr.f32.mxu0 0.0
        %3888 = vmatmul.mubr.f32.gmra.mrb[0].mxu0 %v3662
        %v3889 = vpop.f32.mrb[0].mxu0
        %v3890 = vadd.f32 0.0, %v3889
        %v3891 = vpop.f32.mrb[0].mxu0
        %3892 = vmatprep.mubr.f32.mxu0 0.0
        %3893 = vmatmul.mubr.f32.gmra.mrb[0].mxu0 %v3663
        %v3894 = vpop.f32.mrb[0].mxu0
        %v3895 = vadd.f32 0.0, %v3894
        %v3896 = vpop.f32.mrb[0].mxu0
        %3897 = vmatprep.mubr.f32.mxu0 0.0
        %3898 = vmatmul.mubr.f32.gmra.mrb[0].mxu0 %v3664
        %v3899 = vpop.f32.mrb[0].mxu0
        %v3900 = vadd.f32 0.0, %v3899
        %v3901 = vpop.f32.mrb[0].mxu0
        %3902 = vmatprep.mubr.f32.mxu0 0.0
        %3903 = vmatmul.mubr.f32.gmra.mrb[0].mxu0 %v3665
        %v3904 = vpop.f32.mrb[0].mxu0
        %v3905 = vadd.f32 0.0, %v3904
        %v3906 = vpop.f32.mrb[0].mxu0
        %3907 = vdwg.mxu0
        %v3908 = vadd.f32 %v3476, %v3750
        %v3909 = vadd.f32 %v3481, %v3755
        %v3910 = vadd.f32 %v3486, %v3760
        %v3911 = vadd.f32 %v3491, %v3765
        %v3912 = vadd.f32 %v3496, %v3770
        %v3913 = vadd.f32 %v3501, %v3775
        %v3914 = vadd.f32 %v3506, %v3780
        %v3915 = vadd.f32 %v3511, %v3785
        %v3916 = vadd.f32 %v3516, %v3790
        %v3917 = vadd.f32 %v3521, %v3795
        %v3918 = vadd.f32 %v3526, %v3800
        %v3919 = vadd.f32 %v3531, %v3805
        %v3920 = vadd.f32 %v3536, %v3810
        %v3921 = vadd.f32 %v3541, %v3815
        %v3922 = vadd.f32 %v3546, %v3820
        %v3923 = vadd.f32 %v3551, %v3825
        %v3924 = vadd.f32 %v3556, %v3830
        %v3925 = vadd.f32 %v3561, %v3835
        %v3926 = vadd.f32 %v3566, %v3840
        %v3927 = vadd.f32 %v3571, %v3845
        %v3928 = vadd.f32 %v3576, %v3850
        %v3929 = vadd.f32 %v3581, %v3855
        %v3930 = vadd.f32 %v3586, %v3860
        %v3931 = vadd.f32 %v3591, %v3865
        %v3932 = vadd.f32 %v3596, %v3870
        %v3933 = vadd.f32 %v3601, %v3875
        %v3934 = vadd.f32 %v3606, %v3880
        %v3935 = vadd.f32 %v3611, %v3885
        %v3936 = vadd.f32 %v3616, %v3890
        %v3937 = vadd.f32 %v3621, %v3895
        %v3938 = vadd.f32 %v3626, %v3900
        %v3939 = vadd.f32 %v3631, %v3905
        %v3940 = vld [vmem:[%s3054] sm:$0xff]
        %v3941 = vld [vmem:[%s3054 + $0x8] sm:$0xff]
        %v3942 = vld [vmem:[%s3054 + $0x18] sm:$0xff]
        %v3943 = vld [vmem:[%s3054 + $0x20] sm:$0xff]
        %v3944 = vld [vmem:[%s3054 + $0x30] sm:$0xff]
        %v3945 = vld [vmem:[%s3054 + $0x38] sm:$0xff]
        %v3946 = vld [vmem:[%s3054 + $0x48] sm:$0xff]
        %v3947 = vld [vmem:[%s3054 + $0x50] sm:$0xff]
        %v3948 = vld [vmem:[%s3054 + $0x60] sm:$0xff]
        %v3949 = vld [vmem:[%s3054 + $0x68] sm:$0xff]
        %v3950 = vld [vmem:[%s3054 + $0x78] sm:$0xff]
        %v3951 = vld [vmem:[%s3054 + $0x80] sm:$0xff]
        %v3952 = vld [vmem:[%s3054 + $0x90] sm:$0xff]
        %v3953 = vld [vmem:[%s3054 + $0x98] sm:$0xff]
        %v3954 = vld [vmem:[%s3054 + $0xa8] sm:$0xff]
        %v3955 = vld [vmem:[%s3054 + $0xb0] sm:$0xff]
        %v3956 = vld [vmem:[%s3054 + $0xc0] sm:$0xff]
        %v3957 = vld [vmem:[%s3054 + $0xc8] sm:$0xff]
        %v3958 = vld [vmem:[%s3054 + $0xd8] sm:$0xff]
        %v3959 = vld [vmem:[%s3054 + $0xe0] sm:$0xff]
        %v3960 = vld [vmem:[%s3054 + $0xf0] sm:$0xff]
        %v3961 = vld [vmem:[%s3054 + $0xf8] sm:$0xff]
        %v3962 = vld [vmem:[%s3054 + $0x108] sm:$0xff]
        %v3963 = vld [vmem:[%s3054 + $0x110] sm:$0xff]
        %v3964 = vld [vmem:[%s3054 + $0x120] sm:$0xff]
        %v3965 = vld [vmem:[%s3054 + $0x128] sm:$0xff]
        %v3966 = vld [vmem:[%s3054 + $0x138] sm:$0xff]
        %v3967 = vld [vmem:[%s3054 + $0x140] sm:$0xff]
        %v3968 = vld [vmem:[%s3054 + $0x150] sm:$0xff]
        %v3969 = vld [vmem:[%s3054 + $0x158] sm:$0xff]
        %v3970 = vld [vmem:[%s3054 + $0x168] sm:$0xff]
        %v3971 = vld [vmem:[%s3054 + $0x170] sm:$0xff]
        %s3972 = scalar_lea.vmem [#allocation3], 384
        %v3973 = vld [vmem:[%s3972] sm:$0xff]
        %v3974 = vld [vmem:[%s3972 + $0x8] sm:$0xff]
        %v3975 = vld [vmem:[%s3972 + $0x10] sm:$0xff]
        %v3976 = vld [vmem:[%s3972 + $0x18] sm:$0xff]
        %v3977 = vld [vmem:[%s3972 + $0x20] sm:$0xff]
        %v3978 = vld [vmem:[%s3972 + $0x28] sm:$0xff]
        %v3979 = vld [vmem:[%s3972 + $0x30] sm:$0xff]
        %v3980 = vld [vmem:[%s3972 + $0x38] sm:$0xff]
        %v3981 = vld [vmem:[%s3972 + $0x40] sm:$0xff]
        %v3982 = vld [vmem:[%s3972 + $0x48] sm:$0xff]
        %v3983 = vld [vmem:[%s3972 + $0x50] sm:$0xff]
        %v3984 = vld [vmem:[%s3972 + $0x58] sm:$0xff]
        %v3985 = vld [vmem:[%s3972 + $0x60] sm:$0xff]
        %v3986 = vld [vmem:[%s3972 + $0x68] sm:$0xff]
        %v3987 = vld [vmem:[%s3972 + $0x70] sm:$0xff]
        %v3988 = vld [vmem:[%s3972 + $0x78] sm:$0xff]
        %3989 = vmatprep.subr.mxu0 0.0
        %3990 = vmatpush1.msra.mxu0 %v3973
        %3991 = vmatprep.subr.mxu0 0.0
        %3992 = vmatpush1.msra.mxu0 %v3974
        %3993 = vmatprep.subr.mxu0 0.0
        %3994 = vmatpush1.msra.mxu0 %v3975
        %3995 = vmatprep.subr.mxu0 0.0
        %3996 = vmatpush1.msra.mxu0 %v3976
        %3997 = vmatprep.subr.mxu0 0.0
        %3998 = vmatpush1.msra.mxu0 %v3977
        %3999 = vmatprep.subr.mxu0 0.0
        %4000 = vmatpush1.msra.mxu0 %v3978
        %4001 = vmatprep.subr.mxu0 0.0
        %4002 = vmatpush1.msra.mxu0 %v3979
        %4003 = vmatprep.subr.mxu0 0.0
        %4004 = vmatpush1.msra.mxu0 %v3980
        %4005 = vmatprep.subr.mxu0 0.0
        %4006 = vmatpush1.msra.mxu0 %v3981
        %4007 = vmatprep.subr.mxu0 0.0
        %4008 = vmatpush1.msra.mxu0 %v3982
        %4009 = vmatprep.subr.mxu0 0.0
        %4010 = vmatpush1.msra.mxu0 %v3983
        %4011 = vmatprep.subr.mxu0 0.0
        %4012 = vmatpush1.msra.mxu0 %v3984
        %4013 = vmatprep.subr.mxu0 0.0
        %4014 = vmatpush1.msra.mxu0 %v3985
        %4015 = vmatprep.subr.mxu0 0.0
        %4016 = vmatpush1.msra.mxu0 %v3986
        %4017 = vmatprep.subr.mxu0 0.0
        %4018 = vmatpush1.msra.mxu0 %v3987
        %4019 = vmatprep.subr.mxu0 0.0
        %4020 = vmatpush1.msra.mxu0 %v3988
        %4021 = vmatprep.subr.mxu0 0.0
        %4022 = vmatpush1.msra.mxu0 0.0
        %4023 = vmatprep.subr.mxu0 0.0
        %4024 = vmatpush1.msra.mxu0 0.0
        %4025 = vmatprep.subr.mxu0 0.0
        %4026 = vmatpush1.msra.mxu0 0.0
        %4027 = vmatprep.subr.mxu0 0.0
        %4028 = vmatpush1.msra.mxu0 0.0
        %4029 = vmatprep.subr.mxu0 0.0
        %4030 = vmatpush1.msra.mxu0 0.0
        %4031 = vmatprep.subr.mxu0 0.0
        %4032 = vmatpush1.msra.mxu0 0.0
        %4033 = vmatprep.subr.mxu0 0.0
        %4034 = vmatpush1.msra.mxu0 0.0
        %4035 = vmatprep.subr.mxu0 0.0
        %4036 = vmatpush1.msra.mxu0 0.0
        %4037 = vmatprep.subr.mxu0 0.0
        %4038 = vmatpush1.msra.mxu0 0.0
        %4039 = vmatprep.subr.mxu0 0.0
        %4040 = vmatpush1.msra.mxu0 0.0
        %4041 = vmatprep.subr.mxu0 0.0
        %4042 = vmatpush1.msra.mxu0 0.0
        %4043 = vmatprep.subr.mxu0 0.0
        %4044 = vmatpush1.msra.mxu0 0.0
        %4045 = vmatprep.subr.mxu0 0.0
        %4046 = vmatpush1.msra.mxu0 0.0
        %4047 = vmatprep.subr.mxu0 0.0
        %4048 = vmatpush1.msra.mxu0 0.0
        %4049 = vmatprep.subr.mxu0 0.0
        %4050 = vmatpush1.msra.mxu0 0.0
        %4051 = vmatprep.subr.mxu0 0.0
        %4052 = vmatpush1.msra.mxu0 0.0
        %4053 = vmatprep.mubr.f32.mxu0 0.0
        %4054 = vmatmul.mubr.f32.gmra.mrb[0].mxu0 %v3940
        %v4055 = vpop.f32.mrb[0].mxu0
        %v4056 = vadd.f32 0.0, %v4055
        %v4057 = vpop.f32.mrb[0].mxu0
        %4058 = vmatprep.mubr.f32.mxu0 0.0
        %4059 = vmatmul.mubr.f32.gmra.mrb[0].mxu0 %v3941
        %v4060 = vpop.f32.mrb[0].mxu0
        %v4061 = vadd.f32 0.0, %v4060
        %v4062 = vpop.f32.mrb[0].mxu0
        %4063 = vmatprep.mubr.f32.mxu0 0.0
        %4064 = vmatmul.mubr.f32.gmra.mrb[0].mxu0 %v3942
        %v4065 = vpop.f32.mrb[0].mxu0
        %v4066 = vadd.f32 0.0, %v4065
        %v4067 = vpop.f32.mrb[0].mxu0
        %4068 = vmatprep.mubr.f32.mxu0 0.0
        %4069 = vmatmul.mubr.f32.gmra.mrb[0].mxu0 %v3943
        %v4070 = vpop.f32.mrb[0].mxu0
        %v4071 = vadd.f32 0.0, %v4070
        %v4072 = vpop.f32.mrb[0].mxu0
        %4073 = vmatprep.mubr.f32.mxu0 0.0
        %4074 = vmatmul.mubr.f32.gmra.mrb[0].mxu0 %v3944
        %v4075 = vpop.f32.mrb[0].mxu0
        %v4076 = vadd.f32 0.0, %v4075
        %v4077 = vpop.f32.mrb[0].mxu0
        %4078 = vmatprep.mubr.f32.mxu0 0.0
        %4079 = vmatmul.mubr.f32.gmra.mrb[0].mxu0 %v3945
        %v4080 = vpop.f32.mrb[0].mxu0
        %v4081 = vadd.f32 0.0, %v4080
        %v4082 = vpop.f32.mrb[0].mxu0
        %4083 = vmatprep.mubr.f32.mxu0 0.0
        %4084 = vmatmul.mubr.f32.gmra.mrb[0].mxu0 %v3946
        %v4085 = vpop.f32.mrb[0].mxu0
        %v4086 = vadd.f32 0.0, %v4085
        %v4087 = vpop.f32.mrb[0].mxu0
        %4088 = vmatprep.mubr.f32.mxu0 0.0
        %4089 = vmatmul.mubr.f32.gmra.mrb[0].mxu0 %v3947
        %v4090 = vpop.f32.mrb[0].mxu0
        %v4091 = vadd.f32 0.0, %v4090
        %v4092 = vpop.f32.mrb[0].mxu0
        %4093 = vmatprep.mubr.f32.mxu0 0.0
        %4094 = vmatmul.mubr.f32.gmra.mrb[0].mxu0 %v3948
        %v4095 = vpop.f32.mrb[0].mxu0
        %v4096 = vadd.f32 0.0, %v4095
        %v4097 = vpop.f32.mrb[0].mxu0
        %4098 = vmatprep.mubr.f32.mxu0 0.0
        %4099 = vmatmul.mubr.f32.gmra.mrb[0].mxu0 %v3949
        %v4100 = vpop.f32.mrb[0].mxu0
        %v4101 = vadd.f32 0.0, %v4100
        %v4102 = vpop.f32.mrb[0].mxu0
        %4103 = vmatprep.mubr.f32.mxu0 0.0
        %4104 = vmatmul.mubr.f32.gmra.mrb[0].mxu0 %v3950
        %v4105 = vpop.f32.mrb[0].mxu0
        %v4106 = vadd.f32 0.0, %v4105
        %v4107 = vpop.f32.mrb[0].mxu0
        %4108 = vmatprep.mubr.f32.mxu0 0.0
        %4109 = vmatmul.mubr.f32.gmra.mrb[0].mxu0 %v3951
        %v4110 = vpop.f32.mrb[0].mxu0
        %v4111 = vadd.f32 0.0, %v4110
        %v4112 = vpop.f32.mrb[0].mxu0
        %4113 = vmatprep.mubr.f32.mxu0 0.0
        %4114 = vmatmul.mubr.f32.gmra.mrb[0].mxu0 %v3952
        %v4115 = vpop.f32.mrb[0].mxu0
        %v4116 = vadd.f32 0.0, %v4115
        %v4117 = vpop.f32.mrb[0].mxu0
        %4118 = vmatprep.mubr.f32.mxu0 0.0
        %4119 = vmatmul.mubr.f32.gmra.mrb[0].mxu0 %v3953
        %v4120 = vpop.f32.mrb[0].mxu0
        %v4121 = vadd.f32 0.0, %v4120
        %v4122 = vpop.f32.mrb[0].mxu0
        %4123 = vmatprep.mubr.f32.mxu0 0.0
        %4124 = vmatmul.mubr.f32.gmra.mrb[0].mxu0 %v3954
        %v4125 = vpop.f32.mrb[0].mxu0
        %v4126 = vadd.f32 0.0, %v4125
        %v4127 = vpop.f32.mrb[0].mxu0
        %4128 = vmatprep.mubr.f32.mxu0 0.0
        %4129 = vmatmul.mubr.f32.gmra.mrb[0].mxu0 %v3955
        %v4130 = vpop.f32.mrb[0].mxu0
        %v4131 = vadd.f32 0.0, %v4130
        %v4132 = vpop.f32.mrb[0].mxu0
        %4133 = vmatprep.mubr.f32.mxu0 0.0
        %4134 = vmatmul.mubr.f32.gmra.mrb[0].mxu0 %v3956
        %v4135 = vpop.f32.mrb[0].mxu0
        %v4136 = vadd.f32 0.0, %v4135
        %v4137 = vpop.f32.mrb[0].mxu0
        %4138 = vmatprep.mubr.f32.mxu0 0.0
        %4139 = vmatmul.mubr.f32.gmra.mrb[0].mxu0 %v3957
        %v4140 = vpop.f32.mrb[0].mxu0
        %v4141 = vadd.f32 0.0, %v4140
        %v4142 = vpop.f32.mrb[0].mxu0
        %4143 = vmatprep.mubr.f32.mxu0 0.0
        %4144 = vmatmul.mubr.f32.gmra.mrb[0].mxu0 %v3958
        %v4145 = vpop.f32.mrb[0].mxu0
        %v4146 = vadd.f32 0.0, %v4145
        %v4147 = vpop.f32.mrb[0].mxu0
        %4148 = vmatprep.mubr.f32.mxu0 0.0
        %4149 = vmatmul.mubr.f32.gmra.mrb[0].mxu0 %v3959
        %v4150 = vpop.f32.mrb[0].mxu0
        %v4151 = vadd.f32 0.0, %v4150
        %v4152 = vpop.f32.mrb[0].mxu0
        %4153 = vmatprep.mubr.f32.mxu0 0.0
        %4154 = vmatmul.mubr.f32.gmra.mrb[0].mxu0 %v3960
        %v4155 = vpop.f32.mrb[0].mxu0
        %v4156 = vadd.f32 0.0, %v4155
        %v4157 = vpop.f32.mrb[0].mxu0
        %4158 = vmatprep.mubr.f32.mxu0 0.0
        %4159 = vmatmul.mubr.f32.gmra.mrb[0].mxu0 %v3961
        %v4160 = vpop.f32.mrb[0].mxu0
        %v4161 = vadd.f32 0.0, %v4160
        %v4162 = vpop.f32.mrb[0].mxu0
        %4163 = vmatprep.mubr.f32.mxu0 0.0
        %4164 = vmatmul.mubr.f32.gmra.mrb[0].mxu0 %v3962
        %v4165 = vpop.f32.mrb[0].mxu0
        %v4166 = vadd.f32 0.0, %v4165
        %v4167 = vpop.f32.mrb[0].mxu0
        %4168 = vmatprep.mubr.f32.mxu0 0.0
        %4169 = vmatmul.mubr.f32.gmra.mrb[0].mxu0 %v3963
        %v4170 = vpop.f32.mrb[0].mxu0
        %v4171 = vadd.f32 0.0, %v4170
        %v4172 = vpop.f32.mrb[0].mxu0
        %4173 = vmatprep.mubr.f32.mxu0 0.0
        %4174 = vmatmul.mubr.f32.gmra.mrb[0].mxu0 %v3964
        %v4175 = vpop.f32.mrb[0].mxu0
        %v4176 = vadd.f32 0.0, %v4175
        %v4177 = vpop.f32.mrb[0].mxu0
        %4178 = vmatprep.mubr.f32.mxu0 0.0
        %4179 = vmatmul.mubr.f32.gmra.mrb[0].mxu0 %v3965
        %v4180 = vpop.f32.mrb[0].mxu0
        %v4181 = vadd.f32 0.0, %v4180
        %v4182 = vpop.f32.mrb[0].mxu0
        %4183 = vmatprep.mubr.f32.mxu0 0.0
        %4184 = vmatmul.mubr.f32.gmra.mrb[0].mxu0 %v3966
        %v4185 = vpop.f32.mrb[0].mxu0
        %v4186 = vadd.f32 0.0, %v4185
        %v4187 = vpop.f32.mrb[0].mxu0
        %4188 = vmatprep.mubr.f32.mxu0 0.0
        %4189 = vmatmul.mubr.f32.gmra.mrb[0].mxu0 %v3967
        %v4190 = vpop.f32.mrb[0].mxu0
        %v4191 = vadd.f32 0.0, %v4190
        %v4192 = vpop.f32.mrb[0].mxu0
        %4193 = vmatprep.mubr.f32.mxu0 0.0
        %4194 = vmatmul.mubr.f32.gmra.mrb[0].mxu0 %v3968
        %v4195 = vpop.f32.mrb[0].mxu0
        %v4196 = vadd.f32 0.0, %v4195
        %v4197 = vpop.f32.mrb[0].mxu0
        %4198 = vmatprep.mubr.f32.mxu0 0.0
        %4199 = vmatmul.mubr.f32.gmra.mrb[0].mxu0 %v3969
        %v4200 = vpop.f32.mrb[0].mxu0
        %v4201 = vadd.f32 0.0, %v4200
        %v4202 = vpop.f32.mrb[0].mxu0
        %4203 = vmatprep.mubr.f32.mxu0 0.0
        %4204 = vmatmul.mubr.f32.gmra.mrb[0].mxu0 %v3970
        %v4205 = vpop.f32.mrb[0].mxu0
        %v4206 = vadd.f32 0.0, %v4205
        %v4207 = vpop.f32.mrb[0].mxu0
        %4208 = vmatprep.mubr.f32.mxu0 0.0
        %4209 = vmatmul.mubr.f32.gmra.mrb[0].mxu0 %v3971
        %v4210 = vpop.f32.mrb[0].mxu0
        %v4211 = vadd.f32 0.0, %v4210
        %v4212 = vpop.f32.mrb[0].mxu0
        %4213 = vdwg.mxu0
        %v4214 = vadd.f32 %v3908, %v4056
        %v4215 = vadd.f32 %v3909, %v4061
        %v4216 = vadd.f32 %v3910, %v4066
        %v4217 = vadd.f32 %v3911, %v4071
        %v4218 = vadd.f32 %v3912, %v4076
        %v4219 = vadd.f32 %v3913, %v4081
        %v4220 = vadd.f32 %v3914, %v4086
        %v4221 = vadd.f32 %v3915, %v4091
        %v4222 = vadd.f32 %v3916, %v4096
        %v4223 = vadd.f32 %v3917, %v4101
        %v4224 = vadd.f32 %v3918, %v4106
        %v4225 = vadd.f32 %v3919, %v4111
        %v4226 = vadd.f32 %v3920, %v4116
        %v4227 = vadd.f32 %v3921, %v4121
        %v4228 = vadd.f32 %v3922, %v4126
        %v4229 = vadd.f32 %v3923, %v4131
        %v4230 = vadd.f32 %v3924, %v4136
        %v4231 = vadd.f32 %v3925, %v4141
        %v4232 = vadd.f32 %v3926, %v4146
        %v4233 = vadd.f32 %v3927, %v4151
        %v4234 = vadd.f32 %v3928, %v4156
        %v4235 = vadd.f32 %v3929, %v4161
        %v4236 = vadd.f32 %v3930, %v4166
        %v4237 = vadd.f32 %v3931, %v4171
        %v4238 = vadd.f32 %v3932, %v4176
        %v4239 = vadd.f32 %v3933, %v4181
        %v4240 = vadd.f32 %v3934, %v4186
        %v4241 = vadd.f32 %v3935, %v4191
        %v4242 = vadd.f32 %v3936, %v4196
        %v4243 = vadd.f32 %v3937, %v4201
        %v4244 = vadd.f32 %v3938, %v4206
        %v4245 = vadd.f32 %v3939, %v4211
        %v4246 = vld [vmem:[%s3054 + $0x1] sm:$0xff]
        %v4247 = vld [vmem:[%s3054 + $0x9] sm:$0xff]
        %v4248 = vld [vmem:[%s3054 + $0x19] sm:$0xff]
        %v4249 = vld [vmem:[%s3054 + $0x21] sm:$0xff]
        %v4250 = vld [vmem:[%s3054 + $0x31] sm:$0xff]
        %v4251 = vld [vmem:[%s3054 + $0x39] sm:$0xff]
        %v4252 = vld [vmem:[%s3054 + $0x49] sm:$0xff]
        %v4253 = vld [vmem:[%s3054 + $0x51] sm:$0xff]
        %v4254 = vld [vmem:[%s3054 + $0x61] sm:$0xff]
        %v4255 = vld [vmem:[%s3054 + $0x69] sm:$0xff]
        %v4256 = vld [vmem:[%s3054 + $0x79] sm:$0xff]
        %v4257 = vld [vmem:[%s3054 + $0x81] sm:$0xff]
        %v4258 = vld [vmem:[%s3054 + $0x91] sm:$0xff]
        %v4259 = vld [vmem:[%s3054 + $0x99] sm:$0xff]
        %v4260 = vld [vmem:[%s3054 + $0xa9] sm:$0xff]
        %v4261 = vld [vmem:[%s3054 + $0xb1] sm:$0xff]
        %v4262 = vld [vmem:[%s3054 + $0xc1] sm:$0xff]
        %v4263 = vld [vmem:[%s3054 + $0xc9] sm:$0xff]
        %v4264 = vld [vmem:[%s3054 + $0xd9] sm:$0xff]
        %v4265 = vld [vmem:[%s3054 + $0xe1] sm:$0xff]
        %v4266 = vld [vmem:[%s3054 + $0xf1] sm:$0xff]
        %v4267 = vld [vmem:[%s3054 + $0xf9] sm:$0xff]
        %v4268 = vld [vmem:[%s3054 + $0x109] sm:$0xff]
        %v4269 = vld [vmem:[%s3054 + $0x111] sm:$0xff]
        %v4270 = vld [vmem:[%s3054 + $0x121] sm:$0xff]
        %v4271 = vld [vmem:[%s3054 + $0x129] sm:$0xff]
        %v4272 = vld [vmem:[%s3054 + $0x139] sm:$0xff]
        %v4273 = vld [vmem:[%s3054 + $0x141] sm:$0xff]
        %v4274 = vld [vmem:[%s3054 + $0x151] sm:$0xff]
        %v4275 = vld [vmem:[%s3054 + $0x159] sm:$0xff]
        %v4276 = vld [vmem:[%s3054 + $0x169] sm:$0xff]
        %v4277 = vld [vmem:[%s3054 + $0x171] sm:$0xff]
        %s4278 = scalar_lea.vmem [#allocation3], 512
        %v4279 = vld [vmem:[%s4278] sm:$0xff]
        %v4280 = vld [vmem:[%s4278 + $0x8] sm:$0xff]
        %v4281 = vld [vmem:[%s4278 + $0x10] sm:$0xff]
        %v4282 = vld [vmem:[%s4278 + $0x18] sm:$0xff]
        %v4283 = vld [vmem:[%s4278 + $0x20] sm:$0xff]
        %v4284 = vld [vmem:[%s4278 + $0x28] sm:$0xff]
        %v4285 = vld [vmem:[%s4278 + $0x30] sm:$0xff]
        %v4286 = vld [vmem:[%s4278 + $0x38] sm:$0xff]
        %v4287 = vld [vmem:[%s4278 + $0x40] sm:$0xff]
        %v4288 = vld [vmem:[%s4278 + $0x48] sm:$0xff]
        %v4289 = vld [vmem:[%s4278 + $0x50] sm:$0xff]
        %v4290 = vld [vmem:[%s4278 + $0x58] sm:$0xff]
        %v4291 = vld [vmem:[%s4278 + $0x60] sm:$0xff]
        %v4292 = vld [vmem:[%s4278 + $0x68] sm:$0xff]
        %v4293 = vld [vmem:[%s4278 + $0x70] sm:$0xff]
        %v4294 = vld [vmem:[%s4278 + $0x78] sm:$0xff]
        %4295 = vmatprep.subr.mxu0 0.0
        %4296 = vmatpush1.msra.mxu0 %v4279
        %4297 = vmatprep.subr.mxu0 0.0
        %4298 = vmatpush1.msra.mxu0 %v4280
        %4299 = vmatprep.subr.mxu0 0.0
        %4300 = vmatpush1.msra.mxu0 %v4281
        %4301 = vmatprep.subr.mxu0 0.0
        %4302 = vmatpush1.msra.mxu0 %v4282
        %4303 = vmatprep.subr.mxu0 0.0
        %4304 = vmatpush1.msra.mxu0 %v4283
        %4305 = vmatprep.subr.mxu0 0.0
        %4306 = vmatpush1.msra.mxu0 %v4284
        %4307 = vmatprep.subr.mxu0 0.0
        %4308 = vmatpush1.msra.mxu0 %v4285
        %4309 = vmatprep.subr.mxu0 0.0
        %4310 = vmatpush1.msra.mxu0 %v4286
        %4311 = vmatprep.subr.mxu0 0.0
        %4312 = vmatpush1.msra.mxu0 %v4287
        %4313 = vmatprep.subr.mxu0 0.0
        %4314 = vmatpush1.msra.mxu0 %v4288
        %4315 = vmatprep.subr.mxu0 0.0
        %4316 = vmatpush1.msra.mxu0 %v4289
        %4317 = vmatprep.subr.mxu0 0.0
        %4318 = vmatpush1.msra.mxu0 %v4290
        %4319 = vmatprep.subr.mxu0 0.0
        %4320 = vmatpush1.msra.mxu0 %v4291
        %4321 = vmatprep.subr.mxu0 0.0
        %4322 = vmatpush1.msra.mxu0 %v4292
        %4323 = vmatprep.subr.mxu0 0.0
        %4324 = vmatpush1.msra.mxu0 %v4293
        %4325 = vmatprep.subr.mxu0 0.0
        %4326 = vmatpush1.msra.mxu0 %v4294
        %4327 = vmatprep.subr.mxu0 0.0
        %4328 = vmatpush1.msra.mxu0 0.0
        %4329 = vmatprep.subr.mxu0 0.0
        %4330 = vmatpush1.msra.mxu0 0.0
        %4331 = vmatprep.subr.mxu0 0.0
        %4332 = vmatpush1.msra.mxu0 0.0
        %4333 = vmatprep.subr.mxu0 0.0
        %4334 = vmatpush1.msra.mxu0 0.0
        %4335 = vmatprep.subr.mxu0 0.0
        %4336 = vmatpush1.msra.mxu0 0.0
        %4337 = vmatprep.subr.mxu0 0.0
        %4338 = vmatpush1.msra.mxu0 0.0
        %4339 = vmatprep.subr.mxu0 0.0
        %4340 = vmatpush1.msra.mxu0 0.0
        %4341 = vmatprep.subr.mxu0 0.0
        %4342 = vmatpush1.msra.mxu0 0.0
        %4343 = vmatprep.subr.mxu0 0.0
        %4344 = vmatpush1.msra.mxu0 0.0
        %4345 = vmatprep.subr.mxu0 0.0
        %4346 = vmatpush1.msra.mxu0 0.0
        %4347 = vmatprep.subr.mxu0 0.0
        %4348 = vmatpush1.msra.mxu0 0.0
        %4349 = vmatprep.subr.mxu0 0.0
        %4350 = vmatpush1.msra.mxu0 0.0
        %4351 = vmatprep.subr.mxu0 0.0
        %4352 = vmatpush1.msra.mxu0 0.0
        %4353 = vmatprep.subr.mxu0 0.0
        %4354 = vmatpush1.msra.mxu0 0.0
        %4355 = vmatprep.subr.mxu0 0.0
        %4356 = vmatpush1.msra.mxu0 0.0
        %4357 = vmatprep.subr.mxu0 0.0
        %4358 = vmatpush1.msra.mxu0 0.0
        %4359 = vmatprep.mubr.f32.mxu0 0.0
        %4360 = vmatmul.mubr.f32.gmra.mrb[0].mxu0 %v4246
        %v4361 = vpop.f32.mrb[0].mxu0
        %v4362 = vadd.f32 0.0, %v4361
        %v4363 = vpop.f32.mrb[0].mxu0
        %4364 = vmatprep.mubr.f32.mxu0 0.0
        %4365 = vmatmul.mubr.f32.gmra.mrb[0].mxu0 %v4247
        %v4366 = vpop.f32.mrb[0].mxu0
        %v4367 = vadd.f32 0.0, %v4366
        %v4368 = vpop.f32.mrb[0].mxu0
        %4369 = vmatprep.mubr.f32.mxu0 0.0
        %4370 = vmatmul.mubr.f32.gmra.mrb[0].mxu0 %v4248
        %v4371 = vpop.f32.mrb[0].mxu0
        %v4372 = vadd.f32 0.0, %v4371
        %v4373 = vpop.f32.mrb[0].mxu0
        %4374 = vmatprep.mubr.f32.mxu0 0.0
        %4375 = vmatmul.mubr.f32.gmra.mrb[0].mxu0 %v4249
        %v4376 = vpop.f32.mrb[0].mxu0
        %v4377 = vadd.f32 0.0, %v4376
        %v4378 = vpop.f32.mrb[0].mxu0
        %4379 = vmatprep.mubr.f32.mxu0 0.0
        %4380 = vmatmul.mubr.f32.gmra.mrb[0].mxu0 %v4250
        %v4381 = vpop.f32.mrb[0].mxu0
        %v4382 = vadd.f32 0.0, %v4381
        %v4383 = vpop.f32.mrb[0].mxu0
        %4384 = vmatprep.mubr.f32.mxu0 0.0
        %4385 = vmatmul.mubr.f32.gmra.mrb[0].mxu0 %v4251
        %v4386 = vpop.f32.mrb[0].mxu0
        %v4387 = vadd.f32 0.0, %v4386
        %v4388 = vpop.f32.mrb[0].mxu0
        %4389 = vmatprep.mubr.f32.mxu0 0.0
        %4390 = vmatmul.mubr.f32.gmra.mrb[0].mxu0 %v4252
        %v4391 = vpop.f32.mrb[0].mxu0
        %v4392 = vadd.f32 0.0, %v4391
        %v4393 = vpop.f32.mrb[0].mxu0
        %4394 = vmatprep.mubr.f32.mxu0 0.0
        %4395 = vmatmul.mubr.f32.gmra.mrb[0].mxu0 %v4253
        %v4396 = vpop.f32.mrb[0].mxu0
        %v4397 = vadd.f32 0.0, %v4396
        %v4398 = vpop.f32.mrb[0].mxu0
        %4399 = vmatprep.mubr.f32.mxu0 0.0
        %4400 = vmatmul.mubr.f32.gmra.mrb[0].mxu0 %v4254
        %v4401 = vpop.f32.mrb[0].mxu0
        %v4402 = vadd.f32 0.0, %v4401
        %v4403 = vpop.f32.mrb[0].mxu0
        %4404 = vmatprep.mubr.f32.mxu0 0.0
        %4405 = vmatmul.mubr.f32.gmra.mrb[0].mxu0 %v4255
        %v4406 = vpop.f32.mrb[0].mxu0
        %v4407 = vadd.f32 0.0, %v4406
        %v4408 = vpop.f32.mrb[0].mxu0
        %4409 = vmatprep.mubr.f32.mxu0 0.0
        %4410 = vmatmul.mubr.f32.gmra.mrb[0].mxu0 %v4256
        %v4411 = vpop.f32.mrb[0].mxu0
        %v4412 = vadd.f32 0.0, %v4411
        %v4413 = vpop.f32.mrb[0].mxu0
        %4414 = vmatprep.mubr.f32.mxu0 0.0
        %4415 = vmatmul.mubr.f32.gmra.mrb[0].mxu0 %v4257
        %v4416 = vpop.f32.mrb[0].mxu0
        %v4417 = vadd.f32 0.0, %v4416
        %v4418 = vpop.f32.mrb[0].mxu0
        %4419 = vmatprep.mubr.f32.mxu0 0.0
        %4420 = vmatmul.mubr.f32.gmra.mrb[0].mxu0 %v4258
        %v4421 = vpop.f32.mrb[0].mxu0
        %v4422 = vadd.f32 0.0, %v4421
        %v4423 = vpop.f32.mrb[0].mxu0
        %4424 = vmatprep.mubr.f32.mxu0 0.0
        %4425 = vmatmul.mubr.f32.gmra.mrb[0].mxu0 %v4259
        %v4426 = vpop.f32.mrb[0].mxu0
        %v4427 = vadd.f32 0.0, %v4426
        %v4428 = vpop.f32.mrb[0].mxu0
        %4429 = vmatprep.mubr.f32.mxu0 0.0
        %4430 = vmatmul.mubr.f32.gmra.mrb[0].mxu0 %v4260
        %v4431 = vpop.f32.mrb[0].mxu0
        %v4432 = vadd.f32 0.0, %v4431
        %v4433 = vpop.f32.mrb[0].mxu0
        %4434 = vmatprep.mubr.f32.mxu0 0.0
        %4435 = vmatmul.mubr.f32.gmra.mrb[0].mxu0 %v4261
        %v4436 = vpop.f32.mrb[0].mxu0
        %v4437 = vadd.f32 0.0, %v4436
        %v4438 = vpop.f32.mrb[0].mxu0
        %4439 = vmatprep.mubr.f32.mxu0 0.0
        %4440 = vmatmul.mubr.f32.gmra.mrb[0].mxu0 %v4262
        %v4441 = vpop.f32.mrb[0].mxu0
        %v4442 = vadd.f32 0.0, %v4441
        %v4443 = vpop.f32.mrb[0].mxu0
        %4444 = vmatprep.mubr.f32.mxu0 0.0
        %4445 = vmatmul.mubr.f32.gmra.mrb[0].mxu0 %v4263
        %v4446 = vpop.f32.mrb[0].mxu0
        %v4447 = vadd.f32 0.0, %v4446
        %v4448 = vpop.f32.mrb[0].mxu0
        %4449 = vmatprep.mubr.f32.mxu0 0.0
        %4450 = vmatmul.mubr.f32.gmra.mrb[0].mxu0 %v4264
        %v4451 = vpop.f32.mrb[0].mxu0
        %v4452 = vadd.f32 0.0, %v4451
        %v4453 = vpop.f32.mrb[0].mxu0
        %4454 = vmatprep.mubr.f32.mxu0 0.0
        %4455 = vmatmul.mubr.f32.gmra.mrb[0].mxu0 %v4265
        %v4456 = vpop.f32.mrb[0].mxu0
        %v4457 = vadd.f32 0.0, %v4456
        %v4458 = vpop.f32.mrb[0].mxu0
        %4459 = vmatprep.mubr.f32.mxu0 0.0
        %4460 = vmatmul.mubr.f32.gmra.mrb[0].mxu0 %v4266
        %v4461 = vpop.f32.mrb[0].mxu0
        %v4462 = vadd.f32 0.0, %v4461
        %v4463 = vpop.f32.mrb[0].mxu0
        %4464 = vmatprep.mubr.f32.mxu0 0.0
        %4465 = vmatmul.mubr.f32.gmra.mrb[0].mxu0 %v4267
        %v4466 = vpop.f32.mrb[0].mxu0
        %v4467 = vadd.f32 0.0, %v4466
        %v4468 = vpop.f32.mrb[0].mxu0
        %4469 = vmatprep.mubr.f32.mxu0 0.0
        %4470 = vmatmul.mubr.f32.gmra.mrb[0].mxu0 %v4268
        %v4471 = vpop.f32.mrb[0].mxu0
        %v4472 = vadd.f32 0.0, %v4471
        %v4473 = vpop.f32.mrb[0].mxu0
        %4474 = vmatprep.mubr.f32.mxu0 0.0
        %4475 = vmatmul.mubr.f32.gmra.mrb[0].mxu0 %v4269
        %v4476 = vpop.f32.mrb[0].mxu0
        %v4477 = vadd.f32 0.0, %v4476
        %v4478 = vpop.f32.mrb[0].mxu0
        %4479 = vmatprep.mubr.f32.mxu0 0.0
        %4480 = vmatmul.mubr.f32.gmra.mrb[0].mxu0 %v4270
        %v4481 = vpop.f32.mrb[0].mxu0
        %v4482 = vadd.f32 0.0, %v4481
        %v4483 = vpop.f32.mrb[0].mxu0
        %4484 = vmatprep.mubr.f32.mxu0 0.0
        %4485 = vmatmul.mubr.f32.gmra.mrb[0].mxu0 %v4271
        %v4486 = vpop.f32.mrb[0].mxu0
        %v4487 = vadd.f32 0.0, %v4486
        %v4488 = vpop.f32.mrb[0].mxu0
        %4489 = vmatprep.mubr.f32.mxu0 0.0
        %4490 = vmatmul.mubr.f32.gmra.mrb[0].mxu0 %v4272
        %v4491 = vpop.f32.mrb[0].mxu0
        %v4492 = vadd.f32 0.0, %v4491
        %v4493 = vpop.f32.mrb[0].mxu0
        %4494 = vmatprep.mubr.f32.mxu0 0.0
        %4495 = vmatmul.mubr.f32.gmra.mrb[0].mxu0 %v4273
        %v4496 = vpop.f32.mrb[0].mxu0
        %v4497 = vadd.f32 0.0, %v4496
        %v4498 = vpop.f32.mrb[0].mxu0
        %4499 = vmatprep.mubr.f32.mxu0 0.0
        %4500 = vmatmul.mubr.f32.gmra.mrb[0].mxu0 %v4274
        %v4501 = vpop.f32.mrb[0].mxu0
        %v4502 = vadd.f32 0.0, %v4501
        %v4503 = vpop.f32.mrb[0].mxu0
        %4504 = vmatprep.mubr.f32.mxu0 0.0
        %4505 = vmatmul.mubr.f32.gmra.mrb[0].mxu0 %v4275
        %v4506 = vpop.f32.mrb[0].mxu0
        %v4507 = vadd.f32 0.0, %v4506
        %v4508 = vpop.f32.mrb[0].mxu0
        %4509 = vmatprep.mubr.f32.mxu0 0.0
        %4510 = vmatmul.mubr.f32.gmra.mrb[0].mxu0 %v4276
        %v4511 = vpop.f32.mrb[0].mxu0
        %v4512 = vadd.f32 0.0, %v4511
        %v4513 = vpop.f32.mrb[0].mxu0
        %4514 = vmatprep.mubr.f32.mxu0 0.0
        %4515 = vmatmul.mubr.f32.gmra.mrb[0].mxu0 %v4277
        %v4516 = vpop.f32.mrb[0].mxu0
        %v4517 = vadd.f32 0.0, %v4516
        %v4518 = vpop.f32.mrb[0].mxu0
        %4519 = vdwg.mxu0
        %v4520 = vadd.f32 %v4214, %v4362
        %v4521 = vadd.f32 %v4215, %v4367
        %v4522 = vadd.f32 %v4216, %v4372
        %v4523 = vadd.f32 %v4217, %v4377
        %v4524 = vadd.f32 %v4218, %v4382
        %v4525 = vadd.f32 %v4219, %v4387
        %v4526 = vadd.f32 %v4220, %v4392
        %v4527 = vadd.f32 %v4221, %v4397
        %v4528 = vadd.f32 %v4222, %v4402
        %v4529 = vadd.f32 %v4223, %v4407
        %v4530 = vadd.f32 %v4224, %v4412
        %v4531 = vadd.f32 %v4225, %v4417
        %v4532 = vadd.f32 %v4226, %v4422
        %v4533 = vadd.f32 %v4227, %v4427
        %v4534 = vadd.f32 %v4228, %v4432
        %v4535 = vadd.f32 %v4229, %v4437
        %v4536 = vadd.f32 %v4230, %v4442
        %v4537 = vadd.f32 %v4231, %v4447
        %v4538 = vadd.f32 %v4232, %v4452
        %v4539 = vadd.f32 %v4233, %v4457
        %v4540 = vadd.f32 %v4234, %v4462
        %v4541 = vadd.f32 %v4235, %v4467
        %v4542 = vadd.f32 %v4236, %v4472
        %v4543 = vadd.f32 %v4237, %v4477
        %v4544 = vadd.f32 %v4238, %v4482
        %v4545 = vadd.f32 %v4239, %v4487
        %v4546 = vadd.f32 %v4240, %v4492
        %v4547 = vadd.f32 %v4241, %v4497
        %v4548 = vadd.f32 %v4242, %v4502
        %v4549 = vadd.f32 %v4243, %v4507
        %v4550 = vadd.f32 %v4244, %v4512
        %v4551 = vadd.f32 %v4245, %v4517
        %v4552 = vld [vmem:[%s3054 + $0x2] sm:$0xff]
        %v4553 = vld [vmem:[%s3054 + $0xa] sm:$0xff]
        %v4554 = vld [vmem:[%s3054 + $0x1a] sm:$0xff]
        %v4555 = vld [vmem:[%s3054 + $0x22] sm:$0xff]
        %v4556 = vld [vmem:[%s3054 + $0x32] sm:$0xff]
        %v4557 = vld [vmem:[%s3054 + $0x3a] sm:$0xff]
        %v4558 = vld [vmem:[%s3054 + $0x4a] sm:$0xff]
        %v4559 = vld [vmem:[%s3054 + $0x52] sm:$0xff]
        %v4560 = vld [vmem:[%s3054 + $0x62] sm:$0xff]
        %v4561 = vld [vmem:[%s3054 + $0x6a] sm:$0xff]
        %v4562 = vld [vmem:[%s3054 + $0x7a] sm:$0xff]
        %v4563 = vld [vmem:[%s3054 + $0x82] sm:$0xff]
        %v4564 = vld [vmem:[%s3054 + $0x92] sm:$0xff]
        %v4565 = vld [vmem:[%s3054 + $0x9a] sm:$0xff]
        %v4566 = vld [vmem:[%s3054 + $0xaa] sm:$0xff]
        %v4567 = vld [vmem:[%s3054 + $0xb2] sm:$0xff]
        %v4568 = vld [vmem:[%s3054 + $0xc2] sm:$0xff]
        %v4569 = vld [vmem:[%s3054 + $0xca] sm:$0xff]
        %v4570 = vld [vmem:[%s3054 + $0xda] sm:$0xff]
        %v4571 = vld [vmem:[%s3054 + $0xe2] sm:$0xff]
        %v4572 = vld [vmem:[%s3054 + $0xf2] sm:$0xff]
        %v4573 = vld [vmem:[%s3054 + $0xfa] sm:$0xff]
        %v4574 = vld [vmem:[%s3054 + $0x10a] sm:$0xff]
        %v4575 = vld [vmem:[%s3054 + $0x112] sm:$0xff]
        %v4576 = vld [vmem:[%s3054 + $0x122] sm:$0xff]
        %v4577 = vld [vmem:[%s3054 + $0x12a] sm:$0xff]
        %v4578 = vld [vmem:[%s3054 + $0x13a] sm:$0xff]
        %v4579 = vld [vmem:[%s3054 + $0x142] sm:$0xff]
        %v4580 = vld [vmem:[%s3054 + $0x152] sm:$0xff]
        %v4581 = vld [vmem:[%s3054 + $0x15a] sm:$0xff]
        %v4582 = vld [vmem:[%s3054 + $0x16a] sm:$0xff]
        %v4583 = vld [vmem:[%s3054 + $0x172] sm:$0xff]
        %s4584 = scalar_lea.vmem [#allocation3], 640
        %v4585 = vld [vmem:[%s4584] sm:$0xff]
        %v4586 = vld [vmem:[%s4584 + $0x8] sm:$0xff]
        %v4587 = vld [vmem:[%s4584 + $0x10] sm:$0xff]
        %v4588 = vld [vmem:[%s4584 + $0x18] sm:$0xff]
        %v4589 = vld [vmem:[%s4584 + $0x20] sm:$0xff]
        %v4590 = vld [vmem:[%s4584 + $0x28] sm:$0xff]
        %v4591 = vld [vmem:[%s4584 + $0x30] sm:$0xff]
        %v4592 = vld [vmem:[%s4584 + $0x38] sm:$0xff]
        %v4593 = vld [vmem:[%s4584 + $0x40] sm:$0xff]
        %v4594 = vld [vmem:[%s4584 + $0x48] sm:$0xff]
        %v4595 = vld [vmem:[%s4584 + $0x50] sm:$0xff]
        %v4596 = vld [vmem:[%s4584 + $0x58] sm:$0xff]
        %v4597 = vld [vmem:[%s4584 + $0x60] sm:$0xff]
        %v4598 = vld [vmem:[%s4584 + $0x68] sm:$0xff]
        %v4599 = vld [vmem:[%s4584 + $0x70] sm:$0xff]
        %v4600 = vld [vmem:[%s4584 + $0x78] sm:$0xff]
        %4601 = vmatprep.subr.mxu0 0.0
        %4602 = vmatpush1.msra.mxu0 %v4585
        %4603 = vmatprep.subr.mxu0 0.0
        %4604 = vmatpush1.msra.mxu0 %v4586
        %4605 = vmatprep.subr.mxu0 0.0
        %4606 = vmatpush1.msra.mxu0 %v4587
        %4607 = vmatprep.subr.mxu0 0.0
        %4608 = vmatpush1.msra.mxu0 %v4588
        %4609 = vmatprep.subr.mxu0 0.0
        %4610 = vmatpush1.msra.mxu0 %v4589
        %4611 = vmatprep.subr.mxu0 0.0
        %4612 = vmatpush1.msra.mxu0 %v4590
        %4613 = vmatprep.subr.mxu0 0.0
        %4614 = vmatpush1.msra.mxu0 %v4591
        %4615 = vmatprep.subr.mxu0 0.0
        %4616 = vmatpush1.msra.mxu0 %v4592
        %4617 = vmatprep.subr.mxu0 0.0
        %4618 = vmatpush1.msra.mxu0 %v4593
        %4619 = vmatprep.subr.mxu0 0.0
        %4620 = vmatpush1.msra.mxu0 %v4594
        %4621 = vmatprep.subr.mxu0 0.0
        %4622 = vmatpush1.msra.mxu0 %v4595
        %4623 = vmatprep.subr.mxu0 0.0
        %4624 = vmatpush1.msra.mxu0 %v4596
        %4625 = vmatprep.subr.mxu0 0.0
        %4626 = vmatpush1.msra.mxu0 %v4597
        %4627 = vmatprep.subr.mxu0 0.0
        %4628 = vmatpush1.msra.mxu0 %v4598
        %4629 = vmatprep.subr.mxu0 0.0
        %4630 = vmatpush1.msra.mxu0 %v4599
        %4631 = vmatprep.subr.mxu0 0.0
        %4632 = vmatpush1.msra.mxu0 %v4600
        %4633 = vmatprep.subr.mxu0 0.0
        %4634 = vmatpush1.msra.mxu0 0.0
        %4635 = vmatprep.subr.mxu0 0.0
        %4636 = vmatpush1.msra.mxu0 0.0
        %4637 = vmatprep.subr.mxu0 0.0
        %4638 = vmatpush1.msra.mxu0 0.0
        %4639 = vmatprep.subr.mxu0 0.0
        %4640 = vmatpush1.msra.mxu0 0.0
        %4641 = vmatprep.subr.mxu0 0.0
        %4642 = vmatpush1.msra.mxu0 0.0
        %4643 = vmatprep.subr.mxu0 0.0
        %4644 = vmatpush1.msra.mxu0 0.0
        %4645 = vmatprep.subr.mxu0 0.0
        %4646 = vmatpush1.msra.mxu0 0.0
        %4647 = vmatprep.subr.mxu0 0.0
        %4648 = vmatpush1.msra.mxu0 0.0
        %4649 = vmatprep.subr.mxu0 0.0
        %4650 = vmatpush1.msra.mxu0 0.0
        %4651 = vmatprep.subr.mxu0 0.0
        %4652 = vmatpush1.msra.mxu0 0.0
        %4653 = vmatprep.subr.mxu0 0.0
        %4654 = vmatpush1.msra.mxu0 0.0
        %4655 = vmatprep.subr.mxu0 0.0
        %4656 = vmatpush1.msra.mxu0 0.0
        %4657 = vmatprep.subr.mxu0 0.0
        %4658 = vmatpush1.msra.mxu0 0.0
        %4659 = vmatprep.subr.mxu0 0.0
        %4660 = vmatpush1.msra.mxu0 0.0
        %4661 = vmatprep.subr.mxu0 0.0
        %4662 = vmatpush1.msra.mxu0 0.0
        %4663 = vmatprep.subr.mxu0 0.0
        %4664 = vmatpush1.msra.mxu0 0.0
        %4665 = vmatprep.mubr.f32.mxu0 0.0
        %4666 = vmatmul.mubr.f32.gmra.mrb[0].mxu0 %v4552
        %v4667 = vpop.f32.mrb[0].mxu0
        %v4668 = vadd.f32 0.0, %v4667
        %v4669 = vpop.f32.mrb[0].mxu0
        %4670 = vmatprep.mubr.f32.mxu0 0.0
        %4671 = vmatmul.mubr.f32.gmra.mrb[0].mxu0 %v4553
        %v4672 = vpop.f32.mrb[0].mxu0
        %v4673 = vadd.f32 0.0, %v4672
        %v4674 = vpop.f32.mrb[0].mxu0
        %4675 = vmatprep.mubr.f32.mxu0 0.0
        %4676 = vmatmul.mubr.f32.gmra.mrb[0].mxu0 %v4554
        %v4677 = vpop.f32.mrb[0].mxu0
        %v4678 = vadd.f32 0.0, %v4677
        %v4679 = vpop.f32.mrb[0].mxu0
        %4680 = vmatprep.mubr.f32.mxu0 0.0
        %4681 = vmatmul.mubr.f32.gmra.mrb[0].mxu0 %v4555
        %v4682 = vpop.f32.mrb[0].mxu0
        %v4683 = vadd.f32 0.0, %v4682
        %v4684 = vpop.f32.mrb[0].mxu0
        %4685 = vmatprep.mubr.f32.mxu0 0.0
        %4686 = vmatmul.mubr.f32.gmra.mrb[0].mxu0 %v4556
        %v4687 = vpop.f32.mrb[0].mxu0
        %v4688 = vadd.f32 0.0, %v4687
        %v4689 = vpop.f32.mrb[0].mxu0
        %4690 = vmatprep.mubr.f32.mxu0 0.0
        %4691 = vmatmul.mubr.f32.gmra.mrb[0].mxu0 %v4557
        %v4692 = vpop.f32.mrb[0].mxu0
        %v4693 = vadd.f32 0.0, %v4692
        %v4694 = vpop.f32.mrb[0].mxu0
        %4695 = vmatprep.mubr.f32.mxu0 0.0
        %4696 = vmatmul.mubr.f32.gmra.mrb[0].mxu0 %v4558
        %v4697 = vpop.f32.mrb[0].mxu0
        %v4698 = vadd.f32 0.0, %v4697
        %v4699 = vpop.f32.mrb[0].mxu0
        %4700 = vmatprep.mubr.f32.mxu0 0.0
        %4701 = vmatmul.mubr.f32.gmra.mrb[0].mxu0 %v4559
        %v4702 = vpop.f32.mrb[0].mxu0
        %v4703 = vadd.f32 0.0, %v4702
        %v4704 = vpop.f32.mrb[0].mxu0
        %4705 = vmatprep.mubr.f32.mxu0 0.0
        %4706 = vmatmul.mubr.f32.gmra.mrb[0].mxu0 %v4560
        %v4707 = vpop.f32.mrb[0].mxu0
        %v4708 = vadd.f32 0.0, %v4707
        %v4709 = vpop.f32.mrb[0].mxu0
        %4710 = vmatprep.mubr.f32.mxu0 0.0
        %4711 = vmatmul.mubr.f32.gmra.mrb[0].mxu0 %v4561
        %v4712 = vpop.f32.mrb[0].mxu0
        %v4713 = vadd.f32 0.0, %v4712
        %v4714 = vpop.f32.mrb[0].mxu0
        %4715 = vmatprep.mubr.f32.mxu0 0.0
        %4716 = vmatmul.mubr.f32.gmra.mrb[0].mxu0 %v4562
        %v4717 = vpop.f32.mrb[0].mxu0
        %v4718 = vadd.f32 0.0, %v4717
        %v4719 = vpop.f32.mrb[0].mxu0
        %4720 = vmatprep.mubr.f32.mxu0 0.0
        %4721 = vmatmul.mubr.f32.gmra.mrb[0].mxu0 %v4563
        %v4722 = vpop.f32.mrb[0].mxu0
        %v4723 = vadd.f32 0.0, %v4722
        %v4724 = vpop.f32.mrb[0].mxu0
        %4725 = vmatprep.mubr.f32.mxu0 0.0
        %4726 = vmatmul.mubr.f32.gmra.mrb[0].mxu0 %v4564
        %v4727 = vpop.f32.mrb[0].mxu0
        %v4728 = vadd.f32 0.0, %v4727
        %v4729 = vpop.f32.mrb[0].mxu0
        %4730 = vmatprep.mubr.f32.mxu0 0.0
        %4731 = vmatmul.mubr.f32.gmra.mrb[0].mxu0 %v4565
        %v4732 = vpop.f32.mrb[0].mxu0
        %v4733 = vadd.f32 0.0, %v4732
        %v4734 = vpop.f32.mrb[0].mxu0
        %4735 = vmatprep.mubr.f32.mxu0 0.0
        %4736 = vmatmul.mubr.f32.gmra.mrb[0].mxu0 %v4566
        %v4737 = vpop.f32.mrb[0].mxu0
        %v4738 = vadd.f32 0.0, %v4737
        %v4739 = vpop.f32.mrb[0].mxu0
        %4740 = vmatprep.mubr.f32.mxu0 0.0
        %4741 = vmatmul.mubr.f32.gmra.mrb[0].mxu0 %v4567
        %v4742 = vpop.f32.mrb[0].mxu0
        %v4743 = vadd.f32 0.0, %v4742
        %v4744 = vpop.f32.mrb[0].mxu0
        %4745 = vmatprep.mubr.f32.mxu0 0.0
        %4746 = vmatmul.mubr.f32.gmra.mrb[0].mxu0 %v4568
        %v4747 = vpop.f32.mrb[0].mxu0
        %v4748 = vadd.f32 0.0, %v4747
        %v4749 = vpop.f32.mrb[0].mxu0
        %4750 = vmatprep.mubr.f32.mxu0 0.0
        %4751 = vmatmul.mubr.f32.gmra.mrb[0].mxu0 %v4569
        %v4752 = vpop.f32.mrb[0].mxu0
        %v4753 = vadd.f32 0.0, %v4752
        %v4754 = vpop.f32.mrb[0].mxu0
        %4755 = vmatprep.mubr.f32.mxu0 0.0
        %4756 = vmatmul.mubr.f32.gmra.mrb[0].mxu0 %v4570
        %v4757 = vpop.f32.mrb[0].mxu0
        %v4758 = vadd.f32 0.0, %v4757
        %v4759 = vpop.f32.mrb[0].mxu0
        %4760 = vmatprep.mubr.f32.mxu0 0.0
        %4761 = vmatmul.mubr.f32.gmra.mrb[0].mxu0 %v4571
        %v4762 = vpop.f32.mrb[0].mxu0
        %v4763 = vadd.f32 0.0, %v4762
        %v4764 = vpop.f32.mrb[0].mxu0
        %4765 = vmatprep.mubr.f32.mxu0 0.0
        %4766 = vmatmul.mubr.f32.gmra.mrb[0].mxu0 %v4572
        %v4767 = vpop.f32.mrb[0].mxu0
        %v4768 = vadd.f32 0.0, %v4767
        %v4769 = vpop.f32.mrb[0].mxu0
        %4770 = vmatprep.mubr.f32.mxu0 0.0
        %4771 = vmatmul.mubr.f32.gmra.mrb[0].mxu0 %v4573
        %v4772 = vpop.f32.mrb[0].mxu0
        %v4773 = vadd.f32 0.0, %v4772
        %v4774 = vpop.f32.mrb[0].mxu0
        %4775 = vmatprep.mubr.f32.mxu0 0.0
        %4776 = vmatmul.mubr.f32.gmra.mrb[0].mxu0 %v4574
        %v4777 = vpop.f32.mrb[0].mxu0
        %v4778 = vadd.f32 0.0, %v4777
        %v4779 = vpop.f32.mrb[0].mxu0
        %4780 = vmatprep.mubr.f32.mxu0 0.0
        %4781 = vmatmul.mubr.f32.gmra.mrb[0].mxu0 %v4575
        %v4782 = vpop.f32.mrb[0].mxu0
        %v4783 = vadd.f32 0.0, %v4782
        %v4784 = vpop.f32.mrb[0].mxu0
        %4785 = vmatprep.mubr.f32.mxu0 0.0
        %4786 = vmatmul.mubr.f32.gmra.mrb[0].mxu0 %v4576
        %v4787 = vpop.f32.mrb[0].mxu0
        %v4788 = vadd.f32 0.0, %v4787
        %v4789 = vpop.f32.mrb[0].mxu0
        %4790 = vmatprep.mubr.f32.mxu0 0.0
        %4791 = vmatmul.mubr.f32.gmra.mrb[0].mxu0 %v4577
        %v4792 = vpop.f32.mrb[0].mxu0
        %v4793 = vadd.f32 0.0, %v4792
        %v4794 = vpop.f32.mrb[0].mxu0
        %4795 = vmatprep.mubr.f32.mxu0 0.0
        %4796 = vmatmul.mubr.f32.gmra.mrb[0].mxu0 %v4578
        %v4797 = vpop.f32.mrb[0].mxu0
        %v4798 = vadd.f32 0.0, %v4797
        %v4799 = vpop.f32.mrb[0].mxu0
        %4800 = vmatprep.mubr.f32.mxu0 0.0
        %4801 = vmatmul.mubr.f32.gmra.mrb[0].mxu0 %v4579
        %v4802 = vpop.f32.mrb[0].mxu0
        %v4803 = vadd.f32 0.0, %v4802
        %v4804 = vpop.f32.mrb[0].mxu0
        %4805 = vmatprep.mubr.f32.mxu0 0.0
        %4806 = vmatmul.mubr.f32.gmra.mrb[0].mxu0 %v4580
        %v4807 = vpop.f32.mrb[0].mxu0
        %v4808 = vadd.f32 0.0, %v4807
        %v4809 = vpop.f32.mrb[0].mxu0
        %4810 = vmatprep.mubr.f32.mxu0 0.0
        %4811 = vmatmul.mubr.f32.gmra.mrb[0].mxu0 %v4581
        %v4812 = vpop.f32.mrb[0].mxu0
        %v4813 = vadd.f32 0.0, %v4812
        %v4814 = vpop.f32.mrb[0].mxu0
        %4815 = vmatprep.mubr.f32.mxu0 0.0
        %4816 = vmatmul.mubr.f32.gmra.mrb[0].mxu0 %v4582
        %v4817 = vpop.f32.mrb[0].mxu0
        %v4818 = vadd.f32 0.0, %v4817
        %v4819 = vpop.f32.mrb[0].mxu0
        %4820 = vmatprep.mubr.f32.mxu0 0.0
        %4821 = vmatmul.mubr.f32.gmra.mrb[0].mxu0 %v4583
        %v4822 = vpop.f32.mrb[0].mxu0
        %v4823 = vadd.f32 0.0, %v4822
        %v4824 = vpop.f32.mrb[0].mxu0
        %4825 = vdwg.mxu0
        %v4826 = vadd.f32 %v4520, %v4668
        %v4827 = vadd.f32 %v4521, %v4673
        %v4828 = vadd.f32 %v4522, %v4678
        %v4829 = vadd.f32 %v4523, %v4683
        %v4830 = vadd.f32 %v4524, %v4688
        %v4831 = vadd.f32 %v4525, %v4693
        %v4832 = vadd.f32 %v4526, %v4698
        %v4833 = vadd.f32 %v4527, %v4703
        %v4834 = vadd.f32 %v4528, %v4708
        %v4835 = vadd.f32 %v4529, %v4713
        %v4836 = vadd.f32 %v4530, %v4718
        %v4837 = vadd.f32 %v4531, %v4723
        %v4838 = vadd.f32 %v4532, %v4728
        %v4839 = vadd.f32 %v4533, %v4733
        %v4840 = vadd.f32 %v4534, %v4738
        %v4841 = vadd.f32 %v4535, %v4743
        %v4842 = vadd.f32 %v4536, %v4748
        %v4843 = vadd.f32 %v4537, %v4753
        %v4844 = vadd.f32 %v4538, %v4758
        %v4845 = vadd.f32 %v4539, %v4763
        %v4846 = vadd.f32 %v4540, %v4768
        %v4847 = vadd.f32 %v4541, %v4773
        %v4848 = vadd.f32 %v4542, %v4778
        %v4849 = vadd.f32 %v4543, %v4783
        %v4850 = vadd.f32 %v4544, %v4788
        %v4851 = vadd.f32 %v4545, %v4793
        %v4852 = vadd.f32 %v4546, %v4798
        %v4853 = vadd.f32 %v4547, %v4803
        %v4854 = vadd.f32 %v4548, %v4808
        %v4855 = vadd.f32 %v4549, %v4813
        %v4856 = vadd.f32 %v4550, %v4818
        %v4857 = vadd.f32 %v4551, %v4823
        %s4858 = scalar_lea.vmem [#allocation2], 48
        %v4859 = vld [vmem:[%s4858] sm:$0xff]
        %v4860 = vld [vmem:[%s4858 + $0x8] sm:$0xff]
        %v4861 = vld [vmem:[%s4858 + $0x18] sm:$0xff]
        %v4862 = vld [vmem:[%s4858 + $0x20] sm:$0xff]
        %v4863 = vld [vmem:[%s4858 + $0x30] sm:$0xff]
        %v4864 = vld [vmem:[%s4858 + $0x38] sm:$0xff]
        %v4865 = vld [vmem:[%s4858 + $0x48] sm:$0xff]
        %v4866 = vld [vmem:[%s4858 + $0x50] sm:$0xff]
        %v4867 = vld [vmem:[%s4858 + $0x60] sm:$0xff]
        %v4868 = vld [vmem:[%s4858 + $0x68] sm:$0xff]
        %v4869 = vld [vmem:[%s4858 + $0x78] sm:$0xff]
        %v4870 = vld [vmem:[%s4858 + $0x80] sm:$0xff]
        %v4871 = vld [vmem:[%s4858 + $0x90] sm:$0xff]
        %v4872 = vld [vmem:[%s4858 + $0x98] sm:$0xff]
        %v4873 = vld [vmem:[%s4858 + $0xa8] sm:$0xff]
        %v4874 = vld [vmem:[%s4858 + $0xb0] sm:$0xff]
        %v4875 = vld [vmem:[%s4858 + $0xc0] sm:$0xff]
        %v4876 = vld [vmem:[%s4858 + $0xc8] sm:$0xff]
        %v4877 = vld [vmem:[%s4858 + $0xd8] sm:$0xff]
        %v4878 = vld [vmem:[%s4858 + $0xe0] sm:$0xff]
        %v4879 = vld [vmem:[%s4858 + $0xf0] sm:$0xff]
        %v4880 = vld [vmem:[%s4858 + $0xf8] sm:$0xff]
        %v4881 = vld [vmem:[%s4858 + $0x108] sm:$0xff]
        %v4882 = vld [vmem:[%s4858 + $0x110] sm:$0xff]
        %v4883 = vld [vmem:[%s4858 + $0x120] sm:$0xff]
        %v4884 = vld [vmem:[%s4858 + $0x128] sm:$0xff]
        %v4885 = vld [vmem:[%s4858 + $0x138] sm:$0xff]
        %v4886 = vld [vmem:[%s4858 + $0x140] sm:$0xff]
        %v4887 = vld [vmem:[%s4858 + $0x150] sm:$0xff]
        %v4888 = vld [vmem:[%s4858 + $0x158] sm:$0xff]
        %v4889 = vld [vmem:[%s4858 + $0x168] sm:$0xff]
        %v4890 = vld [vmem:[%s4858 + $0x170] sm:$0xff]
        %s4891 = scalar_lea.vmem [#allocation3], 768
        %v4892 = vld [vmem:[%s4891] sm:$0xff]
        %v4893 = vld [vmem:[%s4891 + $0x8] sm:$0xff]
        %v4894 = vld [vmem:[%s4891 + $0x10] sm:$0xff]
        %v4895 = vld [vmem:[%s4891 + $0x18] sm:$0xff]
        %v4896 = vld [vmem:[%s4891 + $0x20] sm:$0xff]
        %v4897 = vld [vmem:[%s4891 + $0x28] sm:$0xff]
        %v4898 = vld [vmem:[%s4891 + $0x30] sm:$0xff]
        %v4899 = vld [vmem:[%s4891 + $0x38] sm:$0xff]
        %v4900 = vld [vmem:[%s4891 + $0x40] sm:$0xff]
        %v4901 = vld [vmem:[%s4891 + $0x48] sm:$0xff]
        %v4902 = vld [vmem:[%s4891 + $0x50] sm:$0xff]
        %v4903 = vld [vmem:[%s4891 + $0x58] sm:$0xff]
        %v4904 = vld [vmem:[%s4891 + $0x60] sm:$0xff]
        %v4905 = vld [vmem:[%s4891 + $0x68] sm:$0xff]
        %v4906 = vld [vmem:[%s4891 + $0x70] sm:$0xff]
        %v4907 = vld [vmem:[%s4891 + $0x78] sm:$0xff]
        %4908 = vmatprep.subr.mxu0 0.0
        %4909 = vmatpush1.msra.mxu0 %v4892
        %4910 = vmatprep.subr.mxu0 0.0
        %4911 = vmatpush1.msra.mxu0 %v4893
        %4912 = vmatprep.subr.mxu0 0.0
        %4913 = vmatpush1.msra.mxu0 %v4894
        %4914 = vmatprep.subr.mxu0 0.0
        %4915 = vmatpush1.msra.mxu0 %v4895
        %4916 = vmatprep.subr.mxu0 0.0
        %4917 = vmatpush1.msra.mxu0 %v4896
        %4918 = vmatprep.subr.mxu0 0.0
        %4919 = vmatpush1.msra.mxu0 %v4897
        %4920 = vmatprep.subr.mxu0 0.0
        %4921 = vmatpush1.msra.mxu0 %v4898
        %4922 = vmatprep.subr.mxu0 0.0
        %4923 = vmatpush1.msra.mxu0 %v4899
        %4924 = vmatprep.subr.mxu0 0.0
        %4925 = vmatpush1.msra.mxu0 %v4900
        %4926 = vmatprep.subr.mxu0 0.0
        %4927 = vmatpush1.msra.mxu0 %v4901
        %4928 = vmatprep.subr.mxu0 0.0
        %4929 = vmatpush1.msra.mxu0 %v4902
        %4930 = vmatprep.subr.mxu0 0.0
        %4931 = vmatpush1.msra.mxu0 %v4903
        %4932 = vmatprep.subr.mxu0 0.0
        %4933 = vmatpush1.msra.mxu0 %v4904
        %4934 = vmatprep.subr.mxu0 0.0
        %4935 = vmatpush1.msra.mxu0 %v4905
        %4936 = vmatprep.subr.mxu0 0.0
        %4937 = vmatpush1.msra.mxu0 %v4906
        %4938 = vmatprep.subr.mxu0 0.0
        %4939 = vmatpush1.msra.mxu0 %v4907
        %4940 = vmatprep.subr.mxu0 0.0
        %4941 = vmatpush1.msra.mxu0 0.0
        %4942 = vmatprep.subr.mxu0 0.0
        %4943 = vmatpush1.msra.mxu0 0.0
        %4944 = vmatprep.subr.mxu0 0.0
        %4945 = vmatpush1.msra.mxu0 0.0
        %4946 = vmatprep.subr.mxu0 0.0
        %4947 = vmatpush1.msra.mxu0 0.0
        %4948 = vmatprep.subr.mxu0 0.0
        %4949 = vmatpush1.msra.mxu0 0.0
        %4950 = vmatprep.subr.mxu0 0.0
        %4951 = vmatpush1.msra.mxu0 0.0
        %4952 = vmatprep.subr.mxu0 0.0
        %4953 = vmatpush1.msra.mxu0 0.0
        %4954 = vmatprep.subr.mxu0 0.0
        %4955 = vmatpush1.msra.mxu0 0.0
        %4956 = vmatprep.subr.mxu0 0.0
        %4957 = vmatpush1.msra.mxu0 0.0
        %4958 = vmatprep.subr.mxu0 0.0
        %4959 = vmatpush1.msra.mxu0 0.0
        %4960 = vmatprep.subr.mxu0 0.0
        %4961 = vmatpush1.msra.mxu0 0.0
        %4962 = vmatprep.subr.mxu0 0.0
        %4963 = vmatpush1.msra.mxu0 0.0
        %4964 = vmatprep.subr.mxu0 0.0
        %4965 = vmatpush1.msra.mxu0 0.0
        %4966 = vmatprep.subr.mxu0 0.0
        %4967 = vmatpush1.msra.mxu0 0.0
        %4968 = vmatprep.subr.mxu0 0.0
        %4969 = vmatpush1.msra.mxu0 0.0
        %4970 = vmatprep.subr.mxu0 0.0
        %4971 = vmatpush1.msra.mxu0 0.0
        %4972 = vmatprep.mubr.f32.mxu0 0.0
        %4973 = vmatmul.mubr.f32.gmra.mrb[0].mxu0 %v4859
        %v4974 = vpop.f32.mrb[0].mxu0
        %v4975 = vadd.f32 0.0, %v4974
        %v4976 = vpop.f32.mrb[0].mxu0
        %4977 = vmatprep.mubr.f32.mxu0 0.0
        %4978 = vmatmul.mubr.f32.gmra.mrb[0].mxu0 %v4860
        %v4979 = vpop.f32.mrb[0].mxu0
        %v4980 = vadd.f32 0.0, %v4979
        %v4981 = vpop.f32.mrb[0].mxu0
        %4982 = vmatprep.mubr.f32.mxu0 0.0
        %4983 = vmatmul.mubr.f32.gmra.mrb[0].mxu0 %v4861
        %v4984 = vpop.f32.mrb[0].mxu0
        %v4985 = vadd.f32 0.0, %v4984
        %v4986 = vpop.f32.mrb[0].mxu0
        %4987 = vmatprep.mubr.f32.mxu0 0.0
        %4988 = vmatmul.mubr.f32.gmra.mrb[0].mxu0 %v4862
        %v4989 = vpop.f32.mrb[0].mxu0
        %v4990 = vadd.f32 0.0, %v4989
        %v4991 = vpop.f32.mrb[0].mxu0
        %4992 = vmatprep.mubr.f32.mxu0 0.0
        %4993 = vmatmul.mubr.f32.gmra.mrb[0].mxu0 %v4863
        %v4994 = vpop.f32.mrb[0].mxu0
        %v4995 = vadd.f32 0.0, %v4994
        %v4996 = vpop.f32.mrb[0].mxu0
        %4997 = vmatprep.mubr.f32.mxu0 0.0
        %4998 = vmatmul.mubr.f32.gmra.mrb[0].mxu0 %v4864
        %v4999 = vpop.f32.mrb[0].mxu0
        %v5000 = vadd.f32 0.0, %v4999
        %v5001 = vpop.f32.mrb[0].mxu0
        %5002 = vmatprep.mubr.f32.mxu0 0.0
        %5003 = vmatmul.mubr.f32.gmra.mrb[0].mxu0 %v4865
        %v5004 = vpop.f32.mrb[0].mxu0
        %v5005 = vadd.f32 0.0, %v5004
        %v5006 = vpop.f32.mrb[0].mxu0
        %5007 = vmatprep.mubr.f32.mxu0 0.0
        %5008 = vmatmul.mubr.f32.gmra.mrb[0].mxu0 %v4866
        %v5009 = vpop.f32.mrb[0].mxu0
        %v5010 = vadd.f32 0.0, %v5009
        %v5011 = vpop.f32.mrb[0].mxu0
        %5012 = vmatprep.mubr.f32.mxu0 0.0
        %5013 = vmatmul.mubr.f32.gmra.mrb[0].mxu0 %v4867
        %v5014 = vpop.f32.mrb[0].mxu0
        %v5015 = vadd.f32 0.0, %v5014
        %v5016 = vpop.f32.mrb[0].mxu0
        %5017 = vmatprep.mubr.f32.mxu0 0.0
        %5018 = vmatmul.mubr.f32.gmra.mrb[0].mxu0 %v4868
        %v5019 = vpop.f32.mrb[0].mxu0
        %v5020 = vadd.f32 0.0, %v5019
        %v5021 = vpop.f32.mrb[0].mxu0
        %5022 = vmatprep.mubr.f32.mxu0 0.0
        %5023 = vmatmul.mubr.f32.gmra.mrb[0].mxu0 %v4869
        %v5024 = vpop.f32.mrb[0].mxu0
        %v5025 = vadd.f32 0.0, %v5024
        %v5026 = vpop.f32.mrb[0].mxu0
        %5027 = vmatprep.mubr.f32.mxu0 0.0
        %5028 = vmatmul.mubr.f32.gmra.mrb[0].mxu0 %v4870
        %v5029 = vpop.f32.mrb[0].mxu0
        %v5030 = vadd.f32 0.0, %v5029
        %v5031 = vpop.f32.mrb[0].mxu0
        %5032 = vmatprep.mubr.f32.mxu0 0.0
        %5033 = vmatmul.mubr.f32.gmra.mrb[0].mxu0 %v4871
        %v5034 = vpop.f32.mrb[0].mxu0
        %v5035 = vadd.f32 0.0, %v5034
        %v5036 = vpop.f32.mrb[0].mxu0
        %5037 = vmatprep.mubr.f32.mxu0 0.0
        %5038 = vmatmul.mubr.f32.gmra.mrb[0].mxu0 %v4872
        %v5039 = vpop.f32.mrb[0].mxu0
        %v5040 = vadd.f32 0.0, %v5039
        %v5041 = vpop.f32.mrb[0].mxu0
        %5042 = vmatprep.mubr.f32.mxu0 0.0
        %5043 = vmatmul.mubr.f32.gmra.mrb[0].mxu0 %v4873
        %v5044 = vpop.f32.mrb[0].mxu0
        %v5045 = vadd.f32 0.0, %v5044
        %v5046 = vpop.f32.mrb[0].mxu0
        %5047 = vmatprep.mubr.f32.mxu0 0.0
        %5048 = vmatmul.mubr.f32.gmra.mrb[0].mxu0 %v4874
        %v5049 = vpop.f32.mrb[0].mxu0
        %v5050 = vadd.f32 0.0, %v5049
        %v5051 = vpop.f32.mrb[0].mxu0
        %5052 = vmatprep.mubr.f32.mxu0 0.0
        %5053 = vmatmul.mubr.f32.gmra.mrb[0].mxu0 %v4875
        %v5054 = vpop.f32.mrb[0].mxu0
        %v5055 = vadd.f32 0.0, %v5054
        %v5056 = vpop.f32.mrb[0].mxu0
        %5057 = vmatprep.mubr.f32.mxu0 0.0
        %5058 = vmatmul.mubr.f32.gmra.mrb[0].mxu0 %v4876
        %v5059 = vpop.f32.mrb[0].mxu0
        %v5060 = vadd.f32 0.0, %v5059
        %v5061 = vpop.f32.mrb[0].mxu0
        %5062 = vmatprep.mubr.f32.mxu0 0.0
        %5063 = vmatmul.mubr.f32.gmra.mrb[0].mxu0 %v4877
        %v5064 = vpop.f32.mrb[0].mxu0
        %v5065 = vadd.f32 0.0, %v5064
        %v5066 = vpop.f32.mrb[0].mxu0
        %5067 = vmatprep.mubr.f32.mxu0 0.0
        %5068 = vmatmul.mubr.f32.gmra.mrb[0].mxu0 %v4878
        %v5069 = vpop.f32.mrb[0].mxu0
        %v5070 = vadd.f32 0.0, %v5069
        %v5071 = vpop.f32.mrb[0].mxu0
        %5072 = vmatprep.mubr.f32.mxu0 0.0
        %5073 = vmatmul.mubr.f32.gmra.mrb[0].mxu0 %v4879
        %v5074 = vpop.f32.mrb[0].mxu0
        %v5075 = vadd.f32 0.0, %v5074
        %v5076 = vpop.f32.mrb[0].mxu0
        %5077 = vmatprep.mubr.f32.mxu0 0.0
        %5078 = vmatmul.mubr.f32.gmra.mrb[0].mxu0 %v4880
        %v5079 = vpop.f32.mrb[0].mxu0
        %v5080 = vadd.f32 0.0, %v5079
        %v5081 = vpop.f32.mrb[0].mxu0
        %5082 = vmatprep.mubr.f32.mxu0 0.0
        %5083 = vmatmul.mubr.f32.gmra.mrb[0].mxu0 %v4881
        %v5084 = vpop.f32.mrb[0].mxu0
        %v5085 = vadd.f32 0.0, %v5084
        %v5086 = vpop.f32.mrb[0].mxu0
        %5087 = vmatprep.mubr.f32.mxu0 0.0
        %5088 = vmatmul.mubr.f32.gmra.mrb[0].mxu0 %v4882
        %v5089 = vpop.f32.mrb[0].mxu0
        %v5090 = vadd.f32 0.0, %v5089
        %v5091 = vpop.f32.mrb[0].mxu0
        %5092 = vmatprep.mubr.f32.mxu0 0.0
        %5093 = vmatmul.mubr.f32.gmra.mrb[0].mxu0 %v4883
        %v5094 = vpop.f32.mrb[0].mxu0
        %v5095 = vadd.f32 0.0, %v5094
        %v5096 = vpop.f32.mrb[0].mxu0
        %5097 = vmatprep.mubr.f32.mxu0 0.0
        %5098 = vmatmul.mubr.f32.gmra.mrb[0].mxu0 %v4884
        %v5099 = vpop.f32.mrb[0].mxu0
        %v5100 = vadd.f32 0.0, %v5099
        %v5101 = vpop.f32.mrb[0].mxu0
        %5102 = vmatprep.mubr.f32.mxu0 0.0
        %5103 = vmatmul.mubr.f32.gmra.mrb[0].mxu0 %v4885
        %v5104 = vpop.f32.mrb[0].mxu0
        %v5105 = vadd.f32 0.0, %v5104
        %v5106 = vpop.f32.mrb[0].mxu0
        %5107 = vmatprep.mubr.f32.mxu0 0.0
        %5108 = vmatmul.mubr.f32.gmra.mrb[0].mxu0 %v4886
        %v5109 = vpop.f32.mrb[0].mxu0
        %v5110 = vadd.f32 0.0, %v5109
        %v5111 = vpop.f32.mrb[0].mxu0
        %5112 = vmatprep.mubr.f32.mxu0 0.0
        %5113 = vmatmul.mubr.f32.gmra.mrb[0].mxu0 %v4887
        %v5114 = vpop.f32.mrb[0].mxu0
        %v5115 = vadd.f32 0.0, %v5114
        %v5116 = vpop.f32.mrb[0].mxu0
        %5117 = vmatprep.mubr.f32.mxu0 0.0
        %5118 = vmatmul.mubr.f32.gmra.mrb[0].mxu0 %v4888
        %v5119 = vpop.f32.mrb[0].mxu0
        %v5120 = vadd.f32 0.0, %v5119
        %v5121 = vpop.f32.mrb[0].mxu0
        %5122 = vmatprep.mubr.f32.mxu0 0.0
        %5123 = vmatmul.mubr.f32.gmra.mrb[0].mxu0 %v4889
        %v5124 = vpop.f32.mrb[0].mxu0
        %v5125 = vadd.f32 0.0, %v5124
        %v5126 = vpop.f32.mrb[0].mxu0
        %5127 = vmatprep.mubr.f32.mxu0 0.0
        %5128 = vmatmul.mubr.f32.gmra.mrb[0].mxu0 %v4890
        %v5129 = vpop.f32.mrb[0].mxu0
        %v5130 = vadd.f32 0.0, %v5129
        %v5131 = vpop.f32.mrb[0].mxu0
        %5132 = vdwg.mxu0
        %v5133 = vadd.f32 %v4826, %v4975
        %v5134 = vadd.f32 %v4827, %v4980
        %v5135 = vadd.f32 %v4828, %v4985
        %v5136 = vadd.f32 %v4829, %v4990
        %v5137 = vadd.f32 %v4830, %v4995
        %v5138 = vadd.f32 %v4831, %v5000
        %v5139 = vadd.f32 %v4832, %v5005
        %v5140 = vadd.f32 %v4833, %v5010
        %v5141 = vadd.f32 %v4834, %v5015
        %v5142 = vadd.f32 %v4835, %v5020
        %v5143 = vadd.f32 %v4836, %v5025
        %v5144 = vadd.f32 %v4837, %v5030
        %v5145 = vadd.f32 %v4838, %v5035
        %v5146 = vadd.f32 %v4839, %v5040
        %v5147 = vadd.f32 %v4840, %v5045
        %v5148 = vadd.f32 %v4841, %v5050
        %v5149 = vadd.f32 %v4842, %v5055
        %v5150 = vadd.f32 %v4843, %v5060
        %v5151 = vadd.f32 %v4844, %v5065
        %v5152 = vadd.f32 %v4845, %v5070
        %v5153 = vadd.f32 %v4846, %v5075
        %v5154 = vadd.f32 %v4847, %v5080
        %v5155 = vadd.f32 %v4848, %v5085
        %v5156 = vadd.f32 %v4849, %v5090
        %v5157 = vadd.f32 %v4850, %v5095
        %v5158 = vadd.f32 %v4851, %v5100
        %v5159 = vadd.f32 %v4852, %v5105
        %v5160 = vadd.f32 %v4853, %v5110
        %v5161 = vadd.f32 %v4854, %v5115
        %v5162 = vadd.f32 %v4855, %v5120
        %v5163 = vadd.f32 %v4856, %v5125
        %v5164 = vadd.f32 %v4857, %v5130
        %v5165 = vld [vmem:[%s4858 + $0x1] sm:$0xff]
        %v5166 = vld [vmem:[%s4858 + $0x9] sm:$0xff]
        %v5167 = vld [vmem:[%s4858 + $0x19] sm:$0xff]
        %v5168 = vld [vmem:[%s4858 + $0x21] sm:$0xff]
        %v5169 = vld [vmem:[%s4858 + $0x31] sm:$0xff]
        %v5170 = vld [vmem:[%s4858 + $0x39] sm:$0xff]
        %v5171 = vld [vmem:[%s4858 + $0x49] sm:$0xff]
        %v5172 = vld [vmem:[%s4858 + $0x51] sm:$0xff]
        %v5173 = vld [vmem:[%s4858 + $0x61] sm:$0xff]
        %v5174 = vld [vmem:[%s4858 + $0x69] sm:$0xff]
        %v5175 = vld [vmem:[%s4858 + $0x79] sm:$0xff]
        %v5176 = vld [vmem:[%s4858 + $0x81] sm:$0xff]
        %v5177 = vld [vmem:[%s4858 + $0x91] sm:$0xff]
        %v5178 = vld [vmem:[%s4858 + $0x99] sm:$0xff]
        %v5179 = vld [vmem:[%s4858 + $0xa9] sm:$0xff]
        %v5180 = vld [vmem:[%s4858 + $0xb1] sm:$0xff]
        %v5181 = vld [vmem:[%s4858 + $0xc1] sm:$0xff]
        %v5182 = vld [vmem:[%s4858 + $0xc9] sm:$0xff]
        %v5183 = vld [vmem:[%s4858 + $0xd9] sm:$0xff]
        %v5184 = vld [vmem:[%s4858 + $0xe1] sm:$0xff]
        %v5185 = vld [vmem:[%s4858 + $0xf1] sm:$0xff]
        %v5186 = vld [vmem:[%s4858 + $0xf9] sm:$0xff]
        %v5187 = vld [vmem:[%s4858 + $0x109] sm:$0xff]
        %v5188 = vld [vmem:[%s4858 + $0x111] sm:$0xff]
        %v5189 = vld [vmem:[%s4858 + $0x121] sm:$0xff]
        %v5190 = vld [vmem:[%s4858 + $0x129] sm:$0xff]
        %v5191 = vld [vmem:[%s4858 + $0x139] sm:$0xff]
        %v5192 = vld [vmem:[%s4858 + $0x141] sm:$0xff]
        %v5193 = vld [vmem:[%s4858 + $0x151] sm:$0xff]
        %v5194 = vld [vmem:[%s4858 + $0x159] sm:$0xff]
        %v5195 = vld [vmem:[%s4858 + $0x169] sm:$0xff]
        %v5196 = vld [vmem:[%s4858 + $0x171] sm:$0xff]
        %s5197 = scalar_lea.vmem [#allocation3], 896
        %v5198 = vld [vmem:[%s5197] sm:$0xff]
        %v5199 = vld [vmem:[%s5197 + $0x8] sm:$0xff]
        %v5200 = vld [vmem:[%s5197 + $0x10] sm:$0xff]
        %v5201 = vld [vmem:[%s5197 + $0x18] sm:$0xff]
        %v5202 = vld [vmem:[%s5197 + $0x20] sm:$0xff]
        %v5203 = vld [vmem:[%s5197 + $0x28] sm:$0xff]
        %v5204 = vld [vmem:[%s5197 + $0x30] sm:$0xff]
        %v5205 = vld [vmem:[%s5197 + $0x38] sm:$0xff]
        %v5206 = vld [vmem:[%s5197 + $0x40] sm:$0xff]
        %v5207 = vld [vmem:[%s5197 + $0x48] sm:$0xff]
        %v5208 = vld [vmem:[%s5197 + $0x50] sm:$0xff]
        %v5209 = vld [vmem:[%s5197 + $0x58] sm:$0xff]
        %v5210 = vld [vmem:[%s5197 + $0x60] sm:$0xff]
        %v5211 = vld [vmem:[%s5197 + $0x68] sm:$0xff]
        %v5212 = vld [vmem:[%s5197 + $0x70] sm:$0xff]
        %v5213 = vld [vmem:[%s5197 + $0x78] sm:$0xff]
        %5214 = vmatprep.subr.mxu0 0.0
        %5215 = vmatpush1.msra.mxu0 %v5198
        %5216 = vmatprep.subr.mxu0 0.0
        %5217 = vmatpush1.msra.mxu0 %v5199
        %5218 = vmatprep.subr.mxu0 0.0
        %5219 = vmatpush1.msra.mxu0 %v5200
        %5220 = vmatprep.subr.mxu0 0.0
        %5221 = vmatpush1.msra.mxu0 %v5201
        %5222 = vmatprep.subr.mxu0 0.0
        %5223 = vmatpush1.msra.mxu0 %v5202
        %5224 = vmatprep.subr.mxu0 0.0
        %5225 = vmatpush1.msra.mxu0 %v5203
        %5226 = vmatprep.subr.mxu0 0.0
        %5227 = vmatpush1.msra.mxu0 %v5204
        %5228 = vmatprep.subr.mxu0 0.0
        %5229 = vmatpush1.msra.mxu0 %v5205
        %5230 = vmatprep.subr.mxu0 0.0
        %5231 = vmatpush1.msra.mxu0 %v5206
        %5232 = vmatprep.subr.mxu0 0.0
        %5233 = vmatpush1.msra.mxu0 %v5207
        %5234 = vmatprep.subr.mxu0 0.0
        %5235 = vmatpush1.msra.mxu0 %v5208
        %5236 = vmatprep.subr.mxu0 0.0
        %5237 = vmatpush1.msra.mxu0 %v5209
        %5238 = vmatprep.subr.mxu0 0.0
        %5239 = vmatpush1.msra.mxu0 %v5210
        %5240 = vmatprep.subr.mxu0 0.0
        %5241 = vmatpush1.msra.mxu0 %v5211
        %5242 = vmatprep.subr.mxu0 0.0
        %5243 = vmatpush1.msra.mxu0 %v5212
        %5244 = vmatprep.subr.mxu0 0.0
        %5245 = vmatpush1.msra.mxu0 %v5213
        %5246 = vmatprep.subr.mxu0 0.0
        %5247 = vmatpush1.msra.mxu0 0.0
        %5248 = vmatprep.subr.mxu0 0.0
        %5249 = vmatpush1.msra.mxu0 0.0
        %5250 = vmatprep.subr.mxu0 0.0
        %5251 = vmatpush1.msra.mxu0 0.0
        %5252 = vmatprep.subr.mxu0 0.0
        %5253 = vmatpush1.msra.mxu0 0.0
        %5254 = vmatprep.subr.mxu0 0.0
        %5255 = vmatpush1.msra.mxu0 0.0
        %5256 = vmatprep.subr.mxu0 0.0
        %5257 = vmatpush1.msra.mxu0 0.0
        %5258 = vmatprep.subr.mxu0 0.0
        %5259 = vmatpush1.msra.mxu0 0.0
        %5260 = vmatprep.subr.mxu0 0.0
        %5261 = vmatpush1.msra.mxu0 0.0
        %5262 = vmatprep.subr.mxu0 0.0
        %5263 = vmatpush1.msra.mxu0 0.0
        %5264 = vmatprep.subr.mxu0 0.0
        %5265 = vmatpush1.msra.mxu0 0.0
        %5266 = vmatprep.subr.mxu0 0.0
        %5267 = vmatpush1.msra.mxu0 0.0
        %5268 = vmatprep.subr.mxu0 0.0
        %5269 = vmatpush1.msra.mxu0 0.0
        %5270 = vmatprep.subr.mxu0 0.0
        %5271 = vmatpush1.msra.mxu0 0.0
        %5272 = vmatprep.subr.mxu0 0.0
        %5273 = vmatpush1.msra.mxu0 0.0
        %5274 = vmatprep.subr.mxu0 0.0
        %5275 = vmatpush1.msra.mxu0 0.0
        %5276 = vmatprep.subr.mxu0 0.0
        %5277 = vmatpush1.msra.mxu0 0.0
        %5278 = vmatprep.mubr.f32.mxu0 0.0
        %5279 = vmatmul.mubr.f32.gmra.mrb[0].mxu0 %v5165
        %v5280 = vpop.f32.mrb[0].mxu0
        %v5281 = vadd.f32 0.0, %v5280
        %v5282 = vpop.f32.mrb[0].mxu0
        %5283 = vmatprep.mubr.f32.mxu0 0.0
        %5284 = vmatmul.mubr.f32.gmra.mrb[0].mxu0 %v5166
        %v5285 = vpop.f32.mrb[0].mxu0
        %v5286 = vadd.f32 0.0, %v5285
        %v5287 = vpop.f32.mrb[0].mxu0
        %5288 = vmatprep.mubr.f32.mxu0 0.0
        %5289 = vmatmul.mubr.f32.gmra.mrb[0].mxu0 %v5167
        %v5290 = vpop.f32.mrb[0].mxu0
        %v5291 = vadd.f32 0.0, %v5290
        %v5292 = vpop.f32.mrb[0].mxu0
        %5293 = vmatprep.mubr.f32.mxu0 0.0
        %5294 = vmatmul.mubr.f32.gmra.mrb[0].mxu0 %v5168
        %v5295 = vpop.f32.mrb[0].mxu0
        %v5296 = vadd.f32 0.0, %v5295
        %v5297 = vpop.f32.mrb[0].mxu0
        %5298 = vmatprep.mubr.f32.mxu0 0.0
        %5299 = vmatmul.mubr.f32.gmra.mrb[0].mxu0 %v5169
        %v5300 = vpop.f32.mrb[0].mxu0
        %v5301 = vadd.f32 0.0, %v5300
        %v5302 = vpop.f32.mrb[0].mxu0
        %5303 = vmatprep.mubr.f32.mxu0 0.0
        %5304 = vmatmul.mubr.f32.gmra.mrb[0].mxu0 %v5170
        %v5305 = vpop.f32.mrb[0].mxu0
        %v5306 = vadd.f32 0.0, %v5305
        %v5307 = vpop.f32.mrb[0].mxu0
        %5308 = vmatprep.mubr.f32.mxu0 0.0
        %5309 = vmatmul.mubr.f32.gmra.mrb[0].mxu0 %v5171
        %v5310 = vpop.f32.mrb[0].mxu0
        %v5311 = vadd.f32 0.0, %v5310
        %v5312 = vpop.f32.mrb[0].mxu0
        %5313 = vmatprep.mubr.f32.mxu0 0.0
        %5314 = vmatmul.mubr.f32.gmra.mrb[0].mxu0 %v5172
        %v5315 = vpop.f32.mrb[0].mxu0
        %v5316 = vadd.f32 0.0, %v5315
        %v5317 = vpop.f32.mrb[0].mxu0
        %5318 = vmatprep.mubr.f32.mxu0 0.0
        %5319 = vmatmul.mubr.f32.gmra.mrb[0].mxu0 %v5173
        %v5320 = vpop.f32.mrb[0].mxu0
        %v5321 = vadd.f32 0.0, %v5320
        %v5322 = vpop.f32.mrb[0].mxu0
        %5323 = vmatprep.mubr.f32.mxu0 0.0
        %5324 = vmatmul.mubr.f32.gmra.mrb[0].mxu0 %v5174
        %v5325 = vpop.f32.mrb[0].mxu0
        %v5326 = vadd.f32 0.0, %v5325
        %v5327 = vpop.f32.mrb[0].mxu0
        %5328 = vmatprep.mubr.f32.mxu0 0.0
        %5329 = vmatmul.mubr.f32.gmra.mrb[0].mxu0 %v5175
        %v5330 = vpop.f32.mrb[0].mxu0
        %v5331 = vadd.f32 0.0, %v5330
        %v5332 = vpop.f32.mrb[0].mxu0
        %5333 = vmatprep.mubr.f32.mxu0 0.0
        %5334 = vmatmul.mubr.f32.gmra.mrb[0].mxu0 %v5176
        %v5335 = vpop.f32.mrb[0].mxu0
        %v5336 = vadd.f32 0.0, %v5335
        %v5337 = vpop.f32.mrb[0].mxu0
        %5338 = vmatprep.mubr.f32.mxu0 0.0
        %5339 = vmatmul.mubr.f32.gmra.mrb[0].mxu0 %v5177
        %v5340 = vpop.f32.mrb[0].mxu0
        %v5341 = vadd.f32 0.0, %v5340
        %v5342 = vpop.f32.mrb[0].mxu0
        %5343 = vmatprep.mubr.f32.mxu0 0.0
        %5344 = vmatmul.mubr.f32.gmra.mrb[0].mxu0 %v5178
        %v5345 = vpop.f32.mrb[0].mxu0
        %v5346 = vadd.f32 0.0, %v5345
        %v5347 = vpop.f32.mrb[0].mxu0
        %5348 = vmatprep.mubr.f32.mxu0 0.0
        %5349 = vmatmul.mubr.f32.gmra.mrb[0].mxu0 %v5179
        %v5350 = vpop.f32.mrb[0].mxu0
        %v5351 = vadd.f32 0.0, %v5350
        %v5352 = vpop.f32.mrb[0].mxu0
        %5353 = vmatprep.mubr.f32.mxu0 0.0
        %5354 = vmatmul.mubr.f32.gmra.mrb[0].mxu0 %v5180
        %v5355 = vpop.f32.mrb[0].mxu0
        %v5356 = vadd.f32 0.0, %v5355
        %v5357 = vpop.f32.mrb[0].mxu0
        %5358 = vmatprep.mubr.f32.mxu0 0.0
        %5359 = vmatmul.mubr.f32.gmra.mrb[0].mxu0 %v5181
        %v5360 = vpop.f32.mrb[0].mxu0
        %v5361 = vadd.f32 0.0, %v5360
        %v5362 = vpop.f32.mrb[0].mxu0
        %5363 = vmatprep.mubr.f32.mxu0 0.0
        %5364 = vmatmul.mubr.f32.gmra.mrb[0].mxu0 %v5182
        %v5365 = vpop.f32.mrb[0].mxu0
        %v5366 = vadd.f32 0.0, %v5365
        %v5367 = vpop.f32.mrb[0].mxu0
        %5368 = vmatprep.mubr.f32.mxu0 0.0
        %5369 = vmatmul.mubr.f32.gmra.mrb[0].mxu0 %v5183
        %v5370 = vpop.f32.mrb[0].mxu0
        %v5371 = vadd.f32 0.0, %v5370
        %v5372 = vpop.f32.mrb[0].mxu0
        %5373 = vmatprep.mubr.f32.mxu0 0.0
        %5374 = vmatmul.mubr.f32.gmra.mrb[0].mxu0 %v5184
        %v5375 = vpop.f32.mrb[0].mxu0
        %v5376 = vadd.f32 0.0, %v5375
        %v5377 = vpop.f32.mrb[0].mxu0
        %5378 = vmatprep.mubr.f32.mxu0 0.0
        %5379 = vmatmul.mubr.f32.gmra.mrb[0].mxu0 %v5185
        %v5380 = vpop.f32.mrb[0].mxu0
        %v5381 = vadd.f32 0.0, %v5380
        %v5382 = vpop.f32.mrb[0].mxu0
        %5383 = vmatprep.mubr.f32.mxu0 0.0
        %5384 = vmatmul.mubr.f32.gmra.mrb[0].mxu0 %v5186
        %v5385 = vpop.f32.mrb[0].mxu0
        %v5386 = vadd.f32 0.0, %v5385
        %v5387 = vpop.f32.mrb[0].mxu0
        %5388 = vmatprep.mubr.f32.mxu0 0.0
        %5389 = vmatmul.mubr.f32.gmra.mrb[0].mxu0 %v5187
        %v5390 = vpop.f32.mrb[0].mxu0
        %v5391 = vadd.f32 0.0, %v5390
        %v5392 = vpop.f32.mrb[0].mxu0
        %5393 = vmatprep.mubr.f32.mxu0 0.0
        %5394 = vmatmul.mubr.f32.gmra.mrb[0].mxu0 %v5188
        %v5395 = vpop.f32.mrb[0].mxu0
        %v5396 = vadd.f32 0.0, %v5395
        %v5397 = vpop.f32.mrb[0].mxu0
        %5398 = vmatprep.mubr.f32.mxu0 0.0
        %5399 = vmatmul.mubr.f32.gmra.mrb[0].mxu0 %v5189
        %v5400 = vpop.f32.mrb[0].mxu0
        %v5401 = vadd.f32 0.0, %v5400
        %v5402 = vpop.f32.mrb[0].mxu0
        %5403 = vmatprep.mubr.f32.mxu0 0.0
        %5404 = vmatmul.mubr.f32.gmra.mrb[0].mxu0 %v5190
        %v5405 = vpop.f32.mrb[0].mxu0
        %v5406 = vadd.f32 0.0, %v5405
        %v5407 = vpop.f32.mrb[0].mxu0
        %5408 = vmatprep.mubr.f32.mxu0 0.0
        %5409 = vmatmul.mubr.f32.gmra.mrb[0].mxu0 %v5191
        %v5410 = vpop.f32.mrb[0].mxu0
        %v5411 = vadd.f32 0.0, %v5410
        %v5412 = vpop.f32.mrb[0].mxu0
        %5413 = vmatprep.mubr.f32.mxu0 0.0
        %5414 = vmatmul.mubr.f32.gmra.mrb[0].mxu0 %v5192
        %v5415 = vpop.f32.mrb[0].mxu0
        %v5416 = vadd.f32 0.0, %v5415
        %v5417 = vpop.f32.mrb[0].mxu0
        %5418 = vmatprep.mubr.f32.mxu0 0.0
        %5419 = vmatmul.mubr.f32.gmra.mrb[0].mxu0 %v5193
        %v5420 = vpop.f32.mrb[0].mxu0
        %v5421 = vadd.f32 0.0, %v5420
        %v5422 = vpop.f32.mrb[0].mxu0
        %5423 = vmatprep.mubr.f32.mxu0 0.0
        %5424 = vmatmul.mubr.f32.gmra.mrb[0].mxu0 %v5194
        %v5425 = vpop.f32.mrb[0].mxu0
        %v5426 = vadd.f32 0.0, %v5425
        %v5427 = vpop.f32.mrb[0].mxu0
        %5428 = vmatprep.mubr.f32.mxu0 0.0
        %5429 = vmatmul.mubr.f32.gmra.mrb[0].mxu0 %v5195
        %v5430 = vpop.f32.mrb[0].mxu0
        %v5431 = vadd.f32 0.0, %v5430
        %v5432 = vpop.f32.mrb[0].mxu0
        %5433 = vmatprep.mubr.f32.mxu0 0.0
        %5434 = vmatmul.mubr.f32.gmra.mrb[0].mxu0 %v5196
        %v5435 = vpop.f32.mrb[0].mxu0
        %v5436 = vadd.f32 0.0, %v5435
        %v5437 = vpop.f32.mrb[0].mxu0
        %5438 = vdwg.mxu0
        %v5439 = vadd.f32 %v5133, %v5281
        %v5440 = vadd.f32 %v5134, %v5286
        %v5441 = vadd.f32 %v5135, %v5291
        %v5442 = vadd.f32 %v5136, %v5296
        %v5443 = vadd.f32 %v5137, %v5301
        %v5444 = vadd.f32 %v5138, %v5306
        %v5445 = vadd.f32 %v5139, %v5311
        %v5446 = vadd.f32 %v5140, %v5316
        %v5447 = vadd.f32 %v5141, %v5321
        %v5448 = vadd.f32 %v5142, %v5326
        %v5449 = vadd.f32 %v5143, %v5331
        %v5450 = vadd.f32 %v5144, %v5336
        %v5451 = vadd.f32 %v5145, %v5341
        %v5452 = vadd.f32 %v5146, %v5346
        %v5453 = vadd.f32 %v5147, %v5351
        %v5454 = vadd.f32 %v5148, %v5356
        %v5455 = vadd.f32 %v5149, %v5361
        %v5456 = vadd.f32 %v5150, %v5366
        %v5457 = vadd.f32 %v5151, %v5371
        %v5458 = vadd.f32 %v5152, %v5376
        %v5459 = vadd.f32 %v5153, %v5381
        %v5460 = vadd.f32 %v5154, %v5386
        %v5461 = vadd.f32 %v5155, %v5391
        %v5462 = vadd.f32 %v5156, %v5396
        %v5463 = vadd.f32 %v5157, %v5401
        %v5464 = vadd.f32 %v5158, %v5406
        %v5465 = vadd.f32 %v5159, %v5411
        %v5466 = vadd.f32 %v5160, %v5416
        %v5467 = vadd.f32 %v5161, %v5421
        %v5468 = vadd.f32 %v5162, %v5426
        %v5469 = vadd.f32 %v5163, %v5431
        %v5470 = vadd.f32 %v5164, %v5436
        %v5471 = vld [vmem:[%s4858 + $0x2] sm:$0xff]
        %v5472 = vld [vmem:[%s4858 + $0xa] sm:$0xff]
        %v5473 = vld [vmem:[%s4858 + $0x1a] sm:$0xff]
        %v5474 = vld [vmem:[%s4858 + $0x22] sm:$0xff]
        %v5475 = vld [vmem:[%s4858 + $0x32] sm:$0xff]
        %v5476 = vld [vmem:[%s4858 + $0x3a] sm:$0xff]
        %v5477 = vld [vmem:[%s4858 + $0x4a] sm:$0xff]
        %v5478 = vld [vmem:[%s4858 + $0x52] sm:$0xff]
        %v5479 = vld [vmem:[%s4858 + $0x62] sm:$0xff]
        %v5480 = vld [vmem:[%s4858 + $0x6a] sm:$0xff]
        %v5481 = vld [vmem:[%s4858 + $0x7a] sm:$0xff]
        %v5482 = vld [vmem:[%s4858 + $0x82] sm:$0xff]
        %v5483 = vld [vmem:[%s4858 + $0x92] sm:$0xff]
        %v5484 = vld [vmem:[%s4858 + $0x9a] sm:$0xff]
        %v5485 = vld [vmem:[%s4858 + $0xaa] sm:$0xff]
        %v5486 = vld [vmem:[%s4858 + $0xb2] sm:$0xff]
        %v5487 = vld [vmem:[%s4858 + $0xc2] sm:$0xff]
        %v5488 = vld [vmem:[%s4858 + $0xca] sm:$0xff]
        %v5489 = vld [vmem:[%s4858 + $0xda] sm:$0xff]
        %v5490 = vld [vmem:[%s4858 + $0xe2] sm:$0xff]
        %v5491 = vld [vmem:[%s4858 + $0xf2] sm:$0xff]
        %v5492 = vld [vmem:[%s4858 + $0xfa] sm:$0xff]
        %v5493 = vld [vmem:[%s4858 + $0x10a] sm:$0xff]
        %v5494 = vld [vmem:[%s4858 + $0x112] sm:$0xff]
        %v5495 = vld [vmem:[%s4858 + $0x122] sm:$0xff]
        %v5496 = vld [vmem:[%s4858 + $0x12a] sm:$0xff]
        %v5497 = vld [vmem:[%s4858 + $0x13a] sm:$0xff]
        %v5498 = vld [vmem:[%s4858 + $0x142] sm:$0xff]
        %v5499 = vld [vmem:[%s4858 + $0x152] sm:$0xff]
        %v5500 = vld [vmem:[%s4858 + $0x15a] sm:$0xff]
        %v5501 = vld [vmem:[%s4858 + $0x16a] sm:$0xff]
        %v5502 = vld [vmem:[%s4858 + $0x172] sm:$0xff]
        %s5503 = scalar_lea.vmem [#allocation3], 1024
        %v5504 = vld [vmem:[%s5503] sm:$0xff]
        %v5505 = vld [vmem:[%s5503 + $0x8] sm:$0xff]
        %v5506 = vld [vmem:[%s5503 + $0x10] sm:$0xff]
        %v5507 = vld [vmem:[%s5503 + $0x18] sm:$0xff]
        %v5508 = vld [vmem:[%s5503 + $0x20] sm:$0xff]
        %v5509 = vld [vmem:[%s5503 + $0x28] sm:$0xff]
        %v5510 = vld [vmem:[%s5503 + $0x30] sm:$0xff]
        %v5511 = vld [vmem:[%s5503 + $0x38] sm:$0xff]
        %v5512 = vld [vmem:[%s5503 + $0x40] sm:$0xff]
        %v5513 = vld [vmem:[%s5503 + $0x48] sm:$0xff]
        %v5514 = vld [vmem:[%s5503 + $0x50] sm:$0xff]
        %v5515 = vld [vmem:[%s5503 + $0x58] sm:$0xff]
        %v5516 = vld [vmem:[%s5503 + $0x60] sm:$0xff]
        %v5517 = vld [vmem:[%s5503 + $0x68] sm:$0xff]
        %v5518 = vld [vmem:[%s5503 + $0x70] sm:$0xff]
        %v5519 = vld [vmem:[%s5503 + $0x78] sm:$0xff]
        %5520 = vmatprep.subr.mxu0 0.0
        %5521 = vmatpush1.msra.mxu0 %v5504
        %5522 = vmatprep.subr.mxu0 0.0
        %5523 = vmatpush1.msra.mxu0 %v5505
        %5524 = vmatprep.subr.mxu0 0.0
        %5525 = vmatpush1.msra.mxu0 %v5506
        %5526 = vmatprep.subr.mxu0 0.0
        %5527 = vmatpush1.msra.mxu0 %v5507
        %5528 = vmatprep.subr.mxu0 0.0
        %5529 = vmatpush1.msra.mxu0 %v5508
        %5530 = vmatprep.subr.mxu0 0.0
        %5531 = vmatpush1.msra.mxu0 %v5509
        %5532 = vmatprep.subr.mxu0 0.0
        %5533 = vmatpush1.msra.mxu0 %v5510
        %5534 = vmatprep.subr.mxu0 0.0
        %5535 = vmatpush1.msra.mxu0 %v5511
        %5536 = vmatprep.subr.mxu0 0.0
        %5537 = vmatpush1.msra.mxu0 %v5512
        %5538 = vmatprep.subr.mxu0 0.0
        %5539 = vmatpush1.msra.mxu0 %v5513
        %5540 = vmatprep.subr.mxu0 0.0
        %5541 = vmatpush1.msra.mxu0 %v5514
        %5542 = vmatprep.subr.mxu0 0.0
        %5543 = vmatpush1.msra.mxu0 %v5515
        %5544 = vmatprep.subr.mxu0 0.0
        %5545 = vmatpush1.msra.mxu0 %v5516
        %5546 = vmatprep.subr.mxu0 0.0
        %5547 = vmatpush1.msra.mxu0 %v5517
        %5548 = vmatprep.subr.mxu0 0.0
        %5549 = vmatpush1.msra.mxu0 %v5518
        %5550 = vmatprep.subr.mxu0 0.0
        %5551 = vmatpush1.msra.mxu0 %v5519
        %5552 = vmatprep.subr.mxu0 0.0
        %5553 = vmatpush1.msra.mxu0 0.0
        %5554 = vmatprep.subr.mxu0 0.0
        %5555 = vmatpush1.msra.mxu0 0.0
        %5556 = vmatprep.subr.mxu0 0.0
        %5557 = vmatpush1.msra.mxu0 0.0
        %5558 = vmatprep.subr.mxu0 0.0
        %5559 = vmatpush1.msra.mxu0 0.0
        %5560 = vmatprep.subr.mxu0 0.0
        %5561 = vmatpush1.msra.mxu0 0.0
        %5562 = vmatprep.subr.mxu0 0.0
        %5563 = vmatpush1.msra.mxu0 0.0
        %5564 = vmatprep.subr.mxu0 0.0
        %5565 = vmatpush1.msra.mxu0 0.0
        %5566 = vmatprep.subr.mxu0 0.0
        %5567 = vmatpush1.msra.mxu0 0.0
        %5568 = vmatprep.subr.mxu0 0.0
        %5569 = vmatpush1.msra.mxu0 0.0
        %5570 = vmatprep.subr.mxu0 0.0
        %5571 = vmatpush1.msra.mxu0 0.0
        %5572 = vmatprep.subr.mxu0 0.0
        %5573 = vmatpush1.msra.mxu0 0.0
        %5574 = vmatprep.subr.mxu0 0.0
        %5575 = vmatpush1.msra.mxu0 0.0
        %5576 = vmatprep.subr.mxu0 0.0
        %5577 = vmatpush1.msra.mxu0 0.0
        %5578 = vmatprep.subr.mxu0 0.0
        %5579 = vmatpush1.msra.mxu0 0.0
        %5580 = vmatprep.subr.mxu0 0.0
        %5581 = vmatpush1.msra.mxu0 0.0
        %5582 = vmatprep.subr.mxu0 0.0
        %5583 = vmatpush1.msra.mxu0 0.0
        %5584 = vmatprep.mubr.f32.mxu0 0.0
        %5585 = vmatmul.mubr.f32.gmra.mrb[0].mxu0 %v5471
        %v5586 = vpop.f32.mrb[0].mxu0
        %v5587 = vadd.f32 0.0, %v5586
        %v5588 = vpop.f32.mrb[0].mxu0
        %5589 = vmatprep.mubr.f32.mxu0 0.0
        %5590 = vmatmul.mubr.f32.gmra.mrb[0].mxu0 %v5472
        %v5591 = vpop.f32.mrb[0].mxu0
        %v5592 = vadd.f32 0.0, %v5591
        %v5593 = vpop.f32.mrb[0].mxu0
        %5594 = vmatprep.mubr.f32.mxu0 0.0
        %5595 = vmatmul.mubr.f32.gmra.mrb[0].mxu0 %v5473
        %v5596 = vpop.f32.mrb[0].mxu0
        %v5597 = vadd.f32 0.0, %v5596
        %v5598 = vpop.f32.mrb[0].mxu0
        %5599 = vmatprep.mubr.f32.mxu0 0.0
        %5600 = vmatmul.mubr.f32.gmra.mrb[0].mxu0 %v5474
        %v5601 = vpop.f32.mrb[0].mxu0
        %v5602 = vadd.f32 0.0, %v5601
        %v5603 = vpop.f32.mrb[0].mxu0
        %5604 = vmatprep.mubr.f32.mxu0 0.0
        %5605 = vmatmul.mubr.f32.gmra.mrb[0].mxu0 %v5475
        %v5606 = vpop.f32.mrb[0].mxu0
        %v5607 = vadd.f32 0.0, %v5606
        %v5608 = vpop.f32.mrb[0].mxu0
        %5609 = vmatprep.mubr.f32.mxu0 0.0
        %5610 = vmatmul.mubr.f32.gmra.mrb[0].mxu0 %v5476
        %v5611 = vpop.f32.mrb[0].mxu0
        %v5612 = vadd.f32 0.0, %v5611
        %v5613 = vpop.f32.mrb[0].mxu0
        %5614 = vmatprep.mubr.f32.mxu0 0.0
        %5615 = vmatmul.mubr.f32.gmra.mrb[0].mxu0 %v5477
        %v5616 = vpop.f32.mrb[0].mxu0
        %v5617 = vadd.f32 0.0, %v5616
        %v5618 = vpop.f32.mrb[0].mxu0
        %5619 = vmatprep.mubr.f32.mxu0 0.0
        %5620 = vmatmul.mubr.f32.gmra.mrb[0].mxu0 %v5478
        %v5621 = vpop.f32.mrb[0].mxu0
        %v5622 = vadd.f32 0.0, %v5621
        %v5623 = vpop.f32.mrb[0].mxu0
        %5624 = vmatprep.mubr.f32.mxu0 0.0
        %5625 = vmatmul.mubr.f32.gmra.mrb[0].mxu0 %v5479
        %v5626 = vpop.f32.mrb[0].mxu0
        %v5627 = vadd.f32 0.0, %v5626
        %v5628 = vpop.f32.mrb[0].mxu0
        %5629 = vmatprep.mubr.f32.mxu0 0.0
        %5630 = vmatmul.mubr.f32.gmra.mrb[0].mxu0 %v5480
        %v5631 = vpop.f32.mrb[0].mxu0
        %v5632 = vadd.f32 0.0, %v5631
        %v5633 = vpop.f32.mrb[0].mxu0
        %5634 = vmatprep.mubr.f32.mxu0 0.0
        %5635 = vmatmul.mubr.f32.gmra.mrb[0].mxu0 %v5481
        %v5636 = vpop.f32.mrb[0].mxu0
        %v5637 = vadd.f32 0.0, %v5636
        %v5638 = vpop.f32.mrb[0].mxu0
        %5639 = vmatprep.mubr.f32.mxu0 0.0
        %5640 = vmatmul.mubr.f32.gmra.mrb[0].mxu0 %v5482
        %v5641 = vpop.f32.mrb[0].mxu0
        %v5642 = vadd.f32 0.0, %v5641
        %v5643 = vpop.f32.mrb[0].mxu0
        %5644 = vmatprep.mubr.f32.mxu0 0.0
        %5645 = vmatmul.mubr.f32.gmra.mrb[0].mxu0 %v5483
        %v5646 = vpop.f32.mrb[0].mxu0
        %v5647 = vadd.f32 0.0, %v5646
        %v5648 = vpop.f32.mrb[0].mxu0
        %5649 = vmatprep.mubr.f32.mxu0 0.0
        %5650 = vmatmul.mubr.f32.gmra.mrb[0].mxu0 %v5484
        %v5651 = vpop.f32.mrb[0].mxu0
        %v5652 = vadd.f32 0.0, %v5651
        %v5653 = vpop.f32.mrb[0].mxu0
        %5654 = vmatprep.mubr.f32.mxu0 0.0
        %5655 = vmatmul.mubr.f32.gmra.mrb[0].mxu0 %v5485
        %v5656 = vpop.f32.mrb[0].mxu0
        %v5657 = vadd.f32 0.0, %v5656
        %v5658 = vpop.f32.mrb[0].mxu0
        %5659 = vmatprep.mubr.f32.mxu0 0.0
        %5660 = vmatmul.mubr.f32.gmra.mrb[0].mxu0 %v5486
        %v5661 = vpop.f32.mrb[0].mxu0
        %v5662 = vadd.f32 0.0, %v5661
        %v5663 = vpop.f32.mrb[0].mxu0
        %5664 = vmatprep.mubr.f32.mxu0 0.0
        %5665 = vmatmul.mubr.f32.gmra.mrb[0].mxu0 %v5487
        %v5666 = vpop.f32.mrb[0].mxu0
        %v5667 = vadd.f32 0.0, %v5666
        %v5668 = vpop.f32.mrb[0].mxu0
        %5669 = vmatprep.mubr.f32.mxu0 0.0
        %5670 = vmatmul.mubr.f32.gmra.mrb[0].mxu0 %v5488
        %v5671 = vpop.f32.mrb[0].mxu0
        %v5672 = vadd.f32 0.0, %v5671
        %v5673 = vpop.f32.mrb[0].mxu0
        %5674 = vmatprep.mubr.f32.mxu0 0.0
        %5675 = vmatmul.mubr.f32.gmra.mrb[0].mxu0 %v5489
        %v5676 = vpop.f32.mrb[0].mxu0
        %v5677 = vadd.f32 0.0, %v5676
        %v5678 = vpop.f32.mrb[0].mxu0
        %5679 = vmatprep.mubr.f32.mxu0 0.0
        %5680 = vmatmul.mubr.f32.gmra.mrb[0].mxu0 %v5490
        %v5681 = vpop.f32.mrb[0].mxu0
        %v5682 = vadd.f32 0.0, %v5681
        %v5683 = vpop.f32.mrb[0].mxu0
        %5684 = vmatprep.mubr.f32.mxu0 0.0
        %5685 = vmatmul.mubr.f32.gmra.mrb[0].mxu0 %v5491
        %v5686 = vpop.f32.mrb[0].mxu0
        %v5687 = vadd.f32 0.0, %v5686
        %v5688 = vpop.f32.mrb[0].mxu0
        %5689 = vmatprep.mubr.f32.mxu0 0.0
        %5690 = vmatmul.mubr.f32.gmra.mrb[0].mxu0 %v5492
        %v5691 = vpop.f32.mrb[0].mxu0
        %v5692 = vadd.f32 0.0, %v5691
        %v5693 = vpop.f32.mrb[0].mxu0
        %5694 = vmatprep.mubr.f32.mxu0 0.0
        %5695 = vmatmul.mubr.f32.gmra.mrb[0].mxu0 %v5493
        %v5696 = vpop.f32.mrb[0].mxu0
        %v5697 = vadd.f32 0.0, %v5696
        %v5698 = vpop.f32.mrb[0].mxu0
        %5699 = vmatprep.mubr.f32.mxu0 0.0
        %5700 = vmatmul.mubr.f32.gmra.mrb[0].mxu0 %v5494
        %v5701 = vpop.f32.mrb[0].mxu0
        %v5702 = vadd.f32 0.0, %v5701
        %v5703 = vpop.f32.mrb[0].mxu0
        %5704 = vmatprep.mubr.f32.mxu0 0.0
        %5705 = vmatmul.mubr.f32.gmra.mrb[0].mxu0 %v5495
        %v5706 = vpop.f32.mrb[0].mxu0
        %v5707 = vadd.f32 0.0, %v5706
        %v5708 = vpop.f32.mrb[0].mxu0
        %5709 = vmatprep.mubr.f32.mxu0 0.0
        %5710 = vmatmul.mubr.f32.gmra.mrb[0].mxu0 %v5496
        %v5711 = vpop.f32.mrb[0].mxu0
        %v5712 = vadd.f32 0.0, %v5711
        %v5713 = vpop.f32.mrb[0].mxu0
        %5714 = vmatprep.mubr.f32.mxu0 0.0
        %5715 = vmatmul.mubr.f32.gmra.mrb[0].mxu0 %v5497
        %v5716 = vpop.f32.mrb[0].mxu0
        %v5717 = vadd.f32 0.0, %v5716
        %v5718 = vpop.f32.mrb[0].mxu0
        %5719 = vmatprep.mubr.f32.mxu0 0.0
        %5720 = vmatmul.mubr.f32.gmra.mrb[0].mxu0 %v5498
        %v5721 = vpop.f32.mrb[0].mxu0
        %v5722 = vadd.f32 0.0, %v5721
        %v5723 = vpop.f32.mrb[0].mxu0
        %5724 = vmatprep.mubr.f32.mxu0 0.0
        %5725 = vmatmul.mubr.f32.gmra.mrb[0].mxu0 %v5499
        %v5726 = vpop.f32.mrb[0].mxu0
        %v5727 = vadd.f32 0.0, %v5726
        %v5728 = vpop.f32.mrb[0].mxu0
        %5729 = vmatprep.mubr.f32.mxu0 0.0
        %5730 = vmatmul.mubr.f32.gmra.mrb[0].mxu0 %v5500
        %v5731 = vpop.f32.mrb[0].mxu0
        %v5732 = vadd.f32 0.0, %v5731
        %v5733 = vpop.f32.mrb[0].mxu0
        %5734 = vmatprep.mubr.f32.mxu0 0.0
        %5735 = vmatmul.mubr.f32.gmra.mrb[0].mxu0 %v5501
        %v5736 = vpop.f32.mrb[0].mxu0
        %v5737 = vadd.f32 0.0, %v5736
        %v5738 = vpop.f32.mrb[0].mxu0
        %5739 = vmatprep.mubr.f32.mxu0 0.0
        %5740 = vmatmul.mubr.f32.gmra.mrb[0].mxu0 %v5502
        %v5741 = vpop.f32.mrb[0].mxu0
        %v5742 = vadd.f32 0.0, %v5741
        %v5743 = vpop.f32.mrb[0].mxu0
        %5744 = vdwg.mxu0
        %v5745 = vadd.f32 %v5439, %v5587
        %v5746 = vadd.f32 %v5440, %v5592
        %v5747 = vadd.f32 %v5441, %v5597
        %v5748 = vadd.f32 %v5442, %v5602
        %v5749 = vadd.f32 %v5443, %v5607
        %v5750 = vadd.f32 %v5444, %v5612
        %v5751 = vadd.f32 %v5445, %v5617
        %v5752 = vadd.f32 %v5446, %v5622
        %v5753 = vadd.f32 %v5447, %v5627
        %v5754 = vadd.f32 %v5448, %v5632
        %v5755 = vadd.f32 %v5449, %v5637
        %v5756 = vadd.f32 %v5450, %v5642
        %v5757 = vadd.f32 %v5451, %v5647
        %v5758 = vadd.f32 %v5452, %v5652
        %v5759 = vadd.f32 %v5453, %v5657
        %v5760 = vadd.f32 %v5454, %v5662
        %v5761 = vadd.f32 %v5455, %v5667
        %v5762 = vadd.f32 %v5456, %v5672
        %v5763 = vadd.f32 %v5457, %v5677
        %v5764 = vadd.f32 %v5458, %v5682
        %v5765 = vadd.f32 %v5459, %v5687
        %v5766 = vadd.f32 %v5460, %v5692
        %v5767 = vadd.f32 %v5461, %v5697
        %v5768 = vadd.f32 %v5462, %v5702
        %v5769 = vadd.f32 %v5463, %v5707
        %v5770 = vadd.f32 %v5464, %v5712
        %v5771 = vadd.f32 %v5465, %v5717
        %v5772 = vadd.f32 %v5466, %v5722
        %v5773 = vadd.f32 %v5467, %v5727
        %v5774 = vadd.f32 %v5468, %v5732
        %v5775 = vadd.f32 %v5469, %v5737
        %v5776 = vadd.f32 %v5470, %v5742
        %v5777 = vld [vmem:[%s1091 + $0x1] sm:$0xff]
        %v5778 = vld [vmem:[%s1091 + $0x9] sm:$0xff]
        %v5779 = vld [vmem:[%s1091 + $0x19] sm:$0xff]
        %v5780 = vld [vmem:[%s1091 + $0x21] sm:$0xff]
        %v5781 = vld [vmem:[%s1091 + $0x31] sm:$0xff]
        %v5782 = vld [vmem:[%s1091 + $0x39] sm:$0xff]
        %v5783 = vld [vmem:[%s1091 + $0x49] sm:$0xff]
        %v5784 = vld [vmem:[%s1091 + $0x51] sm:$0xff]
        %v5785 = vld [vmem:[%s1091 + $0x61] sm:$0xff]
        %v5786 = vld [vmem:[%s1091 + $0x69] sm:$0xff]
        %v5787 = vld [vmem:[%s1091 + $0x79] sm:$0xff]
        %v5788 = vld [vmem:[%s1091 + $0x81] sm:$0xff]
        %v5789 = vld [vmem:[%s1091 + $0x91] sm:$0xff]
        %v5790 = vld [vmem:[%s1091 + $0x99] sm:$0xff]
        %v5791 = vld [vmem:[%s1091 + $0xa9] sm:$0xff]
        %v5792 = vld [vmem:[%s1091 + $0xb1] sm:$0xff]
        %v5793 = vld [vmem:[%s1091 + $0xc1] sm:$0xff]
        %v5794 = vld [vmem:[%s1091 + $0xc9] sm:$0xff]
        %v5795 = vld [vmem:[%s1091 + $0xd9] sm:$0xff]
        %v5796 = vld [vmem:[%s1091 + $0xe1] sm:$0xff]
        %v5797 = vld [vmem:[%s1091 + $0xf1] sm:$0xff]
        %v5798 = vld [vmem:[%s1091 + $0xf9] sm:$0xff]
        %v5799 = vld [vmem:[%s1091 + $0x109] sm:$0xff]
        %v5800 = vld [vmem:[%s1091 + $0x111] sm:$0xff]
        %v5801 = vld [vmem:[%s1091 + $0x121] sm:$0xff]
        %v5802 = vld [vmem:[%s1091 + $0x129] sm:$0xff]
        %v5803 = vld [vmem:[%s1091 + $0x139] sm:$0xff]
        %v5804 = vld [vmem:[%s1091 + $0x141] sm:$0xff]
        %v5805 = vld [vmem:[%s1091 + $0x151] sm:$0xff]
        %v5806 = vld [vmem:[%s1091 + $0x159] sm:$0xff]
        %v5807 = vld [vmem:[%s1091 + $0x169] sm:$0xff]
        %v5808 = vld [vmem:[%s1091 + $0x171] sm:$0xff]
        %v5809 = vld [vmem:[%s4] sm:$0x1]
        %v5811 = vlaneseq
        %v5812 = vshrl.u32 %v5811, 7
        %v5813 = vsub.s32 0, %v5812
        %v5814 = vrot.slane %v5809, %v5813
        %v5816 = vadd.f32 %v5745, %v5814
        %v5817 = vadd.f32 %v5746, %v5814
        %v5818 = vadd.f32 %v5747, %v5814
        %v5819 = vadd.f32 %v5748, %v5814
        %v5820 = vadd.f32 %v5749, %v5814
        %v5821 = vadd.f32 %v5750, %v5814
        %v5822 = vadd.f32 %v5751, %v5814
        %v5823 = vadd.f32 %v5752, %v5814
        %v5824 = vadd.f32 %v5753, %v5814
        %v5825 = vadd.f32 %v5754, %v5814
        %v5826 = vadd.f32 %v5755, %v5814
        %v5827 = vadd.f32 %v5756, %v5814
        %v5828 = vadd.f32 %v5757, %v5814
        %v5829 = vadd.f32 %v5758, %v5814
        %v5830 = vadd.f32 %v5759, %v5814
        %v5831 = vadd.f32 %v5760, %v5814
        %v5832 = vadd.f32 %v5761, %v5814
        %v5833 = vadd.f32 %v5762, %v5814
        %v5834 = vadd.f32 %v5763, %v5814
        %v5835 = vadd.f32 %v5764, %v5814
        %v5836 = vadd.f32 %v5765, %v5814
        %v5837 = vadd.f32 %v5766, %v5814
        %v5838 = vadd.f32 %v5767, %v5814
        %v5839 = vadd.f32 %v5768, %v5814
        %v5840 = vadd.f32 %v5769, %v5814
        %v5841 = vadd.f32 %v5770, %v5814
        %v5842 = vadd.f32 %v5771, %v5814
        %v5843 = vadd.f32 %v5772, %v5814
        %v5844 = vadd.f32 %v5773, %v5814
        %v5845 = vadd.f32 %v5774, %v5814
        %v5846 = vadd.f32 %v5775, %v5814
        %v5847 = vadd.f32 %v5776, %v5814
        %v5848 = vadd.f32 %v5816, %v5777
        %v5849 = vadd.f32 %v5817, %v5778
        %v5850 = vadd.f32 %v5818, %v5779
        %v5851 = vadd.f32 %v5819, %v5780
        %v5852 = vadd.f32 %v5820, %v5781
        %v5853 = vadd.f32 %v5821, %v5782
        %v5854 = vadd.f32 %v5822, %v5783
        %v5855 = vadd.f32 %v5823, %v5784
        %v5856 = vadd.f32 %v5824, %v5785
        %v5857 = vadd.f32 %v5825, %v5786
        %v5858 = vadd.f32 %v5826, %v5787
        %v5859 = vadd.f32 %v5827, %v5788
        %v5860 = vadd.f32 %v5828, %v5789
        %v5861 = vadd.f32 %v5829, %v5790
        %v5862 = vadd.f32 %v5830, %v5791
        %v5863 = vadd.f32 %v5831, %v5792
        %v5864 = vadd.f32 %v5832, %v5793
        %v5865 = vadd.f32 %v5833, %v5794
        %v5866 = vadd.f32 %v5834, %v5795
        %v5867 = vadd.f32 %v5835, %v5796
        %v5868 = vadd.f32 %v5836, %v5797
        %v5869 = vadd.f32 %v5837, %v5798
        %v5870 = vadd.f32 %v5838, %v5799
        %v5871 = vadd.f32 %v5839, %v5800
        %v5872 = vadd.f32 %v5840, %v5801
        %v5873 = vadd.f32 %v5841, %v5802
        %v5874 = vadd.f32 %v5842, %v5803
        %v5875 = vadd.f32 %v5843, %v5804
        %v5876 = vadd.f32 %v5844, %v5805
        %v5877 = vadd.f32 %v5845, %v5806
        %v5878 = vadd.f32 %v5846, %v5807
        %v5879 = vadd.f32 %v5847, %v5808
        %5880 = vst [vmem:[%s232] sm:$0xff] %v5848
        %5881 = vst [vmem:[%s232 + $0x8] sm:$0xff] %v5849
        %5882 = vst [vmem:[%s232 + $0x10] sm:$0xff] %v5850
        %5883 = vst [vmem:[%s232 + $0x18] sm:$0xff] %v5851
        %5884 = vst [vmem:[%s232 + $0x20] sm:$0xff] %v5852
        %5885 = vst [vmem:[%s232 + $0x28] sm:$0xff] %v5853
        %5886 = vst [vmem:[%s232 + $0x30] sm:$0xff] %v5854
        %5887 = vst [vmem:[%s232 + $0x38] sm:$0xff] %v5855
        %5888 = vst [vmem:[%s232 + $0x40] sm:$0xff] %v5856
        %5889 = vst [vmem:[%s232 + $0x48] sm:$0xff] %v5857
        %5890 = vst [vmem:[%s232 + $0x50] sm:$0xff] %v5858
        %5891 = vst [vmem:[%s232 + $0x58] sm:$0xff] %v5859
        %5892 = vst [vmem:[%s232 + $0x60] sm:$0xff] %v5860
        %5893 = vst [vmem:[%s232 + $0x68] sm:$0xff] %v5861
        %5894 = vst [vmem:[%s232 + $0x70] sm:$0xff] %v5862
        %5895 = vst [vmem:[%s232 + $0x78] sm:$0xff] %v5863
        %5896 = vst [vmem:[%s232 + $0x80] sm:$0xff] %v5864
        %5897 = vst [vmem:[%s232 + $0x88] sm:$0xff] %v5865
        %5898 = vst [vmem:[%s232 + $0x90] sm:$0xff] %v5866
        %5899 = vst [vmem:[%s232 + $0x98] sm:$0xff] %v5867
        %5900 = vst [vmem:[%s232 + $0xa0] sm:$0xff] %v5868
        %5901 = vst [vmem:[%s232 + $0xa8] sm:$0xff] %v5869
        %5902 = vst [vmem:[%s232 + $0xb0] sm:$0xff] %v5870
        %5903 = vst [vmem:[%s232 + $0xb8] sm:$0xff] %v5871
        %5904 = vst [vmem:[%s232 + $0xc0] sm:$0xff] %v5872
        %5905 = vst [vmem:[%s232 + $0xc8] sm:$0xff] %v5873
        %5906 = vst [vmem:[%s232 + $0xd0] sm:$0xff] %v5874
        %5907 = vst [vmem:[%s232 + $0xd8] sm:$0xff] %v5875
        %5908 = vst [vmem:[%s232 + $0xe0] sm:$0xff] %v5876
        %5909 = vst [vmem:[%s232 + $0xe8] sm:$0xff] %v5877
        %5910 = vst [vmem:[%s232 + $0xf0] sm:$0xff] %v5878
        %5911 = vst [vmem:[%s232 + $0xf8] sm:$0xff] %v5879
        %s5912 = sand.u32 %s138, 1
        %s5913 = scalar_lea.sflag [#allocation5], %s5912
        %s5914 = sand.u32 %s138, 1
        %s5915 = smul.addr %s5914, 256
        %s5916 = scalar_lea.vmem [#allocation6], %s5915
        // Predicated region
        $region45: #{tpu_custom_call.1} parent=39 // pred_check
          %p5917 = pneg %p148
        $region46: #{tpu_custom_call.1} parent=39 // pred_check_branch
          %5919 = sbr.rel (%p5917) target = $region48
        $region47: #{tpu_custom_call.1} parent=39 // pred_region
          %s5921 = ssub.s32 4096, 4096
          %5922 = vsyncadd %s5913, %s5921
          %s5923 = smul.addr %s20, 32
          %s5924 = smul.addr %s5923, 128
          %s5925 = scalar_lea.hbm %s5, %s5924
          %s5926 = sshll.u32 %s5916, 4
          %s5927 = int_to_ptr.vmem [resolvable:$true] %s5926
          %5932 = dma.vmem_to_hbm [thread:$0]  %s5927, 4096, %s5925, %s5913, 128, 128, 8
        $region48: #{tpu_custom_call.1} parent=39 // pred_fallthru
          _
      $region40: #{tpu_custom_call.1} parent=5 // pred_fallthru
        _
      %p5933 = scmp.le.s32.totalorder 2, %s15
      // Predicated region
      $region49: #{tpu_custom_call.1} parent=5 // pred_check
        %p5934 = pneg %p5933
      $region50: #{tpu_custom_call.1} parent=5 // pred_check_branch
        %5936 = sbr.rel (%p5934) target = $region52
      $region51: #{tpu_custom_call.1} parent=5 // pred_region
        %s5937 = ssub.s32 %s15, 2
        // Predicated region
        $region53: #{tpu_custom_call.1} parent=51 // pred_check
          %p5938 = pneg %p154
        $region54: #{tpu_custom_call.1} parent=51 // pred_check_branch
          %5940 = sbr.rel (%p5938) target = $region56
        $region55: #{tpu_custom_call.1} parent=51 // pred_region
          %s5941 = sand.u32 %s139, 1
          %s5942 = scalar_lea.sflag [#allocation5], %s5941
          %s5943 = sand.u32 %s139, 1
          %s5944 = smul.addr %s5943, 256
          %s5945 = scalar_lea.vmem [#allocation6], %s5944
          %5946 = dma.done %s5942, 4096
        $region56: #{tpu_custom_call.1} parent=51 // pred_fallthru
          _
      $region52: #{tpu_custom_call.1} parent=5 // pred_fallthru
        _
    $region6: #{tpu_custom_call.1} parent=1 // loop_footer
      %s19 = sadd.s32 1, %s15
    $region7: #{tpu_custom_call.1} parent=1 // loop_footer_branch
      %14 = sbr.rel target = $region3
    $region8: #{tpu_custom_call.1} parent=1 // loop_exit
      _
    %5947 = vsyncpa [#allocation4], 1
    %s5948 = scalar_lea.sflag [#allocation4], 1
    %5949 = vsyncpa %s5948, 1
    %5950 = vsyncpa [#allocation5], 1
    %s5951 = scalar_lea.sflag [#allocation5], 1
    %5952 = vsyncpa %s5951, 1

</llo_original>
